<compile_context>
chip_gen: v7x
topology: tpu7x:2x2x1
jax: 0.10.0
libtpu: 0.0.40
codegen_flags: <defaults>
</compile_context>

<pallas_src>
import functools
import math

import jax
import jax.numpy as jnp
from jax.experimental import pallas as pl
from jax.experimental.pallas import tpu as pltpu

# ---------------- model hyper-parameters (small, synthetic) ----------------
D_MODEL = 32
NHEAD = 4
HEAD_DIM = D_MODEL // NHEAD
DIM_FF = 64
NUM_LAYERS = 2
EPS = 1e-5

T_LEN = 8    # tgt sequence length
S_LEN = 12   # memory sequence length
BATCH = 2

_SCALE = 1.0 / math.sqrt(HEAD_DIM)

NUM_RAW_LAYER_PARAMS = 26   # raw PyTorch-convention params per layer


# ---------------- shared math helpers ----------------------------------------
def _layernorm(x, g, b):
    mu = jnp.mean(x, axis=-1, keepdims=True)
    var = jnp.mean((x - mu) ** 2, axis=-1, keepdims=True)
    return (x - mu) * jax.lax.rsqrt(var + EPS) * g + b


def _attend_kernel(q, k, v, mask):
    """Multi-head scaled-dot-product attention (kernel version).

    The 1/sqrt(head_dim) scale is already folded into q (at weight-pack time).
    q:(Tq,D) k:(Tk,D) v:(Tk,D) mask:(Tq,Tk) -> (Tq,D)
    """
    outs = []
    for h in range(NHEAD):                              # static unroll
        lo = h * HEAD_DIM
        qh = q[:, lo:lo + HEAD_DIM]
        kh = k[:, lo:lo + HEAD_DIM]
        vh = v[:, lo:lo + HEAD_DIM]
        # contract on the head dim of both operands -> no explicit transpose
        s = jax.lax.dot_general(qh, kh, (((1,), (1,)), ((), ())),
                                preferred_element_type=jnp.float32) + mask
        s = s - jnp.max(s, axis=-1, keepdims=True)
        p = jnp.exp(s)
        denom = jnp.sum(p, axis=-1, keepdims=True)
        p = p * pl.reciprocal(denom, approx=True)       # EUP slot, ~free
        outs.append(jnp.dot(p, vh, preferred_element_type=jnp.float32))
    return jnp.concatenate(outs, axis=-1)


# ------------------------------- fused kernel --------------------------------
def fused_decoder_kernel(
        x_ref, mem_ref, tmask_ref, mmask_ref,
        wqkv_s, bqkv_s, wo_s, bo_s,
        wq_c, bq_c, wkv_c, bkv_c, wo_c, bo_c,
        g1, b1, g2, b2, g3, b3,
        w1, bf1, w2, bf2,
        gf, bf,
        out_ref, *, apply_final_norm):
    D = D_MODEL
    x = x_ref[0]            # (T, D)   one batch element per grid step
    mem = mem_ref[0]        # (S, D)
    tmask = tmask_ref[...]  # (T, T)
    mmask = mmask_ref[...]  # (T, S)

    for l in range(NUM_LAYERS):   # static unroll; weights loaded at use site
        # ---- self-attention (packed q|k|v projection, pre-transposed W) ----
        qkv = jnp.dot(x, wqkv_s[l], preferred_element_type=jnp.float32) + bqkv_s[l]
        sa = _attend_kernel(qkv[:, 0:D], qkv[:, D:2 * D], qkv[:, 2 * D:3 * D],
                            tmask)
        sa = jnp.dot(sa, wo_s[l], preferred_element_type=jnp.float32) + bo_s[l]
        x = _layernorm(x + sa, g1[l], b1[l])

        # ---- cross-attention (packed k|v projection of memory) ----
        qc = jnp.dot(x, wq_c[l], preferred_element_type=jnp.float32) + bq_c[l]
        kv = jnp.dot(mem, wkv_c[l], preferred_element_type=jnp.float32) + bkv_c[l]
        ca = _attend_kernel(qc, kv[:, 0:D], kv[:, D:2 * D], mmask)
        ca = jnp.dot(ca, wo_c[l], preferred_element_type=jnp.float32) + bo_c[l]
        x = _layernorm(x + ca, g2[l], b2[l])

        # ---- feed-forward ----
        h = jnp.maximum(
            jnp.dot(x, w1[l], preferred_element_type=jnp.float32) + bf1[l], 0.0)
        ff = jnp.dot(h, w2[l], preferred_element_type=jnp.float32) + bf2[l]
        x = _layernorm(x + ff, g3[l], b3[l])

    if apply_final_norm:
        x = _layernorm(x, gf[...], bf[...])
    out_ref[0] = x


def _full_spec(shape):
    nd = len(shape)
    return pl.BlockSpec(shape, lambda b, _nd=nd: (0,) * _nd)


# --------------------------- public wrapper ----------------------------------
def transformer_decoder(tgt_tbd, mem_sbd, tgt_mask, memory_mask,
                        packed_weights, final_norm_params):
    """tgt (T,B,D), memory (S,B,D) -> (T,B,D), like nn.TransformerDecoder (eval)."""
    x = jnp.transpose(tgt_tbd, (1, 0, 2))      # (B, T, D)
    mem = jnp.transpose(mem_sbd, (1, 0, 2))    # (B, S, D)
    B, T, D = x.shape
    S = mem.shape[1]

    apply_final_norm = final_norm_params is not None
    if apply_final_norm:
        gf, bf = final_norm_params
    else:  # dummies (unused when apply_final_norm=False)
        gf = jnp.ones((1, D), jnp.float32)
        bf = jnp.zeros((1, D), jnp.float32)

    weights = list(packed_weights) + [gf, bf]

    in_specs = [
        pl.BlockSpec((1, T, D), lambda b: (b, 0, 0)),
        pl.BlockSpec((1, S, D), lambda b: (b, 0, 0)),
        _full_spec(tgt_mask.shape),
        _full_spec(memory_mask.shape),
    ] + [_full_spec(w.shape) for w in weights]

    out = pl.pallas_call(
        functools.partial(fused_decoder_kernel,
                          apply_final_norm=apply_final_norm),
        out_shape=jax.ShapeDtypeStruct((B, T, D), jnp.float32),
        grid=(B,),
        in_specs=in_specs,
        out_specs=pl.BlockSpec((1, T, D), lambda b: (b, 0, 0)),
        compiler_params=pltpu.CompilerParams(
            dimension_semantics=("parallel",)),   # 2-way across v7x TCs
    )(x, mem, tgt_mask, memory_mask, *weights)
    return jnp.transpose(out, (1, 0, 2))          # back to (T, B, D)


# --------------- host-side weight packing (one-time, outside kernel) ---------
def pack_layer_weights(layer_params_list):
    """Pre-transpose (out,in)->(in,out), pack qkv / kv lane-dense, fold the
    1/sqrt(head_dim) attention scale into the q projections, stack layers.

    Raw per-layer tuple layout (PyTorch conventions, W stored (out, in)):
      0 wq_s 1 bq_s 2 wk_s 3 bk_s 4 wv_s 5 bv_s 6 wo_s 7 bo_s
      8 wq_c 9 bq_c 10 wk_c 11 bk_c 12 wv_c 13 bv_c 14 wo_c 15 bo_c
      16 g1 17 b1 18 g2 19 b2 20 g3 21 b3 22 w1 23 bf1 24 w2 25 bf2
    """
    def stack(fn):
        return jnp.stack([fn(p) for p in layer_params_list], axis=0)

    wqkv_s = stack(lambda p: jnp.concatenate(
        [p[0].T * _SCALE, p[2].T, p[4].T], axis=1))
    bqkv_s = stack(lambda p: jnp.concatenate(
        [p[1] * _SCALE, p[3], p[5]], axis=1))
    wo_s   = stack(lambda p: p[6].T)
    bo_s   = stack(lambda p: p[7])
    wq_c   = stack(lambda p: p[8].T * _SCALE)
    bq_c   = stack(lambda p: p[9] * _SCALE)
    wkv_c  = stack(lambda p: jnp.concatenate([p[10].T, p[12].T], axis=1))
    bkv_c  = stack(lambda p: jnp.concatenate([p[11], p[13]], axis=1))
    wo_c   = stack(lambda p: p[14].T)
    bo_c   = stack(lambda p: p[15])
    g1 = stack(lambda p: p[16]); b1 = stack(lambda p: p[17])
    g2 = stack(lambda p: p[18]); b2 = stack(lambda p: p[19])
    g3 = stack(lambda p: p[20]); b3 = stack(lambda p: p[21])
    w1 = stack(lambda p: p[22].T); bf1 = stack(lambda p: p[23])
    w2 = stack(lambda p: p[24].T); bf2 = stack(lambda p: p[25])
    return (wqkv_s, bqkv_s, wo_s, bo_s, wq_c, bq_c, wkv_c, bkv_c, wo_c, bo_c,
            g1, b1, g2, b2, g3, b3, w1, bf1, w2, bf2)


# -------------------------- pure-JAX reference --------------------------------
# Uses the RAW PyTorch-convention per-layer params (independent of the packing
# path), with exact softmax division -> validates both packing and kernel.
def reference_decoder(tgt_tbd, mem_sbd, tgt_mask, memory_mask,
                      layer_params_list, final_norm_params):
    x_b = jnp.transpose(tgt_tbd, (1, 0, 2))
    mem_b = jnp.transpose(mem_sbd, (1, 0, 2))

    def mha(q_in, kv_in, wq, bq, wk, bk, wv, bv, wo, bo, mask):
        q = q_in @ wq.T + bq
        k = kv_in @ wk.T + bk
        v = kv_in @ wv.T + bv
        outs = []
        for h in range(NHEAD):
            lo = h * HEAD_DIM
            s = (q[:, lo:lo + HEAD_DIM] @ k[:, lo:lo + HEAD_DIM].T) * _SCALE
            s = s + mask
            p = jax.nn.softmax(s, axis=-1)
            outs.append(p @ v[:, lo:lo + HEAD_DIM])
        return jnp.concatenate(outs, axis=-1) @ wo.T + bo

    def per_sample(x, mem):
        for p in layer_params_list:
            sa = mha(x, x, p[0], p[1], p[2], p[3], p[4], p[5], p[6], p[7],
                     tgt_mask)
            x = _layernorm(x + sa, p[16], p[17])
            ca = mha(x, mem, p[8], p[9], p[10], p[11], p[12], p[13], p[14],
                     p[15], memory_mask)
            x = _layernorm(x + ca, p[18], p[19])
            h = jnp.maximum(x @ p[22].T + p[23], 0.0)
            x = _layernorm(x + h @ p[24].T + p[25], p[20], p[21])
        if final_norm_params is not None:
            g, b = final_norm_params
            x = _layernorm(x, g, b)
        return x

    out = jax.vmap(per_sample)(x_b, mem_b)
    return jnp.transpose(out, (1, 0, 2))


# --------------------------- parameter init -----------------------------------
def _init_layer_params(key):
    keys = jax.random.split(key, 16)

    def w(k, shape, scale=0.1):
        return jax.random.normal(k, shape, jnp.float32) * scale

    params = (
        # self-attention q/k/v/out projections (PyTorch (out, in) convention)
        w(keys[0], (D_MODEL, D_MODEL)), w(keys[1], (1, D_MODEL), 0.02),
        w(keys[2], (D_MODEL, D_MODEL)), w(keys[3], (1, D_MODEL), 0.02),
        w(keys[4], (D_MODEL, D_MODEL)), w(keys[5], (1, D_MODEL), 0.02),
        w(keys[6], (D_MODEL, D_MODEL)), w(keys[7], (1, D_MODEL), 0.02),
        # cross-attention q/k/v/out projections
        w(keys[8], (D_MODEL, D_MODEL)), w(keys[9], (1, D_MODEL), 0.02),
        w(keys[10], (D_MODEL, D_MODEL)), w(keys[11], (1, D_MODEL), 0.02),
        w(keys[12], (D_MODEL, D_MODEL)), w(keys[13], (1, D_MODEL), 0.02),
        w(keys[14], (D_MODEL, D_MODEL)), w(keys[15], (1, D_MODEL), 0.02),
        # layernorm 1/2/3 (gamma=1, beta=0 as in nn.LayerNorm init)
        jnp.ones((1, D_MODEL), jnp.float32), jnp.zeros((1, D_MODEL), jnp.float32),
        jnp.ones((1, D_MODEL), jnp.float32), jnp.zeros((1, D_MODEL), jnp.float32),
        jnp.ones((1, D_MODEL), jnp.float32), jnp.zeros((1, D_MODEL), jnp.float32),
        # feed-forward
        jax.random.normal(jax.random.fold_in(key, 100), (DIM_FF, D_MODEL),
                          jnp.float32) * 0.1,
        jnp.zeros((1, DIM_FF), jnp.float32),
        jax.random.normal(jax.random.fold_in(key, 101), (D_MODEL, DIM_FF),
                          jnp.float32) * 0.1,
        jnp.zeros((1, D_MODEL), jnp.float32),
    )
    assert len(params) == NUM_RAW_LAYER_PARAMS
    return params


if __name__ == "__main__":
    root = jax.random.PRNGKey(0)
    k_tgt, k_mem, k_layers, k_norm = jax.random.split(root, 4)

    tgt = jax.random.normal(k_tgt, (T_LEN, BATCH, D_MODEL), jnp.float32)
    memory = jax.random.normal(k_mem, (S_LEN, BATCH, D_MODEL), jnp.float32)

    # causal additive tgt mask (like generate_square_subsequent_mask), no memory mask
    row = jnp.arange(T_LEN)[:, None]
    col = jnp.arange(T_LEN)[None, :]
    tgt_mask = jnp.where(col > row, -1e9, 0.0).astype(jnp.float32)
    memory_mask = jnp.zeros((T_LEN, S_LEN), jnp.float32)

    layer_keys = jax.random.split(k_layers, NUM_LAYERS)
    layer_params_list = [_init_layer_params(k) for k in layer_keys]
    packed = pack_layer_weights(layer_params_list)
    final_norm_params = (jnp.ones((1, D_MODEL), jnp.float32),
                         jnp.zeros((1, D_MODEL), jnp.float32))

    out = transformer_decoder(tgt, memory, tgt_mask, memory_mask,
                              packed, final_norm_params)
    out = jax.block_until_ready(out)

    ref = reference_decoder(tgt, memory, tgt_mask, memory_mask,
                            layer_params_list, final_norm_params)
    ref = jax.block_until_ready(ref)

    assert out.shape == (T_LEN, BATCH, D_MODEL)
    assert jnp.all(jnp.isfinite(out))
    max_err = float(jnp.max(jnp.abs(out - ref)))
    assert max_err < 3e-2, f"mismatch vs reference: max_err={max_err}"

    print("KERNEL_OK")
</pallas_src>

<mosaic_0001>
module attributes {stable_mosaic.version = 11 : i64} {
  func.func @fused_decoder_kernel(%arg0: i32, %arg1: memref<1x8x32xf32, #tpu.memory_space<vmem>>, %arg2: memref<1x12x32xf32, #tpu.memory_space<vmem>>, %arg3: memref<8x8xf32, #tpu.memory_space<vmem>>, %arg4: memref<8x12xf32, #tpu.memory_space<vmem>>, %arg5: memref<2x32x96xf32, #tpu.memory_space<vmem>>, %arg6: memref<2x1x96xf32, #tpu.memory_space<vmem>>, %arg7: memref<2x32x32xf32, #tpu.memory_space<vmem>>, %arg8: memref<2x1x32xf32, #tpu.memory_space<vmem>>, %arg9: memref<2x32x32xf32, #tpu.memory_space<vmem>>, %arg10: memref<2x1x32xf32, #tpu.memory_space<vmem>>, %arg11: memref<2x32x64xf32, #tpu.memory_space<vmem>>, %arg12: memref<2x1x64xf32, #tpu.memory_space<vmem>>, %arg13: memref<2x32x32xf32, #tpu.memory_space<vmem>>, %arg14: memref<2x1x32xf32, #tpu.memory_space<vmem>>, %arg15: memref<2x1x32xf32, #tpu.memory_space<vmem>>, %arg16: memref<2x1x32xf32, #tpu.memory_space<vmem>>, %arg17: memref<2x1x32xf32, #tpu.memory_space<vmem>>, %arg18: memref<2x1x32xf32, #tpu.memory_space<vmem>>, %arg19: memref<2x1x32xf32, #tpu.memory_space<vmem>>, %arg20: memref<2x1x32xf32, #tpu.memory_space<vmem>>, %arg21: memref<2x32x64xf32, #tpu.memory_space<vmem>>, %arg22: memref<2x1x64xf32, #tpu.memory_space<vmem>>, %arg23: memref<2x64x32xf32, #tpu.memory_space<vmem>>, %arg24: memref<2x1x32xf32, #tpu.memory_space<vmem>>, %arg25: memref<1x32xf32, #tpu.memory_space<vmem>>, %arg26: memref<1x32xf32, #tpu.memory_space<vmem>>, %arg27: memref<1x8x32xf32, #tpu.memory_space<vmem>>) attributes {dimension_semantics = [#tpu.dimension_semantics<parallel>], iteration_bounds = array<i64: 2>, scalar_prefetch = 0 : i64, scratch_operands = 0 : i64, tpu.core_type = #tpu.core_type<tc>, window_params = [{transform_indices = @transform_0, window_bounds = array<i64: 1, 8, 32>}, {transform_indices = @transform_1, window_bounds = array<i64: 1, 12, 32>}, {pipeline_mode = #tpu.pipeline_mode<synchronous>, transform_indices = @transform_2, window_bounds = array<i64: 8, 8>}, {pipeline_mode = #tpu.pipeline_mode<synchronous>, transform_indices = @transform_3, window_bounds = array<i64: 8, 12>}, {pipeline_mode = #tpu.pipeline_mode<synchronous>, transform_indices = @transform_4, window_bounds = array<i64: 2, 32, 96>}, {pipeline_mode = #tpu.pipeline_mode<synchronous>, transform_indices = @transform_5, window_bounds = array<i64: 2, 1, 96>}, {pipeline_mode = #tpu.pipeline_mode<synchronous>, transform_indices = @transform_6, window_bounds = array<i64: 2, 32, 32>}, {pipeline_mode = #tpu.pipeline_mode<synchronous>, transform_indices = @transform_7, window_bounds = array<i64: 2, 1, 32>}, {pipeline_mode = #tpu.pipeline_mode<synchronous>, transform_indices = @transform_8, window_bounds = array<i64: 2, 32, 32>}, {pipeline_mode = #tpu.pipeline_mode<synchronous>, transform_indices = @transform_9, window_bounds = array<i64: 2, 1, 32>}, {pipeline_mode = #tpu.pipeline_mode<synchronous>, transform_indices = @transform_10, window_bounds = array<i64: 2, 32, 64>}, {pipeline_mode = #tpu.pipeline_mode<synchronous>, transform_indices = @transform_11, window_bounds = array<i64: 2, 1, 64>}, {pipeline_mode = #tpu.pipeline_mode<synchronous>, transform_indices = @transform_12, window_bounds = array<i64: 2, 32, 32>}, {pipeline_mode = #tpu.pipeline_mode<synchronous>, transform_indices = @transform_13, window_bounds = array<i64: 2, 1, 32>}, {pipeline_mode = #tpu.pipeline_mode<synchronous>, transform_indices = @transform_14, window_bounds = array<i64: 2, 1, 32>}, {pipeline_mode = #tpu.pipeline_mode<synchronous>, transform_indices = @transform_15, window_bounds = array<i64: 2, 1, 32>}, {pipeline_mode = #tpu.pipeline_mode<synchronous>, transform_indices = @transform_16, window_bounds = array<i64: 2, 1, 32>}, {pipeline_mode = #tpu.pipeline_mode<synchronous>, transform_indices = @transform_17, window_bounds = array<i64: 2, 1, 32>}, {pipeline_mode = #tpu.pipeline_mode<synchronous>, transform_indices = @transform_18, window_bounds = array<i64: 2, 1, 32>}, {pipeline_mode = #tpu.pipeline_mode<synchronous>, transform_indices = @transform_19, window_bounds = array<i64: 2, 1, 32>}, {pipeline_mode = #tpu.pipeline_mode<synchronous>, transform_indices = @transform_20, window_bounds = array<i64: 2, 32, 64>}, {pipeline_mode = #tpu.pipeline_mode<synchronous>, transform_indices = @transform_21, window_bounds = array<i64: 2, 1, 64>}, {pipeline_mode = #tpu.pipeline_mode<synchronous>, transform_indices = @transform_22, window_bounds = array<i64: 2, 64, 32>}, {pipeline_mode = #tpu.pipeline_mode<synchronous>, transform_indices = @transform_23, window_bounds = array<i64: 2, 1, 32>}, {pipeline_mode = #tpu.pipeline_mode<synchronous>, transform_indices = @transform_24, window_bounds = array<i64: 1, 32>}, {pipeline_mode = #tpu.pipeline_mode<synchronous>, transform_indices = @transform_25, window_bounds = array<i64: 1, 32>}, {transform_indices = @transform_26, window_bounds = array<i64: 1, 8, 32>}]} {
    %c0 = arith.constant 0 : index
    %c0_0 = arith.constant 0 : index
    %c0_1 = arith.constant 0 : index
    %0 = vector.load %arg1[%c0, %c0_0, %c0_1] : memref<1x8x32xf32, #tpu.memory_space<vmem>>, vector<1x8x32xf32>
    %1 = vector.shape_cast %0 : vector<1x8x32xf32> to vector<8x32xf32>
    %c0_2 = arith.constant 0 : index
    %c0_3 = arith.constant 0 : index
    %c0_4 = arith.constant 0 : index
    %2 = vector.load %arg2[%c0_2, %c0_3, %c0_4] : memref<1x12x32xf32, #tpu.memory_space<vmem>>, vector<1x12x32xf32>
    %3 = vector.shape_cast %2 : vector<1x12x32xf32> to vector<12x32xf32>
    %c0_5 = arith.constant 0 : index
    %c0_6 = arith.constant 0 : index
    %4 = vector.load %arg3[%c0_5, %c0_6] : memref<8x8xf32, #tpu.memory_space<vmem>>, vector<8x8xf32>
    %c0_7 = arith.constant 0 : index
    %c0_8 = arith.constant 0 : index
    %5 = vector.load %arg4[%c0_7, %c0_8] : memref<8x12xf32, #tpu.memory_space<vmem>>, vector<8x12xf32>
    %c0_9 = arith.constant 0 : index
    %c0_10 = arith.constant 0 : index
    %c0_11 = arith.constant 0 : index
    %6 = vector.load %arg5[%c0_9, %c0_10, %c0_11] : memref<2x32x96xf32, #tpu.memory_space<vmem>>, vector<1x32x96xf32>
    %7 = vector.shape_cast %6 : vector<1x32x96xf32> to vector<32x96xf32>
    %cst = arith.constant dense<0.000000e+00> : vector<8x96xf32>
    %8 = tpu.matmul %1, %7, %cst {dimension_numbers = #tpu.dot_dimension_numbers<[1], [0], [0], [1], [0, 0, 1, 1], [], []>} : vector<8x32xf32>, vector<32x96xf32>, vector<8x96xf32> -> vector<8x96xf32>
    %c0_12 = arith.constant 0 : index
    %c0_13 = arith.constant 0 : index
    %c0_14 = arith.constant 0 : index
    %9 = vector.load %arg6[%c0_12, %c0_13, %c0_14] : memref<2x1x96xf32, #tpu.memory_space<vmem>>, vector<1x1x96xf32>
    %10 = vector.shape_cast %9 : vector<1x1x96xf32> to vector<1x96xf32>
    %11 = vector.broadcast %10 : vector<1x96xf32> to vector<8x96xf32>
    %12 = arith.addf %8, %11 : vector<8x96xf32>
    %13 = vector.extract_strided_slice %12 {offsets = [0, 0], sizes = [8, 32], strides = [1, 1]} : vector<8x96xf32> to vector<8x32xf32>
    %14 = vector.extract_strided_slice %12 {offsets = [0, 32], sizes = [8, 32], strides = [1, 1]} : vector<8x96xf32> to vector<8x32xf32>
    %15 = vector.extract_strided_slice %12 {offsets = [0, 64], sizes = [8, 32], strides = [1, 1]} : vector<8x96xf32> to vector<8x32xf32>
    %16 = vector.extract_strided_slice %13 {offsets = [0, 0], sizes = [8, 8], strides = [1, 1]} : vector<8x32xf32> to vector<8x8xf32>
    %17 = vector.extract_strided_slice %14 {offsets = [0, 0], sizes = [8, 8], strides = [1, 1]} : vector<8x32xf32> to vector<8x8xf32>
    %18 = vector.extract_strided_slice %15 {offsets = [0, 0], sizes = [8, 8], strides = [1, 1]} : vector<8x32xf32> to vector<8x8xf32>
    %cst_15 = arith.constant dense<0.000000e+00> : vector<8x8xf32>
    %19 = tpu.matmul %16, %17, %cst_15 {dimension_numbers = #tpu.dot_dimension_numbers<[1], [1], [0], [0], [0, 0, 1, 0], [], []>} : vector<8x8xf32>, vector<8x8xf32>, vector<8x8xf32> -> vector<8x8xf32>
    %20 = arith.addf %19, %4 : vector<8x8xf32>
    %cst_16 = arith.constant dense<0xFF800000> : vector<8xf32>
    %21 = vector.multi_reduction <maximumf>, %20, %cst_16 [1] : vector<8x8xf32> to vector<8xf32>
    %22 = vector.shape_cast %21 : vector<8xf32> to vector<8x1xf32>
    %23 = vector.broadcast %22 : vector<8x1xf32> to vector<8x8xf32>
    %24 = arith.subf %20, %23 : vector<8x8xf32>
    %25 = math.exp %24 : vector<8x8xf32>
    %cst_17 = arith.constant dense<0.000000e+00> : vector<8xf32>
    %26 = vector.multi_reduction <add>, %25, %cst_17 [1] : vector<8x8xf32> to vector<8xf32>
    %27 = vector.shape_cast %26 : vector<8xf32> to vector<8x1xf32>
    %28 = tpu.reciprocal %27 {approx = true} : vector<8x1xf32> -> vector<8x1xf32>
    %29 = vector.broadcast %28 : vector<8x1xf32> to vector<8x8xf32>
    %30 = arith.mulf %25, %29 : vector<8x8xf32>
    %cst_18 = arith.constant dense<0.000000e+00> : vector<8x8xf32>
    %31 = tpu.matmul %30, %18, %cst_18 {dimension_numbers = #tpu.dot_dimension_numbers<[1], [0], [0], [1], [0, 0, 1, 1], [], []>} : vector<8x8xf32>, vector<8x8xf32>, vector<8x8xf32> -> vector<8x8xf32>
    %32 = vector.extract_strided_slice %13 {offsets = [0, 8], sizes = [8, 8], strides = [1, 1]} : vector<8x32xf32> to vector<8x8xf32>
    %33 = vector.extract_strided_slice %14 {offsets = [0, 8], sizes = [8, 8], strides = [1, 1]} : vector<8x32xf32> to vector<8x8xf32>
    %34 = vector.extract_strided_slice %15 {offsets = [0, 8], sizes = [8, 8], strides = [1, 1]} : vector<8x32xf32> to vector<8x8xf32>
    %cst_19 = arith.constant dense<0.000000e+00> : vector<8x8xf32>
    %35 = tpu.matmul %32, %33, %cst_19 {dimension_numbers = #tpu.dot_dimension_numbers<[1], [1], [0], [0], [0, 0, 1, 0], [], []>} : vector<8x8xf32>, vector<8x8xf32>, vector<8x8xf32> -> vector<8x8xf32>
    %36 = arith.addf %35, %4 : vector<8x8xf32>
    %cst_20 = arith.constant dense<0xFF800000> : vector<8xf32>
    %37 = vector.multi_reduction <maximumf>, %36, %cst_20 [1] : vector<8x8xf32> to vector<8xf32>
    %38 = vector.shape_cast %37 : vector<8xf32> to vector<8x1xf32>
    %39 = vector.broadcast %38 : vector<8x1xf32> to vector<8x8xf32>
    %40 = arith.subf %36, %39 : vector<8x8xf32>
    %41 = math.exp %40 : vector<8x8xf32>
    %cst_21 = arith.constant dense<0.000000e+00> : vector<8xf32>
    %42 = vector.multi_reduction <add>, %41, %cst_21 [1] : vector<8x8xf32> to vector<8xf32>
    %43 = vector.shape_cast %42 : vector<8xf32> to vector<8x1xf32>
    %44 = tpu.reciprocal %43 {approx = true} : vector<8x1xf32> -> vector<8x1xf32>
    %45 = vector.broadcast %44 : vector<8x1xf32> to vector<8x8xf32>
    %46 = arith.mulf %41, %45 : vector<8x8xf32>
    %cst_22 = arith.constant dense<0.000000e+00> : vector<8x8xf32>
    %47 = tpu.matmul %46, %34, %cst_22 {dimension_numbers = #tpu.dot_dimension_numbers<[1], [0], [0], [1], [0, 0, 1, 1], [], []>} : vector<8x8xf32>, vector<8x8xf32>, vector<8x8xf32> -> vector<8x8xf32>
    %48 = vector.extract_strided_slice %13 {offsets = [0, 16], sizes = [8, 8], strides = [1, 1]} : vector<8x32xf32> to vector<8x8xf32>
    %49 = vector.extract_strided_slice %14 {offsets = [0, 16], sizes = [8, 8], strides = [1, 1]} : vector<8x32xf32> to vector<8x8xf32>
    %50 = vector.extract_strided_slice %15 {offsets = [0, 16], sizes = [8, 8], strides = [1, 1]} : vector<8x32xf32> to vector<8x8xf32>
    %cst_23 = arith.constant dense<0.000000e+00> : vector<8x8xf32>
    %51 = tpu.matmul %48, %49, %cst_23 {dimension_numbers = #tpu.dot_dimension_numbers<[1], [1], [0], [0], [0, 0, 1, 0], [], []>} : vector<8x8xf32>, vector<8x8xf32>, vector<8x8xf32> -> vector<8x8xf32>
    %52 = arith.addf %51, %4 : vector<8x8xf32>
    %cst_24 = arith.constant dense<0xFF800000> : vector<8xf32>
    %53 = vector.multi_reduction <maximumf>, %52, %cst_24 [1] : vector<8x8xf32> to vector<8xf32>
    %54 = vector.shape_cast %53 : vector<8xf32> to vector<8x1xf32>
    %55 = vector.broadcast %54 : vector<8x1xf32> to vector<8x8xf32>
    %56 = arith.subf %52, %55 : vector<8x8xf32>
    %57 = math.exp %56 : vector<8x8xf32>
    %cst_25 = arith.constant dense<0.000000e+00> : vector<8xf32>
    %58 = vector.multi_reduction <add>, %57, %cst_25 [1] : vector<8x8xf32> to vector<8xf32>
    %59 = vector.shape_cast %58 : vector<8xf32> to vector<8x1xf32>
    %60 = tpu.reciprocal %59 {approx = true} : vector<8x1xf32> -> vector<8x1xf32>
    %61 = vector.broadcast %60 : vector<8x1xf32> to vector<8x8xf32>
    %62 = arith.mulf %57, %61 : vector<8x8xf32>
    %cst_26 = arith.constant dense<0.000000e+00> : vector<8x8xf32>
    %63 = tpu.matmul %62, %50, %cst_26 {dimension_numbers = #tpu.dot_dimension_numbers<[1], [0], [0], [1], [0, 0, 1, 1], [], []>} : vector<8x8xf32>, vector<8x8xf32>, vector<8x8xf32> -> vector<8x8xf32>
    %64 = vector.extract_strided_slice %13 {offsets = [0, 24], sizes = [8, 8], strides = [1, 1]} : vector<8x32xf32> to vector<8x8xf32>
    %65 = vector.extract_strided_slice %14 {offsets = [0, 24], sizes = [8, 8], strides = [1, 1]} : vector<8x32xf32> to vector<8x8xf32>
    %66 = vector.extract_strided_slice %15 {offsets = [0, 24], sizes = [8, 8], strides = [1, 1]} : vector<8x32xf32> to vector<8x8xf32>
    %cst_27 = arith.constant dense<0.000000e+00> : vector<8x8xf32>
    %67 = tpu.matmul %64, %65, %cst_27 {dimension_numbers = #tpu.dot_dimension_numbers<[1], [1], [0], [0], [0, 0, 1, 0], [], []>} : vector<8x8xf32>, vector<8x8xf32>, vector<8x8xf32> -> vector<8x8xf32>
    %68 = arith.addf %67, %4 : vector<8x8xf32>
    %cst_28 = arith.constant dense<0xFF800000> : vector<8xf32>
    %69 = vector.multi_reduction <maximumf>, %68, %cst_28 [1] : vector<8x8xf32> to vector<8xf32>
    %70 = vector.shape_cast %69 : vector<8xf32> to vector<8x1xf32>
    %71 = vector.broadcast %70 : vector<8x1xf32> to vector<8x8xf32>
    %72 = arith.subf %68, %71 : vector<8x8xf32>
    %73 = math.exp %72 : vector<8x8xf32>
    %cst_29 = arith.constant dense<0.000000e+00> : vector<8xf32>
    %74 = vector.multi_reduction <add>, %73, %cst_29 [1] : vector<8x8xf32> to vector<8xf32>
    %75 = vector.shape_cast %74 : vector<8xf32> to vector<8x1xf32>
    %76 = tpu.reciprocal %75 {approx = true} : vector<8x1xf32> -> vector<8x1xf32>
    %77 = vector.broadcast %76 : vector<8x1xf32> to vector<8x8xf32>
    %78 = arith.mulf %73, %77 : vector<8x8xf32>
    %cst_30 = arith.constant dense<0.000000e+00> : vector<8x8xf32>
    %79 = tpu.matmul %78, %66, %cst_30 {dimension_numbers = #tpu.dot_dimension_numbers<[1], [0], [0], [1], [0, 0, 1, 1], [], []>} : vector<8x8xf32>, vector<8x8xf32>, vector<8x8xf32> -> vector<8x8xf32>
    %80 = tpu.concatenate %31, %47, %63, %79 in 1 : vector<8x8xf32>, vector<8x8xf32>, vector<8x8xf32>, vector<8x8xf32> -> vector<8x32xf32>
    %c0_31 = arith.constant 0 : index
    %c0_32 = arith.constant 0 : index
    %c0_33 = arith.constant 0 : index
    %81 = vector.load %arg7[%c0_31, %c0_32, %c0_33] : memref<2x32x32xf32, #tpu.memory_space<vmem>>, vector<1x32x32xf32>
    %82 = vector.shape_cast %81 : vector<1x32x32xf32> to vector<32x32xf32>
    %cst_34 = arith.constant dense<0.000000e+00> : vector<8x32xf32>
    %83 = tpu.matmul %80, %82, %cst_34 {dimension_numbers = #tpu.dot_dimension_numbers<[1], [0], [0], [1], [0, 0, 1, 1], [], []>} : vector<8x32xf32>, vector<32x32xf32>, vector<8x32xf32> -> vector<8x32xf32>
    %c0_35 = arith.constant 0 : index
    %c0_36 = arith.constant 0 : index
    %c0_37 = arith.constant 0 : index
    %84 = vector.load %arg8[%c0_35, %c0_36, %c0_37] : memref<2x1x32xf32, #tpu.memory_space<vmem>>, vector<1x1x32xf32>
    %85 = vector.shape_cast %84 : vector<1x1x32xf32> to vector<1x32xf32>
    %86 = vector.broadcast %85 : vector<1x32xf32> to vector<8x32xf32>
    %87 = arith.addf %83, %86 : vector<8x32xf32>
    %88 = arith.addf %1, %87 : vector<8x32xf32>
    %c0_38 = arith.constant 0 : index
    %c0_39 = arith.constant 0 : index
    %c0_40 = arith.constant 0 : index
    %89 = vector.load %arg15[%c0_38, %c0_39, %c0_40] : memref<2x1x32xf32, #tpu.memory_space<vmem>>, vector<1x1x32xf32>
    %90 = vector.shape_cast %89 : vector<1x1x32xf32> to vector<1x32xf32>
    %c0_41 = arith.constant 0 : index
    %c0_42 = arith.constant 0 : index
    %c0_43 = arith.constant 0 : index
    %91 = vector.load %arg16[%c0_41, %c0_42, %c0_43] : memref<2x1x32xf32, #tpu.memory_space<vmem>>, vector<1x1x32xf32>
    %92 = vector.shape_cast %91 : vector<1x1x32xf32> to vector<1x32xf32>
    %cst_44 = arith.constant dense<0.000000e+00> : vector<8xf32>
    %93 = vector.multi_reduction <add>, %88, %cst_44 [1] : vector<8x32xf32> to vector<8xf32>
    %94 = vector.shape_cast %93 : vector<8xf32> to vector<8x1xf32>
    %cst_45 = arith.constant 3.200000e+01 : f32
    %95 = vector.broadcast %cst_45 : f32 to vector<8x1xf32>
    %96 = arith.divf %94, %95 : vector<8x1xf32>
    %97 = vector.broadcast %96 : vector<8x1xf32> to vector<8x32xf32>
    %98 = arith.subf %88, %97 : vector<8x32xf32>
    %99 = arith.mulf %98, %98 : vector<8x32xf32>
    %cst_46 = arith.constant dense<0.000000e+00> : vector<8xf32>
    %100 = vector.multi_reduction <add>, %99, %cst_46 [1] : vector<8x32xf32> to vector<8xf32>
    %101 = vector.shape_cast %100 : vector<8xf32> to vector<8x1xf32>
    %cst_47 = arith.constant 3.200000e+01 : f32
    %102 = vector.broadcast %cst_47 : f32 to vector<8x1xf32>
    %103 = arith.divf %101, %102 : vector<8x1xf32>
    %104 = vector.broadcast %96 : vector<8x1xf32> to vector<8x32xf32>
    %105 = arith.subf %88, %104 : vector<8x32xf32>
    %cst_48 = arith.constant 9.99999974E-6 : f32
    %106 = vector.broadcast %cst_48 : f32 to vector<8x1xf32>
    %107 = arith.addf %103, %106 : vector<8x1xf32>
    %108 = math.rsqrt %107 : vector<8x1xf32>
    %109 = vector.broadcast %108 : vector<8x1xf32> to vector<8x32xf32>
    %110 = arith.mulf %105, %109 : vector<8x32xf32>
    %111 = vector.broadcast %90 : vector<1x32xf32> to vector<8x32xf32>
    %112 = arith.mulf %110, %111 : vector<8x32xf32>
    %113 = vector.broadcast %92 : vector<1x32xf32> to vector<8x32xf32>
    %114 = arith.addf %112, %113 : vector<8x32xf32>
    %c0_49 = arith.constant 0 : index
    %c0_50 = arith.constant 0 : index
    %c0_51 = arith.constant 0 : index
    %115 = vector.load %arg9[%c0_49, %c0_50, %c0_51] : memref<2x32x32xf32, #tpu.memory_space<vmem>>, vector<1x32x32xf32>
    %116 = vector.shape_cast %115 : vector<1x32x32xf32> to vector<32x32xf32>
    %cst_52 = arith.constant dense<0.000000e+00> : vector<8x32xf32>
    %117 = tpu.matmul %114, %116, %cst_52 {dimension_numbers = #tpu.dot_dimension_numbers<[1], [0], [0], [1], [0, 0, 1, 1], [], []>} : vector<8x32xf32>, vector<32x32xf32>, vector<8x32xf32> -> vector<8x32xf32>
    %c0_53 = arith.constant 0 : index
    %c0_54 = arith.constant 0 : index
    %c0_55 = arith.constant 0 : index
    %118 = vector.load %arg10[%c0_53, %c0_54, %c0_55] : memref<2x1x32xf32, #tpu.memory_space<vmem>>, vector<1x1x32xf32>
    %119 = vector.shape_cast %118 : vector<1x1x32xf32> to vector<1x32xf32>
    %120 = vector.broadcast %119 : vector<1x32xf32> to vector<8x32xf32>
    %121 = arith.addf %117, %120 : vector<8x32xf32>
    %c0_56 = arith.constant 0 : index
    %c0_57 = arith.constant 0 : index
    %c0_58 = arith.constant 0 : index
    %122 = vector.load %arg11[%c0_56, %c0_57, %c0_58] : memref<2x32x64xf32, #tpu.memory_space<vmem>>, vector<1x32x64xf32>
    %123 = vector.shape_cast %122 : vector<1x32x64xf32> to vector<32x64xf32>
    %cst_59 = arith.constant dense<0.000000e+00> : vector<12x64xf32>
    %124 = tpu.matmul %3, %123, %cst_59 {dimension_numbers = #tpu.dot_dimension_numbers<[1], [0], [0], [1], [0, 0, 1, 1], [], []>} : vector<12x32xf32>, vector<32x64xf32>, vector<12x64xf32> -> vector<12x64xf32>
    %c0_60 = arith.constant 0 : index
    %c0_61 = arith.constant 0 : index
    %c0_62 = arith.constant 0 : index
    %125 = vector.load %arg12[%c0_60, %c0_61, %c0_62] : memref<2x1x64xf32, #tpu.memory_space<vmem>>, vector<1x1x64xf32>
    %126 = vector.shape_cast %125 : vector<1x1x64xf32> to vector<1x64xf32>
    %127 = vector.broadcast %126 : vector<1x64xf32> to vector<12x64xf32>
    %128 = arith.addf %124, %127 : vector<12x64xf32>
    %129 = vector.extract_strided_slice %128 {offsets = [0, 0], sizes = [12, 32], strides = [1, 1]} : vector<12x64xf32> to vector<12x32xf32>
    %130 = vector.extract_strided_slice %128 {offsets = [0, 32], sizes = [12, 32], strides = [1, 1]} : vector<12x64xf32> to vector<12x32xf32>
    %131 = vector.extract_strided_slice %121 {offsets = [0, 0], sizes = [8, 8], strides = [1, 1]} : vector<8x32xf32> to vector<8x8xf32>
    %132 = vector.extract_strided_slice %129 {offsets = [0, 0], sizes = [12, 8], strides = [1, 1]} : vector<12x32xf32> to vector<12x8xf32>
    %133 = vector.extract_strided_slice %130 {offsets = [0, 0], sizes = [12, 8], strides = [1, 1]} : vector<12x32xf32> to vector<12x8xf32>
    %cst_63 = arith.constant dense<0.000000e+00> : vector<8x12xf32>
    %134 = tpu.matmul %131, %132, %cst_63 {dimension_numbers = #tpu.dot_dimension_numbers<[1], [1], [0], [0], [0, 0, 1, 0], [], []>} : vector<8x8xf32>, vector<12x8xf32>, vector<8x12xf32> -> vector<8x12xf32>
    %135 = arith.addf %134, %5 : vector<8x12xf32>
    %cst_64 = arith.constant dense<0xFF800000> : vector<8xf32>
    %136 = vector.multi_reduction <maximumf>, %135, %cst_64 [1] : vector<8x12xf32> to vector<8xf32>
    %137 = vector.shape_cast %136 : vector<8xf32> to vector<8x1xf32>
    %138 = vector.broadcast %137 : vector<8x1xf32> to vector<8x12xf32>
    %139 = arith.subf %135, %138 : vector<8x12xf32>
    %140 = math.exp %139 : vector<8x12xf32>
    %cst_65 = arith.constant dense<0.000000e+00> : vector<8xf32>
    %141 = vector.multi_reduction <add>, %140, %cst_65 [1] : vector<8x12xf32> to vector<8xf32>
    %142 = vector.shape_cast %141 : vector<8xf32> to vector<8x1xf32>
    %143 = tpu.reciprocal %142 {approx = true} : vector<8x1xf32> -> vector<8x1xf32>
    %144 = vector.broadcast %143 : vector<8x1xf32> to vector<8x12xf32>
    %145 = arith.mulf %140, %144 : vector<8x12xf32>
    %cst_66 = arith.constant dense<0.000000e+00> : vector<8x8xf32>
    %146 = tpu.matmul %145, %133, %cst_66 {dimension_numbers = #tpu.dot_dimension_numbers<[1], [0], [0], [1], [0, 0, 1, 1], [], []>} : vector<8x12xf32>, vector<12x8xf32>, vector<8x8xf32> -> vector<8x8xf32>
    %147 = vector.extract_strided_slice %121 {offsets = [0, 8], sizes = [8, 8], strides = [1, 1]} : vector<8x32xf32> to vector<8x8xf32>
    %148 = vector.extract_strided_slice %129 {offsets = [0, 8], sizes = [12, 8], strides = [1, 1]} : vector<12x32xf32> to vector<12x8xf32>
    %149 = vector.extract_strided_slice %130 {offsets = [0, 8], sizes = [12, 8], strides = [1, 1]} : vector<12x32xf32> to vector<12x8xf32>
    %cst_67 = arith.constant dense<0.000000e+00> : vector<8x12xf32>
    %150 = tpu.matmul %147, %148, %cst_67 {dimension_numbers = #tpu.dot_dimension_numbers<[1], [1], [0], [0], [0, 0, 1, 0], [], []>} : vector<8x8xf32>, vector<12x8xf32>, vector<8x12xf32> -> vector<8x12xf32>
    %151 = arith.addf %150, %5 : vector<8x12xf32>
    %cst_68 = arith.constant dense<0xFF800000> : vector<8xf32>
    %152 = vector.multi_reduction <maximumf>, %151, %cst_68 [1] : vector<8x12xf32> to vector<8xf32>
    %153 = vector.shape_cast %152 : vector<8xf32> to vector<8x1xf32>
    %154 = vector.broadcast %153 : vector<8x1xf32> to vector<8x12xf32>
    %155 = arith.subf %151, %154 : vector<8x12xf32>
    %156 = math.exp %155 : vector<8x12xf32>
    %cst_69 = arith.constant dense<0.000000e+00> : vector<8xf32>
    %157 = vector.multi_reduction <add>, %156, %cst_69 [1] : vector<8x12xf32> to vector<8xf32>
    %158 = vector.shape_cast %157 : vector<8xf32> to vector<8x1xf32>
    %159 = tpu.reciprocal %158 {approx = true} : vector<8x1xf32> -> vector<8x1xf32>
    %160 = vector.broadcast %159 : vector<8x1xf32> to vector<8x12xf32>
    %161 = arith.mulf %156, %160 : vector<8x12xf32>
    %cst_70 = arith.constant dense<0.000000e+00> : vector<8x8xf32>
    %162 = tpu.matmul %161, %149, %cst_70 {dimension_numbers = #tpu.dot_dimension_numbers<[1], [0], [0], [1], [0, 0, 1, 1], [], []>} : vector<8x12xf32>, vector<12x8xf32>, vector<8x8xf32> -> vector<8x8xf32>
    %163 = vector.extract_strided_slice %121 {offsets = [0, 16], sizes = [8, 8], strides = [1, 1]} : vector<8x32xf32> to vector<8x8xf32>
    %164 = vector.extract_strided_slice %129 {offsets = [0, 16], sizes = [12, 8], strides = [1, 1]} : vector<12x32xf32> to vector<12x8xf32>
    %165 = vector.extract_strided_slice %130 {offsets = [0, 16], sizes = [12, 8], strides = [1, 1]} : vector<12x32xf32> to vector<12x8xf32>
    %cst_71 = arith.constant dense<0.000000e+00> : vector<8x12xf32>
    %166 = tpu.matmul %163, %164, %cst_71 {dimension_numbers = #tpu.dot_dimension_numbers<[1], [1], [0], [0], [0, 0, 1, 0], [], []>} : vector<8x8xf32>, vector<12x8xf32>, vector<8x12xf32> -> vector<8x12xf32>
    %167 = arith.addf %166, %5 : vector<8x12xf32>
    %cst_72 = arith.constant dense<0xFF800000> : vector<8xf32>
    %168 = vector.multi_reduction <maximumf>, %167, %cst_72 [1] : vector<8x12xf32> to vector<8xf32>
    %169 = vector.shape_cast %168 : vector<8xf32> to vector<8x1xf32>
    %170 = vector.broadcast %169 : vector<8x1xf32> to vector<8x12xf32>
    %171 = arith.subf %167, %170 : vector<8x12xf32>
    %172 = math.exp %171 : vector<8x12xf32>
    %cst_73 = arith.constant dense<0.000000e+00> : vector<8xf32>
    %173 = vector.multi_reduction <add>, %172, %cst_73 [1] : vector<8x12xf32> to vector<8xf32>
    %174 = vector.shape_cast %173 : vector<8xf32> to vector<8x1xf32>
    %175 = tpu.reciprocal %174 {approx = true} : vector<8x1xf32> -> vector<8x1xf32>
    %176 = vector.broadcast %175 : vector<8x1xf32> to vector<8x12xf32>
    %177 = arith.mulf %172, %176 : vector<8x12xf32>
    %cst_74 = arith.constant dense<0.000000e+00> : vector<8x8xf32>
    %178 = tpu.matmul %177, %165, %cst_74 {dimension_numbers = #tpu.dot_dimension_numbers<[1], [0], [0], [1], [0, 0, 1, 1], [], []>} : vector<8x12xf32>, vector<12x8xf32>, vector<8x8xf32> -> vector<8x8xf32>
    %179 = vector.extract_strided_slice %121 {offsets = [0, 24], sizes = [8, 8], strides = [1, 1]} : vector<8x32xf32> to vector<8x8xf32>
    %180 = vector.extract_strided_slice %129 {offsets = [0, 24], sizes = [12, 8], strides = [1, 1]} : vector<12x32xf32> to vector<12x8xf32>
    %181 = vector.extract_strided_slice %130 {offsets = [0, 24], sizes = [12, 8], strides = [1, 1]} : vector<12x32xf32> to vector<12x8xf32>
    %cst_75 = arith.constant dense<0.000000e+00> : vector<8x12xf32>
    %182 = tpu.matmul %179, %180, %cst_75 {dimension_numbers = #tpu.dot_dimension_numbers<[1], [1], [0], [0], [0, 0, 1, 0], [], []>} : vector<8x8xf32>, vector<12x8xf32>, vector<8x12xf32> -> vector<8x12xf32>
    %183 = arith.addf %182, %5 : vector<8x12xf32>
    %cst_76 = arith.constant dense<0xFF800000> : vector<8xf32>
    %184 = vector.multi_reduction <maximumf>, %183, %cst_76 [1] : vector<8x12xf32> to vector<8xf32>
    %185 = vector.shape_cast %184 : vector<8xf32> to vector<8x1xf32>
    %186 = vector.broadcast %185 : vector<8x1xf32> to vector<8x12xf32>
    %187 = arith.subf %183, %186 : vector<8x12xf32>
    %188 = math.exp %187 : vector<8x12xf32>
    %cst_77 = arith.constant dense<0.000000e+00> : vector<8xf32>
    %189 = vector.multi_reduction <add>, %188, %cst_77 [1] : vector<8x12xf32> to vector<8xf32>
    %190 = vector.shape_cast %189 : vector<8xf32> to vector<8x1xf32>
    %191 = tpu.reciprocal %190 {approx = true} : vector<8x1xf32> -> vector<8x1xf32>
    %192 = vector.broadcast %191 : vector<8x1xf32> to vector<8x12xf32>
    %193 = arith.mulf %188, %192 : vector<8x12xf32>
    %cst_78 = arith.constant dense<0.000000e+00> : vector<8x8xf32>
    %194 = tpu.matmul %193, %181, %cst_78 {dimension_numbers = #tpu.dot_dimension_numbers<[1], [0], [0], [1], [0, 0, 1, 1], [], []>} : vector<8x12xf32>, vector<12x8xf32>, vector<8x8xf32> -> vector<8x8xf32>
    %195 = tpu.concatenate %146, %162, %178, %194 in 1 : vector<8x8xf32>, vector<8x8xf32>, vector<8x8xf32>, vector<8x8xf32> -> vector<8x32xf32>
    %c0_79 = arith.constant 0 : index
    %c0_80 = arith.constant 0 : index
    %c0_81 = arith.constant 0 : index
    %196 = vector.load %arg13[%c0_79, %c0_80, %c0_81] : memref<2x32x32xf32, #tpu.memory_space<vmem>>, vector<1x32x32xf32>
    %197 = vector.shape_cast %196 : vector<1x32x32xf32> to vector<32x32xf32>
    %cst_82 = arith.constant dense<0.000000e+00> : vector<8x32xf32>
    %198 = tpu.matmul %195, %197, %cst_82 {dimension_numbers = #tpu.dot_dimension_numbers<[1], [0], [0], [1], [0, 0, 1, 1], [], []>} : vector<8x32xf32>, vector<32x32xf32>, vector<8x32xf32> -> vector<8x32xf32>
    %c0_83 = arith.constant 0 : index
    %c0_84 = arith.constant 0 : index
    %c0_85 = arith.constant 0 : index
    %199 = vector.load %arg14[%c0_83, %c0_84, %c0_85] : memref<2x1x32xf32, #tpu.memory_space<vmem>>, vector<1x1x32xf32>
    %200 = vector.shape_cast %199 : vector<1x1x32xf32> to vector<1x32xf32>
    %201 = vector.broadcast %200 : vector<1x32xf32> to vector<8x32xf32>
    %202 = arith.addf %198, %201 : vector<8x32xf32>
    %203 = arith.addf %114, %202 : vector<8x32xf32>
    %c0_86 = arith.constant 0 : index
    %c0_87 = arith.constant 0 : index
    %c0_88 = arith.constant 0 : index
    %204 = vector.load %arg17[%c0_86, %c0_87, %c0_88] : memref<2x1x32xf32, #tpu.memory_space<vmem>>, vector<1x1x32xf32>
    %205 = vector.shape_cast %204 : vector<1x1x32xf32> to vector<1x32xf32>
    %c0_89 = arith.constant 0 : index
    %c0_90 = arith.constant 0 : index
    %c0_91 = arith.constant 0 : index
    %206 = vector.load %arg18[%c0_89, %c0_90, %c0_91] : memref<2x1x32xf32, #tpu.memory_space<vmem>>, vector<1x1x32xf32>
    %207 = vector.shape_cast %206 : vector<1x1x32xf32> to vector<1x32xf32>
    %cst_92 = arith.constant dense<0.000000e+00> : vector<8xf32>
    %208 = vector.multi_reduction <add>, %203, %cst_92 [1] : vector<8x32xf32> to vector<8xf32>
    %209 = vector.shape_cast %208 : vector<8xf32> to vector<8x1xf32>
    %cst_93 = arith.constant 3.200000e+01 : f32
    %210 = vector.broadcast %cst_93 : f32 to vector<8x1xf32>
    %211 = arith.divf %209, %210 : vector<8x1xf32>
    %212 = vector.broadcast %211 : vector<8x1xf32> to vector<8x32xf32>
    %213 = arith.subf %203, %212 : vector<8x32xf32>
    %214 = arith.mulf %213, %213 : vector<8x32xf32>
    %cst_94 = arith.constant dense<0.000000e+00> : vector<8xf32>
    %215 = vector.multi_reduction <add>, %214, %cst_94 [1] : vector<8x32xf32> to vector<8xf32>
    %216 = vector.shape_cast %215 : vector<8xf32> to vector<8x1xf32>
    %cst_95 = arith.constant 3.200000e+01 : f32
    %217 = vector.broadcast %cst_95 : f32 to vector<8x1xf32>
    %218 = arith.divf %216, %217 : vector<8x1xf32>
    %219 = vector.broadcast %211 : vector<8x1xf32> to vector<8x32xf32>
    %220 = arith.subf %203, %219 : vector<8x32xf32>
    %cst_96 = arith.constant 9.99999974E-6 : f32
    %221 = vector.broadcast %cst_96 : f32 to vector<8x1xf32>
    %222 = arith.addf %218, %221 : vector<8x1xf32>
    %223 = math.rsqrt %222 : vector<8x1xf32>
    %224 = vector.broadcast %223 : vector<8x1xf32> to vector<8x32xf32>
    %225 = arith.mulf %220, %224 : vector<8x32xf32>
    %226 = vector.broadcast %205 : vector<1x32xf32> to vector<8x32xf32>
    %227 = arith.mulf %225, %226 : vector<8x32xf32>
    %228 = vector.broadcast %207 : vector<1x32xf32> to vector<8x32xf32>
    %229 = arith.addf %227, %228 : vector<8x32xf32>
    %c0_97 = arith.constant 0 : index
    %c0_98 = arith.constant 0 : index
    %c0_99 = arith.constant 0 : index
    %230 = vector.load %arg21[%c0_97, %c0_98, %c0_99] : memref<2x32x64xf32, #tpu.memory_space<vmem>>, vector<1x32x64xf32>
    %231 = vector.shape_cast %230 : vector<1x32x64xf32> to vector<32x64xf32>
    %cst_100 = arith.constant dense<0.000000e+00> : vector<8x64xf32>
    %232 = tpu.matmul %229, %231, %cst_100 {dimension_numbers = #tpu.dot_dimension_numbers<[1], [0], [0], [1], [0, 0, 1, 1], [], []>} : vector<8x32xf32>, vector<32x64xf32>, vector<8x64xf32> -> vector<8x64xf32>
    %c0_101 = arith.constant 0 : index
    %c0_102 = arith.constant 0 : index
    %c0_103 = arith.constant 0 : index
    %233 = vector.load %arg22[%c0_101, %c0_102, %c0_103] : memref<2x1x64xf32, #tpu.memory_space<vmem>>, vector<1x1x64xf32>
    %234 = vector.shape_cast %233 : vector<1x1x64xf32> to vector<1x64xf32>
    %235 = vector.broadcast %234 : vector<1x64xf32> to vector<8x64xf32>
    %236 = arith.addf %232, %235 : vector<8x64xf32>
    %cst_104 = arith.constant 0.000000e+00 : f32
    %237 = vector.broadcast %cst_104 : f32 to vector<8x64xf32>
    %238 = arith.maximumf %236, %237 : vector<8x64xf32>
    %c0_105 = arith.constant 0 : index
    %c0_106 = arith.constant 0 : index
    %c0_107 = arith.constant 0 : index
    %239 = vector.load %arg23[%c0_105, %c0_106, %c0_107] : memref<2x64x32xf32, #tpu.memory_space<vmem>>, vector<1x64x32xf32>
    %240 = vector.shape_cast %239 : vector<1x64x32xf32> to vector<64x32xf32>
    %cst_108 = arith.constant dense<0.000000e+00> : vector<8x32xf32>
    %241 = tpu.matmul %238, %240, %cst_108 {dimension_numbers = #tpu.dot_dimension_numbers<[1], [0], [0], [1], [0, 0, 1, 1], [], []>} : vector<8x64xf32>, vector<64x32xf32>, vector<8x32xf32> -> vector<8x32xf32>
    %c0_109 = arith.constant 0 : index
    %c0_110 = arith.constant 0 : index
    %c0_111 = arith.constant 0 : index
    %242 = vector.load %arg24[%c0_109, %c0_110, %c0_111] : memref<2x1x32xf32, #tpu.memory_space<vmem>>, vector<1x1x32xf32>
    %243 = vector.shape_cast %242 : vector<1x1x32xf32> to vector<1x32xf32>
    %244 = vector.broadcast %243 : vector<1x32xf32> to vector<8x32xf32>
    %245 = arith.addf %241, %244 : vector<8x32xf32>
    %246 = arith.addf %229, %245 : vector<8x32xf32>
    %c0_112 = arith.constant 0 : index
    %c0_113 = arith.constant 0 : index
    %c0_114 = arith.constant 0 : index
    %247 = vector.load %arg19[%c0_112, %c0_113, %c0_114] : memref<2x1x32xf32, #tpu.memory_space<vmem>>, vector<1x1x32xf32>
    %248 = vector.shape_cast %247 : vector<1x1x32xf32> to vector<1x32xf32>
    %c0_115 = arith.constant 0 : index
    %c0_116 = arith.constant 0 : index
    %c0_117 = arith.constant 0 : index
    %249 = vector.load %arg20[%c0_115, %c0_116, %c0_117] : memref<2x1x32xf32, #tpu.memory_space<vmem>>, vector<1x1x32xf32>
    %250 = vector.shape_cast %249 : vector<1x1x32xf32> to vector<1x32xf32>
    %cst_118 = arith.constant dense<0.000000e+00> : vector<8xf32>
    %251 = vector.multi_reduction <add>, %246, %cst_118 [1] : vector<8x32xf32> to vector<8xf32>
    %252 = vector.shape_cast %251 : vector<8xf32> to vector<8x1xf32>
    %cst_119 = arith.constant 3.200000e+01 : f32
    %253 = vector.broadcast %cst_119 : f32 to vector<8x1xf32>
    %254 = arith.divf %252, %253 : vector<8x1xf32>
    %255 = vector.broadcast %254 : vector<8x1xf32> to vector<8x32xf32>
    %256 = arith.subf %246, %255 : vector<8x32xf32>
    %257 = arith.mulf %256, %256 : vector<8x32xf32>
    %cst_120 = arith.constant dense<0.000000e+00> : vector<8xf32>
    %258 = vector.multi_reduction <add>, %257, %cst_120 [1] : vector<8x32xf32> to vector<8xf32>
    %259 = vector.shape_cast %258 : vector<8xf32> to vector<8x1xf32>
    %cst_121 = arith.constant 3.200000e+01 : f32
    %260 = vector.broadcast %cst_121 : f32 to vector<8x1xf32>
    %261 = arith.divf %259, %260 : vector<8x1xf32>
    %262 = vector.broadcast %254 : vector<8x1xf32> to vector<8x32xf32>
    %263 = arith.subf %246, %262 : vector<8x32xf32>
    %cst_122 = arith.constant 9.99999974E-6 : f32
    %264 = vector.broadcast %cst_122 : f32 to vector<8x1xf32>
    %265 = arith.addf %261, %264 : vector<8x1xf32>
    %266 = math.rsqrt %265 : vector<8x1xf32>
    %267 = vector.broadcast %266 : vector<8x1xf32> to vector<8x32xf32>
    %268 = arith.mulf %263, %267 : vector<8x32xf32>
    %269 = vector.broadcast %248 : vector<1x32xf32> to vector<8x32xf32>
    %270 = arith.mulf %268, %269 : vector<8x32xf32>
    %271 = vector.broadcast %250 : vector<1x32xf32> to vector<8x32xf32>
    %272 = arith.addf %270, %271 : vector<8x32xf32>
    %c1 = arith.constant 1 : index
    %c0_123 = arith.constant 0 : index
    %c0_124 = arith.constant 0 : index
    %273 = vector.load %arg5[%c1, %c0_123, %c0_124] : memref<2x32x96xf32, #tpu.memory_space<vmem>>, vector<1x32x96xf32>
    %274 = vector.shape_cast %273 : vector<1x32x96xf32> to vector<32x96xf32>
    %cst_125 = arith.constant dense<0.000000e+00> : vector<8x96xf32>
    %275 = tpu.matmul %272, %274, %cst_125 {dimension_numbers = #tpu.dot_dimension_numbers<[1], [0], [0], [1], [0, 0, 1, 1], [], []>} : vector<8x32xf32>, vector<32x96xf32>, vector<8x96xf32> -> vector<8x96xf32>
    %c1_126 = arith.constant 1 : index
    %c0_127 = arith.constant 0 : index
    %c0_128 = arith.constant 0 : index
    %276 = vector.load %arg6[%c1_126, %c0_127, %c0_128] : memref<2x1x96xf32, #tpu.memory_space<vmem>>, vector<1x1x96xf32>
    %277 = vector.shape_cast %276 : vector<1x1x96xf32> to vector<1x96xf32>
    %278 = vector.broadcast %277 : vector<1x96xf32> to vector<8x96xf32>
    %279 = arith.addf %275, %278 : vector<8x96xf32>
    %280 = vector.extract_strided_slice %279 {offsets = [0, 0], sizes = [8, 32], strides = [1, 1]} : vector<8x96xf32> to vector<8x32xf32>
    %281 = vector.extract_strided_slice %279 {offsets = [0, 32], sizes = [8, 32], strides = [1, 1]} : vector<8x96xf32> to vector<8x32xf32>
    %282 = vector.extract_strided_slice %279 {offsets = [0, 64], sizes = [8, 32], strides = [1, 1]} : vector<8x96xf32> to vector<8x32xf32>
    %283 = vector.extract_strided_slice %280 {offsets = [0, 0], sizes = [8, 8], strides = [1, 1]} : vector<8x32xf32> to vector<8x8xf32>
    %284 = vector.extract_strided_slice %281 {offsets = [0, 0], sizes = [8, 8], strides = [1, 1]} : vector<8x32xf32> to vector<8x8xf32>
    %285 = vector.extract_strided_slice %282 {offsets = [0, 0], sizes = [8, 8], strides = [1, 1]} : vector<8x32xf32> to vector<8x8xf32>
    %cst_129 = arith.constant dense<0.000000e+00> : vector<8x8xf32>
    %286 = tpu.matmul %283, %284, %cst_129 {dimension_numbers = #tpu.dot_dimension_numbers<[1], [1], [0], [0], [0, 0, 1, 0], [], []>} : vector<8x8xf32>, vector<8x8xf32>, vector<8x8xf32> -> vector<8x8xf32>
    %287 = arith.addf %286, %4 : vector<8x8xf32>
    %cst_130 = arith.constant dense<0xFF800000> : vector<8xf32>
    %288 = vector.multi_reduction <maximumf>, %287, %cst_130 [1] : vector<8x8xf32> to vector<8xf32>
    %289 = vector.shape_cast %288 : vector<8xf32> to vector<8x1xf32>
    %290 = vector.broadcast %289 : vector<8x1xf32> to vector<8x8xf32>
    %291 = arith.subf %287, %290 : vector<8x8xf32>
    %292 = math.exp %291 : vector<8x8xf32>
    %cst_131 = arith.constant dense<0.000000e+00> : vector<8xf32>
    %293 = vector.multi_reduction <add>, %292, %cst_131 [1] : vector<8x8xf32> to vector<8xf32>
    %294 = vector.shape_cast %293 : vector<8xf32> to vector<8x1xf32>
    %295 = tpu.reciprocal %294 {approx = true} : vector<8x1xf32> -> vector<8x1xf32>
    %296 = vector.broadcast %295 : vector<8x1xf32> to vector<8x8xf32>
    %297 = arith.mulf %292, %296 : vector<8x8xf32>
    %cst_132 = arith.constant dense<0.000000e+00> : vector<8x8xf32>
    %298 = tpu.matmul %297, %285, %cst_132 {dimension_numbers = #tpu.dot_dimension_numbers<[1], [0], [0], [1], [0, 0, 1, 1], [], []>} : vector<8x8xf32>, vector<8x8xf32>, vector<8x8xf32> -> vector<8x8xf32>
    %299 = vector.extract_strided_slice %280 {offsets = [0, 8], sizes = [8, 8], strides = [1, 1]} : vector<8x32xf32> to vector<8x8xf32>
    %300 = vector.extract_strided_slice %281 {offsets = [0, 8], sizes = [8, 8], strides = [1, 1]} : vector<8x32xf32> to vector<8x8xf32>
    %301 = vector.extract_strided_slice %282 {offsets = [0, 8], sizes = [8, 8], strides = [1, 1]} : vector<8x32xf32> to vector<8x8xf32>
    %cst_133 = arith.constant dense<0.000000e+00> : vector<8x8xf32>
    %302 = tpu.matmul %299, %300, %cst_133 {dimension_numbers = #tpu.dot_dimension_numbers<[1], [1], [0], [0], [0, 0, 1, 0], [], []>} : vector<8x8xf32>, vector<8x8xf32>, vector<8x8xf32> -> vector<8x8xf32>
    %303 = arith.addf %302, %4 : vector<8x8xf32>
    %cst_134 = arith.constant dense<0xFF800000> : vector<8xf32>
    %304 = vector.multi_reduction <maximumf>, %303, %cst_134 [1] : vector<8x8xf32> to vector<8xf32>
    %305 = vector.shape_cast %304 : vector<8xf32> to vector<8x1xf32>
    %306 = vector.broadcast %305 : vector<8x1xf32> to vector<8x8xf32>
    %307 = arith.subf %303, %306 : vector<8x8xf32>
    %308 = math.exp %307 : vector<8x8xf32>
    %cst_135 = arith.constant dense<0.000000e+00> : vector<8xf32>
    %309 = vector.multi_reduction <add>, %308, %cst_135 [1] : vector<8x8xf32> to vector<8xf32>
    %310 = vector.shape_cast %309 : vector<8xf32> to vector<8x1xf32>
    %311 = tpu.reciprocal %310 {approx = true} : vector<8x1xf32> -> vector<8x1xf32>
    %312 = vector.broadcast %311 : vector<8x1xf32> to vector<8x8xf32>
    %313 = arith.mulf %308, %312 : vector<8x8xf32>
    %cst_136 = arith.constant dense<0.000000e+00> : vector<8x8xf32>
    %314 = tpu.matmul %313, %301, %cst_136 {dimension_numbers = #tpu.dot_dimension_numbers<[1], [0], [0], [1], [0, 0, 1, 1], [], []>} : vector<8x8xf32>, vector<8x8xf32>, vector<8x8xf32> -> vector<8x8xf32>
    %315 = vector.extract_strided_slice %280 {offsets = [0, 16], sizes = [8, 8], strides = [1, 1]} : vector<8x32xf32> to vector<8x8xf32>
    %316 = vector.extract_strided_slice %281 {offsets = [0, 16], sizes = [8, 8], strides = [1, 1]} : vector<8x32xf32> to vector<8x8xf32>
    %317 = vector.extract_strided_slice %282 {offsets = [0, 16], sizes = [8, 8], strides = [1, 1]} : vector<8x32xf32> to vector<8x8xf32>
    %cst_137 = arith.constant dense<0.000000e+00> : vector<8x8xf32>
    %318 = tpu.matmul %315, %316, %cst_137 {dimension_numbers = #tpu.dot_dimension_numbers<[1], [1], [0], [0], [0, 0, 1, 0], [], []>} : vector<8x8xf32>, vector<8x8xf32>, vector<8x8xf32> -> vector<8x8xf32>
    %319 = arith.addf %318, %4 : vector<8x8xf32>
    %cst_138 = arith.constant dense<0xFF800000> : vector<8xf32>
    %320 = vector.multi_reduction <maximumf>, %319, %cst_138 [1] : vector<8x8xf32> to vector<8xf32>
    %321 = vector.shape_cast %320 : vector<8xf32> to vector<8x1xf32>
    %322 = vector.broadcast %321 : vector<8x1xf32> to vector<8x8xf32>
    %323 = arith.subf %319, %322 : vector<8x8xf32>
    %324 = math.exp %323 : vector<8x8xf32>
    %cst_139 = arith.constant dense<0.000000e+00> : vector<8xf32>
    %325 = vector.multi_reduction <add>, %324, %cst_139 [1] : vector<8x8xf32> to vector<8xf32>
    %326 = vector.shape_cast %325 : vector<8xf32> to vector<8x1xf32>
    %327 = tpu.reciprocal %326 {approx = true} : vector<8x1xf32> -> vector<8x1xf32>
    %328 = vector.broadcast %327 : vector<8x1xf32> to vector<8x8xf32>
    %329 = arith.mulf %324, %328 : vector<8x8xf32>
    %cst_140 = arith.constant dense<0.000000e+00> : vector<8x8xf32>
    %330 = tpu.matmul %329, %317, %cst_140 {dimension_numbers = #tpu.dot_dimension_numbers<[1], [0], [0], [1], [0, 0, 1, 1], [], []>} : vector<8x8xf32>, vector<8x8xf32>, vector<8x8xf32> -> vector<8x8xf32>
    %331 = vector.extract_strided_slice %280 {offsets = [0, 24], sizes = [8, 8], strides = [1, 1]} : vector<8x32xf32> to vector<8x8xf32>
    %332 = vector.extract_strided_slice %281 {offsets = [0, 24], sizes = [8, 8], strides = [1, 1]} : vector<8x32xf32> to vector<8x8xf32>
    %333 = vector.extract_strided_slice %282 {offsets = [0, 24], sizes = [8, 8], strides = [1, 1]} : vector<8x32xf32> to vector<8x8xf32>
    %cst_141 = arith.constant dense<0.000000e+00> : vector<8x8xf32>
    %334 = tpu.matmul %331, %332, %cst_141 {dimension_numbers = #tpu.dot_dimension_numbers<[1], [1], [0], [0], [0, 0, 1, 0], [], []>} : vector<8x8xf32>, vector<8x8xf32>, vector<8x8xf32> -> vector<8x8xf32>
    %335 = arith.addf %334, %4 : vector<8x8xf32>
    %cst_142 = arith.constant dense<0xFF800000> : vector<8xf32>
    %336 = vector.multi_reduction <maximumf>, %335, %cst_142 [1] : vector<8x8xf32> to vector<8xf32>
    %337 = vector.shape_cast %336 : vector<8xf32> to vector<8x1xf32>
    %338 = vector.broadcast %337 : vector<8x1xf32> to vector<8x8xf32>
    %339 = arith.subf %335, %338 : vector<8x8xf32>
    %340 = math.exp %339 : vector<8x8xf32>
    %cst_143 = arith.constant dense<0.000000e+00> : vector<8xf32>
    %341 = vector.multi_reduction <add>, %340, %cst_143 [1] : vector<8x8xf32> to vector<8xf32>
    %342 = vector.shape_cast %341 : vector<8xf32> to vector<8x1xf32>
    %343 = tpu.reciprocal %342 {approx = true} : vector<8x1xf32> -> vector<8x1xf32>
    %344 = vector.broadcast %343 : vector<8x1xf32> to vector<8x8xf32>
    %345 = arith.mulf %340, %344 : vector<8x8xf32>
    %cst_144 = arith.constant dense<0.000000e+00> : vector<8x8xf32>
    %346 = tpu.matmul %345, %333, %cst_144 {dimension_numbers = #tpu.dot_dimension_numbers<[1], [0], [0], [1], [0, 0, 1, 1], [], []>} : vector<8x8xf32>, vector<8x8xf32>, vector<8x8xf32> -> vector<8x8xf32>
    %347 = tpu.concatenate %298, %314, %330, %346 in 1 : vector<8x8xf32>, vector<8x8xf32>, vector<8x8xf32>, vector<8x8xf32> -> vector<8x32xf32>
    %c1_145 = arith.constant 1 : index
    %c0_146 = arith.constant 0 : index
    %c0_147 = arith.constant 0 : index
    %348 = vector.load %arg7[%c1_145, %c0_146, %c0_147] : memref<2x32x32xf32, #tpu.memory_space<vmem>>, vector<1x32x32xf32>
    %349 = vector.shape_cast %348 : vector<1x32x32xf32> to vector<32x32xf32>
    %cst_148 = arith.constant dense<0.000000e+00> : vector<8x32xf32>
    %350 = tpu.matmul %347, %349, %cst_148 {dimension_numbers = #tpu.dot_dimension_numbers<[1], [0], [0], [1], [0, 0, 1, 1], [], []>} : vector<8x32xf32>, vector<32x32xf32>, vector<8x32xf32> -> vector<8x32xf32>
    %c1_149 = arith.constant 1 : index
    %c0_150 = arith.constant 0 : index
    %c0_151 = arith.constant 0 : index
    %351 = vector.load %arg8[%c1_149, %c0_150, %c0_151] : memref<2x1x32xf32, #tpu.memory_space<vmem>>, vector<1x1x32xf32>
    %352 = vector.shape_cast %351 : vector<1x1x32xf32> to vector<1x32xf32>
    %353 = vector.broadcast %352 : vector<1x32xf32> to vector<8x32xf32>
    %354 = arith.addf %350, %353 : vector<8x32xf32>
    %355 = arith.addf %272, %354 : vector<8x32xf32>
    %c1_152 = arith.constant 1 : index
    %c0_153 = arith.constant 0 : index
    %c0_154 = arith.constant 0 : index
    %356 = vector.load %arg15[%c1_152, %c0_153, %c0_154] : memref<2x1x32xf32, #tpu.memory_space<vmem>>, vector<1x1x32xf32>
    %357 = vector.shape_cast %356 : vector<1x1x32xf32> to vector<1x32xf32>
    %c1_155 = arith.constant 1 : index
    %c0_156 = arith.constant 0 : index
    %c0_157 = arith.constant 0 : index
    %358 = vector.load %arg16[%c1_155, %c0_156, %c0_157] : memref<2x1x32xf32, #tpu.memory_space<vmem>>, vector<1x1x32xf32>
    %359 = vector.shape_cast %358 : vector<1x1x32xf32> to vector<1x32xf32>
    %cst_158 = arith.constant dense<0.000000e+00> : vector<8xf32>
    %360 = vector.multi_reduction <add>, %355, %cst_158 [1] : vector<8x32xf32> to vector<8xf32>
    %361 = vector.shape_cast %360 : vector<8xf32> to vector<8x1xf32>
    %cst_159 = arith.constant 3.200000e+01 : f32
    %362 = vector.broadcast %cst_159 : f32 to vector<8x1xf32>
    %363 = arith.divf %361, %362 : vector<8x1xf32>
    %364 = vector.broadcast %363 : vector<8x1xf32> to vector<8x32xf32>
    %365 = arith.subf %355, %364 : vector<8x32xf32>
    %366 = arith.mulf %365, %365 : vector<8x32xf32>
    %cst_160 = arith.constant dense<0.000000e+00> : vector<8xf32>
    %367 = vector.multi_reduction <add>, %366, %cst_160 [1] : vector<8x32xf32> to vector<8xf32>
    %368 = vector.shape_cast %367 : vector<8xf32> to vector<8x1xf32>
    %cst_161 = arith.constant 3.200000e+01 : f32
    %369 = vector.broadcast %cst_161 : f32 to vector<8x1xf32>
    %370 = arith.divf %368, %369 : vector<8x1xf32>
    %371 = vector.broadcast %363 : vector<8x1xf32> to vector<8x32xf32>
    %372 = arith.subf %355, %371 : vector<8x32xf32>
    %cst_162 = arith.constant 9.99999974E-6 : f32
    %373 = vector.broadcast %cst_162 : f32 to vector<8x1xf32>
    %374 = arith.addf %370, %373 : vector<8x1xf32>
    %375 = math.rsqrt %374 : vector<8x1xf32>
    %376 = vector.broadcast %375 : vector<8x1xf32> to vector<8x32xf32>
    %377 = arith.mulf %372, %376 : vector<8x32xf32>
    %378 = vector.broadcast %357 : vector<1x32xf32> to vector<8x32xf32>
    %379 = arith.mulf %377, %378 : vector<8x32xf32>
    %380 = vector.broadcast %359 : vector<1x32xf32> to vector<8x32xf32>
    %381 = arith.addf %379, %380 : vector<8x32xf32>
    %c1_163 = arith.constant 1 : index
    %c0_164 = arith.constant 0 : index
    %c0_165 = arith.constant 0 : index
    %382 = vector.load %arg9[%c1_163, %c0_164, %c0_165] : memref<2x32x32xf32, #tpu.memory_space<vmem>>, vector<1x32x32xf32>
    %383 = vector.shape_cast %382 : vector<1x32x32xf32> to vector<32x32xf32>
    %cst_166 = arith.constant dense<0.000000e+00> : vector<8x32xf32>
    %384 = tpu.matmul %381, %383, %cst_166 {dimension_numbers = #tpu.dot_dimension_numbers<[1], [0], [0], [1], [0, 0, 1, 1], [], []>} : vector<8x32xf32>, vector<32x32xf32>, vector<8x32xf32> -> vector<8x32xf32>
    %c1_167 = arith.constant 1 : index
    %c0_168 = arith.constant 0 : index
    %c0_169 = arith.constant 0 : index
    %385 = vector.load %arg10[%c1_167, %c0_168, %c0_169] : memref<2x1x32xf32, #tpu.memory_space<vmem>>, vector<1x1x32xf32>
    %386 = vector.shape_cast %385 : vector<1x1x32xf32> to vector<1x32xf32>
    %387 = vector.broadcast %386 : vector<1x32xf32> to vector<8x32xf32>
    %388 = arith.addf %384, %387 : vector<8x32xf32>
    %c1_170 = arith.constant 1 : index
    %c0_171 = arith.constant 0 : index
    %c0_172 = arith.constant 0 : index
    %389 = vector.load %arg11[%c1_170, %c0_171, %c0_172] : memref<2x32x64xf32, #tpu.memory_space<vmem>>, vector<1x32x64xf32>
    %390 = vector.shape_cast %389 : vector<1x32x64xf32> to vector<32x64xf32>
    %cst_173 = arith.constant dense<0.000000e+00> : vector<12x64xf32>
    %391 = tpu.matmul %3, %390, %cst_173 {dimension_numbers = #tpu.dot_dimension_numbers<[1], [0], [0], [1], [0, 0, 1, 1], [], []>} : vector<12x32xf32>, vector<32x64xf32>, vector<12x64xf32> -> vector<12x64xf32>
    %c1_174 = arith.constant 1 : index
    %c0_175 = arith.constant 0 : index
    %c0_176 = arith.constant 0 : index
    %392 = vector.load %arg12[%c1_174, %c0_175, %c0_176] : memref<2x1x64xf32, #tpu.memory_space<vmem>>, vector<1x1x64xf32>
    %393 = vector.shape_cast %392 : vector<1x1x64xf32> to vector<1x64xf32>
    %394 = vector.broadcast %393 : vector<1x64xf32> to vector<12x64xf32>
    %395 = arith.addf %391, %394 : vector<12x64xf32>
    %396 = vector.extract_strided_slice %395 {offsets = [0, 0], sizes = [12, 32], strides = [1, 1]} : vector<12x64xf32> to vector<12x32xf32>
    %397 = vector.extract_strided_slice %395 {offsets = [0, 32], sizes = [12, 32], strides = [1, 1]} : vector<12x64xf32> to vector<12x32xf32>
    %398 = vector.extract_strided_slice %388 {offsets = [0, 0], sizes = [8, 8], strides = [1, 1]} : vector<8x32xf32> to vector<8x8xf32>
    %399 = vector.extract_strided_slice %396 {offsets = [0, 0], sizes = [12, 8], strides = [1, 1]} : vector<12x32xf32> to vector<12x8xf32>
    %400 = vector.extract_strided_slice %397 {offsets = [0, 0], sizes = [12, 8], strides = [1, 1]} : vector<12x32xf32> to vector<12x8xf32>
    %cst_177 = arith.constant dense<0.000000e+00> : vector<8x12xf32>
    %401 = tpu.matmul %398, %399, %cst_177 {dimension_numbers = #tpu.dot_dimension_numbers<[1], [1], [0], [0], [0, 0, 1, 0], [], []>} : vector<8x8xf32>, vector<12x8xf32>, vector<8x12xf32> -> vector<8x12xf32>
    %402 = arith.addf %401, %5 : vector<8x12xf32>
    %cst_178 = arith.constant dense<0xFF800000> : vector<8xf32>
    %403 = vector.multi_reduction <maximumf>, %402, %cst_178 [1] : vector<8x12xf32> to vector<8xf32>
    %404 = vector.shape_cast %403 : vector<8xf32> to vector<8x1xf32>
    %405 = vector.broadcast %404 : vector<8x1xf32> to vector<8x12xf32>
    %406 = arith.subf %402, %405 : vector<8x12xf32>
    %407 = math.exp %406 : vector<8x12xf32>
    %cst_179 = arith.constant dense<0.000000e+00> : vector<8xf32>
    %408 = vector.multi_reduction <add>, %407, %cst_179 [1] : vector<8x12xf32> to vector<8xf32>
    %409 = vector.shape_cast %408 : vector<8xf32> to vector<8x1xf32>
    %410 = tpu.reciprocal %409 {approx = true} : vector<8x1xf32> -> vector<8x1xf32>
    %411 = vector.broadcast %410 : vector<8x1xf32> to vector<8x12xf32>
    %412 = arith.mulf %407, %411 : vector<8x12xf32>
    %cst_180 = arith.constant dense<0.000000e+00> : vector<8x8xf32>
    %413 = tpu.matmul %412, %400, %cst_180 {dimension_numbers = #tpu.dot_dimension_numbers<[1], [0], [0], [1], [0, 0, 1, 1], [], []>} : vector<8x12xf32>, vector<12x8xf32>, vector<8x8xf32> -> vector<8x8xf32>
    %414 = vector.extract_strided_slice %388 {offsets = [0, 8], sizes = [8, 8], strides = [1, 1]} : vector<8x32xf32> to vector<8x8xf32>
    %415 = vector.extract_strided_slice %396 {offsets = [0, 8], sizes = [12, 8], strides = [1, 1]} : vector<12x32xf32> to vector<12x8xf32>
    %416 = vector.extract_strided_slice %397 {offsets = [0, 8], sizes = [12, 8], strides = [1, 1]} : vector<12x32xf32> to vector<12x8xf32>
    %cst_181 = arith.constant dense<0.000000e+00> : vector<8x12xf32>
    %417 = tpu.matmul %414, %415, %cst_181 {dimension_numbers = #tpu.dot_dimension_numbers<[1], [1], [0], [0], [0, 0, 1, 0], [], []>} : vector<8x8xf32>, vector<12x8xf32>, vector<8x12xf32> -> vector<8x12xf32>
    %418 = arith.addf %417, %5 : vector<8x12xf32>
    %cst_182 = arith.constant dense<0xFF800000> : vector<8xf32>
    %419 = vector.multi_reduction <maximumf>, %418, %cst_182 [1] : vector<8x12xf32> to vector<8xf32>
    %420 = vector.shape_cast %419 : vector<8xf32> to vector<8x1xf32>
    %421 = vector.broadcast %420 : vector<8x1xf32> to vector<8x12xf32>
    %422 = arith.subf %418, %421 : vector<8x12xf32>
    %423 = math.exp %422 : vector<8x12xf32>
    %cst_183 = arith.constant dense<0.000000e+00> : vector<8xf32>
    %424 = vector.multi_reduction <add>, %423, %cst_183 [1] : vector<8x12xf32> to vector<8xf32>
    %425 = vector.shape_cast %424 : vector<8xf32> to vector<8x1xf32>
    %426 = tpu.reciprocal %425 {approx = true} : vector<8x1xf32> -> vector<8x1xf32>
    %427 = vector.broadcast %426 : vector<8x1xf32> to vector<8x12xf32>
    %428 = arith.mulf %423, %427 : vector<8x12xf32>
    %cst_184 = arith.constant dense<0.000000e+00> : vector<8x8xf32>
    %429 = tpu.matmul %428, %416, %cst_184 {dimension_numbers = #tpu.dot_dimension_numbers<[1], [0], [0], [1], [0, 0, 1, 1], [], []>} : vector<8x12xf32>, vector<12x8xf32>, vector<8x8xf32> -> vector<8x8xf32>
    %430 = vector.extract_strided_slice %388 {offsets = [0, 16], sizes = [8, 8], strides = [1, 1]} : vector<8x32xf32> to vector<8x8xf32>
    %431 = vector.extract_strided_slice %396 {offsets = [0, 16], sizes = [12, 8], strides = [1, 1]} : vector<12x32xf32> to vector<12x8xf32>
    %432 = vector.extract_strided_slice %397 {offsets = [0, 16], sizes = [12, 8], strides = [1, 1]} : vector<12x32xf32> to vector<12x8xf32>
    %cst_185 = arith.constant dense<0.000000e+00> : vector<8x12xf32>
    %433 = tpu.matmul %430, %431, %cst_185 {dimension_numbers = #tpu.dot_dimension_numbers<[1], [1], [0], [0], [0, 0, 1, 0], [], []>} : vector<8x8xf32>, vector<12x8xf32>, vector<8x12xf32> -> vector<8x12xf32>
    %434 = arith.addf %433, %5 : vector<8x12xf32>
    %cst_186 = arith.constant dense<0xFF800000> : vector<8xf32>
    %435 = vector.multi_reduction <maximumf>, %434, %cst_186 [1] : vector<8x12xf32> to vector<8xf32>
    %436 = vector.shape_cast %435 : vector<8xf32> to vector<8x1xf32>
    %437 = vector.broadcast %436 : vector<8x1xf32> to vector<8x12xf32>
    %438 = arith.subf %434, %437 : vector<8x12xf32>
    %439 = math.exp %438 : vector<8x12xf32>
    %cst_187 = arith.constant dense<0.000000e+00> : vector<8xf32>
    %440 = vector.multi_reduction <add>, %439, %cst_187 [1] : vector<8x12xf32> to vector<8xf32>
    %441 = vector.shape_cast %440 : vector<8xf32> to vector<8x1xf32>
    %442 = tpu.reciprocal %441 {approx = true} : vector<8x1xf32> -> vector<8x1xf32>
    %443 = vector.broadcast %442 : vector<8x1xf32> to vector<8x12xf32>
    %444 = arith.mulf %439, %443 : vector<8x12xf32>
    %cst_188 = arith.constant dense<0.000000e+00> : vector<8x8xf32>
    %445 = tpu.matmul %444, %432, %cst_188 {dimension_numbers = #tpu.dot_dimension_numbers<[1], [0], [0], [1], [0, 0, 1, 1], [], []>} : vector<8x12xf32>, vector<12x8xf32>, vector<8x8xf32> -> vector<8x8xf32>
    %446 = vector.extract_strided_slice %388 {offsets = [0, 24], sizes = [8, 8], strides = [1, 1]} : vector<8x32xf32> to vector<8x8xf32>
    %447 = vector.extract_strided_slice %396 {offsets = [0, 24], sizes = [12, 8], strides = [1, 1]} : vector<12x32xf32> to vector<12x8xf32>
    %448 = vector.extract_strided_slice %397 {offsets = [0, 24], sizes = [12, 8], strides = [1, 1]} : vector<12x32xf32> to vector<12x8xf32>
    %cst_189 = arith.constant dense<0.000000e+00> : vector<8x12xf32>
    %449 = tpu.matmul %446, %447, %cst_189 {dimension_numbers = #tpu.dot_dimension_numbers<[1], [1], [0], [0], [0, 0, 1, 0], [], []>} : vector<8x8xf32>, vector<12x8xf32>, vector<8x12xf32> -> vector<8x12xf32>
    %450 = arith.addf %449, %5 : vector<8x12xf32>
    %cst_190 = arith.constant dense<0xFF800000> : vector<8xf32>
    %451 = vector.multi_reduction <maximumf>, %450, %cst_190 [1] : vector<8x12xf32> to vector<8xf32>
    %452 = vector.shape_cast %451 : vector<8xf32> to vector<8x1xf32>
    %453 = vector.broadcast %452 : vector<8x1xf32> to vector<8x12xf32>
    %454 = arith.subf %450, %453 : vector<8x12xf32>
    %455 = math.exp %454 : vector<8x12xf32>
    %cst_191 = arith.constant dense<0.000000e+00> : vector<8xf32>
    %456 = vector.multi_reduction <add>, %455, %cst_191 [1] : vector<8x12xf32> to vector<8xf32>
    %457 = vector.shape_cast %456 : vector<8xf32> to vector<8x1xf32>
    %458 = tpu.reciprocal %457 {approx = true} : vector<8x1xf32> -> vector<8x1xf32>
    %459 = vector.broadcast %458 : vector<8x1xf32> to vector<8x12xf32>
    %460 = arith.mulf %455, %459 : vector<8x12xf32>
    %cst_192 = arith.constant dense<0.000000e+00> : vector<8x8xf32>
    %461 = tpu.matmul %460, %448, %cst_192 {dimension_numbers = #tpu.dot_dimension_numbers<[1], [0], [0], [1], [0, 0, 1, 1], [], []>} : vector<8x12xf32>, vector<12x8xf32>, vector<8x8xf32> -> vector<8x8xf32>
    %462 = tpu.concatenate %413, %429, %445, %461 in 1 : vector<8x8xf32>, vector<8x8xf32>, vector<8x8xf32>, vector<8x8xf32> -> vector<8x32xf32>
    %c1_193 = arith.constant 1 : index
    %c0_194 = arith.constant 0 : index
    %c0_195 = arith.constant 0 : index
    %463 = vector.load %arg13[%c1_193, %c0_194, %c0_195] : memref<2x32x32xf32, #tpu.memory_space<vmem>>, vector<1x32x32xf32>
    %464 = vector.shape_cast %463 : vector<1x32x32xf32> to vector<32x32xf32>
    %cst_196 = arith.constant dense<0.000000e+00> : vector<8x32xf32>
    %465 = tpu.matmul %462, %464, %cst_196 {dimension_numbers = #tpu.dot_dimension_numbers<[1], [0], [0], [1], [0, 0, 1, 1], [], []>} : vector<8x32xf32>, vector<32x32xf32>, vector<8x32xf32> -> vector<8x32xf32>
    %c1_197 = arith.constant 1 : index
    %c0_198 = arith.constant 0 : index
    %c0_199 = arith.constant 0 : index
    %466 = vector.load %arg14[%c1_197, %c0_198, %c0_199] : memref<2x1x32xf32, #tpu.memory_space<vmem>>, vector<1x1x32xf32>
    %467 = vector.shape_cast %466 : vector<1x1x32xf32> to vector<1x32xf32>
    %468 = vector.broadcast %467 : vector<1x32xf32> to vector<8x32xf32>
    %469 = arith.addf %465, %468 : vector<8x32xf32>
    %470 = arith.addf %381, %469 : vector<8x32xf32>
    %c1_200 = arith.constant 1 : index
    %c0_201 = arith.constant 0 : index
    %c0_202 = arith.constant 0 : index
    %471 = vector.load %arg17[%c1_200, %c0_201, %c0_202] : memref<2x1x32xf32, #tpu.memory_space<vmem>>, vector<1x1x32xf32>
    %472 = vector.shape_cast %471 : vector<1x1x32xf32> to vector<1x32xf32>
    %c1_203 = arith.constant 1 : index
    %c0_204 = arith.constant 0 : index
    %c0_205 = arith.constant 0 : index
    %473 = vector.load %arg18[%c1_203, %c0_204, %c0_205] : memref<2x1x32xf32, #tpu.memory_space<vmem>>, vector<1x1x32xf32>
    %474 = vector.shape_cast %473 : vector<1x1x32xf32> to vector<1x32xf32>
    %cst_206 = arith.constant dense<0.000000e+00> : vector<8xf32>
    %475 = vector.multi_reduction <add>, %470, %cst_206 [1] : vector<8x32xf32> to vector<8xf32>
    %476 = vector.shape_cast %475 : vector<8xf32> to vector<8x1xf32>
    %cst_207 = arith.constant 3.200000e+01 : f32
    %477 = vector.broadcast %cst_207 : f32 to vector<8x1xf32>
    %478 = arith.divf %476, %477 : vector<8x1xf32>
    %479 = vector.broadcast %478 : vector<8x1xf32> to vector<8x32xf32>
    %480 = arith.subf %470, %479 : vector<8x32xf32>
    %481 = arith.mulf %480, %480 : vector<8x32xf32>
    %cst_208 = arith.constant dense<0.000000e+00> : vector<8xf32>
    %482 = vector.multi_reduction <add>, %481, %cst_208 [1] : vector<8x32xf32> to vector<8xf32>
    %483 = vector.shape_cast %482 : vector<8xf32> to vector<8x1xf32>
    %cst_209 = arith.constant 3.200000e+01 : f32
    %484 = vector.broadcast %cst_209 : f32 to vector<8x1xf32>
    %485 = arith.divf %483, %484 : vector<8x1xf32>
    %486 = vector.broadcast %478 : vector<8x1xf32> to vector<8x32xf32>
    %487 = arith.subf %470, %486 : vector<8x32xf32>
    %cst_210 = arith.constant 9.99999974E-6 : f32
    %488 = vector.broadcast %cst_210 : f32 to vector<8x1xf32>
    %489 = arith.addf %485, %488 : vector<8x1xf32>
    %490 = math.rsqrt %489 : vector<8x1xf32>
    %491 = vector.broadcast %490 : vector<8x1xf32> to vector<8x32xf32>
    %492 = arith.mulf %487, %491 : vector<8x32xf32>
    %493 = vector.broadcast %472 : vector<1x32xf32> to vector<8x32xf32>
    %494 = arith.mulf %492, %493 : vector<8x32xf32>
    %495 = vector.broadcast %474 : vector<1x32xf32> to vector<8x32xf32>
    %496 = arith.addf %494, %495 : vector<8x32xf32>
    %c1_211 = arith.constant 1 : index
    %c0_212 = arith.constant 0 : index
    %c0_213 = arith.constant 0 : index
    %497 = vector.load %arg21[%c1_211, %c0_212, %c0_213] : memref<2x32x64xf32, #tpu.memory_space<vmem>>, vector<1x32x64xf32>
    %498 = vector.shape_cast %497 : vector<1x32x64xf32> to vector<32x64xf32>
    %cst_214 = arith.constant dense<0.000000e+00> : vector<8x64xf32>
    %499 = tpu.matmul %496, %498, %cst_214 {dimension_numbers = #tpu.dot_dimension_numbers<[1], [0], [0], [1], [0, 0, 1, 1], [], []>} : vector<8x32xf32>, vector<32x64xf32>, vector<8x64xf32> -> vector<8x64xf32>
    %c1_215 = arith.constant 1 : index
    %c0_216 = arith.constant 0 : index
    %c0_217 = arith.constant 0 : index
    %500 = vector.load %arg22[%c1_215, %c0_216, %c0_217] : memref<2x1x64xf32, #tpu.memory_space<vmem>>, vector<1x1x64xf32>
    %501 = vector.shape_cast %500 : vector<1x1x64xf32> to vector<1x64xf32>
    %502 = vector.broadcast %501 : vector<1x64xf32> to vector<8x64xf32>
    %503 = arith.addf %499, %502 : vector<8x64xf32>
    %cst_218 = arith.constant 0.000000e+00 : f32
    %504 = vector.broadcast %cst_218 : f32 to vector<8x64xf32>
    %505 = arith.maximumf %503, %504 : vector<8x64xf32>
    %c1_219 = arith.constant 1 : index
    %c0_220 = arith.constant 0 : index
    %c0_221 = arith.constant 0 : index
    %506 = vector.load %arg23[%c1_219, %c0_220, %c0_221] : memref<2x64x32xf32, #tpu.memory_space<vmem>>, vector<1x64x32xf32>
    %507 = vector.shape_cast %506 : vector<1x64x32xf32> to vector<64x32xf32>
    %cst_222 = arith.constant dense<0.000000e+00> : vector<8x32xf32>
    %508 = tpu.matmul %505, %507, %cst_222 {dimension_numbers = #tpu.dot_dimension_numbers<[1], [0], [0], [1], [0, 0, 1, 1], [], []>} : vector<8x64xf32>, vector<64x32xf32>, vector<8x32xf32> -> vector<8x32xf32>
    %c1_223 = arith.constant 1 : index
    %c0_224 = arith.constant 0 : index
    %c0_225 = arith.constant 0 : index
    %509 = vector.load %arg24[%c1_223, %c0_224, %c0_225] : memref<2x1x32xf32, #tpu.memory_space<vmem>>, vector<1x1x32xf32>
    %510 = vector.shape_cast %509 : vector<1x1x32xf32> to vector<1x32xf32>
    %511 = vector.broadcast %510 : vector<1x32xf32> to vector<8x32xf32>
    %512 = arith.addf %508, %511 : vector<8x32xf32>
    %513 = arith.addf %496, %512 : vector<8x32xf32>
    %c1_226 = arith.constant 1 : index
    %c0_227 = arith.constant 0 : index
    %c0_228 = arith.constant 0 : index
    %514 = vector.load %arg19[%c1_226, %c0_227, %c0_228] : memref<2x1x32xf32, #tpu.memory_space<vmem>>, vector<1x1x32xf32>
    %515 = vector.shape_cast %514 : vector<1x1x32xf32> to vector<1x32xf32>
    %c1_229 = arith.constant 1 : index
    %c0_230 = arith.constant 0 : index
    %c0_231 = arith.constant 0 : index
    %516 = vector.load %arg20[%c1_229, %c0_230, %c0_231] : memref<2x1x32xf32, #tpu.memory_space<vmem>>, vector<1x1x32xf32>
    %517 = vector.shape_cast %516 : vector<1x1x32xf32> to vector<1x32xf32>
    %cst_232 = arith.constant dense<0.000000e+00> : vector<8xf32>
    %518 = vector.multi_reduction <add>, %513, %cst_232 [1] : vector<8x32xf32> to vector<8xf32>
    %519 = vector.shape_cast %518 : vector<8xf32> to vector<8x1xf32>
    %cst_233 = arith.constant 3.200000e+01 : f32
    %520 = vector.broadcast %cst_233 : f32 to vector<8x1xf32>
    %521 = arith.divf %519, %520 : vector<8x1xf32>
    %522 = vector.broadcast %521 : vector<8x1xf32> to vector<8x32xf32>
    %523 = arith.subf %513, %522 : vector<8x32xf32>
    %524 = arith.mulf %523, %523 : vector<8x32xf32>
    %cst_234 = arith.constant dense<0.000000e+00> : vector<8xf32>
    %525 = vector.multi_reduction <add>, %524, %cst_234 [1] : vector<8x32xf32> to vector<8xf32>
    %526 = vector.shape_cast %525 : vector<8xf32> to vector<8x1xf32>
    %cst_235 = arith.constant 3.200000e+01 : f32
    %527 = vector.broadcast %cst_235 : f32 to vector<8x1xf32>
    %528 = arith.divf %526, %527 : vector<8x1xf32>
    %529 = vector.broadcast %521 : vector<8x1xf32> to vector<8x32xf32>
    %530 = arith.subf %513, %529 : vector<8x32xf32>
    %cst_236 = arith.constant 9.99999974E-6 : f32
    %531 = vector.broadcast %cst_236 : f32 to vector<8x1xf32>
    %532 = arith.addf %528, %531 : vector<8x1xf32>
    %533 = math.rsqrt %532 : vector<8x1xf32>
    %534 = vector.broadcast %533 : vector<8x1xf32> to vector<8x32xf32>
    %535 = arith.mulf %530, %534 : vector<8x32xf32>
    %536 = vector.broadcast %515 : vector<1x32xf32> to vector<8x32xf32>
    %537 = arith.mulf %535, %536 : vector<8x32xf32>
    %538 = vector.broadcast %517 : vector<1x32xf32> to vector<8x32xf32>
    %539 = arith.addf %537, %538 : vector<8x32xf32>
    %c0_237 = arith.constant 0 : index
    %c0_238 = arith.constant 0 : index
    %540 = vector.load %arg25[%c0_237, %c0_238] : memref<1x32xf32, #tpu.memory_space<vmem>>, vector<1x32xf32>
    %c0_239 = arith.constant 0 : index
    %c0_240 = arith.constant 0 : index
    %541 = vector.load %arg26[%c0_239, %c0_240] : memref<1x32xf32, #tpu.memory_space<vmem>>, vector<1x32xf32>
    %cst_241 = arith.constant dense<0.000000e+00> : vector<8xf32>
    %542 = vector.multi_reduction <add>, %539, %cst_241 [1] : vector<8x32xf32> to vector<8xf32>
    %543 = vector.shape_cast %542 : vector<8xf32> to vector<8x1xf32>
    %cst_242 = arith.constant 3.200000e+01 : f32
    %544 = vector.broadcast %cst_242 : f32 to vector<8x1xf32>
    %545 = arith.divf %543, %544 : vector<8x1xf32>
    %546 = vector.broadcast %545 : vector<8x1xf32> to vector<8x32xf32>
    %547 = arith.subf %539, %546 : vector<8x32xf32>
    %548 = arith.mulf %547, %547 : vector<8x32xf32>
    %cst_243 = arith.constant dense<0.000000e+00> : vector<8xf32>
    %549 = vector.multi_reduction <add>, %548, %cst_243 [1] : vector<8x32xf32> to vector<8xf32>
    %550 = vector.shape_cast %549 : vector<8xf32> to vector<8x1xf32>
    %cst_244 = arith.constant 3.200000e+01 : f32
    %551 = vector.broadcast %cst_244 : f32 to vector<8x1xf32>
    %552 = arith.divf %550, %551 : vector<8x1xf32>
    %553 = vector.broadcast %545 : vector<8x1xf32> to vector<8x32xf32>
    %554 = arith.subf %539, %553 : vector<8x32xf32>
    %cst_245 = arith.constant 9.99999974E-6 : f32
    %555 = vector.broadcast %cst_245 : f32 to vector<8x1xf32>
    %556 = arith.addf %552, %555 : vector<8x1xf32>
    %557 = math.rsqrt %556 : vector<8x1xf32>
    %558 = vector.broadcast %557 : vector<8x1xf32> to vector<8x32xf32>
    %559 = arith.mulf %554, %558 : vector<8x32xf32>
    %560 = vector.broadcast %540 : vector<1x32xf32> to vector<8x32xf32>
    %561 = arith.mulf %559, %560 : vector<8x32xf32>
    %562 = vector.broadcast %541 : vector<1x32xf32> to vector<8x32xf32>
    %563 = arith.addf %561, %562 : vector<8x32xf32>
    %c0_246 = arith.constant 0 : index
    %c0_247 = arith.constant 0 : index
    %c0_248 = arith.constant 0 : index
    %564 = vector.load %arg27[%c0_246, %c0_247, %c0_248] : memref<1x8x32xf32, #tpu.memory_space<vmem>>, vector<1x8x32xf32>
    %565 = vector.shape_cast %564 : vector<1x8x32xf32> to vector<8x32xf32>
    %566 = vector.shape_cast %563 : vector<8x32xf32> to vector<1x8x32xf32>
    tpu.vector_store %arg27[%c0_246, %c0_247, %c0_248], %566 {strides = array<i32>} : memref<1x8x32xf32, #tpu.memory_space<vmem>>, vector<1x8x32xf32>,
    return
  }
  func.func @transform_0(%arg0: i32) -> (i32, i32, i32) {
    %c0_i32 = arith.constant 0 : i32
    %c0_i32_0 = arith.constant 0 : i32
    %c0_i32_1 = arith.constant 0 : i32
    return %arg0, %c0_i32, %c0_i32_0 : i32, i32, i32
  }
  func.func @transform_1(%arg0: i32) -> (i32, i32, i32) {
    %c0_i32 = arith.constant 0 : i32
    %c0_i32_0 = arith.constant 0 : i32
    %c0_i32_1 = arith.constant 0 : i32
    return %arg0, %c0_i32, %c0_i32_0 : i32, i32, i32
  }
  func.func @transform_2(%arg0: i32) -> (i32, i32) {
    %c0_i32 = arith.constant 0 : i32
    %c0_i32_0 = arith.constant 0 : i32
    %c0_i32_1 = arith.constant 0 : i32
    return %c0_i32, %c0_i32_0 : i32, i32
  }
  func.func @transform_3(%arg0: i32) -> (i32, i32) {
    %c0_i32 = arith.constant 0 : i32
    %c0_i32_0 = arith.constant 0 : i32
    %c0_i32_1 = arith.constant 0 : i32
    return %c0_i32, %c0_i32_0 : i32, i32
  }
  func.func @transform_4(%arg0: i32) -> (i32, i32, i32) {
    %c0_i32 = arith.constant 0 : i32
    %c0_i32_0 = arith.constant 0 : i32
    %c0_i32_1 = arith.constant 0 : i32
    %c0_i32_2 = arith.constant 0 : i32
    return %c0_i32, %c0_i32_0, %c0_i32_1 : i32, i32, i32
  }
  func.func @transform_5(%arg0: i32) -> (i32, i32, i32) {
    %c0_i32 = arith.constant 0 : i32
    %c0_i32_0 = arith.constant 0 : i32
    %c0_i32_1 = arith.constant 0 : i32
    %c0_i32_2 = arith.constant 0 : i32
    return %c0_i32, %c0_i32_0, %c0_i32_1 : i32, i32, i32
  }
  func.func @transform_6(%arg0: i32) -> (i32, i32, i32) {
    %c0_i32 = arith.constant 0 : i32
    %c0_i32_0 = arith.constant 0 : i32
    %c0_i32_1 = arith.constant 0 : i32
    %c0_i32_2 = arith.constant 0 : i32
    return %c0_i32, %c0_i32_0, %c0_i32_1 : i32, i32, i32
  }
  func.func @transform_7(%arg0: i32) -> (i32, i32, i32) {
    %c0_i32 = arith.constant 0 : i32
    %c0_i32_0 = arith.constant 0 : i32
    %c0_i32_1 = arith.constant 0 : i32
    %c0_i32_2 = arith.constant 0 : i32
    return %c0_i32, %c0_i32_0, %c0_i32_1 : i32, i32, i32
  }
  func.func @transform_8(%arg0: i32) -> (i32, i32, i32) {
    %c0_i32 = arith.constant 0 : i32
    %c0_i32_0 = arith.constant 0 : i32
    %c0_i32_1 = arith.constant 0 : i32
    %c0_i32_2 = arith.constant 0 : i32
    return %c0_i32, %c0_i32_0, %c0_i32_1 : i32, i32, i32
  }
  func.func @transform_9(%arg0: i32) -> (i32, i32, i32) {
    %c0_i32 = arith.constant 0 : i32
    %c0_i32_0 = arith.constant 0 : i32
    %c0_i32_1 = arith.constant 0 : i32
    %c0_i32_2 = arith.constant 0 : i32
    return %c0_i32, %c0_i32_0, %c0_i32_1 : i32, i32, i32
  }
  func.func @transform_10(%arg0: i32) -> (i32, i32, i32) {
    %c0_i32 = arith.constant 0 : i32
    %c0_i32_0 = arith.constant 0 : i32
    %c0_i32_1 = arith.constant 0 : i32
    %c0_i32_2 = arith.constant 0 : i32
    return %c0_i32, %c0_i32_0, %c0_i32_1 : i32, i32, i32
  }
  func.func @transform_11(%arg0: i32) -> (i32, i32, i32) {
    %c0_i32 = arith.constant 0 : i32
    %c0_i32_0 = arith.constant 0 : i32
    %c0_i32_1 = arith.constant 0 : i32
    %c0_i32_2 = arith.constant 0 : i32
    return %c0_i32, %c0_i32_0, %c0_i32_1 : i32, i32, i32
  }
  func.func @transform_12(%arg0: i32) -> (i32, i32, i32) {
    %c0_i32 = arith.constant 0 : i32
    %c0_i32_0 = arith.constant 0 : i32
    %c0_i32_1 = arith.constant 0 : i32
    %c0_i32_2 = arith.constant 0 : i32
    return %c0_i32, %c0_i32_0, %c0_i32_1 : i32, i32, i32
  }
  func.func @transform_13(%arg0: i32) -> (i32, i32, i32) {
    %c0_i32 = arith.constant 0 : i32
    %c0_i32_0 = arith.constant 0 : i32
    %c0_i32_1 = arith.constant 0 : i32
    %c0_i32_2 = arith.constant 0 : i32
    return %c0_i32, %c0_i32_0, %c0_i32_1 : i32, i32, i32
  }
  func.func @transform_14(%arg0: i32) -> (i32, i32, i32) {
    %c0_i32 = arith.constant 0 : i32
    %c0_i32_0 = arith.constant 0 : i32
    %c0_i32_1 = arith.constant 0 : i32
    %c0_i32_2 = arith.constant 0 : i32
    return %c0_i32, %c0_i32_0, %c0_i32_1 : i32, i32, i32
  }
  func.func @transform_15(%arg0: i32) -> (i32, i32, i32) {
    %c0_i32 = arith.constant 0 : i32
    %c0_i32_0 = arith.constant 0 : i32
    %c0_i32_1 = arith.constant 0 : i32
    %c0_i32_2 = arith.constant 0 : i32
    return %c0_i32, %c0_i32_0, %c0_i32_1 : i32, i32, i32
  }
  func.func @transform_16(%arg0: i32) -> (i32, i32, i32) {
    %c0_i32 = arith.constant 0 : i32
    %c0_i32_0 = arith.constant 0 : i32
    %c0_i32_1 = arith.constant 0 : i32
    %c0_i32_2 = arith.constant 0 : i32
    return %c0_i32, %c0_i32_0, %c0_i32_1 : i32, i32, i32
  }
  func.func @transform_17(%arg0: i32) -> (i32, i32, i32) {
    %c0_i32 = arith.constant 0 : i32
    %c0_i32_0 = arith.constant 0 : i32
    %c0_i32_1 = arith.constant 0 : i32
    %c0_i32_2 = arith.constant 0 : i32
    return %c0_i32, %c0_i32_0, %c0_i32_1 : i32, i32, i32
  }
  func.func @transform_18(%arg0: i32) -> (i32, i32, i32) {
    %c0_i32 = arith.constant 0 : i32
    %c0_i32_0 = arith.constant 0 : i32
    %c0_i32_1 = arith.constant 0 : i32
    %c0_i32_2 = arith.constant 0 : i32
    return %c0_i32, %c0_i32_0, %c0_i32_1 : i32, i32, i32
  }
  func.func @transform_19(%arg0: i32) -> (i32, i32, i32) {
    %c0_i32 = arith.constant 0 : i32
    %c0_i32_0 = arith.constant 0 : i32
    %c0_i32_1 = arith.constant 0 : i32
    %c0_i32_2 = arith.constant 0 : i32
    return %c0_i32, %c0_i32_0, %c0_i32_1 : i32, i32, i32
  }
  func.func @transform_20(%arg0: i32) -> (i32, i32, i32) {
    %c0_i32 = arith.constant 0 : i32
    %c0_i32_0 = arith.constant 0 : i32
    %c0_i32_1 = arith.constant 0 : i32
    %c0_i32_2 = arith.constant 0 : i32
    return %c0_i32, %c0_i32_0, %c0_i32_1 : i32, i32, i32
  }
  func.func @transform_21(%arg0: i32) -> (i32, i32, i32) {
    %c0_i32 = arith.constant 0 : i32
    %c0_i32_0 = arith.constant 0 : i32
    %c0_i32_1 = arith.constant 0 : i32
    %c0_i32_2 = arith.constant 0 : i32
    return %c0_i32, %c0_i32_0, %c0_i32_1 : i32, i32, i32
  }
  func.func @transform_22(%arg0: i32) -> (i32, i32, i32) {
    %c0_i32 = arith.constant 0 : i32
    %c0_i32_0 = arith.constant 0 : i32
    %c0_i32_1 = arith.constant 0 : i32
    %c0_i32_2 = arith.constant 0 : i32
    return %c0_i32, %c0_i32_0, %c0_i32_1 : i32, i32, i32
  }
  func.func @transform_23(%arg0: i32) -> (i32, i32, i32) {
    %c0_i32 = arith.constant 0 : i32
    %c0_i32_0 = arith.constant 0 : i32
    %c0_i32_1 = arith.constant 0 : i32
    %c0_i32_2 = arith.constant 0 : i32
    return %c0_i32, %c0_i32_0, %c0_i32_1 : i32, i32, i32
  }
  func.func @transform_24(%arg0: i32) -> (i32, i32) {
    %c0_i32 = arith.constant 0 : i32
    %c0_i32_0 = arith.constant 0 : i32
    %c0_i32_1 = arith.constant 0 : i32
    return %c0_i32, %c0_i32_0 : i32, i32
  }
  func.func @transform_25(%arg0: i32) -> (i32, i32) {
    %c0_i32 = arith.constant 0 : i32
    %c0_i32_0 = arith.constant 0 : i32
    %c0_i32_1 = arith.constant 0 : i32
    return %c0_i32, %c0_i32_0 : i32, i32
  }
  func.func @transform_26(%arg0: i32) -> (i32, i32, i32) {
    %c0_i32 = arith.constant 0 : i32
    %c0_i32_0 = arith.constant 0 : i32
    %c0_i32_1 = arith.constant 0 : i32
    return %arg0, %c0_i32, %c0_i32_0 : i32, i32, i32
  }
}

</mosaic_0001>

<llo_original>
// kernel: tpu_custom_call.1
$region0: #{tpu_custom_call.1}
  #allocation0 [shape = 'u32[]', space=smem, size = 0x4, offset = 0x4, fixed_abs, tag = 'smem constant byte address 0x4 - core index']
  #allocation1 [shape = 'u32[144,128]{1,0:T(1,128)}', space=vmem, size = 0x12000, scoped, tag = 'internal scratch']
  %s0 = inlined_call_operand.hbm [shape: f32[2,8,32], index: 0, kind: input, shape index: {}]
  %s1 = inlined_call_operand.vmem [shape: f32[2,12,32], index: 1, kind: input, shape index: {}]
  %s2 = inlined_call_operand.hbm [shape: f32[8,8], index: 2, kind: input, shape index: {}]
  %s3 = inlined_call_operand.hbm [shape: f32[8,12], index: 3, kind: input, shape index: {}]
  %s4 = inlined_call_operand.vmem [shape: f32[2,32,96], index: 4, kind: input, shape index: {}]
  %s5 = inlined_call_operand.vmem [shape: f32[2,1,96], index: 5, kind: input, shape index: {}]
  %s6 = inlined_call_operand.vmem [shape: f32[2,32,32], index: 6, kind: input, shape index: {}]
  %s7 = inlined_call_operand.hbm [shape: f32[2,1,32], index: 7, kind: input, shape index: {}]
  %s8 = inlined_call_operand.vmem [shape: f32[2,32,32], index: 8, kind: input, shape index: {}]
  %s9 = inlined_call_operand.hbm [shape: f32[2,1,32], index: 9, kind: input, shape index: {}]
  %s10 = inlined_call_operand.hbm [shape: f32[2,32,64], index: 10, kind: input, shape index: {}]
  %s11 = inlined_call_operand.hbm [shape: f32[2,1,64], index: 11, kind: input, shape index: {}]
  %s12 = inlined_call_operand.hbm [shape: f32[2,32,32], index: 12, kind: input, shape index: {}]
  %s13 = inlined_call_operand.hbm [shape: f32[2,1,32], index: 13, kind: input, shape index: {}]
  %s14 = inlined_call_operand.hbm [shape: f32[2,1,32], index: 14, kind: input, shape index: {}]
  %s15 = inlined_call_operand.hbm [shape: f32[2,1,32], index: 15, kind: input, shape index: {}]
  %s16 = inlined_call_operand.hbm [shape: f32[2,1,32], index: 16, kind: input, shape index: {}]
  %s17 = inlined_call_operand.hbm [shape: f32[2,1,32], index: 17, kind: input, shape index: {}]
  %s18 = inlined_call_operand.hbm [shape: f32[2,1,32], index: 18, kind: input, shape index: {}]
  %s19 = inlined_call_operand.hbm [shape: f32[2,1,32], index: 19, kind: input, shape index: {}]
  %s20 = inlined_call_operand.vmem [shape: f32[2,32,64], index: 20, kind: input, shape index: {}]
  %s21 = inlined_call_operand.vmem [shape: f32[2,1,64], index: 21, kind: input, shape index: {}]
  %s22 = inlined_call_operand.vmem [shape: f32[2,64,32], index: 22, kind: input, shape index: {}]
  %s23 = inlined_call_operand.vmem [shape: f32[2,1,32], index: 23, kind: input, shape index: {}]
  %s24 = inlined_call_operand.vmem [shape: f32[1,32], index: 24, kind: input, shape index: {}]
  %s25 = inlined_call_operand.vmem [shape: f32[1,32], index: 25, kind: input, shape index: {}]
  %s26 = inlined_call_operand.hbm [shape: f32[2,8,32], index: 26, kind: output, shape index: {}]
  %s27 = sld [smem:[#allocation0]]
  $region197: #{tpu_custom_call.1} parent=0
    _
  %s29 = ssub.s32 1, %s27
  %s30 = scalar_select 0, %s29, %s27
  $region1: #{tpu_custom_call.1} parent=0
    #allocation2 [shape = 'u8[8192]{0}', space=vmem, size = 0x2000, scoped, tag = 'input window, operand 0']
    #allocation3 [shape = 's32[2]{0}', space=sflag, size = 0x8, scoped, tag = 'scoped memory for tpu_custom_call.1']
    #allocation4 [shape = 's32[2]{0}', space=sflag, size = 0x8, scoped, tag = 'scoped memory for tpu_custom_call.1']
    #allocation5 [shape = 'u8[4096]{0}', space=vmem, size = 0x1000, scoped, tag = 'input window, operand 2, single buffered']
    #allocation6 [shape = 's32[1]{0}', space=sflag, size = 0x4, scoped, tag = 'scoped memory for tpu_custom_call.1']
    #allocation7 [shape = 'u8[4096]{0}', space=vmem, size = 0x1000, scoped, tag = 'input window, operand 3, single buffered']
    #allocation8 [shape = 'u8[1024]{0}', space=vmem, size = 0x400, scoped, tag = 'input window, operand 7, single buffered']
    #allocation9 [shape = 's32[1]{0}', space=sflag, size = 0x4, scoped, tag = 'scoped memory for tpu_custom_call.1']
    #allocation10 [shape = 'u8[1024]{0}', space=vmem, size = 0x400, scoped, tag = 'input window, operand 9, single buffered']
    #allocation11 [shape = 'u8[32768]{0}', space=vmem, size = 0x8000, scoped, tag = 'input window, operand 10, single buffered']
    #allocation12 [shape = 's32[1]{0}', space=sflag, size = 0x4, scoped, tag = 'scoped memory for tpu_custom_call.1']
    #allocation13 [shape = 'u8[1024]{0}', space=vmem, size = 0x400, scoped, tag = 'input window, operand 11, single buffered']
    #allocation14 [shape = 'u8[32768]{0}', space=vmem, size = 0x8000, scoped, tag = 'input window, operand 12, single buffered']
    #allocation15 [shape = 's32[1]{0}', space=sflag, size = 0x4, scoped, tag = 'scoped memory for tpu_custom_call.1']
    #allocation16 [shape = 'u8[1024]{0}', space=vmem, size = 0x400, scoped, tag = 'input window, operand 13, single buffered']
    #allocation17 [shape = 'u8[1024]{0}', space=vmem, size = 0x400, scoped, tag = 'input window, operand 14, single buffered']
    #allocation18 [shape = 's32[1]{0}', space=sflag, size = 0x4, scoped, tag = 'scoped memory for tpu_custom_call.1']
    #allocation19 [shape = 'u8[1024]{0}', space=vmem, size = 0x400, scoped, tag = 'input window, operand 15, single buffered']
    #allocation20 [shape = 'u8[1024]{0}', space=vmem, size = 0x400, scoped, tag = 'input window, operand 16, single buffered']
    #allocation21 [shape = 's32[1]{0}', space=sflag, size = 0x4, scoped, tag = 'scoped memory for tpu_custom_call.1']
    #allocation22 [shape = 'u8[1024]{0}', space=vmem, size = 0x400, scoped, tag = 'input window, operand 17, single buffered']
    #allocation23 [shape = 'u8[1024]{0}', space=vmem, size = 0x400, scoped, tag = 'input window, operand 18, single buffered']
    #allocation24 [shape = 's32[1]{0}', space=sflag, size = 0x4, scoped, tag = 'scoped memory for tpu_custom_call.1']
    #allocation25 [shape = 'u8[1024]{0}', space=vmem, size = 0x400, scoped, tag = 'input window, operand 19, single buffered']
    #allocation26 [shape = 'u8[8192]{0}', space=vmem, size = 0x2000, scoped, tag = 'output window, operand 0']
    %31 = vsyncpa [#allocation3], 0
    %s32 = scalar_lea.sflag [#allocation3], 1
    %33 = vsyncpa %s32, 0
    %34 = vsyncpa [#allocation6], 0
    %35 = vsyncpa [#allocation9], 0
    %36 = vsyncpa [#allocation12], 0
    %37 = vsyncpa [#allocation15], 0
    %38 = vsyncpa [#allocation18], 0
    %39 = vsyncpa [#allocation21], 0
    %40 = vsyncpa [#allocation24], 0
    %41 = vsyncpa [#allocation4], 0
    %s42 = scalar_lea.sflag [#allocation4], 1
    %43 = vsyncpa %s42, 0
    loop: start=0, step=1, limit=4
    $region2: #{tpu_custom_call.1} parent=1 // loop_pre_header
      _
    $region3: #{tpu_custom_call.1} parent=1 // loop_header
      %s45 = sphi 0, %s49
      %p46 = scmp.ge.s32.totalorder %s45, 4
      %s55 = sphi 0, %s57
      %s58 = sphi 0, %s55
      %s59 = sphi 0, %s58
      %s75 = sphi 0, %s59
      %s81 = sphi 0, %s83
      %s84 = sphi 0, %s81
      %s85 = sphi 0, %s84
      %s101 = sphi 0, %s85
      %s105 = sphi 0, %s105
      %s107 = sphi 0, %s105
      %s108 = sphi 0, %s107
      %s122 = sphi 0, %s108
      %s126 = sphi 0, %s126
      %s128 = sphi 0, %s126
      %s129 = sphi 0, %s128
      %s143 = sphi 0, %s129
      %s147 = sphi 0, %s147
      %s149 = sphi 0, %s147
      %s150 = sphi 0, %s149
      %s164 = sphi 0, %s150
      %s168 = sphi 0, %s168
      %s170 = sphi 0, %s168
      %s171 = sphi 0, %s170
      %s185 = sphi 0, %s171
      %s189 = sphi 0, %s189
      %s191 = sphi 0, %s189
      %s192 = sphi 0, %s191
      %s206 = sphi 0, %s192
      %s210 = sphi 0, %s210
      %s212 = sphi 0, %s210
      %s213 = sphi 0, %s212
      %s227 = sphi 0, %s213
      %s231 = sphi 0, %s231
      %s233 = sphi 0, %s231
      %s234 = sphi 0, %s233
      %s248 = sphi 0, %s234
      %s252 = sphi 0, %s252
      %s254 = sphi 0, %s252
      %s255 = sphi 0, %s254
      %s269 = sphi 0, %s255
      %s273 = sphi 0, %s273
      %s275 = sphi 0, %s273
      %s276 = sphi 0, %s275
      %s290 = sphi 0, %s276
      %s294 = sphi 0, %s294
      %s296 = sphi 0, %s294
      %s297 = sphi 0, %s296
      %s311 = sphi 0, %s297
      %s315 = sphi 0, %s315
      %s317 = sphi 0, %s315
      %s318 = sphi 0, %s317
      %s332 = sphi 0, %s318
      %s336 = sphi 0, %s336
      %s338 = sphi 0, %s336
      %s339 = sphi 0, %s338
      %s353 = sphi 0, %s339
      %s357 = sphi 0, %s357
      %s359 = sphi 0, %s357
      %s360 = sphi 0, %s359
      %s374 = sphi 0, %s360
      %s378 = sphi 0, %s378
      %s380 = sphi 0, %s378
      %s381 = sphi 0, %s380
      %s395 = sphi 0, %s381
      %s399 = sphi 0, %s399
      %s401 = sphi 0, %s399
      %s402 = sphi 0, %s401
      %s416 = sphi 0, %s402
      %s420 = sphi 0, %s420
      %s422 = sphi 0, %s420
      %s423 = sphi 0, %s422
      %s437 = sphi 0, %s423
      %s441 = sphi 0, %s441
      %s443 = sphi 0, %s441
      %s444 = sphi 0, %s443
      %s458 = sphi 0, %s444
      %s462 = sphi 0, %s462
      %s464 = sphi 0, %s462
      %s465 = sphi 0, %s464
      %s479 = sphi 0, %s465
      %s483 = sphi 0, %s483
      %s485 = sphi 0, %s483
      %s486 = sphi 0, %s485
      %s500 = sphi 0, %s486
      %s504 = sphi 0, %s504
      %s506 = sphi 0, %s504
      %s507 = sphi 0, %s506
      %s521 = sphi 0, %s507
      %s525 = sphi 0, %s525
      %s527 = sphi 0, %s525
      %s528 = sphi 0, %s527
      %s542 = sphi 0, %s528
      %s546 = sphi 0, %s546
      %s548 = sphi 0, %s546
      %s549 = sphi 0, %s548
      %s563 = sphi 0, %s549
      %s567 = sphi 0, %s567
      %s569 = sphi 0, %s567
      %s570 = sphi 0, %s569
      %s584 = sphi 0, %s570
      %s588 = sphi 0, %s588
      %s590 = sphi 0, %s588
      %s591 = sphi 0, %s590
      %s605 = sphi 0, %s591
      %s611 = sphi 0, %s613
      %s614 = sphi 0, %s611
      %s615 = sphi 0, %s614
      %s631 = sphi 0, %s615
    $region4: #{tpu_custom_call.1} parent=1 // loop_header_branch
      %48 = sbr.rel (%p46) target = $region8
    $region5: #{tpu_custom_call.1} parent=1 // loop_body
      %s50 = ssub.s32 %s45, 1
      %s51 = ssub.s32 %s45, 2
      %s52 = sadd.s32 %s45, 1
      %s53 = ssub.s32 %s45, %s52
      %p54 = scmp.eq.s32.totalorder %s53, 0
      %s56 = sadd.s32 %s55, 1
      %s57 = scalar_select %p54, %s55, %s56
      %p60 = pneg %p54
      %p61 = scmp.eq.s32.totalorder %s45, 1
      %p62 = por %p60, %p61
      %p63 = scmp.ne.s32.totalorder %s55, %s58
      %p64 = scmp.eq.s32.totalorder %s45, 0
      %p65 = por %p63, %p64
      %p66 = scmp.ne.s32.totalorder %s55, %s58
      %p67 = scmp.eq.s32.totalorder %s50, 1
      %p68 = por %p66, %p67
      %p69 = scmp.ne.s32.totalorder %s58, %s59
      %p70 = scmp.eq.s32.totalorder %s50, 0
      %p71 = por %p69, %p70
      %p72 = scmp.ne.s32.totalorder %s58, %s59
      %p73 = scmp.eq.s32.totalorder %s51, 1
      %p74 = por %p72, %p73
      %p76 = scmp.ne.s32.totalorder %s59, %s75
      %p77 = scmp.eq.s32.totalorder %s51, 0
      %p78 = por %p76, %p77
      %s79 = ssub.s32 %s45, %s52
      %p80 = scmp.eq.s32.totalorder %s79, 0
      %s82 = sadd.s32 %s81, 1
      %s83 = scalar_select %p80, %s81, %s82
      %p86 = pneg %p80
      %p87 = scmp.eq.s32.totalorder %s45, 1
      %p88 = por %p86, %p87
      %p89 = scmp.ne.s32.totalorder %s81, %s84
      %p90 = scmp.eq.s32.totalorder %s45, 0
      %p91 = por %p89, %p90
      %p92 = scmp.ne.s32.totalorder %s81, %s84
      %p93 = scmp.eq.s32.totalorder %s50, 1
      %p94 = por %p92, %p93
      %p95 = scmp.ne.s32.totalorder %s84, %s85
      %p96 = scmp.eq.s32.totalorder %s50, 0
      %p97 = por %p95, %p96
      %p98 = scmp.ne.s32.totalorder %s84, %s85
      %p99 = scmp.eq.s32.totalorder %s51, 1
      %p100 = por %p98, %p99
      %p102 = scmp.ne.s32.totalorder %s85, %s101
      %p103 = scmp.eq.s32.totalorder %s51, 0
      %p104 = por %p102, %p103
      %s106 = sadd.s32 %s105, 1
      %p109 = scmp.eq.s32.totalorder %s45, 1
      %p110 = scmp.ne.s32.totalorder %s105, %s107
      %p111 = scmp.eq.s32.totalorder %s45, 0
      %p112 = por %p110, %p111
      %p113 = scmp.ne.s32.totalorder %s105, %s107
      %p114 = scmp.eq.s32.totalorder %s50, 1
      %p115 = por %p113, %p114
      %p116 = scmp.ne.s32.totalorder %s107, %s108
      %p117 = scmp.eq.s32.totalorder %s50, 0
      %p118 = por %p116, %p117
      %p119 = scmp.ne.s32.totalorder %s107, %s108
      %p120 = scmp.eq.s32.totalorder %s51, 1
      %p121 = por %p119, %p120
      %p123 = scmp.ne.s32.totalorder %s108, %s122
      %p124 = scmp.eq.s32.totalorder %s51, 0
      %p125 = por %p123, %p124
      %s127 = sadd.s32 %s126, 1
      %p130 = scmp.eq.s32.totalorder %s45, 1
      %p131 = scmp.ne.s32.totalorder %s126, %s128
      %p132 = scmp.eq.s32.totalorder %s45, 0
      %p133 = por %p131, %p132
      %p134 = scmp.ne.s32.totalorder %s126, %s128
      %p135 = scmp.eq.s32.totalorder %s50, 1
      %p136 = por %p134, %p135
      %p137 = scmp.ne.s32.totalorder %s128, %s129
      %p138 = scmp.eq.s32.totalorder %s50, 0
      %p139 = por %p137, %p138
      %p140 = scmp.ne.s32.totalorder %s128, %s129
      %p141 = scmp.eq.s32.totalorder %s51, 1
      %p142 = por %p140, %p141
      %p144 = scmp.ne.s32.totalorder %s129, %s143
      %p145 = scmp.eq.s32.totalorder %s51, 0
      %p146 = por %p144, %p145
      %s148 = sadd.s32 %s147, 1
      %p151 = scmp.eq.s32.totalorder %s45, 1
      %p152 = scmp.ne.s32.totalorder %s147, %s149
      %p153 = scmp.eq.s32.totalorder %s45, 0
      %p154 = por %p152, %p153
      %p155 = scmp.ne.s32.totalorder %s147, %s149
      %p156 = scmp.eq.s32.totalorder %s50, 1
      %p157 = por %p155, %p156
      %p158 = scmp.ne.s32.totalorder %s149, %s150
      %p159 = scmp.eq.s32.totalorder %s50, 0
      %p160 = por %p158, %p159
      %p161 = scmp.ne.s32.totalorder %s149, %s150
      %p162 = scmp.eq.s32.totalorder %s51, 1
      %p163 = por %p161, %p162
      %p165 = scmp.ne.s32.totalorder %s150, %s164
      %p166 = scmp.eq.s32.totalorder %s51, 0
      %p167 = por %p165, %p166
      %s169 = sadd.s32 %s168, 1
      %p172 = scmp.eq.s32.totalorder %s45, 1
      %p173 = scmp.ne.s32.totalorder %s168, %s170
      %p174 = scmp.eq.s32.totalorder %s45, 0
      %p175 = por %p173, %p174
      %p176 = scmp.ne.s32.totalorder %s168, %s170
      %p177 = scmp.eq.s32.totalorder %s50, 1
      %p178 = por %p176, %p177
      %p179 = scmp.ne.s32.totalorder %s170, %s171
      %p180 = scmp.eq.s32.totalorder %s50, 0
      %p181 = por %p179, %p180
      %p182 = scmp.ne.s32.totalorder %s170, %s171
      %p183 = scmp.eq.s32.totalorder %s51, 1
      %p184 = por %p182, %p183
      %p186 = scmp.ne.s32.totalorder %s171, %s185
      %p187 = scmp.eq.s32.totalorder %s51, 0
      %p188 = por %p186, %p187
      %s190 = sadd.s32 %s189, 1
      %p193 = scmp.eq.s32.totalorder %s45, 1
      %p194 = scmp.ne.s32.totalorder %s189, %s191
      %p195 = scmp.eq.s32.totalorder %s45, 0
      %p196 = por %p194, %p195
      %p197 = scmp.ne.s32.totalorder %s189, %s191
      %p198 = scmp.eq.s32.totalorder %s50, 1
      %p199 = por %p197, %p198
      %p200 = scmp.ne.s32.totalorder %s191, %s192
      %p201 = scmp.eq.s32.totalorder %s50, 0
      %p202 = por %p200, %p201
      %p203 = scmp.ne.s32.totalorder %s191, %s192
      %p204 = scmp.eq.s32.totalorder %s51, 1
      %p205 = por %p203, %p204
      %p207 = scmp.ne.s32.totalorder %s192, %s206
      %p208 = scmp.eq.s32.totalorder %s51, 0
      %p209 = por %p207, %p208
      %s211 = sadd.s32 %s210, 1
      %p214 = scmp.eq.s32.totalorder %s45, 1
      %p215 = scmp.ne.s32.totalorder %s210, %s212
      %p216 = scmp.eq.s32.totalorder %s45, 0
      %p217 = por %p215, %p216
      %p218 = scmp.ne.s32.totalorder %s210, %s212
      %p219 = scmp.eq.s32.totalorder %s50, 1
      %p220 = por %p218, %p219
      %p221 = scmp.ne.s32.totalorder %s212, %s213
      %p222 = scmp.eq.s32.totalorder %s50, 0
      %p223 = por %p221, %p222
      %p224 = scmp.ne.s32.totalorder %s212, %s213
      %p225 = scmp.eq.s32.totalorder %s51, 1
      %p226 = por %p224, %p225
      %p228 = scmp.ne.s32.totalorder %s213, %s227
      %p229 = scmp.eq.s32.totalorder %s51, 0
      %p230 = por %p228, %p229
      %s232 = sadd.s32 %s231, 1
      %p235 = scmp.eq.s32.totalorder %s45, 1
      %p236 = scmp.ne.s32.totalorder %s231, %s233
      %p237 = scmp.eq.s32.totalorder %s45, 0
      %p238 = por %p236, %p237
      %p239 = scmp.ne.s32.totalorder %s231, %s233
      %p240 = scmp.eq.s32.totalorder %s50, 1
      %p241 = por %p239, %p240
      %p242 = scmp.ne.s32.totalorder %s233, %s234
      %p243 = scmp.eq.s32.totalorder %s50, 0
      %p244 = por %p242, %p243
      %p245 = scmp.ne.s32.totalorder %s233, %s234
      %p246 = scmp.eq.s32.totalorder %s51, 1
      %p247 = por %p245, %p246
      %p249 = scmp.ne.s32.totalorder %s234, %s248
      %p250 = scmp.eq.s32.totalorder %s51, 0
      %p251 = por %p249, %p250
      %s253 = sadd.s32 %s252, 1
      %p256 = scmp.eq.s32.totalorder %s45, 1
      %p257 = scmp.ne.s32.totalorder %s252, %s254
      %p258 = scmp.eq.s32.totalorder %s45, 0
      %p259 = por %p257, %p258
      %p260 = scmp.ne.s32.totalorder %s252, %s254
      %p261 = scmp.eq.s32.totalorder %s50, 1
      %p262 = por %p260, %p261
      %p263 = scmp.ne.s32.totalorder %s254, %s255
      %p264 = scmp.eq.s32.totalorder %s50, 0
      %p265 = por %p263, %p264
      %p266 = scmp.ne.s32.totalorder %s254, %s255
      %p267 = scmp.eq.s32.totalorder %s51, 1
      %p268 = por %p266, %p267
      %p270 = scmp.ne.s32.totalorder %s255, %s269
      %p271 = scmp.eq.s32.totalorder %s51, 0
      %p272 = por %p270, %p271
      %s274 = sadd.s32 %s273, 1
      %p277 = scmp.eq.s32.totalorder %s45, 1
      %p278 = scmp.ne.s32.totalorder %s273, %s275
      %p279 = scmp.eq.s32.totalorder %s45, 0
      %p280 = por %p278, %p279
      %p281 = scmp.ne.s32.totalorder %s273, %s275
      %p282 = scmp.eq.s32.totalorder %s50, 1
      %p283 = por %p281, %p282
      %p284 = scmp.ne.s32.totalorder %s275, %s276
      %p285 = scmp.eq.s32.totalorder %s50, 0
      %p286 = por %p284, %p285
      %p287 = scmp.ne.s32.totalorder %s275, %s276
      %p288 = scmp.eq.s32.totalorder %s51, 1
      %p289 = por %p287, %p288
      %p291 = scmp.ne.s32.totalorder %s276, %s290
      %p292 = scmp.eq.s32.totalorder %s51, 0
      %p293 = por %p291, %p292
      %s295 = sadd.s32 %s294, 1
      %p298 = scmp.eq.s32.totalorder %s45, 1
      %p299 = scmp.ne.s32.totalorder %s294, %s296
      %p300 = scmp.eq.s32.totalorder %s45, 0
      %p301 = por %p299, %p300
      %p302 = scmp.ne.s32.totalorder %s294, %s296
      %p303 = scmp.eq.s32.totalorder %s50, 1
      %p304 = por %p302, %p303
      %p305 = scmp.ne.s32.totalorder %s296, %s297
      %p306 = scmp.eq.s32.totalorder %s50, 0
      %p307 = por %p305, %p306
      %p308 = scmp.ne.s32.totalorder %s296, %s297
      %p309 = scmp.eq.s32.totalorder %s51, 1
      %p310 = por %p308, %p309
      %p312 = scmp.ne.s32.totalorder %s297, %s311
      %p313 = scmp.eq.s32.totalorder %s51, 0
      %p314 = por %p312, %p313
      %s316 = sadd.s32 %s315, 1
      %p319 = scmp.eq.s32.totalorder %s45, 1
      %p320 = scmp.ne.s32.totalorder %s315, %s317
      %p321 = scmp.eq.s32.totalorder %s45, 0
      %p322 = por %p320, %p321
      %p323 = scmp.ne.s32.totalorder %s315, %s317
      %p324 = scmp.eq.s32.totalorder %s50, 1
      %p325 = por %p323, %p324
      %p326 = scmp.ne.s32.totalorder %s317, %s318
      %p327 = scmp.eq.s32.totalorder %s50, 0
      %p328 = por %p326, %p327
      %p329 = scmp.ne.s32.totalorder %s317, %s318
      %p330 = scmp.eq.s32.totalorder %s51, 1
      %p331 = por %p329, %p330
      %p333 = scmp.ne.s32.totalorder %s318, %s332
      %p334 = scmp.eq.s32.totalorder %s51, 0
      %p335 = por %p333, %p334
      %s337 = sadd.s32 %s336, 1
      %p340 = scmp.eq.s32.totalorder %s45, 1
      %p341 = scmp.ne.s32.totalorder %s336, %s338
      %p342 = scmp.eq.s32.totalorder %s45, 0
      %p343 = por %p341, %p342
      %p344 = scmp.ne.s32.totalorder %s336, %s338
      %p345 = scmp.eq.s32.totalorder %s50, 1
      %p346 = por %p344, %p345
      %p347 = scmp.ne.s32.totalorder %s338, %s339
      %p348 = scmp.eq.s32.totalorder %s50, 0
      %p349 = por %p347, %p348
      %p350 = scmp.ne.s32.totalorder %s338, %s339
      %p351 = scmp.eq.s32.totalorder %s51, 1
      %p352 = por %p350, %p351
      %p354 = scmp.ne.s32.totalorder %s339, %s353
      %p355 = scmp.eq.s32.totalorder %s51, 0
      %p356 = por %p354, %p355
      %s358 = sadd.s32 %s357, 1
      %p361 = scmp.eq.s32.totalorder %s45, 1
      %p362 = scmp.ne.s32.totalorder %s357, %s359
      %p363 = scmp.eq.s32.totalorder %s45, 0
      %p364 = por %p362, %p363
      %p365 = scmp.ne.s32.totalorder %s357, %s359
      %p366 = scmp.eq.s32.totalorder %s50, 1
      %p367 = por %p365, %p366
      %p368 = scmp.ne.s32.totalorder %s359, %s360
      %p369 = scmp.eq.s32.totalorder %s50, 0
      %p370 = por %p368, %p369
      %p371 = scmp.ne.s32.totalorder %s359, %s360
      %p372 = scmp.eq.s32.totalorder %s51, 1
      %p373 = por %p371, %p372
      %p375 = scmp.ne.s32.totalorder %s360, %s374
      %p376 = scmp.eq.s32.totalorder %s51, 0
      %p377 = por %p375, %p376
      %s379 = sadd.s32 %s378, 1
      %p382 = scmp.eq.s32.totalorder %s45, 1
      %p383 = scmp.ne.s32.totalorder %s378, %s380
      %p384 = scmp.eq.s32.totalorder %s45, 0
      %p385 = por %p383, %p384
      %p386 = scmp.ne.s32.totalorder %s378, %s380
      %p387 = scmp.eq.s32.totalorder %s50, 1
      %p388 = por %p386, %p387
      %p389 = scmp.ne.s32.totalorder %s380, %s381
      %p390 = scmp.eq.s32.totalorder %s50, 0
      %p391 = por %p389, %p390
      %p392 = scmp.ne.s32.totalorder %s380, %s381
      %p393 = scmp.eq.s32.totalorder %s51, 1
      %p394 = por %p392, %p393
      %p396 = scmp.ne.s32.totalorder %s381, %s395
      %p397 = scmp.eq.s32.totalorder %s51, 0
      %p398 = por %p396, %p397
      %s400 = sadd.s32 %s399, 1
      %p403 = scmp.eq.s32.totalorder %s45, 1
      %p404 = scmp.ne.s32.totalorder %s399, %s401
      %p405 = scmp.eq.s32.totalorder %s45, 0
      %p406 = por %p404, %p405
      %p407 = scmp.ne.s32.totalorder %s399, %s401
      %p408 = scmp.eq.s32.totalorder %s50, 1
      %p409 = por %p407, %p408
      %p410 = scmp.ne.s32.totalorder %s401, %s402
      %p411 = scmp.eq.s32.totalorder %s50, 0
      %p412 = por %p410, %p411
      %p413 = scmp.ne.s32.totalorder %s401, %s402
      %p414 = scmp.eq.s32.totalorder %s51, 1
      %p415 = por %p413, %p414
      %p417 = scmp.ne.s32.totalorder %s402, %s416
      %p418 = scmp.eq.s32.totalorder %s51, 0
      %p419 = por %p417, %p418
      %s421 = sadd.s32 %s420, 1
      %p424 = scmp.eq.s32.totalorder %s45, 1
      %p425 = scmp.ne.s32.totalorder %s420, %s422
      %p426 = scmp.eq.s32.totalorder %s45, 0
      %p427 = por %p425, %p426
      %p428 = scmp.ne.s32.totalorder %s420, %s422
      %p429 = scmp.eq.s32.totalorder %s50, 1
      %p430 = por %p428, %p429
      %p431 = scmp.ne.s32.totalorder %s422, %s423
      %p432 = scmp.eq.s32.totalorder %s50, 0
      %p433 = por %p431, %p432
      %p434 = scmp.ne.s32.totalorder %s422, %s423
      %p435 = scmp.eq.s32.totalorder %s51, 1
      %p436 = por %p434, %p435
      %p438 = scmp.ne.s32.totalorder %s423, %s437
      %p439 = scmp.eq.s32.totalorder %s51, 0
      %p440 = por %p438, %p439
      %s442 = sadd.s32 %s441, 1
      %p445 = scmp.eq.s32.totalorder %s45, 1
      %p446 = scmp.ne.s32.totalorder %s441, %s443
      %p447 = scmp.eq.s32.totalorder %s45, 0
      %p448 = por %p446, %p447
      %p449 = scmp.ne.s32.totalorder %s441, %s443
      %p450 = scmp.eq.s32.totalorder %s50, 1
      %p451 = por %p449, %p450
      %p452 = scmp.ne.s32.totalorder %s443, %s444
      %p453 = scmp.eq.s32.totalorder %s50, 0
      %p454 = por %p452, %p453
      %p455 = scmp.ne.s32.totalorder %s443, %s444
      %p456 = scmp.eq.s32.totalorder %s51, 1
      %p457 = por %p455, %p456
      %p459 = scmp.ne.s32.totalorder %s444, %s458
      %p460 = scmp.eq.s32.totalorder %s51, 0
      %p461 = por %p459, %p460
      %s463 = sadd.s32 %s462, 1
      %p466 = scmp.eq.s32.totalorder %s45, 1
      %p467 = scmp.ne.s32.totalorder %s462, %s464
      %p468 = scmp.eq.s32.totalorder %s45, 0
      %p469 = por %p467, %p468
      %p470 = scmp.ne.s32.totalorder %s462, %s464
      %p471 = scmp.eq.s32.totalorder %s50, 1
      %p472 = por %p470, %p471
      %p473 = scmp.ne.s32.totalorder %s464, %s465
      %p474 = scmp.eq.s32.totalorder %s50, 0
      %p475 = por %p473, %p474
      %p476 = scmp.ne.s32.totalorder %s464, %s465
      %p477 = scmp.eq.s32.totalorder %s51, 1
      %p478 = por %p476, %p477
      %p480 = scmp.ne.s32.totalorder %s465, %s479
      %p481 = scmp.eq.s32.totalorder %s51, 0
      %p482 = por %p480, %p481
      %s484 = sadd.s32 %s483, 1
      %p487 = scmp.eq.s32.totalorder %s45, 1
      %p488 = scmp.ne.s32.totalorder %s483, %s485
      %p489 = scmp.eq.s32.totalorder %s45, 0
      %p490 = por %p488, %p489
      %p491 = scmp.ne.s32.totalorder %s483, %s485
      %p492 = scmp.eq.s32.totalorder %s50, 1
      %p493 = por %p491, %p492
      %p494 = scmp.ne.s32.totalorder %s485, %s486
      %p495 = scmp.eq.s32.totalorder %s50, 0
      %p496 = por %p494, %p495
      %p497 = scmp.ne.s32.totalorder %s485, %s486
      %p498 = scmp.eq.s32.totalorder %s51, 1
      %p499 = por %p497, %p498
      %p501 = scmp.ne.s32.totalorder %s486, %s500
      %p502 = scmp.eq.s32.totalorder %s51, 0
      %p503 = por %p501, %p502
      %s505 = sadd.s32 %s504, 1
      %p508 = scmp.eq.s32.totalorder %s45, 1
      %p509 = scmp.ne.s32.totalorder %s504, %s506
      %p510 = scmp.eq.s32.totalorder %s45, 0
      %p511 = por %p509, %p510
      %p512 = scmp.ne.s32.totalorder %s504, %s506
      %p513 = scmp.eq.s32.totalorder %s50, 1
      %p514 = por %p512, %p513
      %p515 = scmp.ne.s32.totalorder %s506, %s507
      %p516 = scmp.eq.s32.totalorder %s50, 0
      %p517 = por %p515, %p516
      %p518 = scmp.ne.s32.totalorder %s506, %s507
      %p519 = scmp.eq.s32.totalorder %s51, 1
      %p520 = por %p518, %p519
      %p522 = scmp.ne.s32.totalorder %s507, %s521
      %p523 = scmp.eq.s32.totalorder %s51, 0
      %p524 = por %p522, %p523
      %s526 = sadd.s32 %s525, 1
      %p529 = scmp.eq.s32.totalorder %s45, 1
      %p530 = scmp.ne.s32.totalorder %s525, %s527
      %p531 = scmp.eq.s32.totalorder %s45, 0
      %p532 = por %p530, %p531
      %p533 = scmp.ne.s32.totalorder %s525, %s527
      %p534 = scmp.eq.s32.totalorder %s50, 1
      %p535 = por %p533, %p534
      %p536 = scmp.ne.s32.totalorder %s527, %s528
      %p537 = scmp.eq.s32.totalorder %s50, 0
      %p538 = por %p536, %p537
      %p539 = scmp.ne.s32.totalorder %s527, %s528
      %p540 = scmp.eq.s32.totalorder %s51, 1
      %p541 = por %p539, %p540
      %p543 = scmp.ne.s32.totalorder %s528, %s542
      %p544 = scmp.eq.s32.totalorder %s51, 0
      %p545 = por %p543, %p544
      %s547 = sadd.s32 %s546, 1
      %p550 = scmp.eq.s32.totalorder %s45, 1
      %p551 = scmp.ne.s32.totalorder %s546, %s548
      %p552 = scmp.eq.s32.totalorder %s45, 0
      %p553 = por %p551, %p552
      %p554 = scmp.ne.s32.totalorder %s546, %s548
      %p555 = scmp.eq.s32.totalorder %s50, 1
      %p556 = por %p554, %p555
      %p557 = scmp.ne.s32.totalorder %s548, %s549
      %p558 = scmp.eq.s32.totalorder %s50, 0
      %p559 = por %p557, %p558
      %p560 = scmp.ne.s32.totalorder %s548, %s549
      %p561 = scmp.eq.s32.totalorder %s51, 1
      %p562 = por %p560, %p561
      %p564 = scmp.ne.s32.totalorder %s549, %s563
      %p565 = scmp.eq.s32.totalorder %s51, 0
      %p566 = por %p564, %p565
      %s568 = sadd.s32 %s567, 1
      %p571 = scmp.eq.s32.totalorder %s45, 1
      %p572 = scmp.ne.s32.totalorder %s567, %s569
      %p573 = scmp.eq.s32.totalorder %s45, 0
      %p574 = por %p572, %p573
      %p575 = scmp.ne.s32.totalorder %s567, %s569
      %p576 = scmp.eq.s32.totalorder %s50, 1
      %p577 = por %p575, %p576
      %p578 = scmp.ne.s32.totalorder %s569, %s570
      %p579 = scmp.eq.s32.totalorder %s50, 0
      %p580 = por %p578, %p579
      %p581 = scmp.ne.s32.totalorder %s569, %s570
      %p582 = scmp.eq.s32.totalorder %s51, 1
      %p583 = por %p581, %p582
      %p585 = scmp.ne.s32.totalorder %s570, %s584
      %p586 = scmp.eq.s32.totalorder %s51, 0
      %p587 = por %p585, %p586
      %s589 = sadd.s32 %s588, 1
      %p592 = scmp.eq.s32.totalorder %s45, 1
      %p593 = scmp.ne.s32.totalorder %s588, %s590
      %p594 = scmp.eq.s32.totalorder %s45, 0
      %p595 = por %p593, %p594
      %p596 = scmp.ne.s32.totalorder %s588, %s590
      %p597 = scmp.eq.s32.totalorder %s50, 1
      %p598 = por %p596, %p597
      %p599 = scmp.ne.s32.totalorder %s590, %s591
      %p600 = scmp.eq.s32.totalorder %s50, 0
      %p601 = por %p599, %p600
      %p602 = scmp.ne.s32.totalorder %s590, %s591
      %p603 = scmp.eq.s32.totalorder %s51, 1
      %p604 = por %p602, %p603
      %p606 = scmp.ne.s32.totalorder %s591, %s605
      %p607 = scmp.eq.s32.totalorder %s51, 0
      %p608 = por %p606, %p607
      %s609 = ssub.s32 %s45, %s52
      %p610 = scmp.eq.s32.totalorder %s609, 0
      %s612 = sadd.s32 %s611, 1
      %s613 = scalar_select %p610, %s611, %s612
      %p616 = pneg %p610
      %p617 = scmp.eq.s32.totalorder %s45, 1
      %p618 = por %p616, %p617
      %p619 = scmp.ne.s32.totalorder %s611, %s614
      %p620 = scmp.eq.s32.totalorder %s45, 0
      %p621 = por %p619, %p620
      %p622 = scmp.ne.s32.totalorder %s611, %s614
      %p623 = scmp.eq.s32.totalorder %s50, 1
      %p624 = por %p622, %p623
      %p625 = scmp.ne.s32.totalorder %s614, %s615
      %p626 = scmp.eq.s32.totalorder %s50, 0
      %p627 = por %p625, %p626
      %p628 = scmp.ne.s32.totalorder %s614, %s615
      %p629 = scmp.eq.s32.totalorder %s51, 1
      %p630 = por %p628, %p629
      %p632 = scmp.ne.s32.totalorder %s615, %s631
      %p633 = scmp.eq.s32.totalorder %s51, 0
      %p634 = por %p632, %p633
      %p635 = scmp.le.s32.totalorder 1, %s45
      %p636 = scmp.lt.s32.totalorder %s45, 3
      %p637 = pnand %p635, %p636
      %p638 = pneg %p637
      // Predicated region
      $region9: #{tpu_custom_call.1} parent=5 // pred_check
        _
      $region10: #{tpu_custom_call.1} parent=5 // pred_check_branch
        %640 = sbr.rel (%p637) target = $region12
      $region11: #{tpu_custom_call.1} parent=5 // pred_region
        %s641 = ssub.s32 %s45, 1
        // Predicated region
        $region13: #{tpu_custom_call.1} parent=11 // pred_check
          %p642 = pneg %p118
        $region14: #{tpu_custom_call.1} parent=11 // pred_check_branch
          %644 = sbr.rel (%p642) target = $region16
        $region15: #{tpu_custom_call.1} parent=11 // pred_region
          %s646 = ssub.s32 128, 128
          %647 = vsyncadd [#allocation6], %s646
          %s649 = sshll.u32 [#allocation5], 4
          %s650 = int_to_ptr.vmem [resolvable:$true] %s649
          %652 = dma.hbm_to_vmem [thread:$0]  %s2, 128, %s650, [#allocation6]
        $region16: #{tpu_custom_call.1} parent=11 // pred_fallthru
          _
        // Predicated region
        $region17: #{tpu_custom_call.1} parent=11 // pred_check
          %p653 = pneg %p139
        $region18: #{tpu_custom_call.1} parent=11 // pred_check_branch
          %655 = sbr.rel (%p653) target = $region20
        $region19: #{tpu_custom_call.1} parent=11 // pred_region
          %s657 = ssub.s32 128, 128
          %658 = vsyncadd [#allocation6], %s657
          %s660 = sshll.u32 [#allocation7], 4
          %s661 = int_to_ptr.vmem [resolvable:$true] %s660
          %663 = dma.hbm_to_vmem [thread:$0]  %s3, 128, %s661, [#allocation6]
        $region20: #{tpu_custom_call.1} parent=11 // pred_fallthru
          _
        // Predicated region
        $region21: #{tpu_custom_call.1} parent=11 // pred_check
          %p664 = pneg %p160
        $region22: #{tpu_custom_call.1} parent=11 // pred_check_branch
          %666 = sbr.rel (%p664) target = $region24
        $region23: #{tpu_custom_call.1} parent=11 // pred_region
          _
        $region24: #{tpu_custom_call.1} parent=11 // pred_fallthru
          _
        // Predicated region
        $region25: #{tpu_custom_call.1} parent=11 // pred_check
          %p667 = pneg %p181
        $region26: #{tpu_custom_call.1} parent=11 // pred_check_branch
          %669 = sbr.rel (%p667) target = $region28
        $region27: #{tpu_custom_call.1} parent=11 // pred_region
          _
        $region28: #{tpu_custom_call.1} parent=11 // pred_fallthru
          _
        // Predicated region
        $region29: #{tpu_custom_call.1} parent=11 // pred_check
          %p670 = pneg %p202
        $region30: #{tpu_custom_call.1} parent=11 // pred_check_branch
          %672 = sbr.rel (%p670) target = $region32
        $region31: #{tpu_custom_call.1} parent=11 // pred_region
          _
        $region32: #{tpu_custom_call.1} parent=11 // pred_fallthru
          _
        // Predicated region
        $region33: #{tpu_custom_call.1} parent=11 // pred_check
          %p673 = pneg %p223
        $region34: #{tpu_custom_call.1} parent=11 // pred_check_branch
          %675 = sbr.rel (%p673) target = $region36
        $region35: #{tpu_custom_call.1} parent=11 // pred_region
          %s677 = ssub.s32 32, 32
          %678 = vsyncadd [#allocation9], %s677
          %s679 = sshll.u32 [#allocation8], 4
          %s680 = int_to_ptr.vmem [resolvable:$true] %s679
          %685 = dma.hbm_to_vmem [thread:$0]  %s7, 32, %s680, [#allocation9], 16, 16, 1
        $region36: #{tpu_custom_call.1} parent=11 // pred_fallthru
          _
        // Predicated region
        $region37: #{tpu_custom_call.1} parent=11 // pred_check
          %p686 = pneg %p244
        $region38: #{tpu_custom_call.1} parent=11 // pred_check_branch
          %688 = sbr.rel (%p686) target = $region40
        $region39: #{tpu_custom_call.1} parent=11 // pred_region
          _
        $region40: #{tpu_custom_call.1} parent=11 // pred_fallthru
          _
        // Predicated region
        $region41: #{tpu_custom_call.1} parent=11 // pred_check
          %p689 = pneg %p265
        $region42: #{tpu_custom_call.1} parent=11 // pred_check_branch
          %691 = sbr.rel (%p689) target = $region44
        $region43: #{tpu_custom_call.1} parent=11 // pred_region
          %s693 = ssub.s32 32, 32
          %694 = vsyncadd [#allocation9], %s693
          %s695 = sshll.u32 [#allocation10], 4
          %s696 = int_to_ptr.vmem [resolvable:$true] %s695
          %701 = dma.hbm_to_vmem [thread:$0]  %s9, 32, %s696, [#allocation9], 16, 16, 1
        $region44: #{tpu_custom_call.1} parent=11 // pred_fallthru
          _
        // Predicated region
        $region45: #{tpu_custom_call.1} parent=11 // pred_check
          %p702 = pneg %p286
        $region46: #{tpu_custom_call.1} parent=11 // pred_check_branch
          %704 = sbr.rel (%p702) target = $region48
        $region47: #{tpu_custom_call.1} parent=11 // pred_region
          %s706 = ssub.s32 1024, 1024
          %707 = vsyncadd [#allocation12], %s706
          %s708 = sshll.u32 [#allocation11], 4
          %s709 = int_to_ptr.vmem [resolvable:$true] %s708
          %714 = dma.hbm_to_vmem [thread:$0]  %s10, 1024, %s709, [#allocation12], 128, 128, 8
        $region48: #{tpu_custom_call.1} parent=11 // pred_fallthru
          _
        // Predicated region
        $region49: #{tpu_custom_call.1} parent=11 // pred_check
          %p715 = pneg %p307
        $region50: #{tpu_custom_call.1} parent=11 // pred_check_branch
          %717 = sbr.rel (%p715) target = $region52
        $region51: #{tpu_custom_call.1} parent=11 // pred_region
          %s719 = ssub.s32 32, 32
          %720 = vsyncadd [#allocation12], %s719
          %s721 = sshll.u32 [#allocation13], 4
          %s722 = int_to_ptr.vmem [resolvable:$true] %s721
          %727 = dma.hbm_to_vmem [thread:$0]  %s11, 32, %s722, [#allocation12], 16, 16, 1
        $region52: #{tpu_custom_call.1} parent=11 // pred_fallthru
          _
        // Predicated region
        $region53: #{tpu_custom_call.1} parent=11 // pred_check
          %p728 = pneg %p328
        $region54: #{tpu_custom_call.1} parent=11 // pred_check_branch
          %730 = sbr.rel (%p728) target = $region56
        $region55: #{tpu_custom_call.1} parent=11 // pred_region
          %s732 = ssub.s32 1024, 1024
          %733 = vsyncadd [#allocation15], %s732
          %s734 = sshll.u32 [#allocation14], 4
          %s735 = int_to_ptr.vmem [resolvable:$true] %s734
          %740 = dma.hbm_to_vmem [thread:$0]  %s12, 1024, %s735, [#allocation15], 128, 128, 8
        $region56: #{tpu_custom_call.1} parent=11 // pred_fallthru
          _
        // Predicated region
        $region57: #{tpu_custom_call.1} parent=11 // pred_check
          %p741 = pneg %p349
        $region58: #{tpu_custom_call.1} parent=11 // pred_check_branch
          %743 = sbr.rel (%p741) target = $region60
        $region59: #{tpu_custom_call.1} parent=11 // pred_region
          %s745 = ssub.s32 32, 32
          %746 = vsyncadd [#allocation15], %s745
          %s747 = sshll.u32 [#allocation16], 4
          %s748 = int_to_ptr.vmem [resolvable:$true] %s747
          %753 = dma.hbm_to_vmem [thread:$0]  %s13, 32, %s748, [#allocation15], 16, 16, 1
        $region60: #{tpu_custom_call.1} parent=11 // pred_fallthru
          _
        // Predicated region
        $region61: #{tpu_custom_call.1} parent=11 // pred_check
          %p754 = pneg %p370
        $region62: #{tpu_custom_call.1} parent=11 // pred_check_branch
          %756 = sbr.rel (%p754) target = $region64
        $region63: #{tpu_custom_call.1} parent=11 // pred_region
          %s758 = ssub.s32 32, 32
          %759 = vsyncadd [#allocation18], %s758
          %s760 = sshll.u32 [#allocation17], 4
          %s761 = int_to_ptr.vmem [resolvable:$true] %s760
          %766 = dma.hbm_to_vmem [thread:$0]  %s14, 32, %s761, [#allocation18], 16, 16, 1
        $region64: #{tpu_custom_call.1} parent=11 // pred_fallthru
          _
        // Predicated region
        $region65: #{tpu_custom_call.1} parent=11 // pred_check
          %p767 = pneg %p391
        $region66: #{tpu_custom_call.1} parent=11 // pred_check_branch
          %769 = sbr.rel (%p767) target = $region68
        $region67: #{tpu_custom_call.1} parent=11 // pred_region
          %s771 = ssub.s32 32, 32
          %772 = vsyncadd [#allocation18], %s771
          %s773 = sshll.u32 [#allocation19], 4
          %s774 = int_to_ptr.vmem [resolvable:$true] %s773
          %779 = dma.hbm_to_vmem [thread:$0]  %s15, 32, %s774, [#allocation18], 16, 16, 1
        $region68: #{tpu_custom_call.1} parent=11 // pred_fallthru
          _
        // Predicated region
        $region69: #{tpu_custom_call.1} parent=11 // pred_check
          %p780 = pneg %p412
        $region70: #{tpu_custom_call.1} parent=11 // pred_check_branch
          %782 = sbr.rel (%p780) target = $region72
        $region71: #{tpu_custom_call.1} parent=11 // pred_region
          %s784 = ssub.s32 32, 32
          %785 = vsyncadd [#allocation21], %s784
          %s786 = sshll.u32 [#allocation20], 4
          %s787 = int_to_ptr.vmem [resolvable:$true] %s786
          %792 = dma.hbm_to_vmem [thread:$0]  %s16, 32, %s787, [#allocation21], 16, 16, 1
        $region72: #{tpu_custom_call.1} parent=11 // pred_fallthru
          _
        // Predicated region
        $region73: #{tpu_custom_call.1} parent=11 // pred_check
          %p793 = pneg %p433
        $region74: #{tpu_custom_call.1} parent=11 // pred_check_branch
          %795 = sbr.rel (%p793) target = $region76
        $region75: #{tpu_custom_call.1} parent=11 // pred_region
          %s797 = ssub.s32 32, 32
          %798 = vsyncadd [#allocation21], %s797
          %s799 = sshll.u32 [#allocation22], 4
          %s800 = int_to_ptr.vmem [resolvable:$true] %s799
          %805 = dma.hbm_to_vmem [thread:$0]  %s17, 32, %s800, [#allocation21], 16, 16, 1
        $region76: #{tpu_custom_call.1} parent=11 // pred_fallthru
          _
        // Predicated region
        $region77: #{tpu_custom_call.1} parent=11 // pred_check
          %p806 = pneg %p454
        $region78: #{tpu_custom_call.1} parent=11 // pred_check_branch
          %808 = sbr.rel (%p806) target = $region80
        $region79: #{tpu_custom_call.1} parent=11 // pred_region
          %s810 = ssub.s32 32, 32
          %811 = vsyncadd [#allocation24], %s810
          %s812 = sshll.u32 [#allocation23], 4
          %s813 = int_to_ptr.vmem [resolvable:$true] %s812
          %818 = dma.hbm_to_vmem [thread:$0]  %s18, 32, %s813, [#allocation24], 16, 16, 1
        $region80: #{tpu_custom_call.1} parent=11 // pred_fallthru
          _
        // Predicated region
        $region81: #{tpu_custom_call.1} parent=11 // pred_check
          %p819 = pneg %p475
        $region82: #{tpu_custom_call.1} parent=11 // pred_check_branch
          %821 = sbr.rel (%p819) target = $region84
        $region83: #{tpu_custom_call.1} parent=11 // pred_region
          %s823 = ssub.s32 32, 32
          %824 = vsyncadd [#allocation24], %s823
          %s825 = sshll.u32 [#allocation25], 4
          %s826 = int_to_ptr.vmem [resolvable:$true] %s825
          %831 = dma.hbm_to_vmem [thread:$0]  %s19, 32, %s826, [#allocation24], 16, 16, 1
        $region84: #{tpu_custom_call.1} parent=11 // pred_fallthru
          _
        // Predicated region
        $region85: #{tpu_custom_call.1} parent=11 // pred_check
          %p832 = pneg %p496
        $region86: #{tpu_custom_call.1} parent=11 // pred_check_branch
          %834 = sbr.rel (%p832) target = $region88
        $region87: #{tpu_custom_call.1} parent=11 // pred_region
          _
        $region88: #{tpu_custom_call.1} parent=11 // pred_fallthru
          _
        // Predicated region
        $region89: #{tpu_custom_call.1} parent=11 // pred_check
          %p835 = pneg %p517
        $region90: #{tpu_custom_call.1} parent=11 // pred_check_branch
          %837 = sbr.rel (%p835) target = $region92
        $region91: #{tpu_custom_call.1} parent=11 // pred_region
          _
        $region92: #{tpu_custom_call.1} parent=11 // pred_fallthru
          _
        // Predicated region
        $region93: #{tpu_custom_call.1} parent=11 // pred_check
          %p838 = pneg %p538
        $region94: #{tpu_custom_call.1} parent=11 // pred_check_branch
          %840 = sbr.rel (%p838) target = $region96
        $region95: #{tpu_custom_call.1} parent=11 // pred_region
          _
        $region96: #{tpu_custom_call.1} parent=11 // pred_fallthru
          _
        // Predicated region
        $region97: #{tpu_custom_call.1} parent=11 // pred_check
          %p841 = pneg %p559
        $region98: #{tpu_custom_call.1} parent=11 // pred_check_branch
          %843 = sbr.rel (%p841) target = $region100
        $region99: #{tpu_custom_call.1} parent=11 // pred_region
          _
        $region100: #{tpu_custom_call.1} parent=11 // pred_fallthru
          _
        // Predicated region
        $region101: #{tpu_custom_call.1} parent=11 // pred_check
          %p844 = pneg %p580
        $region102: #{tpu_custom_call.1} parent=11 // pred_check_branch
          %846 = sbr.rel (%p844) target = $region104
        $region103: #{tpu_custom_call.1} parent=11 // pred_region
          _
        $region104: #{tpu_custom_call.1} parent=11 // pred_fallthru
          _
        // Predicated region
        $region105: #{tpu_custom_call.1} parent=11 // pred_check
          %p847 = pneg %p601
        $region106: #{tpu_custom_call.1} parent=11 // pred_check_branch
          %849 = sbr.rel (%p847) target = $region108
        $region107: #{tpu_custom_call.1} parent=11 // pred_region
          _
        $region108: #{tpu_custom_call.1} parent=11 // pred_fallthru
          _
      $region12: #{tpu_custom_call.1} parent=5 // pred_fallthru
        _
      %p850 = scmp.lt.s32.totalorder %s45, 2
      // Predicated region
      $region109: #{tpu_custom_call.1} parent=5 // pred_check
        %p851 = pneg %p850
      $region110: #{tpu_custom_call.1} parent=5 // pred_check_branch
        %853 = sbr.rel (%p851) target = $region112
      $region111: #{tpu_custom_call.1} parent=5 // pred_region
        // Predicated region
        $region113: #{tpu_custom_call.1} parent=111 // pred_check
          %p854 = pneg %p65
        $region114: #{tpu_custom_call.1} parent=111 // pred_check_branch
          %856 = sbr.rel (%p854) target = $region116
        $region115: #{tpu_custom_call.1} parent=111 // pred_region
          %s857 = sand.u32 %s55, 1
          %s858 = scalar_lea.sflag [#allocation3], %s857
          %s859 = sand.u32 %s55, 1
          %s860 = smul.addr %s859, 8
          %s861 = scalar_lea.vmem [#allocation2], %s860
          %s863 = ssub.s32 128, 128
          %864 = vsyncadd %s858, %s863
          %s865 = smul.addr %s45, 128
          %s866 = scalar_lea.hbm %s0, %s865
          %s868 = sshll.u32 %s861, 4
          %s869 = int_to_ptr.vmem [resolvable:$true] %s868
          %871 = dma.hbm_to_vmem [thread:$0]  %s866, 128, %s869, %s858
        $region116: #{tpu_custom_call.1} parent=111 // pred_fallthru
          _
        // Predicated region
        $region117: #{tpu_custom_call.1} parent=111 // pred_check
          %p872 = pneg %p91
        $region118: #{tpu_custom_call.1} parent=111 // pred_check_branch
          %874 = sbr.rel (%p872) target = $region120
        $region119: #{tpu_custom_call.1} parent=111 // pred_region
          %p875 = scmp.lt.s32.totalorder %s45, 1
          %s876 = scalar_select %p875, %s45, 1
          %s877 = smul.addr %s876, 2
          %s878 = smul.addr %s877, 8
          %s879 = scalar_lea.vmem %s1, %s878
        $region120: #{tpu_custom_call.1} parent=111 // pred_fallthru
          _
      $region112: #{tpu_custom_call.1} parent=5 // pred_fallthru
        _
      %p880 = scmp.le.s32.totalorder 1, %s45
      %p881 = scmp.lt.s32.totalorder %s45, 3
      %p882 = pnand %p880, %p881
      %p883 = pneg %p882
      // Predicated region
      $region121: #{tpu_custom_call.1} parent=5 // pred_check
        _
      $region122: #{tpu_custom_call.1} parent=5 // pred_check_branch
        %885 = sbr.rel (%p882) target = $region124
      $region123: #{tpu_custom_call.1} parent=5 // pred_region
        %s886 = ssub.s32 %s45, 1
        %s887 = sand.u32 %s58, 1
        %s888 = scalar_lea.sflag [#allocation3], %s887
        %s889 = sand.u32 %s58, 1
        %s890 = smul.addr %s889, 8
        %s891 = scalar_lea.vmem [#allocation2], %s890
        // Predicated region
        $region125: #{tpu_custom_call.1} parent=123 // pred_check
          %p892 = pneg %p71
        $region126: #{tpu_custom_call.1} parent=123 // pred_check_branch
          %894 = sbr.rel (%p892) target = $region128
        $region127: #{tpu_custom_call.1} parent=123 // pred_region
          %895 = dma.done %s888, 128
        $region128: #{tpu_custom_call.1} parent=123 // pred_fallthru
          _
        // Predicated region
        $region129: #{tpu_custom_call.1} parent=123 // pred_check
          %p896 = pneg %p118
        $region130: #{tpu_custom_call.1} parent=123 // pred_check_branch
          %898 = sbr.rel (%p896) target = $region132
        $region131: #{tpu_custom_call.1} parent=123 // pred_region
          %899 = dma.done [#allocation6], 128
        $region132: #{tpu_custom_call.1} parent=123 // pred_fallthru
          _
        // Predicated region
        $region133: #{tpu_custom_call.1} parent=123 // pred_check
          %p900 = pneg %p139
        $region134: #{tpu_custom_call.1} parent=123 // pred_check_branch
          %902 = sbr.rel (%p900) target = $region136
        $region135: #{tpu_custom_call.1} parent=123 // pred_region
          %903 = dma.done [#allocation6], 128
        $region136: #{tpu_custom_call.1} parent=123 // pred_fallthru
          _
        // Predicated region
        $region137: #{tpu_custom_call.1} parent=123 // pred_check
          %p904 = pneg %p223
        $region138: #{tpu_custom_call.1} parent=123 // pred_check_branch
          %906 = sbr.rel (%p904) target = $region140
        $region139: #{tpu_custom_call.1} parent=123 // pred_region
          %907 = dma.done [#allocation9], 32
        $region140: #{tpu_custom_call.1} parent=123 // pred_fallthru
          _
        // Predicated region
        $region141: #{tpu_custom_call.1} parent=123 // pred_check
          %p908 = pneg %p265
        $region142: #{tpu_custom_call.1} parent=123 // pred_check_branch
          %910 = sbr.rel (%p908) target = $region144
        $region143: #{tpu_custom_call.1} parent=123 // pred_region
          %911 = dma.done [#allocation9], 32
        $region144: #{tpu_custom_call.1} parent=123 // pred_fallthru
          _
        // Predicated region
        $region145: #{tpu_custom_call.1} parent=123 // pred_check
          %p912 = pneg %p286
        $region146: #{tpu_custom_call.1} parent=123 // pred_check_branch
          %914 = sbr.rel (%p912) target = $region148
        $region147: #{tpu_custom_call.1} parent=123 // pred_region
          %915 = dma.done [#allocation12], 1024
        $region148: #{tpu_custom_call.1} parent=123 // pred_fallthru
          _
        // Predicated region
        $region149: #{tpu_custom_call.1} parent=123 // pred_check
          %p916 = pneg %p307
        $region150: #{tpu_custom_call.1} parent=123 // pred_check_branch
          %918 = sbr.rel (%p916) target = $region152
        $region151: #{tpu_custom_call.1} parent=123 // pred_region
          %919 = dma.done [#allocation12], 32
        $region152: #{tpu_custom_call.1} parent=123 // pred_fallthru
          _
        // Predicated region
        $region153: #{tpu_custom_call.1} parent=123 // pred_check
          %p920 = pneg %p328
        $region154: #{tpu_custom_call.1} parent=123 // pred_check_branch
          %922 = sbr.rel (%p920) target = $region156
        $region155: #{tpu_custom_call.1} parent=123 // pred_region
          %923 = dma.done [#allocation15], 1024
        $region156: #{tpu_custom_call.1} parent=123 // pred_fallthru
          _
        // Predicated region
        $region157: #{tpu_custom_call.1} parent=123 // pred_check
          %p924 = pneg %p349
        $region158: #{tpu_custom_call.1} parent=123 // pred_check_branch
          %926 = sbr.rel (%p924) target = $region160
        $region159: #{tpu_custom_call.1} parent=123 // pred_region
          %927 = dma.done [#allocation15], 32
        $region160: #{tpu_custom_call.1} parent=123 // pred_fallthru
          _
        // Predicated region
        $region161: #{tpu_custom_call.1} parent=123 // pred_check
          %p928 = pneg %p370
        $region162: #{tpu_custom_call.1} parent=123 // pred_check_branch
          %930 = sbr.rel (%p928) target = $region164
        $region163: #{tpu_custom_call.1} parent=123 // pred_region
          %931 = dma.done [#allocation18], 32
        $region164: #{tpu_custom_call.1} parent=123 // pred_fallthru
          _
        // Predicated region
        $region165: #{tpu_custom_call.1} parent=123 // pred_check
          %p932 = pneg %p391
        $region166: #{tpu_custom_call.1} parent=123 // pred_check_branch
          %934 = sbr.rel (%p932) target = $region168
        $region167: #{tpu_custom_call.1} parent=123 // pred_region
          %935 = dma.done [#allocation18], 32
        $region168: #{tpu_custom_call.1} parent=123 // pred_fallthru
          _
        // Predicated region
        $region169: #{tpu_custom_call.1} parent=123 // pred_check
          %p936 = pneg %p412
        $region170: #{tpu_custom_call.1} parent=123 // pred_check_branch
          %938 = sbr.rel (%p936) target = $region172
        $region171: #{tpu_custom_call.1} parent=123 // pred_region
          %939 = dma.done [#allocation21], 32
        $region172: #{tpu_custom_call.1} parent=123 // pred_fallthru
          _
        // Predicated region
        $region173: #{tpu_custom_call.1} parent=123 // pred_check
          %p940 = pneg %p433
        $region174: #{tpu_custom_call.1} parent=123 // pred_check_branch
          %942 = sbr.rel (%p940) target = $region176
        $region175: #{tpu_custom_call.1} parent=123 // pred_region
          %943 = dma.done [#allocation21], 32
        $region176: #{tpu_custom_call.1} parent=123 // pred_fallthru
          _
        // Predicated region
        $region177: #{tpu_custom_call.1} parent=123 // pred_check
          %p944 = pneg %p454
        $region178: #{tpu_custom_call.1} parent=123 // pred_check_branch
          %946 = sbr.rel (%p944) target = $region180
        $region179: #{tpu_custom_call.1} parent=123 // pred_region
          %947 = dma.done [#allocation24], 32
        $region180: #{tpu_custom_call.1} parent=123 // pred_fallthru
          _
        // Predicated region
        $region181: #{tpu_custom_call.1} parent=123 // pred_check
          %p948 = pneg %p475
        $region182: #{tpu_custom_call.1} parent=123 // pred_check_branch
          %950 = sbr.rel (%p948) target = $region184
        $region183: #{tpu_custom_call.1} parent=123 // pred_region
          %951 = dma.done [#allocation24], 32
        $region184: #{tpu_custom_call.1} parent=123 // pred_fallthru
          _
        %s952 = sand.u32 %s58, 1
        %s953 = scalar_lea.sflag [#allocation3], %s952
        %s954 = sand.u32 %s58, 1
        %s955 = smul.addr %s954, 8
        %s956 = scalar_lea.vmem [#allocation2], %s955
        %p957 = pneg %p71
        %p958 = pneg %p68
        %p959 = scmp.lt.s32.totalorder %s50, 1
        %s960 = scalar_select %p959, %s50, 1
        %s961 = smul.addr %s960, 2
        %s962 = smul.addr %s961, 8
        %s963 = scalar_lea.vmem %s1, %s962
        %p964 = pneg %p97
        %p965 = pneg %p94
        %p966 = pneg %p118
        %p967 = pneg %p115
        %p968 = pneg %p139
        %p969 = pneg %p136
        %p970 = pneg %p160
        %p971 = pneg %p157
        %p972 = pneg %p181
        %p973 = pneg %p178
        %p974 = pneg %p202
        %p975 = pneg %p199
        %p976 = pneg %p223
        %p977 = pneg %p220
        %p978 = pneg %p244
        %p979 = pneg %p241
        %p980 = pneg %p265
        %p981 = pneg %p262
        %p982 = pneg %p286
        %p983 = pneg %p283
        %p984 = pneg %p307
        %p985 = pneg %p304
        %p986 = pneg %p328
        %p987 = pneg %p325
        %p988 = pneg %p349
        %p989 = pneg %p346
        %p990 = pneg %p370
        %p991 = pneg %p367
        %p992 = pneg %p391
        %p993 = pneg %p388
        %p994 = pneg %p412
        %p995 = pneg %p409
        %p996 = pneg %p433
        %p997 = pneg %p430
        %p998 = pneg %p454
        %p999 = pneg %p451
        %p1000 = pneg %p475
        %p1001 = pneg %p472
        %p1002 = pneg %p496
        %p1003 = pneg %p493
        %p1004 = pneg %p517
        %p1005 = pneg %p514
        %p1006 = pneg %p538
        %p1007 = pneg %p535
        %p1008 = pneg %p559
        %p1009 = pneg %p556
        %p1010 = pneg %p580
        %p1011 = pneg %p577
        %p1012 = pneg %p601
        %p1013 = pneg %p598
        %p1014 = pneg %p627
        %p1015 = pneg %p624
        %s1016 = sand.u32 %s614, 1
        %s1017 = scalar_lea.sflag [#allocation4], %s1016
        %s1018 = sand.u32 %s614, 1
        %s1019 = smul.addr %s1018, 8
        %s1020 = scalar_lea.vmem [#allocation26], %s1019
        %p1021 = scmp.lt.s32.totalorder %s50, 1
        %s1022 = scalar_select %p1021, %s50, 1
        %s1023 = smul.addr %s1022, 2
        %s1024 = smul.addr %s1023, 8
        %s1025 = scalar_lea.vmem %s1, %s1024
        %v1026 = vld [vmem:[%s891] sm:$0xff]
        %v1027 = vld [vmem:[%s1025] sm:$0xff]
        %v1028 = vld [vmem:[%s1025 + $0x8] sm:$0xf]
        %v1029 = vld [vmem:[#allocation5] sm:$0xff]
        %v1030 = vld [vmem:[#allocation7] sm:$0xff]
        %v1031 = vld [vmem:[%s4] sm:$0xff]
        %v1032 = vld [vmem:[%s4 + $0x8] sm:$0xff]
        %v1033 = vld [vmem:[%s4 + $0x10] sm:$0xff]
        %v1034 = vld [vmem:[%s4 + $0x18] sm:$0xff]
        %v1035 = vld [vmem:[%s5] sm:$0x1]
        %v1037 = vlaneseq
        %v1038 = vshrl.u32 %v1037, 7
        %v1039 = vsub.s32 0, %v1038
        %v1040 = vrot.slane %v1035, %v1039
        %vm1042 = vcmask 261120
        %v1044 = vsel %vm1042, %v1026, 0
        %1046 = vmatprep.subr.mxu0 0.0
        %1047 = vmatpush1.msra.mxu0 %v1031
        %1048 = vmatprep.subr.mxu0 0.0
        %1049 = vmatpush1.msra.mxu0 %v1032
        %1050 = vmatprep.subr.mxu0 0.0
        %1051 = vmatpush1.msra.mxu0 %v1033
        %1052 = vmatprep.subr.mxu0 0.0
        %1053 = vmatpush1.msra.mxu0 %v1034
        %1054 = vmatprep.subr.mxu0 0.0
        %1055 = vmatpush1.msra.mxu0 0.0
        %1056 = vmatprep.subr.mxu0 0.0
        %1057 = vmatpush1.msra.mxu0 0.0
        %1058 = vmatprep.subr.mxu0 0.0
        %1059 = vmatpush1.msra.mxu0 0.0
        %1060 = vmatprep.subr.mxu0 0.0
        %1061 = vmatpush1.msra.mxu0 0.0
        %1062 = vmatprep.subr.mxu0 0.0
        %1063 = vmatpush1.msra.mxu0 0.0
        %1064 = vmatprep.subr.mxu0 0.0
        %1065 = vmatpush1.msra.mxu0 0.0
        %1066 = vmatprep.subr.mxu0 0.0
        %1067 = vmatpush1.msra.mxu0 0.0
        %1068 = vmatprep.subr.mxu0 0.0
        %1069 = vmatpush1.msra.mxu0 0.0
        %1070 = vmatprep.subr.mxu0 0.0
        %1071 = vmatpush1.msra.mxu0 0.0
        %1072 = vmatprep.subr.mxu0 0.0
        %1073 = vmatpush1.msra.mxu0 0.0
        %1074 = vmatprep.subr.mxu0 0.0
        %1075 = vmatpush1.msra.mxu0 0.0
        %1076 = vmatprep.subr.mxu0 0.0
        %1077 = vmatpush1.msra.mxu0 0.0
        %1078 = vmatprep.subr.mxu0 0.0
        %1079 = vmatpush1.msra.mxu0 0.0
        %1080 = vmatprep.subr.mxu0 0.0
        %1081 = vmatpush1.msra.mxu0 0.0
        %1082 = vmatprep.subr.mxu0 0.0
        %1083 = vmatpush1.msra.mxu0 0.0
        %1084 = vmatprep.subr.mxu0 0.0
        %1085 = vmatpush1.msra.mxu0 0.0
        %1086 = vmatprep.subr.mxu0 0.0
        %1087 = vmatpush1.msra.mxu0 0.0
        %1088 = vmatprep.subr.mxu0 0.0
        %1089 = vmatpush1.msra.mxu0 0.0
        %1090 = vmatprep.subr.mxu0 0.0
        %1091 = vmatpush1.msra.mxu0 0.0
        %1092 = vmatprep.subr.mxu0 0.0
        %1093 = vmatpush1.msra.mxu0 0.0
        %1094 = vmatprep.subr.mxu0 0.0
        %1095 = vmatpush1.msra.mxu0 0.0
        %1096 = vmatprep.subr.mxu0 0.0
        %1097 = vmatpush1.msra.mxu0 0.0
        %1098 = vmatprep.subr.mxu0 0.0
        %1099 = vmatpush1.msra.mxu0 0.0
        %1100 = vmatprep.subr.mxu0 0.0
        %1101 = vmatpush1.msra.mxu0 0.0
        %1102 = vmatprep.subr.mxu0 0.0
        %1103 = vmatpush1.msra.mxu0 0.0
        %1104 = vmatprep.subr.mxu0 0.0
        %1105 = vmatpush1.msra.mxu0 0.0
        %1106 = vmatprep.subr.mxu0 0.0
        %1107 = vmatpush1.msra.mxu0 0.0
        %1108 = vmatprep.subr.mxu0 0.0
        %1109 = vmatpush1.msra.mxu0 0.0
        %1110 = vmatprep.mubr.f32.mxu0 0.0
        %1111 = vmatmul.mubr.f32.gmra.mrb[0].mxu0 %v1044
        %v1112 = vpop.f32.mrb[0].mxu0
        %v1113 = vadd.f32 %v1040, %v1112
        %v1114 = vpop.f32.mrb[0].mxu0
        %1115 = vdwg.mxu0
        %1117 = vrot.lane.b32.xlu0 %v1113, 96
        %v1118 = vpop.permute.xlu0 %1117
        %vm1119 = vcmask 64512
        %v1120 = vsel %vm1119, %v1113, 0
        %v1122 = vsel %vm1119, %v1118, 0
        %1124 = vmatprep.subr.mxu0 0.0
        %1125 = vmatpush1.xpose.msra.mxu0 %v1122
        %1126 = vmatprep.subr.mxu0 0.0
        %1127 = vmatpush1.xpose.msra.mxu0 0.0
        %1128 = vmatprep.subr.mxu0 0.0
        %1129 = vmatpush1.xpose.msra.mxu0 0.0
        %1130 = vmatprep.subr.mxu0 0.0
        %1131 = vmatpush1.xpose.msra.mxu0 0.0
        %1132 = vmatprep.subr.mxu0 0.0
        %1133 = vmatpush1.xpose.msra.mxu0 0.0
        %1134 = vmatprep.subr.mxu0 0.0
        %1135 = vmatpush1.xpose.msra.mxu0 0.0
        %1136 = vmatprep.subr.mxu0 0.0
        %1137 = vmatpush1.xpose.msra.mxu0 0.0
        %1138 = vmatprep.subr.mxu0 0.0
        %1139 = vmatpush1.xpose.msra.mxu0 0.0
        %1140 = vmatprep.subr.mxu0 0.0
        %1141 = vmatpush1.xpose.msra.mxu0 0.0
        %1142 = vmatprep.subr.mxu0 0.0
        %1143 = vmatpush1.xpose.msra.mxu0 0.0
        %1144 = vmatprep.subr.mxu0 0.0
        %1145 = vmatpush1.xpose.msra.mxu0 0.0
        %1146 = vmatprep.subr.mxu0 0.0
        %1147 = vmatpush1.xpose.msra.mxu0 0.0
        %1148 = vmatprep.subr.mxu0 0.0
        %1149 = vmatpush1.xpose.msra.mxu0 0.0
        %1150 = vmatprep.subr.mxu0 0.0
        %1151 = vmatpush1.xpose.msra.mxu0 0.0
        %1152 = vmatprep.subr.mxu0 0.0
        %1153 = vmatpush1.xpose.msra.mxu0 0.0
        %1154 = vmatprep.subr.mxu0 0.0
        %1155 = vmatpush1.xpose.msra.mxu0 0.0
        %1156 = vmatprep.subr.mxu0 0.0
        %1157 = vmatpush1.xpose.msra.mxu0 0.0
        %1158 = vmatprep.subr.mxu0 0.0
        %1159 = vmatpush1.xpose.msra.mxu0 0.0
        %1160 = vmatprep.subr.mxu0 0.0
        %1161 = vmatpush1.xpose.msra.mxu0 0.0
        %1162 = vmatprep.subr.mxu0 0.0
        %1163 = vmatpush1.xpose.msra.mxu0 0.0
        %1164 = vmatprep.subr.mxu0 0.0
        %1165 = vmatpush1.xpose.msra.mxu0 0.0
        %1166 = vmatprep.subr.mxu0 0.0
        %1167 = vmatpush1.xpose.msra.mxu0 0.0
        %1168 = vmatprep.subr.mxu0 0.0
        %1169 = vmatpush1.xpose.msra.mxu0 0.0
        %1170 = vmatprep.subr.mxu0 0.0
        %1171 = vmatpush1.xpose.msra.mxu0 0.0
        %1172 = vmatprep.subr.mxu0 0.0
        %1173 = vmatpush1.xpose.msra.mxu0 0.0
        %1174 = vmatprep.subr.mxu0 0.0
        %1175 = vmatpush1.xpose.msra.mxu0 0.0
        %1176 = vmatprep.subr.mxu0 0.0
        %1177 = vmatpush1.xpose.msra.mxu0 0.0
        %1178 = vmatprep.subr.mxu0 0.0
        %1179 = vmatpush1.xpose.msra.mxu0 0.0
        %1180 = vmatprep.subr.mxu0 0.0
        %1181 = vmatpush1.xpose.msra.mxu0 0.0
        %1182 = vmatprep.subr.mxu0 0.0
        %1183 = vmatpush1.xpose.msra.mxu0 0.0
        %1184 = vmatprep.subr.mxu0 0.0
        %1185 = vmatpush1.xpose.msra.mxu0 0.0
        %1186 = vmatprep.subr.mxu0 0.0
        %1187 = vmatpush1.xpose.msra.mxu0 0.0
        %1188 = vmatprep.mubr.f32.mxu0 0.0
        %1189 = vmatmul.mubr.f32.gmra.mrb[0].mxu0 %v1120
        %v1190 = vpop.f32.mrb[0].mxu0
        %v1191 = vadd.f32 %v1029, %v1190
        %v1192 = vpop.f32.mrb[0].mxu0
        %1193 = vdwg.mxu0
        %v1194 = vsel %vm1119, %v1191, -inf
        %1195 = vmax.xlane.f32.xlu0 %v1194
        %v1196 = vpop.xlane.xlu0 %1195
        %v1197 = vsub.f32 %v1191, %v1196
        %v1198 = vmul.f32 %v1197, 1.442695
        %v1199 = vpow.pop %v1198
        %v1200 = vsel %vm1119, %v1199, 0.0
        %1201 = vadd.xlane.f32.xlu0 %v1200
        %v1202 = vpop.xlane.xlu0 %1201
        %v1203 = vrcp.pop %v1202
        %v1204 = vmul.f32 %v1199, %v1203
        %1205 = vrot.lane.b32.xlu0 %v1113, 64
        %v1206 = vpop.permute.xlu0 %1205
        %v1209 = vsel %vm1119, %v1204, 0
        %1211 = vmatprep.subr.mxu0 0.0
        %1212 = vmatpush1.msra.mxu0 %v1206
        %1213 = vmatprep.subr.mxu0 0.0
        %1214 = vmatpush1.msra.mxu0 0.0
        %1215 = vmatprep.subr.mxu0 0.0
        %1216 = vmatpush1.msra.mxu0 0.0
        %1217 = vmatprep.subr.mxu0 0.0
        %1218 = vmatpush1.msra.mxu0 0.0
        %1219 = vmatprep.subr.mxu0 0.0
        %1220 = vmatpush1.msra.mxu0 0.0
        %1221 = vmatprep.subr.mxu0 0.0
        %1222 = vmatpush1.msra.mxu0 0.0
        %1223 = vmatprep.subr.mxu0 0.0
        %1224 = vmatpush1.msra.mxu0 0.0
        %1225 = vmatprep.subr.mxu0 0.0
        %1226 = vmatpush1.msra.mxu0 0.0
        %1227 = vmatprep.subr.mxu0 0.0
        %1228 = vmatpush1.msra.mxu0 0.0
        %1229 = vmatprep.subr.mxu0 0.0
        %1230 = vmatpush1.msra.mxu0 0.0
        %1231 = vmatprep.subr.mxu0 0.0
        %1232 = vmatpush1.msra.mxu0 0.0
        %1233 = vmatprep.subr.mxu0 0.0
        %1234 = vmatpush1.msra.mxu0 0.0
        %1235 = vmatprep.subr.mxu0 0.0
        %1236 = vmatpush1.msra.mxu0 0.0
        %1237 = vmatprep.subr.mxu0 0.0
        %1238 = vmatpush1.msra.mxu0 0.0
        %1239 = vmatprep.subr.mxu0 0.0
        %1240 = vmatpush1.msra.mxu0 0.0
        %1241 = vmatprep.subr.mxu0 0.0
        %1242 = vmatpush1.msra.mxu0 0.0
        %1243 = vmatprep.subr.mxu0 0.0
        %1244 = vmatpush1.msra.mxu0 0.0
        %1245 = vmatprep.subr.mxu0 0.0
        %1246 = vmatpush1.msra.mxu0 0.0
        %1247 = vmatprep.subr.mxu0 0.0
        %1248 = vmatpush1.msra.mxu0 0.0
        %1249 = vmatprep.subr.mxu0 0.0
        %1250 = vmatpush1.msra.mxu0 0.0
        %1251 = vmatprep.subr.mxu0 0.0
        %1252 = vmatpush1.msra.mxu0 0.0
        %1253 = vmatprep.subr.mxu0 0.0
        %1254 = vmatpush1.msra.mxu0 0.0
        %1255 = vmatprep.subr.mxu0 0.0
        %1256 = vmatpush1.msra.mxu0 0.0
        %1257 = vmatprep.subr.mxu0 0.0
        %1258 = vmatpush1.msra.mxu0 0.0
        %1259 = vmatprep.subr.mxu0 0.0
        %1260 = vmatpush1.msra.mxu0 0.0
        %1261 = vmatprep.subr.mxu0 0.0
        %1262 = vmatpush1.msra.mxu0 0.0
        %1263 = vmatprep.subr.mxu0 0.0
        %1264 = vmatpush1.msra.mxu0 0.0
        %1265 = vmatprep.subr.mxu0 0.0
        %1266 = vmatpush1.msra.mxu0 0.0
        %1267 = vmatprep.subr.mxu0 0.0
        %1268 = vmatpush1.msra.mxu0 0.0
        %1269 = vmatprep.subr.mxu0 0.0
        %1270 = vmatpush1.msra.mxu0 0.0
        %1271 = vmatprep.subr.mxu0 0.0
        %1272 = vmatpush1.msra.mxu0 0.0
        %1273 = vmatprep.subr.mxu0 0.0
        %1274 = vmatpush1.msra.mxu0 0.0
        %1275 = vmatprep.mubr.f32.mxu0 0.0
        %1276 = vmatmul.mubr.f32.gmra.mrb[0].mxu0 %v1209
        %v1277 = vpop.f32.mrb[0].mxu0
        %v1278 = vadd.f32 0.0, %v1277
        %v1279 = vpop.f32.mrb[0].mxu0
        %1280 = vdwg.mxu0
        %1281 = vrot.lane.b32.xlu0 %v1113, 120
        %v1282 = vpop.permute.xlu0 %1281
        %1283 = vrot.lane.b32.xlu0 %v1113, 88
        %v1284 = vpop.permute.xlu0 %1283
        %v1285 = vsel %vm1119, %v1282, 0
        %v1287 = vsel %vm1119, %v1284, 0
        %1289 = vmatprep.subr.mxu0 0.0
        %1290 = vmatpush1.xpose.msra.mxu0 %v1287
        %1291 = vmatprep.subr.mxu0 0.0
        %1292 = vmatpush1.xpose.msra.mxu0 0.0
        %1293 = vmatprep.subr.mxu0 0.0
        %1294 = vmatpush1.xpose.msra.mxu0 0.0
        %1295 = vmatprep.subr.mxu0 0.0
        %1296 = vmatpush1.xpose.msra.mxu0 0.0
        %1297 = vmatprep.subr.mxu0 0.0
        %1298 = vmatpush1.xpose.msra.mxu0 0.0
        %1299 = vmatprep.subr.mxu0 0.0
        %1300 = vmatpush1.xpose.msra.mxu0 0.0
        %1301 = vmatprep.subr.mxu0 0.0
        %1302 = vmatpush1.xpose.msra.mxu0 0.0
        %1303 = vmatprep.subr.mxu0 0.0
        %1304 = vmatpush1.xpose.msra.mxu0 0.0
        %1305 = vmatprep.subr.mxu0 0.0
        %1306 = vmatpush1.xpose.msra.mxu0 0.0
        %1307 = vmatprep.subr.mxu0 0.0
        %1308 = vmatpush1.xpose.msra.mxu0 0.0
        %1309 = vmatprep.subr.mxu0 0.0
        %1310 = vmatpush1.xpose.msra.mxu0 0.0
        %1311 = vmatprep.subr.mxu0 0.0
        %1312 = vmatpush1.xpose.msra.mxu0 0.0
        %1313 = vmatprep.subr.mxu0 0.0
        %1314 = vmatpush1.xpose.msra.mxu0 0.0
        %1315 = vmatprep.subr.mxu0 0.0
        %1316 = vmatpush1.xpose.msra.mxu0 0.0
        %1317 = vmatprep.subr.mxu0 0.0
        %1318 = vmatpush1.xpose.msra.mxu0 0.0
        %1319 = vmatprep.subr.mxu0 0.0
        %1320 = vmatpush1.xpose.msra.mxu0 0.0
        %1321 = vmatprep.subr.mxu0 0.0
        %1322 = vmatpush1.xpose.msra.mxu0 0.0
        %1323 = vmatprep.subr.mxu0 0.0
        %1324 = vmatpush1.xpose.msra.mxu0 0.0
        %1325 = vmatprep.subr.mxu0 0.0
        %1326 = vmatpush1.xpose.msra.mxu0 0.0
        %1327 = vmatprep.subr.mxu0 0.0
        %1328 = vmatpush1.xpose.msra.mxu0 0.0
        %1329 = vmatprep.subr.mxu0 0.0
        %1330 = vmatpush1.xpose.msra.mxu0 0.0
        %1331 = vmatprep.subr.mxu0 0.0
        %1332 = vmatpush1.xpose.msra.mxu0 0.0
        %1333 = vmatprep.subr.mxu0 0.0
        %1334 = vmatpush1.xpose.msra.mxu0 0.0
        %1335 = vmatprep.subr.mxu0 0.0
        %1336 = vmatpush1.xpose.msra.mxu0 0.0
        %1337 = vmatprep.subr.mxu0 0.0
        %1338 = vmatpush1.xpose.msra.mxu0 0.0
        %1339 = vmatprep.subr.mxu0 0.0
        %1340 = vmatpush1.xpose.msra.mxu0 0.0
        %1341 = vmatprep.subr.mxu0 0.0
        %1342 = vmatpush1.xpose.msra.mxu0 0.0
        %1343 = vmatprep.subr.mxu0 0.0
        %1344 = vmatpush1.xpose.msra.mxu0 0.0
        %1345 = vmatprep.subr.mxu0 0.0
        %1346 = vmatpush1.xpose.msra.mxu0 0.0
        %1347 = vmatprep.subr.mxu0 0.0
        %1348 = vmatpush1.xpose.msra.mxu0 0.0
        %1349 = vmatprep.subr.mxu0 0.0
        %1350 = vmatpush1.xpose.msra.mxu0 0.0
        %1351 = vmatprep.subr.mxu0 0.0
        %1352 = vmatpush1.xpose.msra.mxu0 0.0
        %1353 = vmatprep.mubr.f32.mxu0 0.0
        %1354 = vmatmul.mubr.f32.gmra.mrb[0].mxu0 %v1285
        %v1355 = vpop.f32.mrb[0].mxu0
        %v1356 = vadd.f32 %v1029, %v1355
        %v1357 = vpop.f32.mrb[0].mxu0
        %1358 = vdwg.mxu0
        %v1359 = vsel %vm1119, %v1356, -inf
        %1360 = vmax.xlane.f32.xlu0 %v1359
        %v1361 = vpop.xlane.xlu0 %1360
        %v1362 = vsub.f32 %v1356, %v1361
        %v1363 = vmul.f32 %v1362, 1.442695
        %v1364 = vpow.pop %v1363
        %v1365 = vsel %vm1119, %v1364, 0.0
        %1366 = vadd.xlane.f32.xlu0 %v1365
        %v1367 = vpop.xlane.xlu0 %1366
        %v1368 = vrcp.pop %v1367
        %v1369 = vmul.f32 %v1364, %v1368
        %1370 = vrot.lane.b32.xlu0 %v1113, 56
        %v1371 = vpop.permute.xlu0 %1370
        %v1374 = vsel %vm1119, %v1369, 0
        %1376 = vmatprep.subr.mxu0 0.0
        %1377 = vmatpush1.msra.mxu0 %v1371
        %1378 = vmatprep.subr.mxu0 0.0
        %1379 = vmatpush1.msra.mxu0 0.0
        %1380 = vmatprep.subr.mxu0 0.0
        %1381 = vmatpush1.msra.mxu0 0.0
        %1382 = vmatprep.subr.mxu0 0.0
        %1383 = vmatpush1.msra.mxu0 0.0
        %1384 = vmatprep.subr.mxu0 0.0
        %1385 = vmatpush1.msra.mxu0 0.0
        %1386 = vmatprep.subr.mxu0 0.0
        %1387 = vmatpush1.msra.mxu0 0.0
        %1388 = vmatprep.subr.mxu0 0.0
        %1389 = vmatpush1.msra.mxu0 0.0
        %1390 = vmatprep.subr.mxu0 0.0
        %1391 = vmatpush1.msra.mxu0 0.0
        %1392 = vmatprep.subr.mxu0 0.0
        %1393 = vmatpush1.msra.mxu0 0.0
        %1394 = vmatprep.subr.mxu0 0.0
        %1395 = vmatpush1.msra.mxu0 0.0
        %1396 = vmatprep.subr.mxu0 0.0
        %1397 = vmatpush1.msra.mxu0 0.0
        %1398 = vmatprep.subr.mxu0 0.0
        %1399 = vmatpush1.msra.mxu0 0.0
        %1400 = vmatprep.subr.mxu0 0.0
        %1401 = vmatpush1.msra.mxu0 0.0
        %1402 = vmatprep.subr.mxu0 0.0
        %1403 = vmatpush1.msra.mxu0 0.0
        %1404 = vmatprep.subr.mxu0 0.0
        %1405 = vmatpush1.msra.mxu0 0.0
        %1406 = vmatprep.subr.mxu0 0.0
        %1407 = vmatpush1.msra.mxu0 0.0
        %1408 = vmatprep.subr.mxu0 0.0
        %1409 = vmatpush1.msra.mxu0 0.0
        %1410 = vmatprep.subr.mxu0 0.0
        %1411 = vmatpush1.msra.mxu0 0.0
        %1412 = vmatprep.subr.mxu0 0.0
        %1413 = vmatpush1.msra.mxu0 0.0
        %1414 = vmatprep.subr.mxu0 0.0
        %1415 = vmatpush1.msra.mxu0 0.0
        %1416 = vmatprep.subr.mxu0 0.0
        %1417 = vmatpush1.msra.mxu0 0.0
        %1418 = vmatprep.subr.mxu0 0.0
        %1419 = vmatpush1.msra.mxu0 0.0
        %1420 = vmatprep.subr.mxu0 0.0
        %1421 = vmatpush1.msra.mxu0 0.0
        %1422 = vmatprep.subr.mxu0 0.0
        %1423 = vmatpush1.msra.mxu0 0.0
        %1424 = vmatprep.subr.mxu0 0.0
        %1425 = vmatpush1.msra.mxu0 0.0
        %1426 = vmatprep.subr.mxu0 0.0
        %1427 = vmatpush1.msra.mxu0 0.0
        %1428 = vmatprep.subr.mxu0 0.0
        %1429 = vmatpush1.msra.mxu0 0.0
        %1430 = vmatprep.subr.mxu0 0.0
        %1431 = vmatpush1.msra.mxu0 0.0
        %1432 = vmatprep.subr.mxu0 0.0
        %1433 = vmatpush1.msra.mxu0 0.0
        %1434 = vmatprep.subr.mxu0 0.0
        %1435 = vmatpush1.msra.mxu0 0.0
        %1436 = vmatprep.subr.mxu0 0.0
        %1437 = vmatpush1.msra.mxu0 0.0
        %1438 = vmatprep.subr.mxu0 0.0
        %1439 = vmatpush1.msra.mxu0 0.0
        %1440 = vmatprep.mubr.f32.mxu0 0.0
        %1441 = vmatmul.mubr.f32.gmra.mrb[0].mxu0 %v1374
        %v1442 = vpop.f32.mrb[0].mxu0
        %v1443 = vadd.f32 0.0, %v1442
        %v1444 = vpop.f32.mrb[0].mxu0
        %1445 = vdwg.mxu0
        %1446 = vrot.lane.b32.xlu0 %v1113, 112
        %v1447 = vpop.permute.xlu0 %1446
        %1448 = vrot.lane.b32.xlu0 %v1113, 80
        %v1449 = vpop.permute.xlu0 %1448
        %v1450 = vsel %vm1119, %v1447, 0
        %v1452 = vsel %vm1119, %v1449, 0
        %1454 = vmatprep.subr.mxu0 0.0
        %1455 = vmatpush1.xpose.msra.mxu0 %v1452
        %1456 = vmatprep.subr.mxu0 0.0
        %1457 = vmatpush1.xpose.msra.mxu0 0.0
        %1458 = vmatprep.subr.mxu0 0.0
        %1459 = vmatpush1.xpose.msra.mxu0 0.0
        %1460 = vmatprep.subr.mxu0 0.0
        %1461 = vmatpush1.xpose.msra.mxu0 0.0
        %1462 = vmatprep.subr.mxu0 0.0
        %1463 = vmatpush1.xpose.msra.mxu0 0.0
        %1464 = vmatprep.subr.mxu0 0.0
        %1465 = vmatpush1.xpose.msra.mxu0 0.0
        %1466 = vmatprep.subr.mxu0 0.0
        %1467 = vmatpush1.xpose.msra.mxu0 0.0
        %1468 = vmatprep.subr.mxu0 0.0
        %1469 = vmatpush1.xpose.msra.mxu0 0.0
        %1470 = vmatprep.subr.mxu0 0.0
        %1471 = vmatpush1.xpose.msra.mxu0 0.0
        %1472 = vmatprep.subr.mxu0 0.0
        %1473 = vmatpush1.xpose.msra.mxu0 0.0
        %1474 = vmatprep.subr.mxu0 0.0
        %1475 = vmatpush1.xpose.msra.mxu0 0.0
        %1476 = vmatprep.subr.mxu0 0.0
        %1477 = vmatpush1.xpose.msra.mxu0 0.0
        %1478 = vmatprep.subr.mxu0 0.0
        %1479 = vmatpush1.xpose.msra.mxu0 0.0
        %1480 = vmatprep.subr.mxu0 0.0
        %1481 = vmatpush1.xpose.msra.mxu0 0.0
        %1482 = vmatprep.subr.mxu0 0.0
        %1483 = vmatpush1.xpose.msra.mxu0 0.0
        %1484 = vmatprep.subr.mxu0 0.0
        %1485 = vmatpush1.xpose.msra.mxu0 0.0
        %1486 = vmatprep.subr.mxu0 0.0
        %1487 = vmatpush1.xpose.msra.mxu0 0.0
        %1488 = vmatprep.subr.mxu0 0.0
        %1489 = vmatpush1.xpose.msra.mxu0 0.0
        %1490 = vmatprep.subr.mxu0 0.0
        %1491 = vmatpush1.xpose.msra.mxu0 0.0
        %1492 = vmatprep.subr.mxu0 0.0
        %1493 = vmatpush1.xpose.msra.mxu0 0.0
        %1494 = vmatprep.subr.mxu0 0.0
        %1495 = vmatpush1.xpose.msra.mxu0 0.0
        %1496 = vmatprep.subr.mxu0 0.0
        %1497 = vmatpush1.xpose.msra.mxu0 0.0
        %1498 = vmatprep.subr.mxu0 0.0
        %1499 = vmatpush1.xpose.msra.mxu0 0.0
        %1500 = vmatprep.subr.mxu0 0.0
        %1501 = vmatpush1.xpose.msra.mxu0 0.0
        %1502 = vmatprep.subr.mxu0 0.0
        %1503 = vmatpush1.xpose.msra.mxu0 0.0
        %1504 = vmatprep.subr.mxu0 0.0
        %1505 = vmatpush1.xpose.msra.mxu0 0.0
        %1506 = vmatprep.subr.mxu0 0.0
        %1507 = vmatpush1.xpose.msra.mxu0 0.0
        %1508 = vmatprep.subr.mxu0 0.0
        %1509 = vmatpush1.xpose.msra.mxu0 0.0
        %1510 = vmatprep.subr.mxu0 0.0
        %1511 = vmatpush1.xpose.msra.mxu0 0.0
        %1512 = vmatprep.subr.mxu0 0.0
        %1513 = vmatpush1.xpose.msra.mxu0 0.0
        %1514 = vmatprep.subr.mxu0 0.0
        %1515 = vmatpush1.xpose.msra.mxu0 0.0
        %1516 = vmatprep.subr.mxu0 0.0
        %1517 = vmatpush1.xpose.msra.mxu0 0.0
        %1518 = vmatprep.mubr.f32.mxu0 0.0
        %1519 = vmatmul.mubr.f32.gmra.mrb[0].mxu0 %v1450
        %v1520 = vpop.f32.mrb[0].mxu0
        %v1521 = vadd.f32 %v1029, %v1520
        %v1522 = vpop.f32.mrb[0].mxu0
        %1523 = vdwg.mxu0
        %v1524 = vsel %vm1119, %v1521, -inf
        %1525 = vmax.xlane.f32.xlu0 %v1524
        %v1526 = vpop.xlane.xlu0 %1525
        %v1527 = vsub.f32 %v1521, %v1526
        %v1528 = vmul.f32 %v1527, 1.442695
        %v1529 = vpow.pop %v1528
        %v1530 = vsel %vm1119, %v1529, 0.0
        %1531 = vadd.xlane.f32.xlu0 %v1530
        %v1532 = vpop.xlane.xlu0 %1531
        %v1533 = vrcp.pop %v1532
        %v1534 = vmul.f32 %v1529, %v1533
        %1535 = vrot.lane.b32.xlu0 %v1113, 48
        %v1536 = vpop.permute.xlu0 %1535
        %v1539 = vsel %vm1119, %v1534, 0
        %1541 = vmatprep.subr.mxu0 0.0
        %1542 = vmatpush1.msra.mxu0 %v1536
        %1543 = vmatprep.subr.mxu0 0.0
        %1544 = vmatpush1.msra.mxu0 0.0
        %1545 = vmatprep.subr.mxu0 0.0
        %1546 = vmatpush1.msra.mxu0 0.0
        %1547 = vmatprep.subr.mxu0 0.0
        %1548 = vmatpush1.msra.mxu0 0.0
        %1549 = vmatprep.subr.mxu0 0.0
        %1550 = vmatpush1.msra.mxu0 0.0
        %1551 = vmatprep.subr.mxu0 0.0
        %1552 = vmatpush1.msra.mxu0 0.0
        %1553 = vmatprep.subr.mxu0 0.0
        %1554 = vmatpush1.msra.mxu0 0.0
        %1555 = vmatprep.subr.mxu0 0.0
        %1556 = vmatpush1.msra.mxu0 0.0
        %1557 = vmatprep.subr.mxu0 0.0
        %1558 = vmatpush1.msra.mxu0 0.0
        %1559 = vmatprep.subr.mxu0 0.0
        %1560 = vmatpush1.msra.mxu0 0.0
        %1561 = vmatprep.subr.mxu0 0.0
        %1562 = vmatpush1.msra.mxu0 0.0
        %1563 = vmatprep.subr.mxu0 0.0
        %1564 = vmatpush1.msra.mxu0 0.0
        %1565 = vmatprep.subr.mxu0 0.0
        %1566 = vmatpush1.msra.mxu0 0.0
        %1567 = vmatprep.subr.mxu0 0.0
        %1568 = vmatpush1.msra.mxu0 0.0
        %1569 = vmatprep.subr.mxu0 0.0
        %1570 = vmatpush1.msra.mxu0 0.0
        %1571 = vmatprep.subr.mxu0 0.0
        %1572 = vmatpush1.msra.mxu0 0.0
        %1573 = vmatprep.subr.mxu0 0.0
        %1574 = vmatpush1.msra.mxu0 0.0
        %1575 = vmatprep.subr.mxu0 0.0
        %1576 = vmatpush1.msra.mxu0 0.0
        %1577 = vmatprep.subr.mxu0 0.0
        %1578 = vmatpush1.msra.mxu0 0.0
        %1579 = vmatprep.subr.mxu0 0.0
        %1580 = vmatpush1.msra.mxu0 0.0
        %1581 = vmatprep.subr.mxu0 0.0
        %1582 = vmatpush1.msra.mxu0 0.0
        %1583 = vmatprep.subr.mxu0 0.0
        %1584 = vmatpush1.msra.mxu0 0.0
        %1585 = vmatprep.subr.mxu0 0.0
        %1586 = vmatpush1.msra.mxu0 0.0
        %1587 = vmatprep.subr.mxu0 0.0
        %1588 = vmatpush1.msra.mxu0 0.0
        %1589 = vmatprep.subr.mxu0 0.0
        %1590 = vmatpush1.msra.mxu0 0.0
        %1591 = vmatprep.subr.mxu0 0.0
        %1592 = vmatpush1.msra.mxu0 0.0
        %1593 = vmatprep.subr.mxu0 0.0
        %1594 = vmatpush1.msra.mxu0 0.0
        %1595 = vmatprep.subr.mxu0 0.0
        %1596 = vmatpush1.msra.mxu0 0.0
        %1597 = vmatprep.subr.mxu0 0.0
        %1598 = vmatpush1.msra.mxu0 0.0
        %1599 = vmatprep.subr.mxu0 0.0
        %1600 = vmatpush1.msra.mxu0 0.0
        %1601 = vmatprep.subr.mxu0 0.0
        %1602 = vmatpush1.msra.mxu0 0.0
        %1603 = vmatprep.subr.mxu0 0.0
        %1604 = vmatpush1.msra.mxu0 0.0
        %1605 = vmatprep.mubr.f32.mxu0 0.0
        %1606 = vmatmul.mubr.f32.gmra.mrb[0].mxu0 %v1539
        %v1607 = vpop.f32.mrb[0].mxu0
        %v1608 = vadd.f32 0.0, %v1607
        %v1609 = vpop.f32.mrb[0].mxu0
        %1610 = vdwg.mxu0
        %1611 = vrot.lane.b32.xlu0 %v1113, 104
        %v1612 = vpop.permute.xlu0 %1611
        %1613 = vrot.lane.b32.xlu0 %v1113, 72
        %v1614 = vpop.permute.xlu0 %1613
        %v1615 = vsel %vm1119, %v1612, 0
        %v1617 = vsel %vm1119, %v1614, 0
        %1619 = vmatprep.subr.mxu0 0.0
        %1620 = vmatpush1.xpose.msra.mxu0 %v1617
        %1621 = vmatprep.subr.mxu0 0.0
        %1622 = vmatpush1.xpose.msra.mxu0 0.0
        %1623 = vmatprep.subr.mxu0 0.0
        %1624 = vmatpush1.xpose.msra.mxu0 0.0
        %1625 = vmatprep.subr.mxu0 0.0
        %1626 = vmatpush1.xpose.msra.mxu0 0.0
        %1627 = vmatprep.subr.mxu0 0.0
        %1628 = vmatpush1.xpose.msra.mxu0 0.0
        %1629 = vmatprep.subr.mxu0 0.0
        %1630 = vmatpush1.xpose.msra.mxu0 0.0
        %1631 = vmatprep.subr.mxu0 0.0
        %1632 = vmatpush1.xpose.msra.mxu0 0.0
        %1633 = vmatprep.subr.mxu0 0.0
        %1634 = vmatpush1.xpose.msra.mxu0 0.0
        %1635 = vmatprep.subr.mxu0 0.0
        %1636 = vmatpush1.xpose.msra.mxu0 0.0
        %1637 = vmatprep.subr.mxu0 0.0
        %1638 = vmatpush1.xpose.msra.mxu0 0.0
        %1639 = vmatprep.subr.mxu0 0.0
        %1640 = vmatpush1.xpose.msra.mxu0 0.0
        %1641 = vmatprep.subr.mxu0 0.0
        %1642 = vmatpush1.xpose.msra.mxu0 0.0
        %1643 = vmatprep.subr.mxu0 0.0
        %1644 = vmatpush1.xpose.msra.mxu0 0.0
        %1645 = vmatprep.subr.mxu0 0.0
        %1646 = vmatpush1.xpose.msra.mxu0 0.0
        %1647 = vmatprep.subr.mxu0 0.0
        %1648 = vmatpush1.xpose.msra.mxu0 0.0
        %1649 = vmatprep.subr.mxu0 0.0
        %1650 = vmatpush1.xpose.msra.mxu0 0.0
        %1651 = vmatprep.subr.mxu0 0.0
        %1652 = vmatpush1.xpose.msra.mxu0 0.0
        %1653 = vmatprep.subr.mxu0 0.0
        %1654 = vmatpush1.xpose.msra.mxu0 0.0
        %1655 = vmatprep.subr.mxu0 0.0
        %1656 = vmatpush1.xpose.msra.mxu0 0.0
        %1657 = vmatprep.subr.mxu0 0.0
        %1658 = vmatpush1.xpose.msra.mxu0 0.0
        %1659 = vmatprep.subr.mxu0 0.0
        %1660 = vmatpush1.xpose.msra.mxu0 0.0
        %1661 = vmatprep.subr.mxu0 0.0
        %1662 = vmatpush1.xpose.msra.mxu0 0.0
        %1663 = vmatprep.subr.mxu0 0.0
        %1664 = vmatpush1.xpose.msra.mxu0 0.0
        %1665 = vmatprep.subr.mxu0 0.0
        %1666 = vmatpush1.xpose.msra.mxu0 0.0
        %1667 = vmatprep.subr.mxu0 0.0
        %1668 = vmatpush1.xpose.msra.mxu0 0.0
        %1669 = vmatprep.subr.mxu0 0.0
        %1670 = vmatpush1.xpose.msra.mxu0 0.0
        %1671 = vmatprep.subr.mxu0 0.0
        %1672 = vmatpush1.xpose.msra.mxu0 0.0
        %1673 = vmatprep.subr.mxu0 0.0
        %1674 = vmatpush1.xpose.msra.mxu0 0.0
        %1675 = vmatprep.subr.mxu0 0.0
        %1676 = vmatpush1.xpose.msra.mxu0 0.0
        %1677 = vmatprep.subr.mxu0 0.0
        %1678 = vmatpush1.xpose.msra.mxu0 0.0
        %1679 = vmatprep.subr.mxu0 0.0
        %1680 = vmatpush1.xpose.msra.mxu0 0.0
        %1681 = vmatprep.subr.mxu0 0.0
        %1682 = vmatpush1.xpose.msra.mxu0 0.0
        %1683 = vmatprep.mubr.f32.mxu0 0.0
        %1684 = vmatmul.mubr.f32.gmra.mrb[0].mxu0 %v1615
        %v1685 = vpop.f32.mrb[0].mxu0
        %v1686 = vadd.f32 %v1029, %v1685
        %v1687 = vpop.f32.mrb[0].mxu0
        %1688 = vdwg.mxu0
        %v1689 = vsel %vm1119, %v1686, -inf
        %1690 = vmax.xlane.f32.xlu0 %v1689
        %v1691 = vpop.xlane.xlu0 %1690
        %v1692 = vsub.f32 %v1686, %v1691
        %v1693 = vmul.f32 %v1692, 1.442695
        %v1694 = vpow.pop %v1693
        %v1695 = vsel %vm1119, %v1694, 0.0
        %1696 = vadd.xlane.f32.xlu0 %v1695
        %v1697 = vpop.xlane.xlu0 %1696
        %v1698 = vrcp.pop %v1697
        %v1699 = vmul.f32 %v1694, %v1698
        %1700 = vrot.lane.b32.xlu0 %v1113, 40
        %v1701 = vpop.permute.xlu0 %1700
        %v1704 = vsel %vm1119, %v1699, 0
        %1706 = vmatprep.subr.mxu0 0.0
        %1707 = vmatpush1.msra.mxu0 %v1701
        %1708 = vmatprep.subr.mxu0 0.0
        %1709 = vmatpush1.msra.mxu0 0.0
        %1710 = vmatprep.subr.mxu0 0.0
        %1711 = vmatpush1.msra.mxu0 0.0
        %1712 = vmatprep.subr.mxu0 0.0
        %1713 = vmatpush1.msra.mxu0 0.0
        %1714 = vmatprep.subr.mxu0 0.0
        %1715 = vmatpush1.msra.mxu0 0.0
        %1716 = vmatprep.subr.mxu0 0.0
        %1717 = vmatpush1.msra.mxu0 0.0
        %1718 = vmatprep.subr.mxu0 0.0
        %1719 = vmatpush1.msra.mxu0 0.0
        %1720 = vmatprep.subr.mxu0 0.0
        %1721 = vmatpush1.msra.mxu0 0.0
        %1722 = vmatprep.subr.mxu0 0.0
        %1723 = vmatpush1.msra.mxu0 0.0
        %1724 = vmatprep.subr.mxu0 0.0
        %1725 = vmatpush1.msra.mxu0 0.0
        %1726 = vmatprep.subr.mxu0 0.0
        %1727 = vmatpush1.msra.mxu0 0.0
        %1728 = vmatprep.subr.mxu0 0.0
        %1729 = vmatpush1.msra.mxu0 0.0
        %1730 = vmatprep.subr.mxu0 0.0
        %1731 = vmatpush1.msra.mxu0 0.0
        %1732 = vmatprep.subr.mxu0 0.0
        %1733 = vmatpush1.msra.mxu0 0.0
        %1734 = vmatprep.subr.mxu0 0.0
        %1735 = vmatpush1.msra.mxu0 0.0
        %1736 = vmatprep.subr.mxu0 0.0
        %1737 = vmatpush1.msra.mxu0 0.0
        %1738 = vmatprep.subr.mxu0 0.0
        %1739 = vmatpush1.msra.mxu0 0.0
        %1740 = vmatprep.subr.mxu0 0.0
        %1741 = vmatpush1.msra.mxu0 0.0
        %1742 = vmatprep.subr.mxu0 0.0
        %1743 = vmatpush1.msra.mxu0 0.0
        %1744 = vmatprep.subr.mxu0 0.0
        %1745 = vmatpush1.msra.mxu0 0.0
        %1746 = vmatprep.subr.mxu0 0.0
        %1747 = vmatpush1.msra.mxu0 0.0
        %1748 = vmatprep.subr.mxu0 0.0
        %1749 = vmatpush1.msra.mxu0 0.0
        %1750 = vmatprep.subr.mxu0 0.0
        %1751 = vmatpush1.msra.mxu0 0.0
        %1752 = vmatprep.subr.mxu0 0.0
        %1753 = vmatpush1.msra.mxu0 0.0
        %1754 = vmatprep.subr.mxu0 0.0
        %1755 = vmatpush1.msra.mxu0 0.0
        %1756 = vmatprep.subr.mxu0 0.0
        %1757 = vmatpush1.msra.mxu0 0.0
        %1758 = vmatprep.subr.mxu0 0.0
        %1759 = vmatpush1.msra.mxu0 0.0
        %1760 = vmatprep.subr.mxu0 0.0
        %1761 = vmatpush1.msra.mxu0 0.0
        %1762 = vmatprep.subr.mxu0 0.0
        %1763 = vmatpush1.msra.mxu0 0.0
        %1764 = vmatprep.subr.mxu0 0.0
        %1765 = vmatpush1.msra.mxu0 0.0
        %1766 = vmatprep.subr.mxu0 0.0
        %1767 = vmatpush1.msra.mxu0 0.0
        %1768 = vmatprep.subr.mxu0 0.0
        %1769 = vmatpush1.msra.mxu0 0.0
        %1770 = vmatprep.mubr.f32.mxu0 0.0
        %1771 = vmatmul.mubr.f32.gmra.mrb[0].mxu0 %v1704
        %v1772 = vpop.f32.mrb[0].mxu0
        %v1773 = vadd.f32 0.0, %v1772
        %v1774 = vpop.f32.mrb[0].mxu0
        %1775 = vdwg.mxu0
        %1777 = vrot.lane.b32.xlu0 %v1443, 8
        %v1778 = vpop.permute.xlu0 %1777
        %1781 = vrot.lane.b32.xlu0 %v1608, 16
        %v1782 = vpop.permute.xlu0 %1781
        %1785 = vrot.lane.b32.xlu0 %v1773, 24
        %v1786 = vpop.permute.xlu0 %1785
        %v1788 = vsel %vm1119, %v1278, %v1778
        %vm1789 = vcmask 130048
        %v1790 = vsel %vm1789, %v1788, %v1782
        %vm1791 = vcmask 195584
        %v1792 = vsel %vm1791, %v1790, %v1786
        %v1793 = vld [vmem:[%s6] sm:$0xff]
        %v1794 = vld [vmem:[%s6 + $0x8] sm:$0xff]
        %v1795 = vld [vmem:[%s6 + $0x10] sm:$0xff]
        %v1796 = vld [vmem:[%s6 + $0x18] sm:$0xff]
        %v1797 = vld [vmem:[#allocation8] sm:$0x1]
        %v1799 = vlaneseq
        %v1800 = vshrl.u32 %v1799, 7
        %v1801 = vsub.s32 0, %v1800
        %v1802 = vrot.slane %v1797, %v1801
        %v1805 = vsel %vm1042, %v1792, 0
        %1807 = vmatprep.subr.mxu0 0.0
        %1808 = vmatpush1.msra.mxu0 %v1793
        %1809 = vmatprep.subr.mxu0 0.0
        %1810 = vmatpush1.msra.mxu0 %v1794
        %1811 = vmatprep.subr.mxu0 0.0
        %1812 = vmatpush1.msra.mxu0 %v1795
        %1813 = vmatprep.subr.mxu0 0.0
        %1814 = vmatpush1.msra.mxu0 %v1796
        %1815 = vmatprep.subr.mxu0 0.0
        %1816 = vmatpush1.msra.mxu0 0.0
        %1817 = vmatprep.subr.mxu0 0.0
        %1818 = vmatpush1.msra.mxu0 0.0
        %1819 = vmatprep.subr.mxu0 0.0
        %1820 = vmatpush1.msra.mxu0 0.0
        %1821 = vmatprep.subr.mxu0 0.0
        %1822 = vmatpush1.msra.mxu0 0.0
        %1823 = vmatprep.subr.mxu0 0.0
        %1824 = vmatpush1.msra.mxu0 0.0
        %1825 = vmatprep.subr.mxu0 0.0
        %1826 = vmatpush1.msra.mxu0 0.0
        %1827 = vmatprep.subr.mxu0 0.0
        %1828 = vmatpush1.msra.mxu0 0.0
        %1829 = vmatprep.subr.mxu0 0.0
        %1830 = vmatpush1.msra.mxu0 0.0
        %1831 = vmatprep.subr.mxu0 0.0
        %1832 = vmatpush1.msra.mxu0 0.0
        %1833 = vmatprep.subr.mxu0 0.0
        %1834 = vmatpush1.msra.mxu0 0.0
        %1835 = vmatprep.subr.mxu0 0.0
        %1836 = vmatpush1.msra.mxu0 0.0
        %1837 = vmatprep.subr.mxu0 0.0
        %1838 = vmatpush1.msra.mxu0 0.0
        %1839 = vmatprep.subr.mxu0 0.0
        %1840 = vmatpush1.msra.mxu0 0.0
        %1841 = vmatprep.subr.mxu0 0.0
        %1842 = vmatpush1.msra.mxu0 0.0
        %1843 = vmatprep.subr.mxu0 0.0
        %1844 = vmatpush1.msra.mxu0 0.0
        %1845 = vmatprep.subr.mxu0 0.0
        %1846 = vmatpush1.msra.mxu0 0.0
        %1847 = vmatprep.subr.mxu0 0.0
        %1848 = vmatpush1.msra.mxu0 0.0
        %1849 = vmatprep.subr.mxu0 0.0
        %1850 = vmatpush1.msra.mxu0 0.0
        %1851 = vmatprep.subr.mxu0 0.0
        %1852 = vmatpush1.msra.mxu0 0.0
        %1853 = vmatprep.subr.mxu0 0.0
        %1854 = vmatpush1.msra.mxu0 0.0
        %1855 = vmatprep.subr.mxu0 0.0
        %1856 = vmatpush1.msra.mxu0 0.0
        %1857 = vmatprep.subr.mxu0 0.0
        %1858 = vmatpush1.msra.mxu0 0.0
        %1859 = vmatprep.subr.mxu0 0.0
        %1860 = vmatpush1.msra.mxu0 0.0
        %1861 = vmatprep.subr.mxu0 0.0
        %1862 = vmatpush1.msra.mxu0 0.0
        %1863 = vmatprep.subr.mxu0 0.0
        %1864 = vmatpush1.msra.mxu0 0.0
        %1865 = vmatprep.subr.mxu0 0.0
        %1866 = vmatpush1.msra.mxu0 0.0
        %1867 = vmatprep.subr.mxu0 0.0
        %1868 = vmatpush1.msra.mxu0 0.0
        %1869 = vmatprep.subr.mxu0 0.0
        %1870 = vmatpush1.msra.mxu0 0.0
        %1871 = vmatprep.mubr.f32.mxu0 0.0
        %1872 = vmatmul.mubr.f32.gmra.mrb[0].mxu0 %v1805
        %v1873 = vpop.f32.mrb[0].mxu0
        %v1874 = vadd.f32 %v1802, %v1873
        %v1875 = vpop.f32.mrb[0].mxu0
        %1876 = vdwg.mxu0
        %v1877 = vadd.f32 %v1026, %v1874
        %v1878 = vld [vmem:[#allocation17] sm:$0x1]
        %v1879 = vld [vmem:[#allocation19] sm:$0x1]
        %v1880 = vsel %vm1042, %v1877, 0.0
        %1881 = vadd.xlane.f32.xlu0 %v1880
        %v1882 = vpop.xlane.xlu0 %1881
        %v1883 = vrcp.pop 32.0
        %v1884 = vmul.f32 %v1882, %v1883
        %v1885 = vsub.f32 %v1877, %v1884
        %v1886 = vmul.f32 %v1885, %v1885
        %v1887 = vsel %vm1042, %v1886, 0.0
        %1888 = vadd.xlane.f32.xlu0 %v1887
        %v1889 = vpop.xlane.xlu0 %1888
        %v1890 = vmul.f32 %v1889, %v1883
        %v1891 = vadd.f32 %v1890, 1e-05
        %v1892 = vrsqrt.pop %v1891
        %v1893 = vmul.f32 %v1885, %v1892
        %v1895 = vlaneseq
        %v1896 = vshrl.u32 %v1895, 7
        %v1897 = vsub.s32 0, %v1896
        %v1898 = vrot.slane %v1878, %v1897
        %v1900 = vmul.f32 %v1893, %v1898
        %v1902 = vlaneseq
        %v1903 = vshrl.u32 %v1902, 7
        %v1904 = vsub.s32 0, %v1903
        %v1905 = vrot.slane %v1879, %v1904
        %v1907 = vadd.f32 %v1900, %v1905
        %v1908 = vld [vmem:[%s8] sm:$0xff]
        %v1909 = vld [vmem:[%s8 + $0x8] sm:$0xff]
        %v1910 = vld [vmem:[%s8 + $0x10] sm:$0xff]
        %v1911 = vld [vmem:[%s8 + $0x18] sm:$0xff]
        %v1912 = vld [vmem:[#allocation10] sm:$0x1]
        %v1914 = vlaneseq
        %v1915 = vshrl.u32 %v1914, 7
        %v1916 = vsub.s32 0, %v1915
        %v1917 = vrot.slane %v1912, %v1916
        %v1920 = vsel %vm1042, %v1907, 0
        %1922 = vmatprep.subr.mxu0 0.0
        %1923 = vmatpush1.msra.mxu0 %v1908
        %1924 = vmatprep.subr.mxu0 0.0
        %1925 = vmatpush1.msra.mxu0 %v1909
        %1926 = vmatprep.subr.mxu0 0.0
        %1927 = vmatpush1.msra.mxu0 %v1910
        %1928 = vmatprep.subr.mxu0 0.0
        %1929 = vmatpush1.msra.mxu0 %v1911
        %1930 = vmatprep.subr.mxu0 0.0
        %1931 = vmatpush1.msra.mxu0 0.0
        %1932 = vmatprep.subr.mxu0 0.0
        %1933 = vmatpush1.msra.mxu0 0.0
        %1934 = vmatprep.subr.mxu0 0.0
        %1935 = vmatpush1.msra.mxu0 0.0
        %1936 = vmatprep.subr.mxu0 0.0
        %1937 = vmatpush1.msra.mxu0 0.0
        %1938 = vmatprep.subr.mxu0 0.0
        %1939 = vmatpush1.msra.mxu0 0.0
        %1940 = vmatprep.subr.mxu0 0.0
        %1941 = vmatpush1.msra.mxu0 0.0
        %1942 = vmatprep.subr.mxu0 0.0
        %1943 = vmatpush1.msra.mxu0 0.0
        %1944 = vmatprep.subr.mxu0 0.0
        %1945 = vmatpush1.msra.mxu0 0.0
        %1946 = vmatprep.subr.mxu0 0.0
        %1947 = vmatpush1.msra.mxu0 0.0
        %1948 = vmatprep.subr.mxu0 0.0
        %1949 = vmatpush1.msra.mxu0 0.0
        %1950 = vmatprep.subr.mxu0 0.0
        %1951 = vmatpush1.msra.mxu0 0.0
        %1952 = vmatprep.subr.mxu0 0.0
        %1953 = vmatpush1.msra.mxu0 0.0
        %1954 = vmatprep.subr.mxu0 0.0
        %1955 = vmatpush1.msra.mxu0 0.0
        %1956 = vmatprep.subr.mxu0 0.0
        %1957 = vmatpush1.msra.mxu0 0.0
        %1958 = vmatprep.subr.mxu0 0.0
        %1959 = vmatpush1.msra.mxu0 0.0
        %1960 = vmatprep.subr.mxu0 0.0
        %1961 = vmatpush1.msra.mxu0 0.0
        %1962 = vmatprep.subr.mxu0 0.0
        %1963 = vmatpush1.msra.mxu0 0.0
        %1964 = vmatprep.subr.mxu0 0.0
        %1965 = vmatpush1.msra.mxu0 0.0
        %1966 = vmatprep.subr.mxu0 0.0
        %1967 = vmatpush1.msra.mxu0 0.0
        %1968 = vmatprep.subr.mxu0 0.0
        %1969 = vmatpush1.msra.mxu0 0.0
        %1970 = vmatprep.subr.mxu0 0.0
        %1971 = vmatpush1.msra.mxu0 0.0
        %1972 = vmatprep.subr.mxu0 0.0
        %1973 = vmatpush1.msra.mxu0 0.0
        %1974 = vmatprep.subr.mxu0 0.0
        %1975 = vmatpush1.msra.mxu0 0.0
        %1976 = vmatprep.subr.mxu0 0.0
        %1977 = vmatpush1.msra.mxu0 0.0
        %1978 = vmatprep.subr.mxu0 0.0
        %1979 = vmatpush1.msra.mxu0 0.0
        %1980 = vmatprep.subr.mxu0 0.0
        %1981 = vmatpush1.msra.mxu0 0.0
        %1982 = vmatprep.subr.mxu0 0.0
        %1983 = vmatpush1.msra.mxu0 0.0
        %1984 = vmatprep.subr.mxu0 0.0
        %1985 = vmatpush1.msra.mxu0 0.0
        %1986 = vmatprep.mubr.f32.mxu0 0.0
        %1987 = vmatmul.mubr.f32.gmra.mrb[0].mxu0 %v1920
        %v1988 = vpop.f32.mrb[0].mxu0
        %v1989 = vadd.f32 %v1917, %v1988
        %v1990 = vpop.f32.mrb[0].mxu0
        %1991 = vdwg.mxu0
        %v1992 = vld [vmem:[#allocation11] sm:$0xff]
        %v1993 = vld [vmem:[#allocation11 + $0x8] sm:$0xff]
        %v1994 = vld [vmem:[#allocation11 + $0x10] sm:$0xff]
        %v1995 = vld [vmem:[#allocation11 + $0x18] sm:$0xff]
        %v1996 = vld [vmem:[#allocation13] sm:$0x1]
        %v1998 = vlaneseq
        %v1999 = vshrl.u32 %v1998, 7
        %v2000 = vsub.s32 0, %v1999
        %v2001 = vrot.slane %v1996, %v2000
        %v2004 = vsel %vm1042, %v1027, 0
        %v2007 = vsel %vm1042, %v1028, 0
        %2009 = vmatprep.subr.mxu0 0.0
        %2010 = vmatpush1.msra.mxu0 %v1992
        %2011 = vmatprep.subr.mxu0 0.0
        %2012 = vmatpush1.msra.mxu0 %v1993
        %2013 = vmatprep.subr.mxu0 0.0
        %2014 = vmatpush1.msra.mxu0 %v1994
        %2015 = vmatprep.subr.mxu0 0.0
        %2016 = vmatpush1.msra.mxu0 %v1995
        %2017 = vmatprep.subr.mxu0 0.0
        %2018 = vmatpush1.msra.mxu0 0.0
        %2019 = vmatprep.subr.mxu0 0.0
        %2020 = vmatpush1.msra.mxu0 0.0
        %2021 = vmatprep.subr.mxu0 0.0
        %2022 = vmatpush1.msra.mxu0 0.0
        %2023 = vmatprep.subr.mxu0 0.0
        %2024 = vmatpush1.msra.mxu0 0.0
        %2025 = vmatprep.subr.mxu0 0.0
        %2026 = vmatpush1.msra.mxu0 0.0
        %2027 = vmatprep.subr.mxu0 0.0
        %2028 = vmatpush1.msra.mxu0 0.0
        %2029 = vmatprep.subr.mxu0 0.0
        %2030 = vmatpush1.msra.mxu0 0.0
        %2031 = vmatprep.subr.mxu0 0.0
        %2032 = vmatpush1.msra.mxu0 0.0
        %2033 = vmatprep.subr.mxu0 0.0
        %2034 = vmatpush1.msra.mxu0 0.0
        %2035 = vmatprep.subr.mxu0 0.0
        %2036 = vmatpush1.msra.mxu0 0.0
        %2037 = vmatprep.subr.mxu0 0.0
        %2038 = vmatpush1.msra.mxu0 0.0
        %2039 = vmatprep.subr.mxu0 0.0
        %2040 = vmatpush1.msra.mxu0 0.0
        %2041 = vmatprep.subr.mxu0 0.0
        %2042 = vmatpush1.msra.mxu0 0.0
        %2043 = vmatprep.subr.mxu0 0.0
        %2044 = vmatpush1.msra.mxu0 0.0
        %2045 = vmatprep.subr.mxu0 0.0
        %2046 = vmatpush1.msra.mxu0 0.0
        %2047 = vmatprep.subr.mxu0 0.0
        %2048 = vmatpush1.msra.mxu0 0.0
        %2049 = vmatprep.subr.mxu0 0.0
        %2050 = vmatpush1.msra.mxu0 0.0
        %2051 = vmatprep.subr.mxu0 0.0
        %2052 = vmatpush1.msra.mxu0 0.0
        %2053 = vmatprep.subr.mxu0 0.0
        %2054 = vmatpush1.msra.mxu0 0.0
        %2055 = vmatprep.subr.mxu0 0.0
        %2056 = vmatpush1.msra.mxu0 0.0
        %2057 = vmatprep.subr.mxu0 0.0
        %2058 = vmatpush1.msra.mxu0 0.0
        %2059 = vmatprep.subr.mxu0 0.0
        %2060 = vmatpush1.msra.mxu0 0.0
        %2061 = vmatprep.subr.mxu0 0.0
        %2062 = vmatpush1.msra.mxu0 0.0
        %2063 = vmatprep.subr.mxu0 0.0
        %2064 = vmatpush1.msra.mxu0 0.0
        %2065 = vmatprep.subr.mxu0 0.0
        %2066 = vmatpush1.msra.mxu0 0.0
        %2067 = vmatprep.subr.mxu0 0.0
        %2068 = vmatpush1.msra.mxu0 0.0
        %2069 = vmatprep.subr.mxu0 0.0
        %2070 = vmatpush1.msra.mxu0 0.0
        %2071 = vmatprep.subr.mxu0 0.0
        %2072 = vmatpush1.msra.mxu0 0.0
        %2073 = vmatprep.mubr.f32.mxu0 0.0
        %2074 = vmatmul.mubr.f32.gmra.mrb[0].mxu0 %v2004
        %v2075 = vpop.f32.mrb[0].mxu0
        %v2076 = vadd.f32 %v2001, %v2075
        %v2077 = vpop.f32.mrb[0].mxu0
        %2078 = vmatprep.mubr.f32.mxu0 0.0
        %2079 = vmatmul.mubr.f32.gmra.mrb[0].mxu0 %v2007
        %v2080 = vpop.f32.mrb[0].mxu0
        %v2081 = vadd.f32 %v2001, %v2080
        %v2082 = vpop.f32.mrb[0].mxu0
        %2083 = vdwg.mxu0
        %v2085 = vsel %vm1119, %v1989, 0
        %v2088 = vsel %vm1119, %v2076, 0
        %v2091 = vsel %vm1119, %v2081, 0
        %2093 = vmatprep.subr.mxu0 0.0
        %2094 = vmatpush1.xpose.msra.mxu0 %v2088
        %2095 = vmatprep.subr.mxu0 0.0
        %2096 = vmatpush1.xpose.msra.mxu0 %v2091
        %2097 = vmatprep.subr.mxu0 0.0
        %2098 = vmatpush1.xpose.msra.mxu0 0.0
        %2099 = vmatprep.subr.mxu0 0.0
        %2100 = vmatpush1.xpose.msra.mxu0 0.0
        %2101 = vmatprep.subr.mxu0 0.0
        %2102 = vmatpush1.xpose.msra.mxu0 0.0
        %2103 = vmatprep.subr.mxu0 0.0
        %2104 = vmatpush1.xpose.msra.mxu0 0.0
        %2105 = vmatprep.subr.mxu0 0.0
        %2106 = vmatpush1.xpose.msra.mxu0 0.0
        %2107 = vmatprep.subr.mxu0 0.0
        %2108 = vmatpush1.xpose.msra.mxu0 0.0
        %2109 = vmatprep.subr.mxu0 0.0
        %2110 = vmatpush1.xpose.msra.mxu0 0.0
        %2111 = vmatprep.subr.mxu0 0.0
        %2112 = vmatpush1.xpose.msra.mxu0 0.0
        %2113 = vmatprep.subr.mxu0 0.0
        %2114 = vmatpush1.xpose.msra.mxu0 0.0
        %2115 = vmatprep.subr.mxu0 0.0
        %2116 = vmatpush1.xpose.msra.mxu0 0.0
        %2117 = vmatprep.subr.mxu0 0.0
        %2118 = vmatpush1.xpose.msra.mxu0 0.0
        %2119 = vmatprep.subr.mxu0 0.0
        %2120 = vmatpush1.xpose.msra.mxu0 0.0
        %2121 = vmatprep.subr.mxu0 0.0
        %2122 = vmatpush1.xpose.msra.mxu0 0.0
        %2123 = vmatprep.subr.mxu0 0.0
        %2124 = vmatpush1.xpose.msra.mxu0 0.0
        %2125 = vmatprep.subr.mxu0 0.0
        %2126 = vmatpush1.xpose.msra.mxu0 0.0
        %2127 = vmatprep.subr.mxu0 0.0
        %2128 = vmatpush1.xpose.msra.mxu0 0.0
        %2129 = vmatprep.subr.mxu0 0.0
        %2130 = vmatpush1.xpose.msra.mxu0 0.0
        %2131 = vmatprep.subr.mxu0 0.0
        %2132 = vmatpush1.xpose.msra.mxu0 0.0
        %2133 = vmatprep.subr.mxu0 0.0
        %2134 = vmatpush1.xpose.msra.mxu0 0.0
        %2135 = vmatprep.subr.mxu0 0.0
        %2136 = vmatpush1.xpose.msra.mxu0 0.0
        %2137 = vmatprep.subr.mxu0 0.0
        %2138 = vmatpush1.xpose.msra.mxu0 0.0
        %2139 = vmatprep.subr.mxu0 0.0
        %2140 = vmatpush1.xpose.msra.mxu0 0.0
        %2141 = vmatprep.subr.mxu0 0.0
        %2142 = vmatpush1.xpose.msra.mxu0 0.0
        %2143 = vmatprep.subr.mxu0 0.0
        %2144 = vmatpush1.xpose.msra.mxu0 0.0
        %2145 = vmatprep.subr.mxu0 0.0
        %2146 = vmatpush1.xpose.msra.mxu0 0.0
        %2147 = vmatprep.subr.mxu0 0.0
        %2148 = vmatpush1.xpose.msra.mxu0 0.0
        %2149 = vmatprep.subr.mxu0 0.0
        %2150 = vmatpush1.xpose.msra.mxu0 0.0
        %2151 = vmatprep.subr.mxu0 0.0
        %2152 = vmatpush1.xpose.msra.mxu0 0.0
        %2153 = vmatprep.subr.mxu0 0.0
        %2154 = vmatpush1.xpose.msra.mxu0 0.0
        %2155 = vmatprep.subr.mxu0 0.0
        %2156 = vmatpush1.xpose.msra.mxu0 0.0
        %2157 = vmatprep.mubr.f32.mxu0 0.0
        %2158 = vmatmul.mubr.f32.gmra.mrb[0].mxu0 %v2085
        %v2159 = vpop.f32.mrb[0].mxu0
        %v2160 = vadd.f32 %v1030, %v2159
        %v2161 = vpop.f32.mrb[0].mxu0
        %2162 = vdwg.mxu0
        %vm2163 = vcmask 97280
        %v2164 = vsel %vm2163, %v2160, -inf
        %2165 = vmax.xlane.f32.xlu0 %v2164
        %v2166 = vpop.xlane.xlu0 %2165
        %v2167 = vsub.f32 %v2160, %v2166
        %v2168 = vmul.f32 %v2167, 1.442695
        %v2169 = vpow.pop %v2168
        %v2170 = vsel %vm2163, %v2169, 0.0
        %2171 = vadd.xlane.f32.xlu0 %v2170
        %v2172 = vpop.xlane.xlu0 %2171
        %v2173 = vrcp.pop %v2172
        %v2174 = vmul.f32 %v2169, %v2173
        %2175 = vrot.lane.b32.xlu0 %v2076, 96
        %v2176 = vpop.permute.xlu0 %2175
        %2177 = vrot.lane.b32.xlu0 %v2081, 96
        %v2178 = vpop.permute.xlu0 %2177
        %v2181 = vsel %vm2163, %v2174, 0
        %vm2183 = vcmask 1043456
        %v2184 = vsel %vm2183, %v2178, 0
        %2186 = vmatprep.subr.mxu0 0.0
        %2187 = vmatpush1.msra.mxu0 %v2176
        %2188 = vmatprep.subr.mxu0 0.0
        %2189 = vmatpush1.msra.mxu0 %v2184
        %2190 = vmatprep.subr.mxu0 0.0
        %2191 = vmatpush1.msra.mxu0 0.0
        %2192 = vmatprep.subr.mxu0 0.0
        %2193 = vmatpush1.msra.mxu0 0.0
        %2194 = vmatprep.subr.mxu0 0.0
        %2195 = vmatpush1.msra.mxu0 0.0
        %2196 = vmatprep.subr.mxu0 0.0
        %2197 = vmatpush1.msra.mxu0 0.0
        %2198 = vmatprep.subr.mxu0 0.0
        %2199 = vmatpush1.msra.mxu0 0.0
        %2200 = vmatprep.subr.mxu0 0.0
        %2201 = vmatpush1.msra.mxu0 0.0
        %2202 = vmatprep.subr.mxu0 0.0
        %2203 = vmatpush1.msra.mxu0 0.0
        %2204 = vmatprep.subr.mxu0 0.0
        %2205 = vmatpush1.msra.mxu0 0.0
        %2206 = vmatprep.subr.mxu0 0.0
        %2207 = vmatpush1.msra.mxu0 0.0
        %2208 = vmatprep.subr.mxu0 0.0
        %2209 = vmatpush1.msra.mxu0 0.0
        %2210 = vmatprep.subr.mxu0 0.0
        %2211 = vmatpush1.msra.mxu0 0.0
        %2212 = vmatprep.subr.mxu0 0.0
        %2213 = vmatpush1.msra.mxu0 0.0
        %2214 = vmatprep.subr.mxu0 0.0
        %2215 = vmatpush1.msra.mxu0 0.0
        %2216 = vmatprep.subr.mxu0 0.0
        %2217 = vmatpush1.msra.mxu0 0.0
        %2218 = vmatprep.subr.mxu0 0.0
        %2219 = vmatpush1.msra.mxu0 0.0
        %2220 = vmatprep.subr.mxu0 0.0
        %2221 = vmatpush1.msra.mxu0 0.0
        %2222 = vmatprep.subr.mxu0 0.0
        %2223 = vmatpush1.msra.mxu0 0.0
        %2224 = vmatprep.subr.mxu0 0.0
        %2225 = vmatpush1.msra.mxu0 0.0
        %2226 = vmatprep.subr.mxu0 0.0
        %2227 = vmatpush1.msra.mxu0 0.0
        %2228 = vmatprep.subr.mxu0 0.0
        %2229 = vmatpush1.msra.mxu0 0.0
        %2230 = vmatprep.subr.mxu0 0.0
        %2231 = vmatpush1.msra.mxu0 0.0
        %2232 = vmatprep.subr.mxu0 0.0
        %2233 = vmatpush1.msra.mxu0 0.0
        %2234 = vmatprep.subr.mxu0 0.0
        %2235 = vmatpush1.msra.mxu0 0.0
        %2236 = vmatprep.subr.mxu0 0.0
        %2237 = vmatpush1.msra.mxu0 0.0
        %2238 = vmatprep.subr.mxu0 0.0
        %2239 = vmatpush1.msra.mxu0 0.0
        %2240 = vmatprep.subr.mxu0 0.0
        %2241 = vmatpush1.msra.mxu0 0.0
        %2242 = vmatprep.subr.mxu0 0.0
        %2243 = vmatpush1.msra.mxu0 0.0
        %2244 = vmatprep.subr.mxu0 0.0
        %2245 = vmatpush1.msra.mxu0 0.0
        %2246 = vmatprep.subr.mxu0 0.0
        %2247 = vmatpush1.msra.mxu0 0.0
        %2248 = vmatprep.subr.mxu0 0.0
        %2249 = vmatpush1.msra.mxu0 0.0
        %2250 = vmatprep.mubr.f32.mxu0 0.0
        %2251 = vmatmul.mubr.f32.gmra.mrb[0].mxu0 %v2181
        %v2252 = vpop.f32.mrb[0].mxu0
        %v2253 = vadd.f32 0.0, %v2252
        %v2254 = vpop.f32.mrb[0].mxu0
        %2255 = vdwg.mxu0
        %2256 = vrot.lane.b32.xlu0 %v1989, 120
        %v2257 = vpop.permute.xlu0 %2256
        %2258 = vrot.lane.b32.xlu0 %v2076, 120
        %v2259 = vpop.permute.xlu0 %2258
        %2260 = vrot.lane.b32.xlu0 %v2081, 120
        %v2261 = vpop.permute.xlu0 %2260
        %v2262 = vsel %vm1119, %v2257, 0
        %v2264 = vsel %vm1119, %v2259, 0
        %v2266 = vsel %vm1119, %v2261, 0
        %2268 = vmatprep.subr.mxu0 0.0
        %2269 = vmatpush1.xpose.msra.mxu0 %v2264
        %2270 = vmatprep.subr.mxu0 0.0
        %2271 = vmatpush1.xpose.msra.mxu0 %v2266
        %2272 = vmatprep.subr.mxu0 0.0
        %2273 = vmatpush1.xpose.msra.mxu0 0.0
        %2274 = vmatprep.subr.mxu0 0.0
        %2275 = vmatpush1.xpose.msra.mxu0 0.0
        %2276 = vmatprep.subr.mxu0 0.0
        %2277 = vmatpush1.xpose.msra.mxu0 0.0
        %2278 = vmatprep.subr.mxu0 0.0
        %2279 = vmatpush1.xpose.msra.mxu0 0.0
        %2280 = vmatprep.subr.mxu0 0.0
        %2281 = vmatpush1.xpose.msra.mxu0 0.0
        %2282 = vmatprep.subr.mxu0 0.0
        %2283 = vmatpush1.xpose.msra.mxu0 0.0
        %2284 = vmatprep.subr.mxu0 0.0
        %2285 = vmatpush1.xpose.msra.mxu0 0.0
        %2286 = vmatprep.subr.mxu0 0.0
        %2287 = vmatpush1.xpose.msra.mxu0 0.0
        %2288 = vmatprep.subr.mxu0 0.0
        %2289 = vmatpush1.xpose.msra.mxu0 0.0
        %2290 = vmatprep.subr.mxu0 0.0
        %2291 = vmatpush1.xpose.msra.mxu0 0.0
        %2292 = vmatprep.subr.mxu0 0.0
        %2293 = vmatpush1.xpose.msra.mxu0 0.0
        %2294 = vmatprep.subr.mxu0 0.0
        %2295 = vmatpush1.xpose.msra.mxu0 0.0
        %2296 = vmatprep.subr.mxu0 0.0
        %2297 = vmatpush1.xpose.msra.mxu0 0.0
        %2298 = vmatprep.subr.mxu0 0.0
        %2299 = vmatpush1.xpose.msra.mxu0 0.0
        %2300 = vmatprep.subr.mxu0 0.0
        %2301 = vmatpush1.xpose.msra.mxu0 0.0
        %2302 = vmatprep.subr.mxu0 0.0
        %2303 = vmatpush1.xpose.msra.mxu0 0.0
        %2304 = vmatprep.subr.mxu0 0.0
        %2305 = vmatpush1.xpose.msra.mxu0 0.0
        %2306 = vmatprep.subr.mxu0 0.0
        %2307 = vmatpush1.xpose.msra.mxu0 0.0
        %2308 = vmatprep.subr.mxu0 0.0
        %2309 = vmatpush1.xpose.msra.mxu0 0.0
        %2310 = vmatprep.subr.mxu0 0.0
        %2311 = vmatpush1.xpose.msra.mxu0 0.0
        %2312 = vmatprep.subr.mxu0 0.0
        %2313 = vmatpush1.xpose.msra.mxu0 0.0
        %2314 = vmatprep.subr.mxu0 0.0
        %2315 = vmatpush1.xpose.msra.mxu0 0.0
        %2316 = vmatprep.subr.mxu0 0.0
        %2317 = vmatpush1.xpose.msra.mxu0 0.0
        %2318 = vmatprep.subr.mxu0 0.0
        %2319 = vmatpush1.xpose.msra.mxu0 0.0
        %2320 = vmatprep.subr.mxu0 0.0
        %2321 = vmatpush1.xpose.msra.mxu0 0.0
        %2322 = vmatprep.subr.mxu0 0.0
        %2323 = vmatpush1.xpose.msra.mxu0 0.0
        %2324 = vmatprep.subr.mxu0 0.0
        %2325 = vmatpush1.xpose.msra.mxu0 0.0
        %2326 = vmatprep.subr.mxu0 0.0
        %2327 = vmatpush1.xpose.msra.mxu0 0.0
        %2328 = vmatprep.subr.mxu0 0.0
        %2329 = vmatpush1.xpose.msra.mxu0 0.0
        %2330 = vmatprep.subr.mxu0 0.0
        %2331 = vmatpush1.xpose.msra.mxu0 0.0
        %2332 = vmatprep.mubr.f32.mxu0 0.0
        %2333 = vmatmul.mubr.f32.gmra.mrb[0].mxu0 %v2262
        %v2334 = vpop.f32.mrb[0].mxu0
        %v2335 = vadd.f32 %v1030, %v2334
        %v2336 = vpop.f32.mrb[0].mxu0
        %2337 = vdwg.mxu0
        %v2338 = vsel %vm2163, %v2335, -inf
        %2339 = vmax.xlane.f32.xlu0 %v2338
        %v2340 = vpop.xlane.xlu0 %2339
        %v2341 = vsub.f32 %v2335, %v2340
        %v2342 = vmul.f32 %v2341, 1.442695
        %v2343 = vpow.pop %v2342
        %v2344 = vsel %vm2163, %v2343, 0.0
        %2345 = vadd.xlane.f32.xlu0 %v2344
        %v2346 = vpop.xlane.xlu0 %2345
        %v2347 = vrcp.pop %v2346
        %v2348 = vmul.f32 %v2343, %v2347
        %2349 = vrot.lane.b32.xlu0 %v2076, 88
        %v2350 = vpop.permute.xlu0 %2349
        %2351 = vrot.lane.b32.xlu0 %v2081, 88
        %v2352 = vpop.permute.xlu0 %2351
        %v2355 = vsel %vm2163, %v2348, 0
        %v2357 = vsel %vm2183, %v2352, 0
        %2359 = vmatprep.subr.mxu0 0.0
        %2360 = vmatpush1.msra.mxu0 %v2350
        %2361 = vmatprep.subr.mxu0 0.0
        %2362 = vmatpush1.msra.mxu0 %v2357
        %2363 = vmatprep.subr.mxu0 0.0
        %2364 = vmatpush1.msra.mxu0 0.0
        %2365 = vmatprep.subr.mxu0 0.0
        %2366 = vmatpush1.msra.mxu0 0.0
        %2367 = vmatprep.subr.mxu0 0.0
        %2368 = vmatpush1.msra.mxu0 0.0
        %2369 = vmatprep.subr.mxu0 0.0
        %2370 = vmatpush1.msra.mxu0 0.0
        %2371 = vmatprep.subr.mxu0 0.0
        %2372 = vmatpush1.msra.mxu0 0.0
        %2373 = vmatprep.subr.mxu0 0.0
        %2374 = vmatpush1.msra.mxu0 0.0
        %2375 = vmatprep.subr.mxu0 0.0
        %2376 = vmatpush1.msra.mxu0 0.0
        %2377 = vmatprep.subr.mxu0 0.0
        %2378 = vmatpush1.msra.mxu0 0.0
        %2379 = vmatprep.subr.mxu0 0.0
        %2380 = vmatpush1.msra.mxu0 0.0
        %2381 = vmatprep.subr.mxu0 0.0
        %2382 = vmatpush1.msra.mxu0 0.0
        %2383 = vmatprep.subr.mxu0 0.0
        %2384 = vmatpush1.msra.mxu0 0.0
        %2385 = vmatprep.subr.mxu0 0.0
        %2386 = vmatpush1.msra.mxu0 0.0
        %2387 = vmatprep.subr.mxu0 0.0
        %2388 = vmatpush1.msra.mxu0 0.0
        %2389 = vmatprep.subr.mxu0 0.0
        %2390 = vmatpush1.msra.mxu0 0.0
        %2391 = vmatprep.subr.mxu0 0.0
        %2392 = vmatpush1.msra.mxu0 0.0
        %2393 = vmatprep.subr.mxu0 0.0
        %2394 = vmatpush1.msra.mxu0 0.0
        %2395 = vmatprep.subr.mxu0 0.0
        %2396 = vmatpush1.msra.mxu0 0.0
        %2397 = vmatprep.subr.mxu0 0.0
        %2398 = vmatpush1.msra.mxu0 0.0
        %2399 = vmatprep.subr.mxu0 0.0
        %2400 = vmatpush1.msra.mxu0 0.0
        %2401 = vmatprep.subr.mxu0 0.0
        %2402 = vmatpush1.msra.mxu0 0.0
        %2403 = vmatprep.subr.mxu0 0.0
        %2404 = vmatpush1.msra.mxu0 0.0
        %2405 = vmatprep.subr.mxu0 0.0
        %2406 = vmatpush1.msra.mxu0 0.0
        %2407 = vmatprep.subr.mxu0 0.0
        %2408 = vmatpush1.msra.mxu0 0.0
        %2409 = vmatprep.subr.mxu0 0.0
        %2410 = vmatpush1.msra.mxu0 0.0
        %2411 = vmatprep.subr.mxu0 0.0
        %2412 = vmatpush1.msra.mxu0 0.0
        %2413 = vmatprep.subr.mxu0 0.0
        %2414 = vmatpush1.msra.mxu0 0.0
        %2415 = vmatprep.subr.mxu0 0.0
        %2416 = vmatpush1.msra.mxu0 0.0
        %2417 = vmatprep.subr.mxu0 0.0
        %2418 = vmatpush1.msra.mxu0 0.0
        %2419 = vmatprep.subr.mxu0 0.0
        %2420 = vmatpush1.msra.mxu0 0.0
        %2421 = vmatprep.subr.mxu0 0.0
        %2422 = vmatpush1.msra.mxu0 0.0
        %2423 = vmatprep.mubr.f32.mxu0 0.0
        %2424 = vmatmul.mubr.f32.gmra.mrb[0].mxu0 %v2355
        %v2425 = vpop.f32.mrb[0].mxu0
        %v2426 = vadd.f32 0.0, %v2425
        %v2427 = vpop.f32.mrb[0].mxu0
        %2428 = vdwg.mxu0
        %2429 = vrot.lane.b32.xlu0 %v1989, 112
        %v2430 = vpop.permute.xlu0 %2429
        %2431 = vrot.lane.b32.xlu0 %v2076, 112
        %v2432 = vpop.permute.xlu0 %2431
        %2433 = vrot.lane.b32.xlu0 %v2081, 112
        %v2434 = vpop.permute.xlu0 %2433
        %v2435 = vsel %vm1119, %v2430, 0
        %v2437 = vsel %vm1119, %v2432, 0
        %v2439 = vsel %vm1119, %v2434, 0
        %2441 = vmatprep.subr.mxu0 0.0
        %2442 = vmatpush1.xpose.msra.mxu0 %v2437
        %2443 = vmatprep.subr.mxu0 0.0
        %2444 = vmatpush1.xpose.msra.mxu0 %v2439
        %2445 = vmatprep.subr.mxu0 0.0
        %2446 = vmatpush1.xpose.msra.mxu0 0.0
        %2447 = vmatprep.subr.mxu0 0.0
        %2448 = vmatpush1.xpose.msra.mxu0 0.0
        %2449 = vmatprep.subr.mxu0 0.0
        %2450 = vmatpush1.xpose.msra.mxu0 0.0
        %2451 = vmatprep.subr.mxu0 0.0
        %2452 = vmatpush1.xpose.msra.mxu0 0.0
        %2453 = vmatprep.subr.mxu0 0.0
        %2454 = vmatpush1.xpose.msra.mxu0 0.0
        %2455 = vmatprep.subr.mxu0 0.0
        %2456 = vmatpush1.xpose.msra.mxu0 0.0
        %2457 = vmatprep.subr.mxu0 0.0
        %2458 = vmatpush1.xpose.msra.mxu0 0.0
        %2459 = vmatprep.subr.mxu0 0.0
        %2460 = vmatpush1.xpose.msra.mxu0 0.0
        %2461 = vmatprep.subr.mxu0 0.0
        %2462 = vmatpush1.xpose.msra.mxu0 0.0
        %2463 = vmatprep.subr.mxu0 0.0
        %2464 = vmatpush1.xpose.msra.mxu0 0.0
        %2465 = vmatprep.subr.mxu0 0.0
        %2466 = vmatpush1.xpose.msra.mxu0 0.0
        %2467 = vmatprep.subr.mxu0 0.0
        %2468 = vmatpush1.xpose.msra.mxu0 0.0
        %2469 = vmatprep.subr.mxu0 0.0
        %2470 = vmatpush1.xpose.msra.mxu0 0.0
        %2471 = vmatprep.subr.mxu0 0.0
        %2472 = vmatpush1.xpose.msra.mxu0 0.0
        %2473 = vmatprep.subr.mxu0 0.0
        %2474 = vmatpush1.xpose.msra.mxu0 0.0
        %2475 = vmatprep.subr.mxu0 0.0
        %2476 = vmatpush1.xpose.msra.mxu0 0.0
        %2477 = vmatprep.subr.mxu0 0.0
        %2478 = vmatpush1.xpose.msra.mxu0 0.0
        %2479 = vmatprep.subr.mxu0 0.0
        %2480 = vmatpush1.xpose.msra.mxu0 0.0
        %2481 = vmatprep.subr.mxu0 0.0
        %2482 = vmatpush1.xpose.msra.mxu0 0.0
        %2483 = vmatprep.subr.mxu0 0.0
        %2484 = vmatpush1.xpose.msra.mxu0 0.0
        %2485 = vmatprep.subr.mxu0 0.0
        %2486 = vmatpush1.xpose.msra.mxu0 0.0
        %2487 = vmatprep.subr.mxu0 0.0
        %2488 = vmatpush1.xpose.msra.mxu0 0.0
        %2489 = vmatprep.subr.mxu0 0.0
        %2490 = vmatpush1.xpose.msra.mxu0 0.0
        %2491 = vmatprep.subr.mxu0 0.0
        %2492 = vmatpush1.xpose.msra.mxu0 0.0
        %2493 = vmatprep.subr.mxu0 0.0
        %2494 = vmatpush1.xpose.msra.mxu0 0.0
        %2495 = vmatprep.subr.mxu0 0.0
        %2496 = vmatpush1.xpose.msra.mxu0 0.0
        %2497 = vmatprep.subr.mxu0 0.0
        %2498 = vmatpush1.xpose.msra.mxu0 0.0
        %2499 = vmatprep.subr.mxu0 0.0
        %2500 = vmatpush1.xpose.msra.mxu0 0.0
        %2501 = vmatprep.subr.mxu0 0.0
        %2502 = vmatpush1.xpose.msra.mxu0 0.0
        %2503 = vmatprep.subr.mxu0 0.0
        %2504 = vmatpush1.xpose.msra.mxu0 0.0
        %2505 = vmatprep.mubr.f32.mxu0 0.0
        %2506 = vmatmul.mubr.f32.gmra.mrb[0].mxu0 %v2435
        %v2507 = vpop.f32.mrb[0].mxu0
        %v2508 = vadd.f32 %v1030, %v2507
        %v2509 = vpop.f32.mrb[0].mxu0
        %2510 = vdwg.mxu0
        %v2511 = vsel %vm2163, %v2508, -inf
        %2512 = vmax.xlane.f32.xlu0 %v2511
        %v2513 = vpop.xlane.xlu0 %2512
        %v2514 = vsub.f32 %v2508, %v2513
        %v2515 = vmul.f32 %v2514, 1.442695
        %v2516 = vpow.pop %v2515
        %v2517 = vsel %vm2163, %v2516, 0.0
        %2518 = vadd.xlane.f32.xlu0 %v2517
        %v2519 = vpop.xlane.xlu0 %2518
        %v2520 = vrcp.pop %v2519
        %v2521 = vmul.f32 %v2516, %v2520
        %2522 = vrot.lane.b32.xlu0 %v2076, 80
        %v2523 = vpop.permute.xlu0 %2522
        %2524 = vrot.lane.b32.xlu0 %v2081, 80
        %v2525 = vpop.permute.xlu0 %2524
        %v2528 = vsel %vm2163, %v2521, 0
        %v2530 = vsel %vm2183, %v2525, 0
        %2532 = vmatprep.subr.mxu0 0.0
        %2533 = vmatpush1.msra.mxu0 %v2523
        %2534 = vmatprep.subr.mxu0 0.0
        %2535 = vmatpush1.msra.mxu0 %v2530
        %2536 = vmatprep.subr.mxu0 0.0
        %2537 = vmatpush1.msra.mxu0 0.0
        %2538 = vmatprep.subr.mxu0 0.0
        %2539 = vmatpush1.msra.mxu0 0.0
        %2540 = vmatprep.subr.mxu0 0.0
        %2541 = vmatpush1.msra.mxu0 0.0
        %2542 = vmatprep.subr.mxu0 0.0
        %2543 = vmatpush1.msra.mxu0 0.0
        %2544 = vmatprep.subr.mxu0 0.0
        %2545 = vmatpush1.msra.mxu0 0.0
        %2546 = vmatprep.subr.mxu0 0.0
        %2547 = vmatpush1.msra.mxu0 0.0
        %2548 = vmatprep.subr.mxu0 0.0
        %2549 = vmatpush1.msra.mxu0 0.0
        %2550 = vmatprep.subr.mxu0 0.0
        %2551 = vmatpush1.msra.mxu0 0.0
        %2552 = vmatprep.subr.mxu0 0.0
        %2553 = vmatpush1.msra.mxu0 0.0
        %2554 = vmatprep.subr.mxu0 0.0
        %2555 = vmatpush1.msra.mxu0 0.0
        %2556 = vmatprep.subr.mxu0 0.0
        %2557 = vmatpush1.msra.mxu0 0.0
        %2558 = vmatprep.subr.mxu0 0.0
        %2559 = vmatpush1.msra.mxu0 0.0
        %2560 = vmatprep.subr.mxu0 0.0
        %2561 = vmatpush1.msra.mxu0 0.0
        %2562 = vmatprep.subr.mxu0 0.0
        %2563 = vmatpush1.msra.mxu0 0.0
        %2564 = vmatprep.subr.mxu0 0.0
        %2565 = vmatpush1.msra.mxu0 0.0
        %2566 = vmatprep.subr.mxu0 0.0
        %2567 = vmatpush1.msra.mxu0 0.0
        %2568 = vmatprep.subr.mxu0 0.0
        %2569 = vmatpush1.msra.mxu0 0.0
        %2570 = vmatprep.subr.mxu0 0.0
        %2571 = vmatpush1.msra.mxu0 0.0
        %2572 = vmatprep.subr.mxu0 0.0
        %2573 = vmatpush1.msra.mxu0 0.0
        %2574 = vmatprep.subr.mxu0 0.0
        %2575 = vmatpush1.msra.mxu0 0.0
        %2576 = vmatprep.subr.mxu0 0.0
        %2577 = vmatpush1.msra.mxu0 0.0
        %2578 = vmatprep.subr.mxu0 0.0
        %2579 = vmatpush1.msra.mxu0 0.0
        %2580 = vmatprep.subr.mxu0 0.0
        %2581 = vmatpush1.msra.mxu0 0.0
        %2582 = vmatprep.subr.mxu0 0.0
        %2583 = vmatpush1.msra.mxu0 0.0
        %2584 = vmatprep.subr.mxu0 0.0
        %2585 = vmatpush1.msra.mxu0 0.0
        %2586 = vmatprep.subr.mxu0 0.0
        %2587 = vmatpush1.msra.mxu0 0.0
        %2588 = vmatprep.subr.mxu0 0.0
        %2589 = vmatpush1.msra.mxu0 0.0
        %2590 = vmatprep.subr.mxu0 0.0
        %2591 = vmatpush1.msra.mxu0 0.0
        %2592 = vmatprep.subr.mxu0 0.0
        %2593 = vmatpush1.msra.mxu0 0.0
        %2594 = vmatprep.subr.mxu0 0.0
        %2595 = vmatpush1.msra.mxu0 0.0
        %2596 = vmatprep.mubr.f32.mxu0 0.0
        %2597 = vmatmul.mubr.f32.gmra.mrb[0].mxu0 %v2528
        %v2598 = vpop.f32.mrb[0].mxu0
        %v2599 = vadd.f32 0.0, %v2598
        %v2600 = vpop.f32.mrb[0].mxu0
        %2601 = vdwg.mxu0
        %2602 = vrot.lane.b32.xlu0 %v1989, 104
        %v2603 = vpop.permute.xlu0 %2602
        %2604 = vrot.lane.b32.xlu0 %v2076, 104
        %v2605 = vpop.permute.xlu0 %2604
        %2606 = vrot.lane.b32.xlu0 %v2081, 104
        %v2607 = vpop.permute.xlu0 %2606
        %v2608 = vsel %vm1119, %v2603, 0
        %v2610 = vsel %vm1119, %v2605, 0
        %v2612 = vsel %vm1119, %v2607, 0
        %2614 = vmatprep.subr.mxu0 0.0
        %2615 = vmatpush1.xpose.msra.mxu0 %v2610
        %2616 = vmatprep.subr.mxu0 0.0
        %2617 = vmatpush1.xpose.msra.mxu0 %v2612
        %2618 = vmatprep.subr.mxu0 0.0
        %2619 = vmatpush1.xpose.msra.mxu0 0.0
        %2620 = vmatprep.subr.mxu0 0.0
        %2621 = vmatpush1.xpose.msra.mxu0 0.0
        %2622 = vmatprep.subr.mxu0 0.0
        %2623 = vmatpush1.xpose.msra.mxu0 0.0
        %2624 = vmatprep.subr.mxu0 0.0
        %2625 = vmatpush1.xpose.msra.mxu0 0.0
        %2626 = vmatprep.subr.mxu0 0.0
        %2627 = vmatpush1.xpose.msra.mxu0 0.0
        %2628 = vmatprep.subr.mxu0 0.0
        %2629 = vmatpush1.xpose.msra.mxu0 0.0
        %2630 = vmatprep.subr.mxu0 0.0
        %2631 = vmatpush1.xpose.msra.mxu0 0.0
        %2632 = vmatprep.subr.mxu0 0.0
        %2633 = vmatpush1.xpose.msra.mxu0 0.0
        %2634 = vmatprep.subr.mxu0 0.0
        %2635 = vmatpush1.xpose.msra.mxu0 0.0
        %2636 = vmatprep.subr.mxu0 0.0
        %2637 = vmatpush1.xpose.msra.mxu0 0.0
        %2638 = vmatprep.subr.mxu0 0.0
        %2639 = vmatpush1.xpose.msra.mxu0 0.0
        %2640 = vmatprep.subr.mxu0 0.0
        %2641 = vmatpush1.xpose.msra.mxu0 0.0
        %2642 = vmatprep.subr.mxu0 0.0
        %2643 = vmatpush1.xpose.msra.mxu0 0.0
        %2644 = vmatprep.subr.mxu0 0.0
        %2645 = vmatpush1.xpose.msra.mxu0 0.0
        %2646 = vmatprep.subr.mxu0 0.0
        %2647 = vmatpush1.xpose.msra.mxu0 0.0
        %2648 = vmatprep.subr.mxu0 0.0
        %2649 = vmatpush1.xpose.msra.mxu0 0.0
        %2650 = vmatprep.subr.mxu0 0.0
        %2651 = vmatpush1.xpose.msra.mxu0 0.0
        %2652 = vmatprep.subr.mxu0 0.0
        %2653 = vmatpush1.xpose.msra.mxu0 0.0
        %2654 = vmatprep.subr.mxu0 0.0
        %2655 = vmatpush1.xpose.msra.mxu0 0.0
        %2656 = vmatprep.subr.mxu0 0.0
        %2657 = vmatpush1.xpose.msra.mxu0 0.0
        %2658 = vmatprep.subr.mxu0 0.0
        %2659 = vmatpush1.xpose.msra.mxu0 0.0
        %2660 = vmatprep.subr.mxu0 0.0
        %2661 = vmatpush1.xpose.msra.mxu0 0.0
        %2662 = vmatprep.subr.mxu0 0.0
        %2663 = vmatpush1.xpose.msra.mxu0 0.0
        %2664 = vmatprep.subr.mxu0 0.0
        %2665 = vmatpush1.xpose.msra.mxu0 0.0
        %2666 = vmatprep.subr.mxu0 0.0
        %2667 = vmatpush1.xpose.msra.mxu0 0.0
        %2668 = vmatprep.subr.mxu0 0.0
        %2669 = vmatpush1.xpose.msra.mxu0 0.0
        %2670 = vmatprep.subr.mxu0 0.0
        %2671 = vmatpush1.xpose.msra.mxu0 0.0
        %2672 = vmatprep.subr.mxu0 0.0
        %2673 = vmatpush1.xpose.msra.mxu0 0.0
        %2674 = vmatprep.subr.mxu0 0.0
        %2675 = vmatpush1.xpose.msra.mxu0 0.0
        %2676 = vmatprep.subr.mxu0 0.0
        %2677 = vmatpush1.xpose.msra.mxu0 0.0
        %2678 = vmatprep.mubr.f32.mxu0 0.0
        %2679 = vmatmul.mubr.f32.gmra.mrb[0].mxu0 %v2608
        %v2680 = vpop.f32.mrb[0].mxu0
        %v2681 = vadd.f32 %v1030, %v2680
        %v2682 = vpop.f32.mrb[0].mxu0
        %2683 = vdwg.mxu0
        %v2684 = vsel %vm2163, %v2681, -inf
        %2685 = vmax.xlane.f32.xlu0 %v2684
        %v2686 = vpop.xlane.xlu0 %2685
        %v2687 = vsub.f32 %v2681, %v2686
        %v2688 = vmul.f32 %v2687, 1.442695
        %v2689 = vpow.pop %v2688
        %v2690 = vsel %vm2163, %v2689, 0.0
        %2691 = vadd.xlane.f32.xlu0 %v2690
        %v2692 = vpop.xlane.xlu0 %2691
        %v2693 = vrcp.pop %v2692
        %v2694 = vmul.f32 %v2689, %v2693
        %2695 = vrot.lane.b32.xlu0 %v2076, 72
        %v2696 = vpop.permute.xlu0 %2695
        %2697 = vrot.lane.b32.xlu0 %v2081, 72
        %v2698 = vpop.permute.xlu0 %2697
        %v2701 = vsel %vm2163, %v2694, 0
        %v2703 = vsel %vm2183, %v2698, 0
        %2705 = vmatprep.subr.mxu0 0.0
        %2706 = vmatpush1.msra.mxu0 %v2696
        %2707 = vmatprep.subr.mxu0 0.0
        %2708 = vmatpush1.msra.mxu0 %v2703
        %2709 = vmatprep.subr.mxu0 0.0
        %2710 = vmatpush1.msra.mxu0 0.0
        %2711 = vmatprep.subr.mxu0 0.0
        %2712 = vmatpush1.msra.mxu0 0.0
        %2713 = vmatprep.subr.mxu0 0.0
        %2714 = vmatpush1.msra.mxu0 0.0
        %2715 = vmatprep.subr.mxu0 0.0
        %2716 = vmatpush1.msra.mxu0 0.0
        %2717 = vmatprep.subr.mxu0 0.0
        %2718 = vmatpush1.msra.mxu0 0.0
        %2719 = vmatprep.subr.mxu0 0.0
        %2720 = vmatpush1.msra.mxu0 0.0
        %2721 = vmatprep.subr.mxu0 0.0
        %2722 = vmatpush1.msra.mxu0 0.0
        %2723 = vmatprep.subr.mxu0 0.0
        %2724 = vmatpush1.msra.mxu0 0.0
        %2725 = vmatprep.subr.mxu0 0.0
        %2726 = vmatpush1.msra.mxu0 0.0
        %2727 = vmatprep.subr.mxu0 0.0
        %2728 = vmatpush1.msra.mxu0 0.0
        %2729 = vmatprep.subr.mxu0 0.0
        %2730 = vmatpush1.msra.mxu0 0.0
        %2731 = vmatprep.subr.mxu0 0.0
        %2732 = vmatpush1.msra.mxu0 0.0
        %2733 = vmatprep.subr.mxu0 0.0
        %2734 = vmatpush1.msra.mxu0 0.0
        %2735 = vmatprep.subr.mxu0 0.0
        %2736 = vmatpush1.msra.mxu0 0.0
        %2737 = vmatprep.subr.mxu0 0.0
        %2738 = vmatpush1.msra.mxu0 0.0
        %2739 = vmatprep.subr.mxu0 0.0
        %2740 = vmatpush1.msra.mxu0 0.0
        %2741 = vmatprep.subr.mxu0 0.0
        %2742 = vmatpush1.msra.mxu0 0.0
        %2743 = vmatprep.subr.mxu0 0.0
        %2744 = vmatpush1.msra.mxu0 0.0
        %2745 = vmatprep.subr.mxu0 0.0
        %2746 = vmatpush1.msra.mxu0 0.0
        %2747 = vmatprep.subr.mxu0 0.0
        %2748 = vmatpush1.msra.mxu0 0.0
        %2749 = vmatprep.subr.mxu0 0.0
        %2750 = vmatpush1.msra.mxu0 0.0
        %2751 = vmatprep.subr.mxu0 0.0
        %2752 = vmatpush1.msra.mxu0 0.0
        %2753 = vmatprep.subr.mxu0 0.0
        %2754 = vmatpush1.msra.mxu0 0.0
        %2755 = vmatprep.subr.mxu0 0.0
        %2756 = vmatpush1.msra.mxu0 0.0
        %2757 = vmatprep.subr.mxu0 0.0
        %2758 = vmatpush1.msra.mxu0 0.0
        %2759 = vmatprep.subr.mxu0 0.0
        %2760 = vmatpush1.msra.mxu0 0.0
        %2761 = vmatprep.subr.mxu0 0.0
        %2762 = vmatpush1.msra.mxu0 0.0
        %2763 = vmatprep.subr.mxu0 0.0
        %2764 = vmatpush1.msra.mxu0 0.0
        %2765 = vmatprep.subr.mxu0 0.0
        %2766 = vmatpush1.msra.mxu0 0.0
        %2767 = vmatprep.subr.mxu0 0.0
        %2768 = vmatpush1.msra.mxu0 0.0
        %2769 = vmatprep.mubr.f32.mxu0 0.0
        %2770 = vmatmul.mubr.f32.gmra.mrb[0].mxu0 %v2701
        %v2771 = vpop.f32.mrb[0].mxu0
        %v2772 = vadd.f32 0.0, %v2771
        %v2773 = vpop.f32.mrb[0].mxu0
        %2774 = vdwg.mxu0
        %2776 = vrot.lane.b32.xlu0 %v2426, 8
        %v2777 = vpop.permute.xlu0 %2776
        %2780 = vrot.lane.b32.xlu0 %v2599, 16
        %v2781 = vpop.permute.xlu0 %2780
        %2784 = vrot.lane.b32.xlu0 %v2772, 24
        %v2785 = vpop.permute.xlu0 %2784
        %v2787 = vsel %vm1119, %v2253, %v2777
        %v2788 = vsel %vm1789, %v2787, %v2781
        %v2789 = vsel %vm1791, %v2788, %v2785
        %v2790 = vld [vmem:[#allocation14] sm:$0xff]
        %v2791 = vld [vmem:[#allocation14 + $0x8] sm:$0xff]
        %v2792 = vld [vmem:[#allocation14 + $0x10] sm:$0xff]
        %v2793 = vld [vmem:[#allocation14 + $0x18] sm:$0xff]
        %v2794 = vld [vmem:[#allocation16] sm:$0x1]
        %v2796 = vlaneseq
        %v2797 = vshrl.u32 %v2796, 7
        %v2798 = vsub.s32 0, %v2797
        %v2799 = vrot.slane %v2794, %v2798
        %v2802 = vsel %vm1042, %v2789, 0
        %2804 = vmatprep.subr.mxu0 0.0
        %2805 = vmatpush1.msra.mxu0 %v2790
        %2806 = vmatprep.subr.mxu0 0.0
        %2807 = vmatpush1.msra.mxu0 %v2791
        %2808 = vmatprep.subr.mxu0 0.0
        %2809 = vmatpush1.msra.mxu0 %v2792
        %2810 = vmatprep.subr.mxu0 0.0
        %2811 = vmatpush1.msra.mxu0 %v2793
        %2812 = vmatprep.subr.mxu0 0.0
        %2813 = vmatpush1.msra.mxu0 0.0
        %2814 = vmatprep.subr.mxu0 0.0
        %2815 = vmatpush1.msra.mxu0 0.0
        %2816 = vmatprep.subr.mxu0 0.0
        %2817 = vmatpush1.msra.mxu0 0.0
        %2818 = vmatprep.subr.mxu0 0.0
        %2819 = vmatpush1.msra.mxu0 0.0
        %2820 = vmatprep.subr.mxu0 0.0
        %2821 = vmatpush1.msra.mxu0 0.0
        %2822 = vmatprep.subr.mxu0 0.0
        %2823 = vmatpush1.msra.mxu0 0.0
        %2824 = vmatprep.subr.mxu0 0.0
        %2825 = vmatpush1.msra.mxu0 0.0
        %2826 = vmatprep.subr.mxu0 0.0
        %2827 = vmatpush1.msra.mxu0 0.0
        %2828 = vmatprep.subr.mxu0 0.0
        %2829 = vmatpush1.msra.mxu0 0.0
        %2830 = vmatprep.subr.mxu0 0.0
        %2831 = vmatpush1.msra.mxu0 0.0
        %2832 = vmatprep.subr.mxu0 0.0
        %2833 = vmatpush1.msra.mxu0 0.0
        %2834 = vmatprep.subr.mxu0 0.0
        %2835 = vmatpush1.msra.mxu0 0.0
        %2836 = vmatprep.subr.mxu0 0.0
        %2837 = vmatpush1.msra.mxu0 0.0
        %2838 = vmatprep.subr.mxu0 0.0
        %2839 = vmatpush1.msra.mxu0 0.0
        %2840 = vmatprep.subr.mxu0 0.0
        %2841 = vmatpush1.msra.mxu0 0.0
        %2842 = vmatprep.subr.mxu0 0.0
        %2843 = vmatpush1.msra.mxu0 0.0
        %2844 = vmatprep.subr.mxu0 0.0
        %2845 = vmatpush1.msra.mxu0 0.0
        %2846 = vmatprep.subr.mxu0 0.0
        %2847 = vmatpush1.msra.mxu0 0.0
        %2848 = vmatprep.subr.mxu0 0.0
        %2849 = vmatpush1.msra.mxu0 0.0
        %2850 = vmatprep.subr.mxu0 0.0
        %2851 = vmatpush1.msra.mxu0 0.0
        %2852 = vmatprep.subr.mxu0 0.0
        %2853 = vmatpush1.msra.mxu0 0.0
        %2854 = vmatprep.subr.mxu0 0.0
        %2855 = vmatpush1.msra.mxu0 0.0
        %2856 = vmatprep.subr.mxu0 0.0
        %2857 = vmatpush1.msra.mxu0 0.0
        %2858 = vmatprep.subr.mxu0 0.0
        %2859 = vmatpush1.msra.mxu0 0.0
        %2860 = vmatprep.subr.mxu0 0.0
        %2861 = vmatpush1.msra.mxu0 0.0
        %2862 = vmatprep.subr.mxu0 0.0
        %2863 = vmatpush1.msra.mxu0 0.0
        %2864 = vmatprep.subr.mxu0 0.0
        %2865 = vmatpush1.msra.mxu0 0.0
        %2866 = vmatprep.subr.mxu0 0.0
        %2867 = vmatpush1.msra.mxu0 0.0
        %2868 = vmatprep.mubr.f32.mxu0 0.0
        %2869 = vmatmul.mubr.f32.gmra.mrb[0].mxu0 %v2802
        %v2870 = vpop.f32.mrb[0].mxu0
        %v2871 = vadd.f32 %v2799, %v2870
        %v2872 = vpop.f32.mrb[0].mxu0
        %2873 = vdwg.mxu0
        %v2874 = vadd.f32 %v1907, %v2871
        %v2875 = vld [vmem:[#allocation20] sm:$0x1]
        %v2876 = vld [vmem:[#allocation22] sm:$0x1]
        %v2877 = vsel %vm1042, %v2874, 0.0
        %2878 = vadd.xlane.f32.xlu0 %v2877
        %v2879 = vpop.xlane.xlu0 %2878
        %v2880 = vmul.f32 %v2879, %v1883
        %v2881 = vsub.f32 %v2874, %v2880
        %v2882 = vmul.f32 %v2881, %v2881
        %v2883 = vsel %vm1042, %v2882, 0.0
        %2884 = vadd.xlane.f32.xlu0 %v2883
        %v2885 = vpop.xlane.xlu0 %2884
        %v2886 = vmul.f32 %v2885, %v1883
        %v2887 = vadd.f32 %v2886, 1e-05
        %v2888 = vrsqrt.pop %v2887
        %v2889 = vmul.f32 %v2881, %v2888
        %v2891 = vlaneseq
        %v2892 = vshrl.u32 %v2891, 7
        %v2893 = vsub.s32 0, %v2892
        %v2894 = vrot.slane %v2875, %v2893
        %v2896 = vmul.f32 %v2889, %v2894
        %v2898 = vlaneseq
        %v2899 = vshrl.u32 %v2898, 7
        %v2900 = vsub.s32 0, %v2899
        %v2901 = vrot.slane %v2876, %v2900
        %v2903 = vadd.f32 %v2896, %v2901
        %v2904 = vld [vmem:[%s20] sm:$0xff]
        %v2905 = vld [vmem:[%s20 + $0x8] sm:$0xff]
        %v2906 = vld [vmem:[%s20 + $0x10] sm:$0xff]
        %v2907 = vld [vmem:[%s20 + $0x18] sm:$0xff]
        %v2908 = vld [vmem:[%s21] sm:$0x1]
        %v2910 = vlaneseq
        %v2911 = vshrl.u32 %v2910, 7
        %v2912 = vsub.s32 0, %v2911
        %v2913 = vrot.slane %v2908, %v2912
        %v2916 = vsel %vm1042, %v2903, 0
        %2918 = vmatprep.subr.mxu0 0.0
        %2919 = vmatpush1.msra.mxu0 %v2904
        %2920 = vmatprep.subr.mxu0 0.0
        %2921 = vmatpush1.msra.mxu0 %v2905
        %2922 = vmatprep.subr.mxu0 0.0
        %2923 = vmatpush1.msra.mxu0 %v2906
        %2924 = vmatprep.subr.mxu0 0.0
        %2925 = vmatpush1.msra.mxu0 %v2907
        %2926 = vmatprep.subr.mxu0 0.0
        %2927 = vmatpush1.msra.mxu0 0.0
        %2928 = vmatprep.subr.mxu0 0.0
        %2929 = vmatpush1.msra.mxu0 0.0
        %2930 = vmatprep.subr.mxu0 0.0
        %2931 = vmatpush1.msra.mxu0 0.0
        %2932 = vmatprep.subr.mxu0 0.0
        %2933 = vmatpush1.msra.mxu0 0.0
        %2934 = vmatprep.subr.mxu0 0.0
        %2935 = vmatpush1.msra.mxu0 0.0
        %2936 = vmatprep.subr.mxu0 0.0
        %2937 = vmatpush1.msra.mxu0 0.0
        %2938 = vmatprep.subr.mxu0 0.0
        %2939 = vmatpush1.msra.mxu0 0.0
        %2940 = vmatprep.subr.mxu0 0.0
        %2941 = vmatpush1.msra.mxu0 0.0
        %2942 = vmatprep.subr.mxu0 0.0
        %2943 = vmatpush1.msra.mxu0 0.0
        %2944 = vmatprep.subr.mxu0 0.0
        %2945 = vmatpush1.msra.mxu0 0.0
        %2946 = vmatprep.subr.mxu0 0.0
        %2947 = vmatpush1.msra.mxu0 0.0
        %2948 = vmatprep.subr.mxu0 0.0
        %2949 = vmatpush1.msra.mxu0 0.0
        %2950 = vmatprep.subr.mxu0 0.0
        %2951 = vmatpush1.msra.mxu0 0.0
        %2952 = vmatprep.subr.mxu0 0.0
        %2953 = vmatpush1.msra.mxu0 0.0
        %2954 = vmatprep.subr.mxu0 0.0
        %2955 = vmatpush1.msra.mxu0 0.0
        %2956 = vmatprep.subr.mxu0 0.0
        %2957 = vmatpush1.msra.mxu0 0.0
        %2958 = vmatprep.subr.mxu0 0.0
        %2959 = vmatpush1.msra.mxu0 0.0
        %2960 = vmatprep.subr.mxu0 0.0
        %2961 = vmatpush1.msra.mxu0 0.0
        %2962 = vmatprep.subr.mxu0 0.0
        %2963 = vmatpush1.msra.mxu0 0.0
        %2964 = vmatprep.subr.mxu0 0.0
        %2965 = vmatpush1.msra.mxu0 0.0
        %2966 = vmatprep.subr.mxu0 0.0
        %2967 = vmatpush1.msra.mxu0 0.0
        %2968 = vmatprep.subr.mxu0 0.0
        %2969 = vmatpush1.msra.mxu0 0.0
        %2970 = vmatprep.subr.mxu0 0.0
        %2971 = vmatpush1.msra.mxu0 0.0
        %2972 = vmatprep.subr.mxu0 0.0
        %2973 = vmatpush1.msra.mxu0 0.0
        %2974 = vmatprep.subr.mxu0 0.0
        %2975 = vmatpush1.msra.mxu0 0.0
        %2976 = vmatprep.subr.mxu0 0.0
        %2977 = vmatpush1.msra.mxu0 0.0
        %2978 = vmatprep.subr.mxu0 0.0
        %2979 = vmatpush1.msra.mxu0 0.0
        %2980 = vmatprep.subr.mxu0 0.0
        %2981 = vmatpush1.msra.mxu0 0.0
        %2982 = vmatprep.mubr.f32.mxu0 0.0
        %2983 = vmatmul.mubr.f32.gmra.mrb[0].mxu0 %v2916
        %v2984 = vpop.f32.mrb[0].mxu0
        %v2985 = vadd.f32 %v2913, %v2984
        %v2986 = vpop.f32.mrb[0].mxu0
        %2987 = vdwg.mxu0
        %v2988 = vmax.f32 %v2985, 0.0
        %v2989 = vld [vmem:[%s22] sm:$0xff]
        %v2990 = vld [vmem:[%s22 + $0x8] sm:$0xff]
        %v2991 = vld [vmem:[%s22 + $0x10] sm:$0xff]
        %v2992 = vld [vmem:[%s22 + $0x18] sm:$0xff]
        %v2993 = vld [vmem:[%s22 + $0x20] sm:$0xff]
        %v2994 = vld [vmem:[%s22 + $0x28] sm:$0xff]
        %v2995 = vld [vmem:[%s22 + $0x30] sm:$0xff]
        %v2996 = vld [vmem:[%s22 + $0x38] sm:$0xff]
        %v2997 = vld [vmem:[%s23] sm:$0x1]
        %v2999 = vlaneseq
        %v3000 = vshrl.u32 %v2999, 7
        %v3001 = vsub.s32 0, %v3000
        %v3002 = vrot.slane %v2997, %v3001
        %vm3004 = vcmask 523264
        %v3006 = vsel %vm3004, %v2988, 0
        %3008 = vmatprep.subr.mxu0 0.0
        %3009 = vmatpush1.msra.mxu0 %v2989
        %3010 = vmatprep.subr.mxu0 0.0
        %3011 = vmatpush1.msra.mxu0 %v2990
        %3012 = vmatprep.subr.mxu0 0.0
        %3013 = vmatpush1.msra.mxu0 %v2991
        %3014 = vmatprep.subr.mxu0 0.0
        %3015 = vmatpush1.msra.mxu0 %v2992
        %3016 = vmatprep.subr.mxu0 0.0
        %3017 = vmatpush1.msra.mxu0 %v2993
        %3018 = vmatprep.subr.mxu0 0.0
        %3019 = vmatpush1.msra.mxu0 %v2994
        %3020 = vmatprep.subr.mxu0 0.0
        %3021 = vmatpush1.msra.mxu0 %v2995
        %3022 = vmatprep.subr.mxu0 0.0
        %3023 = vmatpush1.msra.mxu0 %v2996
        %3024 = vmatprep.subr.mxu0 0.0
        %3025 = vmatpush1.msra.mxu0 0.0
        %3026 = vmatprep.subr.mxu0 0.0
        %3027 = vmatpush1.msra.mxu0 0.0
        %3028 = vmatprep.subr.mxu0 0.0
        %3029 = vmatpush1.msra.mxu0 0.0
        %3030 = vmatprep.subr.mxu0 0.0
        %3031 = vmatpush1.msra.mxu0 0.0
        %3032 = vmatprep.subr.mxu0 0.0
        %3033 = vmatpush1.msra.mxu0 0.0
        %3034 = vmatprep.subr.mxu0 0.0
        %3035 = vmatpush1.msra.mxu0 0.0
        %3036 = vmatprep.subr.mxu0 0.0
        %3037 = vmatpush1.msra.mxu0 0.0
        %3038 = vmatprep.subr.mxu0 0.0
        %3039 = vmatpush1.msra.mxu0 0.0
        %3040 = vmatprep.subr.mxu0 0.0
        %3041 = vmatpush1.msra.mxu0 0.0
        %3042 = vmatprep.subr.mxu0 0.0
        %3043 = vmatpush1.msra.mxu0 0.0
        %3044 = vmatprep.subr.mxu0 0.0
        %3045 = vmatpush1.msra.mxu0 0.0
        %3046 = vmatprep.subr.mxu0 0.0
        %3047 = vmatpush1.msra.mxu0 0.0
        %3048 = vmatprep.subr.mxu0 0.0
        %3049 = vmatpush1.msra.mxu0 0.0
        %3050 = vmatprep.subr.mxu0 0.0
        %3051 = vmatpush1.msra.mxu0 0.0
        %3052 = vmatprep.subr.mxu0 0.0
        %3053 = vmatpush1.msra.mxu0 0.0
        %3054 = vmatprep.subr.mxu0 0.0
        %3055 = vmatpush1.msra.mxu0 0.0
        %3056 = vmatprep.subr.mxu0 0.0
        %3057 = vmatpush1.msra.mxu0 0.0
        %3058 = vmatprep.subr.mxu0 0.0
        %3059 = vmatpush1.msra.mxu0 0.0
        %3060 = vmatprep.subr.mxu0 0.0
        %3061 = vmatpush1.msra.mxu0 0.0
        %3062 = vmatprep.subr.mxu0 0.0
        %3063 = vmatpush1.msra.mxu0 0.0
        %3064 = vmatprep.subr.mxu0 0.0
        %3065 = vmatpush1.msra.mxu0 0.0
        %3066 = vmatprep.subr.mxu0 0.0
        %3067 = vmatpush1.msra.mxu0 0.0
        %3068 = vmatprep.subr.mxu0 0.0
        %3069 = vmatpush1.msra.mxu0 0.0
        %3070 = vmatprep.subr.mxu0 0.0
        %3071 = vmatpush1.msra.mxu0 0.0
        %3072 = vmatprep.mubr.f32.mxu0 0.0
        %3073 = vmatmul.mubr.f32.gmra.mrb[0].mxu0 %v3006
        %v3074 = vpop.f32.mrb[0].mxu0
        %v3075 = vadd.f32 %v3002, %v3074
        %v3076 = vpop.f32.mrb[0].mxu0
        %3077 = vdwg.mxu0
        %v3078 = vadd.f32 %v2903, %v3075
        %v3079 = vld [vmem:[#allocation23] sm:$0x1]
        %v3080 = vld [vmem:[#allocation25] sm:$0x1]
        %v3081 = vsel %vm1042, %v3078, 0.0
        %3082 = vadd.xlane.f32.xlu0 %v3081
        %v3083 = vpop.xlane.xlu0 %3082
        %v3084 = vmul.f32 %v3083, %v1883
        %v3085 = vsub.f32 %v3078, %v3084
        %v3086 = vmul.f32 %v3085, %v3085
        %v3087 = vsel %vm1042, %v3086, 0.0
        %3088 = vadd.xlane.f32.xlu0 %v3087
        %v3089 = vpop.xlane.xlu0 %3088
        %v3090 = vmul.f32 %v3089, %v1883
        %v3091 = vadd.f32 %v3090, 1e-05
        %v3092 = vrsqrt.pop %v3091
        %v3093 = vmul.f32 %v3085, %v3092
        %v3095 = vlaneseq
        %v3096 = vshrl.u32 %v3095, 7
        %v3097 = vsub.s32 0, %v3096
        %v3098 = vrot.slane %v3079, %v3097
        %v3100 = vmul.f32 %v3093, %v3098
        %v3102 = vlaneseq
        %v3103 = vshrl.u32 %v3102, 7
        %v3104 = vsub.s32 0, %v3103
        %v3105 = vrot.slane %v3080, %v3104
        %v3107 = vadd.f32 %v3100, %v3105
        %s3108 = scalar_lea.vmem %s4, 32
        %v3109 = vld [vmem:[%s3108] sm:$0xff]
        %v3110 = vld [vmem:[%s3108 + $0x8] sm:$0xff]
        %v3111 = vld [vmem:[%s3108 + $0x10] sm:$0xff]
        %v3112 = vld [vmem:[%s3108 + $0x18] sm:$0xff]
        %s3113 = scalar_lea.vmem %s5, 1
        %v3114 = vld [vmem:[%s3113] sm:$0x1]
        %v3116 = vlaneseq
        %v3117 = vshrl.u32 %v3116, 7
        %v3118 = vsub.s32 0, %v3117
        %v3119 = vrot.slane %v3114, %v3118
        %v3122 = vsel %vm1042, %v3107, 0
        %3124 = vmatprep.subr.mxu0 0.0
        %3125 = vmatpush1.msra.mxu0 %v3109
        %3126 = vmatprep.subr.mxu0 0.0
        %3127 = vmatpush1.msra.mxu0 %v3110
        %3128 = vmatprep.subr.mxu0 0.0
        %3129 = vmatpush1.msra.mxu0 %v3111
        %3130 = vmatprep.subr.mxu0 0.0
        %3131 = vmatpush1.msra.mxu0 %v3112
        %3132 = vmatprep.subr.mxu0 0.0
        %3133 = vmatpush1.msra.mxu0 0.0
        %3134 = vmatprep.subr.mxu0 0.0
        %3135 = vmatpush1.msra.mxu0 0.0
        %3136 = vmatprep.subr.mxu0 0.0
        %3137 = vmatpush1.msra.mxu0 0.0
        %3138 = vmatprep.subr.mxu0 0.0
        %3139 = vmatpush1.msra.mxu0 0.0
        %3140 = vmatprep.subr.mxu0 0.0
        %3141 = vmatpush1.msra.mxu0 0.0
        %3142 = vmatprep.subr.mxu0 0.0
        %3143 = vmatpush1.msra.mxu0 0.0
        %3144 = vmatprep.subr.mxu0 0.0
        %3145 = vmatpush1.msra.mxu0 0.0
        %3146 = vmatprep.subr.mxu0 0.0
        %3147 = vmatpush1.msra.mxu0 0.0
        %3148 = vmatprep.subr.mxu0 0.0
        %3149 = vmatpush1.msra.mxu0 0.0
        %3150 = vmatprep.subr.mxu0 0.0
        %3151 = vmatpush1.msra.mxu0 0.0
        %3152 = vmatprep.subr.mxu0 0.0
        %3153 = vmatpush1.msra.mxu0 0.0
        %3154 = vmatprep.subr.mxu0 0.0
        %3155 = vmatpush1.msra.mxu0 0.0
        %3156 = vmatprep.subr.mxu0 0.0
        %3157 = vmatpush1.msra.mxu0 0.0
        %3158 = vmatprep.subr.mxu0 0.0
        %3159 = vmatpush1.msra.mxu0 0.0
        %3160 = vmatprep.subr.mxu0 0.0
        %3161 = vmatpush1.msra.mxu0 0.0
        %3162 = vmatprep.subr.mxu0 0.0
        %3163 = vmatpush1.msra.mxu0 0.0
        %3164 = vmatprep.subr.mxu0 0.0
        %3165 = vmatpush1.msra.mxu0 0.0
        %3166 = vmatprep.subr.mxu0 0.0
        %3167 = vmatpush1.msra.mxu0 0.0
        %3168 = vmatprep.subr.mxu0 0.0
        %3169 = vmatpush1.msra.mxu0 0.0
        %3170 = vmatprep.subr.mxu0 0.0
        %3171 = vmatpush1.msra.mxu0 0.0
        %3172 = vmatprep.subr.mxu0 0.0
        %3173 = vmatpush1.msra.mxu0 0.0
        %3174 = vmatprep.subr.mxu0 0.0
        %3175 = vmatpush1.msra.mxu0 0.0
        %3176 = vmatprep.subr.mxu0 0.0
        %3177 = vmatpush1.msra.mxu0 0.0
        %3178 = vmatprep.subr.mxu0 0.0
        %3179 = vmatpush1.msra.mxu0 0.0
        %3180 = vmatprep.subr.mxu0 0.0
        %3181 = vmatpush1.msra.mxu0 0.0
        %3182 = vmatprep.subr.mxu0 0.0
        %3183 = vmatpush1.msra.mxu0 0.0
        %3184 = vmatprep.subr.mxu0 0.0
        %3185 = vmatpush1.msra.mxu0 0.0
        %3186 = vmatprep.subr.mxu0 0.0
        %3187 = vmatpush1.msra.mxu0 0.0
        %3188 = vmatprep.mubr.f32.mxu0 0.0
        %3189 = vmatmul.mubr.f32.gmra.mrb[0].mxu0 %v3122
        %v3190 = vpop.f32.mrb[0].mxu0
        %v3191 = vadd.f32 %v3119, %v3190
        %v3192 = vpop.f32.mrb[0].mxu0
        %3193 = vdwg.mxu0
        %3195 = vrot.lane.b32.xlu0 %v3191, 96
        %v3196 = vpop.permute.xlu0 %3195
        %v3197 = vsel %vm1119, %v3191, 0
        %v3199 = vsel %vm1119, %v3196, 0
        %3201 = vmatprep.subr.mxu0 0.0
        %3202 = vmatpush1.xpose.msra.mxu0 %v3199
        %3203 = vmatprep.subr.mxu0 0.0
        %3204 = vmatpush1.xpose.msra.mxu0 0.0
        %3205 = vmatprep.subr.mxu0 0.0
        %3206 = vmatpush1.xpose.msra.mxu0 0.0
        %3207 = vmatprep.subr.mxu0 0.0
        %3208 = vmatpush1.xpose.msra.mxu0 0.0
        %3209 = vmatprep.subr.mxu0 0.0
        %3210 = vmatpush1.xpose.msra.mxu0 0.0
        %3211 = vmatprep.subr.mxu0 0.0
        %3212 = vmatpush1.xpose.msra.mxu0 0.0
        %3213 = vmatprep.subr.mxu0 0.0
        %3214 = vmatpush1.xpose.msra.mxu0 0.0
        %3215 = vmatprep.subr.mxu0 0.0
        %3216 = vmatpush1.xpose.msra.mxu0 0.0
        %3217 = vmatprep.subr.mxu0 0.0
        %3218 = vmatpush1.xpose.msra.mxu0 0.0
        %3219 = vmatprep.subr.mxu0 0.0
        %3220 = vmatpush1.xpose.msra.mxu0 0.0
        %3221 = vmatprep.subr.mxu0 0.0
        %3222 = vmatpush1.xpose.msra.mxu0 0.0
        %3223 = vmatprep.subr.mxu0 0.0
        %3224 = vmatpush1.xpose.msra.mxu0 0.0
        %3225 = vmatprep.subr.mxu0 0.0
        %3226 = vmatpush1.xpose.msra.mxu0 0.0
        %3227 = vmatprep.subr.mxu0 0.0
        %3228 = vmatpush1.xpose.msra.mxu0 0.0
        %3229 = vmatprep.subr.mxu0 0.0
        %3230 = vmatpush1.xpose.msra.mxu0 0.0
        %3231 = vmatprep.subr.mxu0 0.0
        %3232 = vmatpush1.xpose.msra.mxu0 0.0
        %3233 = vmatprep.subr.mxu0 0.0
        %3234 = vmatpush1.xpose.msra.mxu0 0.0
        %3235 = vmatprep.subr.mxu0 0.0
        %3236 = vmatpush1.xpose.msra.mxu0 0.0
        %3237 = vmatprep.subr.mxu0 0.0
        %3238 = vmatpush1.xpose.msra.mxu0 0.0
        %3239 = vmatprep.subr.mxu0 0.0
        %3240 = vmatpush1.xpose.msra.mxu0 0.0
        %3241 = vmatprep.subr.mxu0 0.0
        %3242 = vmatpush1.xpose.msra.mxu0 0.0
        %3243 = vmatprep.subr.mxu0 0.0
        %3244 = vmatpush1.xpose.msra.mxu0 0.0
        %3245 = vmatprep.subr.mxu0 0.0
        %3246 = vmatpush1.xpose.msra.mxu0 0.0
        %3247 = vmatprep.subr.mxu0 0.0
        %3248 = vmatpush1.xpose.msra.mxu0 0.0
        %3249 = vmatprep.subr.mxu0 0.0
        %3250 = vmatpush1.xpose.msra.mxu0 0.0
        %3251 = vmatprep.subr.mxu0 0.0
        %3252 = vmatpush1.xpose.msra.mxu0 0.0
        %3253 = vmatprep.subr.mxu0 0.0
        %3254 = vmatpush1.xpose.msra.mxu0 0.0
        %3255 = vmatprep.subr.mxu0 0.0
        %3256 = vmatpush1.xpose.msra.mxu0 0.0
        %3257 = vmatprep.subr.mxu0 0.0
        %3258 = vmatpush1.xpose.msra.mxu0 0.0
        %3259 = vmatprep.subr.mxu0 0.0
        %3260 = vmatpush1.xpose.msra.mxu0 0.0
        %3261 = vmatprep.subr.mxu0 0.0
        %3262 = vmatpush1.xpose.msra.mxu0 0.0
        %3263 = vmatprep.subr.mxu0 0.0
        %3264 = vmatpush1.xpose.msra.mxu0 0.0
        %3265 = vmatprep.mubr.f32.mxu0 0.0
        %3266 = vmatmul.mubr.f32.gmra.mrb[0].mxu0 %v3197
        %v3267 = vpop.f32.mrb[0].mxu0
        %v3268 = vadd.f32 %v1029, %v3267
        %v3269 = vpop.f32.mrb[0].mxu0
        %3270 = vdwg.mxu0
        %v3271 = vsel %vm1119, %v3268, -inf
        %3272 = vmax.xlane.f32.xlu0 %v3271
        %v3273 = vpop.xlane.xlu0 %3272
        %v3274 = vsub.f32 %v3268, %v3273
        %v3275 = vmul.f32 %v3274, 1.442695
        %v3276 = vpow.pop %v3275
        %v3277 = vsel %vm1119, %v3276, 0.0
        %3278 = vadd.xlane.f32.xlu0 %v3277
        %v3279 = vpop.xlane.xlu0 %3278
        %v3280 = vrcp.pop %v3279
        %v3281 = vmul.f32 %v3276, %v3280
        %3282 = vrot.lane.b32.xlu0 %v3191, 64
        %v3283 = vpop.permute.xlu0 %3282
        %v3286 = vsel %vm1119, %v3281, 0
        %3288 = vmatprep.subr.mxu0 0.0
        %3289 = vmatpush1.msra.mxu0 %v3283
        %3290 = vmatprep.subr.mxu0 0.0
        %3291 = vmatpush1.msra.mxu0 0.0
        %3292 = vmatprep.subr.mxu0 0.0
        %3293 = vmatpush1.msra.mxu0 0.0
        %3294 = vmatprep.subr.mxu0 0.0
        %3295 = vmatpush1.msra.mxu0 0.0
        %3296 = vmatprep.subr.mxu0 0.0
        %3297 = vmatpush1.msra.mxu0 0.0
        %3298 = vmatprep.subr.mxu0 0.0
        %3299 = vmatpush1.msra.mxu0 0.0
        %3300 = vmatprep.subr.mxu0 0.0
        %3301 = vmatpush1.msra.mxu0 0.0
        %3302 = vmatprep.subr.mxu0 0.0
        %3303 = vmatpush1.msra.mxu0 0.0
        %3304 = vmatprep.subr.mxu0 0.0
        %3305 = vmatpush1.msra.mxu0 0.0
        %3306 = vmatprep.subr.mxu0 0.0
        %3307 = vmatpush1.msra.mxu0 0.0
        %3308 = vmatprep.subr.mxu0 0.0
        %3309 = vmatpush1.msra.mxu0 0.0
        %3310 = vmatprep.subr.mxu0 0.0
        %3311 = vmatpush1.msra.mxu0 0.0
        %3312 = vmatprep.subr.mxu0 0.0
        %3313 = vmatpush1.msra.mxu0 0.0
        %3314 = vmatprep.subr.mxu0 0.0
        %3315 = vmatpush1.msra.mxu0 0.0
        %3316 = vmatprep.subr.mxu0 0.0
        %3317 = vmatpush1.msra.mxu0 0.0
        %3318 = vmatprep.subr.mxu0 0.0
        %3319 = vmatpush1.msra.mxu0 0.0
        %3320 = vmatprep.subr.mxu0 0.0
        %3321 = vmatpush1.msra.mxu0 0.0
        %3322 = vmatprep.subr.mxu0 0.0
        %3323 = vmatpush1.msra.mxu0 0.0
        %3324 = vmatprep.subr.mxu0 0.0
        %3325 = vmatpush1.msra.mxu0 0.0
        %3326 = vmatprep.subr.mxu0 0.0
        %3327 = vmatpush1.msra.mxu0 0.0
        %3328 = vmatprep.subr.mxu0 0.0
        %3329 = vmatpush1.msra.mxu0 0.0
        %3330 = vmatprep.subr.mxu0 0.0
        %3331 = vmatpush1.msra.mxu0 0.0
        %3332 = vmatprep.subr.mxu0 0.0
        %3333 = vmatpush1.msra.mxu0 0.0
        %3334 = vmatprep.subr.mxu0 0.0
        %3335 = vmatpush1.msra.mxu0 0.0
        %3336 = vmatprep.subr.mxu0 0.0
        %3337 = vmatpush1.msra.mxu0 0.0
        %3338 = vmatprep.subr.mxu0 0.0
        %3339 = vmatpush1.msra.mxu0 0.0
        %3340 = vmatprep.subr.mxu0 0.0
        %3341 = vmatpush1.msra.mxu0 0.0
        %3342 = vmatprep.subr.mxu0 0.0
        %3343 = vmatpush1.msra.mxu0 0.0
        %3344 = vmatprep.subr.mxu0 0.0
        %3345 = vmatpush1.msra.mxu0 0.0
        %3346 = vmatprep.subr.mxu0 0.0
        %3347 = vmatpush1.msra.mxu0 0.0
        %3348 = vmatprep.subr.mxu0 0.0
        %3349 = vmatpush1.msra.mxu0 0.0
        %3350 = vmatprep.subr.mxu0 0.0
        %3351 = vmatpush1.msra.mxu0 0.0
        %3352 = vmatprep.mubr.f32.mxu0 0.0
        %3353 = vmatmul.mubr.f32.gmra.mrb[0].mxu0 %v3286
        %v3354 = vpop.f32.mrb[0].mxu0
        %v3355 = vadd.f32 0.0, %v3354
        %v3356 = vpop.f32.mrb[0].mxu0
        %3357 = vdwg.mxu0
        %3358 = vrot.lane.b32.xlu0 %v3191, 120
        %v3359 = vpop.permute.xlu0 %3358
        %3360 = vrot.lane.b32.xlu0 %v3191, 88
        %v3361 = vpop.permute.xlu0 %3360
        %v3362 = vsel %vm1119, %v3359, 0
        %v3364 = vsel %vm1119, %v3361, 0
        %3366 = vmatprep.subr.mxu0 0.0
        %3367 = vmatpush1.xpose.msra.mxu0 %v3364
        %3368 = vmatprep.subr.mxu0 0.0
        %3369 = vmatpush1.xpose.msra.mxu0 0.0
        %3370 = vmatprep.subr.mxu0 0.0
        %3371 = vmatpush1.xpose.msra.mxu0 0.0
        %3372 = vmatprep.subr.mxu0 0.0
        %3373 = vmatpush1.xpose.msra.mxu0 0.0
        %3374 = vmatprep.subr.mxu0 0.0
        %3375 = vmatpush1.xpose.msra.mxu0 0.0
        %3376 = vmatprep.subr.mxu0 0.0
        %3377 = vmatpush1.xpose.msra.mxu0 0.0
        %3378 = vmatprep.subr.mxu0 0.0
        %3379 = vmatpush1.xpose.msra.mxu0 0.0
        %3380 = vmatprep.subr.mxu0 0.0
        %3381 = vmatpush1.xpose.msra.mxu0 0.0
        %3382 = vmatprep.subr.mxu0 0.0
        %3383 = vmatpush1.xpose.msra.mxu0 0.0
        %3384 = vmatprep.subr.mxu0 0.0
        %3385 = vmatpush1.xpose.msra.mxu0 0.0
        %3386 = vmatprep.subr.mxu0 0.0
        %3387 = vmatpush1.xpose.msra.mxu0 0.0
        %3388 = vmatprep.subr.mxu0 0.0
        %3389 = vmatpush1.xpose.msra.mxu0 0.0
        %3390 = vmatprep.subr.mxu0 0.0
        %3391 = vmatpush1.xpose.msra.mxu0 0.0
        %3392 = vmatprep.subr.mxu0 0.0
        %3393 = vmatpush1.xpose.msra.mxu0 0.0
        %3394 = vmatprep.subr.mxu0 0.0
        %3395 = vmatpush1.xpose.msra.mxu0 0.0
        %3396 = vmatprep.subr.mxu0 0.0
        %3397 = vmatpush1.xpose.msra.mxu0 0.0
        %3398 = vmatprep.subr.mxu0 0.0
        %3399 = vmatpush1.xpose.msra.mxu0 0.0
        %3400 = vmatprep.subr.mxu0 0.0
        %3401 = vmatpush1.xpose.msra.mxu0 0.0
        %3402 = vmatprep.subr.mxu0 0.0
        %3403 = vmatpush1.xpose.msra.mxu0 0.0
        %3404 = vmatprep.subr.mxu0 0.0
        %3405 = vmatpush1.xpose.msra.mxu0 0.0
        %3406 = vmatprep.subr.mxu0 0.0
        %3407 = vmatpush1.xpose.msra.mxu0 0.0
        %3408 = vmatprep.subr.mxu0 0.0
        %3409 = vmatpush1.xpose.msra.mxu0 0.0
        %3410 = vmatprep.subr.mxu0 0.0
        %3411 = vmatpush1.xpose.msra.mxu0 0.0
        %3412 = vmatprep.subr.mxu0 0.0
        %3413 = vmatpush1.xpose.msra.mxu0 0.0
        %3414 = vmatprep.subr.mxu0 0.0
        %3415 = vmatpush1.xpose.msra.mxu0 0.0
        %3416 = vmatprep.subr.mxu0 0.0
        %3417 = vmatpush1.xpose.msra.mxu0 0.0
        %3418 = vmatprep.subr.mxu0 0.0
        %3419 = vmatpush1.xpose.msra.mxu0 0.0
        %3420 = vmatprep.subr.mxu0 0.0
        %3421 = vmatpush1.xpose.msra.mxu0 0.0
        %3422 = vmatprep.subr.mxu0 0.0
        %3423 = vmatpush1.xpose.msra.mxu0 0.0
        %3424 = vmatprep.subr.mxu0 0.0
        %3425 = vmatpush1.xpose.msra.mxu0 0.0
        %3426 = vmatprep.subr.mxu0 0.0
        %3427 = vmatpush1.xpose.msra.mxu0 0.0
        %3428 = vmatprep.subr.mxu0 0.0
        %3429 = vmatpush1.xpose.msra.mxu0 0.0
        %3430 = vmatprep.mubr.f32.mxu0 0.0
        %3431 = vmatmul.mubr.f32.gmra.mrb[0].mxu0 %v3362
        %v3432 = vpop.f32.mrb[0].mxu0
        %v3433 = vadd.f32 %v1029, %v3432
        %v3434 = vpop.f32.mrb[0].mxu0
        %3435 = vdwg.mxu0
        %v3436 = vsel %vm1119, %v3433, -inf
        %3437 = vmax.xlane.f32.xlu0 %v3436
        %v3438 = vpop.xlane.xlu0 %3437
        %v3439 = vsub.f32 %v3433, %v3438
        %v3440 = vmul.f32 %v3439, 1.442695
        %v3441 = vpow.pop %v3440
        %v3442 = vsel %vm1119, %v3441, 0.0
        %3443 = vadd.xlane.f32.xlu0 %v3442
        %v3444 = vpop.xlane.xlu0 %3443
        %v3445 = vrcp.pop %v3444
        %v3446 = vmul.f32 %v3441, %v3445
        %3447 = vrot.lane.b32.xlu0 %v3191, 56
        %v3448 = vpop.permute.xlu0 %3447
        %v3451 = vsel %vm1119, %v3446, 0
        %3453 = vmatprep.subr.mxu0 0.0
        %3454 = vmatpush1.msra.mxu0 %v3448
        %3455 = vmatprep.subr.mxu0 0.0
        %3456 = vmatpush1.msra.mxu0 0.0
        %3457 = vmatprep.subr.mxu0 0.0
        %3458 = vmatpush1.msra.mxu0 0.0
        %3459 = vmatprep.subr.mxu0 0.0
        %3460 = vmatpush1.msra.mxu0 0.0
        %3461 = vmatprep.subr.mxu0 0.0
        %3462 = vmatpush1.msra.mxu0 0.0
        %3463 = vmatprep.subr.mxu0 0.0
        %3464 = vmatpush1.msra.mxu0 0.0
        %3465 = vmatprep.subr.mxu0 0.0
        %3466 = vmatpush1.msra.mxu0 0.0
        %3467 = vmatprep.subr.mxu0 0.0
        %3468 = vmatpush1.msra.mxu0 0.0
        %3469 = vmatprep.subr.mxu0 0.0
        %3470 = vmatpush1.msra.mxu0 0.0
        %3471 = vmatprep.subr.mxu0 0.0
        %3472 = vmatpush1.msra.mxu0 0.0
        %3473 = vmatprep.subr.mxu0 0.0
        %3474 = vmatpush1.msra.mxu0 0.0
        %3475 = vmatprep.subr.mxu0 0.0
        %3476 = vmatpush1.msra.mxu0 0.0
        %3477 = vmatprep.subr.mxu0 0.0
        %3478 = vmatpush1.msra.mxu0 0.0
        %3479 = vmatprep.subr.mxu0 0.0
        %3480 = vmatpush1.msra.mxu0 0.0
        %3481 = vmatprep.subr.mxu0 0.0
        %3482 = vmatpush1.msra.mxu0 0.0
        %3483 = vmatprep.subr.mxu0 0.0
        %3484 = vmatpush1.msra.mxu0 0.0
        %3485 = vmatprep.subr.mxu0 0.0
        %3486 = vmatpush1.msra.mxu0 0.0
        %3487 = vmatprep.subr.mxu0 0.0
        %3488 = vmatpush1.msra.mxu0 0.0
        %3489 = vmatprep.subr.mxu0 0.0
        %3490 = vmatpush1.msra.mxu0 0.0
        %3491 = vmatprep.subr.mxu0 0.0
        %3492 = vmatpush1.msra.mxu0 0.0
        %3493 = vmatprep.subr.mxu0 0.0
        %3494 = vmatpush1.msra.mxu0 0.0
        %3495 = vmatprep.subr.mxu0 0.0
        %3496 = vmatpush1.msra.mxu0 0.0
        %3497 = vmatprep.subr.mxu0 0.0
        %3498 = vmatpush1.msra.mxu0 0.0
        %3499 = vmatprep.subr.mxu0 0.0
        %3500 = vmatpush1.msra.mxu0 0.0
        %3501 = vmatprep.subr.mxu0 0.0
        %3502 = vmatpush1.msra.mxu0 0.0
        %3503 = vmatprep.subr.mxu0 0.0
        %3504 = vmatpush1.msra.mxu0 0.0
        %3505 = vmatprep.subr.mxu0 0.0
        %3506 = vmatpush1.msra.mxu0 0.0
        %3507 = vmatprep.subr.mxu0 0.0
        %3508 = vmatpush1.msra.mxu0 0.0
        %3509 = vmatprep.subr.mxu0 0.0
        %3510 = vmatpush1.msra.mxu0 0.0
        %3511 = vmatprep.subr.mxu0 0.0
        %3512 = vmatpush1.msra.mxu0 0.0
        %3513 = vmatprep.subr.mxu0 0.0
        %3514 = vmatpush1.msra.mxu0 0.0
        %3515 = vmatprep.subr.mxu0 0.0
        %3516 = vmatpush1.msra.mxu0 0.0
        %3517 = vmatprep.mubr.f32.mxu0 0.0
        %3518 = vmatmul.mubr.f32.gmra.mrb[0].mxu0 %v3451
        %v3519 = vpop.f32.mrb[0].mxu0
        %v3520 = vadd.f32 0.0, %v3519
        %v3521 = vpop.f32.mrb[0].mxu0
        %3522 = vdwg.mxu0
        %3523 = vrot.lane.b32.xlu0 %v3191, 112
        %v3524 = vpop.permute.xlu0 %3523
        %3525 = vrot.lane.b32.xlu0 %v3191, 80
        %v3526 = vpop.permute.xlu0 %3525
        %v3527 = vsel %vm1119, %v3524, 0
        %v3529 = vsel %vm1119, %v3526, 0
        %3531 = vmatprep.subr.mxu0 0.0
        %3532 = vmatpush1.xpose.msra.mxu0 %v3529
        %3533 = vmatprep.subr.mxu0 0.0
        %3534 = vmatpush1.xpose.msra.mxu0 0.0
        %3535 = vmatprep.subr.mxu0 0.0
        %3536 = vmatpush1.xpose.msra.mxu0 0.0
        %3537 = vmatprep.subr.mxu0 0.0
        %3538 = vmatpush1.xpose.msra.mxu0 0.0
        %3539 = vmatprep.subr.mxu0 0.0
        %3540 = vmatpush1.xpose.msra.mxu0 0.0
        %3541 = vmatprep.subr.mxu0 0.0
        %3542 = vmatpush1.xpose.msra.mxu0 0.0
        %3543 = vmatprep.subr.mxu0 0.0
        %3544 = vmatpush1.xpose.msra.mxu0 0.0
        %3545 = vmatprep.subr.mxu0 0.0
        %3546 = vmatpush1.xpose.msra.mxu0 0.0
        %3547 = vmatprep.subr.mxu0 0.0
        %3548 = vmatpush1.xpose.msra.mxu0 0.0
        %3549 = vmatprep.subr.mxu0 0.0
        %3550 = vmatpush1.xpose.msra.mxu0 0.0
        %3551 = vmatprep.subr.mxu0 0.0
        %3552 = vmatpush1.xpose.msra.mxu0 0.0
        %3553 = vmatprep.subr.mxu0 0.0
        %3554 = vmatpush1.xpose.msra.mxu0 0.0
        %3555 = vmatprep.subr.mxu0 0.0
        %3556 = vmatpush1.xpose.msra.mxu0 0.0
        %3557 = vmatprep.subr.mxu0 0.0
        %3558 = vmatpush1.xpose.msra.mxu0 0.0
        %3559 = vmatprep.subr.mxu0 0.0
        %3560 = vmatpush1.xpose.msra.mxu0 0.0
        %3561 = vmatprep.subr.mxu0 0.0
        %3562 = vmatpush1.xpose.msra.mxu0 0.0
        %3563 = vmatprep.subr.mxu0 0.0
        %3564 = vmatpush1.xpose.msra.mxu0 0.0
        %3565 = vmatprep.subr.mxu0 0.0
        %3566 = vmatpush1.xpose.msra.mxu0 0.0
        %3567 = vmatprep.subr.mxu0 0.0
        %3568 = vmatpush1.xpose.msra.mxu0 0.0
        %3569 = vmatprep.subr.mxu0 0.0
        %3570 = vmatpush1.xpose.msra.mxu0 0.0
        %3571 = vmatprep.subr.mxu0 0.0
        %3572 = vmatpush1.xpose.msra.mxu0 0.0
        %3573 = vmatprep.subr.mxu0 0.0
        %3574 = vmatpush1.xpose.msra.mxu0 0.0
        %3575 = vmatprep.subr.mxu0 0.0
        %3576 = vmatpush1.xpose.msra.mxu0 0.0
        %3577 = vmatprep.subr.mxu0 0.0
        %3578 = vmatpush1.xpose.msra.mxu0 0.0
        %3579 = vmatprep.subr.mxu0 0.0
        %3580 = vmatpush1.xpose.msra.mxu0 0.0
        %3581 = vmatprep.subr.mxu0 0.0
        %3582 = vmatpush1.xpose.msra.mxu0 0.0
        %3583 = vmatprep.subr.mxu0 0.0
        %3584 = vmatpush1.xpose.msra.mxu0 0.0
        %3585 = vmatprep.subr.mxu0 0.0
        %3586 = vmatpush1.xpose.msra.mxu0 0.0
        %3587 = vmatprep.subr.mxu0 0.0
        %3588 = vmatpush1.xpose.msra.mxu0 0.0
        %3589 = vmatprep.subr.mxu0 0.0
        %3590 = vmatpush1.xpose.msra.mxu0 0.0
        %3591 = vmatprep.subr.mxu0 0.0
        %3592 = vmatpush1.xpose.msra.mxu0 0.0
        %3593 = vmatprep.subr.mxu0 0.0
        %3594 = vmatpush1.xpose.msra.mxu0 0.0
        %3595 = vmatprep.mubr.f32.mxu0 0.0
        %3596 = vmatmul.mubr.f32.gmra.mrb[0].mxu0 %v3527
        %v3597 = vpop.f32.mrb[0].mxu0
        %v3598 = vadd.f32 %v1029, %v3597
        %v3599 = vpop.f32.mrb[0].mxu0
        %3600 = vdwg.mxu0
        %v3601 = vsel %vm1119, %v3598, -inf
        %3602 = vmax.xlane.f32.xlu0 %v3601
        %v3603 = vpop.xlane.xlu0 %3602
        %v3604 = vsub.f32 %v3598, %v3603
        %v3605 = vmul.f32 %v3604, 1.442695
        %v3606 = vpow.pop %v3605
        %v3607 = vsel %vm1119, %v3606, 0.0
        %3608 = vadd.xlane.f32.xlu0 %v3607
        %v3609 = vpop.xlane.xlu0 %3608
        %v3610 = vrcp.pop %v3609
        %v3611 = vmul.f32 %v3606, %v3610
        %3612 = vrot.lane.b32.xlu0 %v3191, 48
        %v3613 = vpop.permute.xlu0 %3612
        %v3616 = vsel %vm1119, %v3611, 0
        %3618 = vmatprep.subr.mxu0 0.0
        %3619 = vmatpush1.msra.mxu0 %v3613
        %3620 = vmatprep.subr.mxu0 0.0
        %3621 = vmatpush1.msra.mxu0 0.0
        %3622 = vmatprep.subr.mxu0 0.0
        %3623 = vmatpush1.msra.mxu0 0.0
        %3624 = vmatprep.subr.mxu0 0.0
        %3625 = vmatpush1.msra.mxu0 0.0
        %3626 = vmatprep.subr.mxu0 0.0
        %3627 = vmatpush1.msra.mxu0 0.0
        %3628 = vmatprep.subr.mxu0 0.0
        %3629 = vmatpush1.msra.mxu0 0.0
        %3630 = vmatprep.subr.mxu0 0.0
        %3631 = vmatpush1.msra.mxu0 0.0
        %3632 = vmatprep.subr.mxu0 0.0
        %3633 = vmatpush1.msra.mxu0 0.0
        %3634 = vmatprep.subr.mxu0 0.0
        %3635 = vmatpush1.msra.mxu0 0.0
        %3636 = vmatprep.subr.mxu0 0.0
        %3637 = vmatpush1.msra.mxu0 0.0
        %3638 = vmatprep.subr.mxu0 0.0
        %3639 = vmatpush1.msra.mxu0 0.0
        %3640 = vmatprep.subr.mxu0 0.0
        %3641 = vmatpush1.msra.mxu0 0.0
        %3642 = vmatprep.subr.mxu0 0.0
        %3643 = vmatpush1.msra.mxu0 0.0
        %3644 = vmatprep.subr.mxu0 0.0
        %3645 = vmatpush1.msra.mxu0 0.0
        %3646 = vmatprep.subr.mxu0 0.0
        %3647 = vmatpush1.msra.mxu0 0.0
        %3648 = vmatprep.subr.mxu0 0.0
        %3649 = vmatpush1.msra.mxu0 0.0
        %3650 = vmatprep.subr.mxu0 0.0
        %3651 = vmatpush1.msra.mxu0 0.0
        %3652 = vmatprep.subr.mxu0 0.0
        %3653 = vmatpush1.msra.mxu0 0.0
        %3654 = vmatprep.subr.mxu0 0.0
        %3655 = vmatpush1.msra.mxu0 0.0
        %3656 = vmatprep.subr.mxu0 0.0
        %3657 = vmatpush1.msra.mxu0 0.0
        %3658 = vmatprep.subr.mxu0 0.0
        %3659 = vmatpush1.msra.mxu0 0.0
        %3660 = vmatprep.subr.mxu0 0.0
        %3661 = vmatpush1.msra.mxu0 0.0
        %3662 = vmatprep.subr.mxu0 0.0
        %3663 = vmatpush1.msra.mxu0 0.0
        %3664 = vmatprep.subr.mxu0 0.0
        %3665 = vmatpush1.msra.mxu0 0.0
        %3666 = vmatprep.subr.mxu0 0.0
        %3667 = vmatpush1.msra.mxu0 0.0
        %3668 = vmatprep.subr.mxu0 0.0
        %3669 = vmatpush1.msra.mxu0 0.0
        %3670 = vmatprep.subr.mxu0 0.0
        %3671 = vmatpush1.msra.mxu0 0.0
        %3672 = vmatprep.subr.mxu0 0.0
        %3673 = vmatpush1.msra.mxu0 0.0
        %3674 = vmatprep.subr.mxu0 0.0
        %3675 = vmatpush1.msra.mxu0 0.0
        %3676 = vmatprep.subr.mxu0 0.0
        %3677 = vmatpush1.msra.mxu0 0.0
        %3678 = vmatprep.subr.mxu0 0.0
        %3679 = vmatpush1.msra.mxu0 0.0
        %3680 = vmatprep.subr.mxu0 0.0
        %3681 = vmatpush1.msra.mxu0 0.0
        %3682 = vmatprep.mubr.f32.mxu0 0.0
        %3683 = vmatmul.mubr.f32.gmra.mrb[0].mxu0 %v3616
        %v3684 = vpop.f32.mrb[0].mxu0
        %v3685 = vadd.f32 0.0, %v3684
        %v3686 = vpop.f32.mrb[0].mxu0
        %3687 = vdwg.mxu0
        %3688 = vrot.lane.b32.xlu0 %v3191, 104
        %v3689 = vpop.permute.xlu0 %3688
        %3690 = vrot.lane.b32.xlu0 %v3191, 72
        %v3691 = vpop.permute.xlu0 %3690
        %v3692 = vsel %vm1119, %v3689, 0
        %v3694 = vsel %vm1119, %v3691, 0
        %3696 = vmatprep.subr.mxu0 0.0
        %3697 = vmatpush1.xpose.msra.mxu0 %v3694
        %3698 = vmatprep.subr.mxu0 0.0
        %3699 = vmatpush1.xpose.msra.mxu0 0.0
        %3700 = vmatprep.subr.mxu0 0.0
        %3701 = vmatpush1.xpose.msra.mxu0 0.0
        %3702 = vmatprep.subr.mxu0 0.0
        %3703 = vmatpush1.xpose.msra.mxu0 0.0
        %3704 = vmatprep.subr.mxu0 0.0
        %3705 = vmatpush1.xpose.msra.mxu0 0.0
        %3706 = vmatprep.subr.mxu0 0.0
        %3707 = vmatpush1.xpose.msra.mxu0 0.0
        %3708 = vmatprep.subr.mxu0 0.0
        %3709 = vmatpush1.xpose.msra.mxu0 0.0
        %3710 = vmatprep.subr.mxu0 0.0
        %3711 = vmatpush1.xpose.msra.mxu0 0.0
        %3712 = vmatprep.subr.mxu0 0.0
        %3713 = vmatpush1.xpose.msra.mxu0 0.0
        %3714 = vmatprep.subr.mxu0 0.0
        %3715 = vmatpush1.xpose.msra.mxu0 0.0
        %3716 = vmatprep.subr.mxu0 0.0
        %3717 = vmatpush1.xpose.msra.mxu0 0.0
        %3718 = vmatprep.subr.mxu0 0.0
        %3719 = vmatpush1.xpose.msra.mxu0 0.0
        %3720 = vmatprep.subr.mxu0 0.0
        %3721 = vmatpush1.xpose.msra.mxu0 0.0
        %3722 = vmatprep.subr.mxu0 0.0
        %3723 = vmatpush1.xpose.msra.mxu0 0.0
        %3724 = vmatprep.subr.mxu0 0.0
        %3725 = vmatpush1.xpose.msra.mxu0 0.0
        %3726 = vmatprep.subr.mxu0 0.0
        %3727 = vmatpush1.xpose.msra.mxu0 0.0
        %3728 = vmatprep.subr.mxu0 0.0
        %3729 = vmatpush1.xpose.msra.mxu0 0.0
        %3730 = vmatprep.subr.mxu0 0.0
        %3731 = vmatpush1.xpose.msra.mxu0 0.0
        %3732 = vmatprep.subr.mxu0 0.0
        %3733 = vmatpush1.xpose.msra.mxu0 0.0
        %3734 = vmatprep.subr.mxu0 0.0
        %3735 = vmatpush1.xpose.msra.mxu0 0.0
        %3736 = vmatprep.subr.mxu0 0.0
        %3737 = vmatpush1.xpose.msra.mxu0 0.0
        %3738 = vmatprep.subr.mxu0 0.0
        %3739 = vmatpush1.xpose.msra.mxu0 0.0
        %3740 = vmatprep.subr.mxu0 0.0
        %3741 = vmatpush1.xpose.msra.mxu0 0.0
        %3742 = vmatprep.subr.mxu0 0.0
        %3743 = vmatpush1.xpose.msra.mxu0 0.0
        %3744 = vmatprep.subr.mxu0 0.0
        %3745 = vmatpush1.xpose.msra.mxu0 0.0
        %3746 = vmatprep.subr.mxu0 0.0
        %3747 = vmatpush1.xpose.msra.mxu0 0.0
        %3748 = vmatprep.subr.mxu0 0.0
        %3749 = vmatpush1.xpose.msra.mxu0 0.0
        %3750 = vmatprep.subr.mxu0 0.0
        %3751 = vmatpush1.xpose.msra.mxu0 0.0
        %3752 = vmatprep.subr.mxu0 0.0
        %3753 = vmatpush1.xpose.msra.mxu0 0.0
        %3754 = vmatprep.subr.mxu0 0.0
        %3755 = vmatpush1.xpose.msra.mxu0 0.0
        %3756 = vmatprep.subr.mxu0 0.0
        %3757 = vmatpush1.xpose.msra.mxu0 0.0
        %3758 = vmatprep.subr.mxu0 0.0
        %3759 = vmatpush1.xpose.msra.mxu0 0.0
        %3760 = vmatprep.mubr.f32.mxu0 0.0
        %3761 = vmatmul.mubr.f32.gmra.mrb[0].mxu0 %v3692
        %v3762 = vpop.f32.mrb[0].mxu0
        %v3763 = vadd.f32 %v1029, %v3762
        %v3764 = vpop.f32.mrb[0].mxu0
        %3765 = vdwg.mxu0
        %v3766 = vsel %vm1119, %v3763, -inf
        %3767 = vmax.xlane.f32.xlu0 %v3766
        %v3768 = vpop.xlane.xlu0 %3767
        %v3769 = vsub.f32 %v3763, %v3768
        %v3770 = vmul.f32 %v3769, 1.442695
        %v3771 = vpow.pop %v3770
        %v3772 = vsel %vm1119, %v3771, 0.0
        %3773 = vadd.xlane.f32.xlu0 %v3772
        %v3774 = vpop.xlane.xlu0 %3773
        %v3775 = vrcp.pop %v3774
        %v3776 = vmul.f32 %v3771, %v3775
        %3777 = vrot.lane.b32.xlu0 %v3191, 40
        %v3778 = vpop.permute.xlu0 %3777
        %v3781 = vsel %vm1119, %v3776, 0
        %3783 = vmatprep.subr.mxu0 0.0
        %3784 = vmatpush1.msra.mxu0 %v3778
        %3785 = vmatprep.subr.mxu0 0.0
        %3786 = vmatpush1.msra.mxu0 0.0
        %3787 = vmatprep.subr.mxu0 0.0
        %3788 = vmatpush1.msra.mxu0 0.0
        %3789 = vmatprep.subr.mxu0 0.0
        %3790 = vmatpush1.msra.mxu0 0.0
        %3791 = vmatprep.subr.mxu0 0.0
        %3792 = vmatpush1.msra.mxu0 0.0
        %3793 = vmatprep.subr.mxu0 0.0
        %3794 = vmatpush1.msra.mxu0 0.0
        %3795 = vmatprep.subr.mxu0 0.0
        %3796 = vmatpush1.msra.mxu0 0.0
        %3797 = vmatprep.subr.mxu0 0.0
        %3798 = vmatpush1.msra.mxu0 0.0
        %3799 = vmatprep.subr.mxu0 0.0
        %3800 = vmatpush1.msra.mxu0 0.0
        %3801 = vmatprep.subr.mxu0 0.0
        %3802 = vmatpush1.msra.mxu0 0.0
        %3803 = vmatprep.subr.mxu0 0.0
        %3804 = vmatpush1.msra.mxu0 0.0
        %3805 = vmatprep.subr.mxu0 0.0
        %3806 = vmatpush1.msra.mxu0 0.0
        %3807 = vmatprep.subr.mxu0 0.0
        %3808 = vmatpush1.msra.mxu0 0.0
        %3809 = vmatprep.subr.mxu0 0.0
        %3810 = vmatpush1.msra.mxu0 0.0
        %3811 = vmatprep.subr.mxu0 0.0
        %3812 = vmatpush1.msra.mxu0 0.0
        %3813 = vmatprep.subr.mxu0 0.0
        %3814 = vmatpush1.msra.mxu0 0.0
        %3815 = vmatprep.subr.mxu0 0.0
        %3816 = vmatpush1.msra.mxu0 0.0
        %3817 = vmatprep.subr.mxu0 0.0
        %3818 = vmatpush1.msra.mxu0 0.0
        %3819 = vmatprep.subr.mxu0 0.0
        %3820 = vmatpush1.msra.mxu0 0.0
        %3821 = vmatprep.subr.mxu0 0.0
        %3822 = vmatpush1.msra.mxu0 0.0
        %3823 = vmatprep.subr.mxu0 0.0
        %3824 = vmatpush1.msra.mxu0 0.0
        %3825 = vmatprep.subr.mxu0 0.0
        %3826 = vmatpush1.msra.mxu0 0.0
        %3827 = vmatprep.subr.mxu0 0.0
        %3828 = vmatpush1.msra.mxu0 0.0
        %3829 = vmatprep.subr.mxu0 0.0
        %3830 = vmatpush1.msra.mxu0 0.0
        %3831 = vmatprep.subr.mxu0 0.0
        %3832 = vmatpush1.msra.mxu0 0.0
        %3833 = vmatprep.subr.mxu0 0.0
        %3834 = vmatpush1.msra.mxu0 0.0
        %3835 = vmatprep.subr.mxu0 0.0
        %3836 = vmatpush1.msra.mxu0 0.0
        %3837 = vmatprep.subr.mxu0 0.0
        %3838 = vmatpush1.msra.mxu0 0.0
        %3839 = vmatprep.subr.mxu0 0.0
        %3840 = vmatpush1.msra.mxu0 0.0
        %3841 = vmatprep.subr.mxu0 0.0
        %3842 = vmatpush1.msra.mxu0 0.0
        %3843 = vmatprep.subr.mxu0 0.0
        %3844 = vmatpush1.msra.mxu0 0.0
        %3845 = vmatprep.subr.mxu0 0.0
        %3846 = vmatpush1.msra.mxu0 0.0
        %3847 = vmatprep.mubr.f32.mxu0 0.0
        %3848 = vmatmul.mubr.f32.gmra.mrb[0].mxu0 %v3781
        %v3849 = vpop.f32.mrb[0].mxu0
        %v3850 = vadd.f32 0.0, %v3849
        %v3851 = vpop.f32.mrb[0].mxu0
        %3852 = vdwg.mxu0
        %3854 = vrot.lane.b32.xlu0 %v3520, 8
        %v3855 = vpop.permute.xlu0 %3854
        %3858 = vrot.lane.b32.xlu0 %v3685, 16
        %v3859 = vpop.permute.xlu0 %3858
        %3862 = vrot.lane.b32.xlu0 %v3850, 24
        %v3863 = vpop.permute.xlu0 %3862
        %v3865 = vsel %vm1119, %v3355, %v3855
        %v3866 = vsel %vm1789, %v3865, %v3859
        %v3867 = vsel %vm1791, %v3866, %v3863
        %s3868 = scalar_lea.vmem %s6, 32
        %v3869 = vld [vmem:[%s3868] sm:$0xff]
        %v3870 = vld [vmem:[%s3868 + $0x8] sm:$0xff]
        %v3871 = vld [vmem:[%s3868 + $0x10] sm:$0xff]
        %v3872 = vld [vmem:[%s3868 + $0x18] sm:$0xff]
        %s3873 = scalar_lea.vmem [#allocation8], 1
        %v3874 = vld [vmem:[%s3873] sm:$0x1]
        %v3876 = vlaneseq
        %v3877 = vshrl.u32 %v3876, 7
        %v3878 = vsub.s32 0, %v3877
        %v3879 = vrot.slane %v3874, %v3878
        %v3882 = vsel %vm1042, %v3867, 0
        %3884 = vmatprep.subr.mxu0 0.0
        %3885 = vmatpush1.msra.mxu0 %v3869
        %3886 = vmatprep.subr.mxu0 0.0
        %3887 = vmatpush1.msra.mxu0 %v3870
        %3888 = vmatprep.subr.mxu0 0.0
        %3889 = vmatpush1.msra.mxu0 %v3871
        %3890 = vmatprep.subr.mxu0 0.0
        %3891 = vmatpush1.msra.mxu0 %v3872
        %3892 = vmatprep.subr.mxu0 0.0
        %3893 = vmatpush1.msra.mxu0 0.0
        %3894 = vmatprep.subr.mxu0 0.0
        %3895 = vmatpush1.msra.mxu0 0.0
        %3896 = vmatprep.subr.mxu0 0.0
        %3897 = vmatpush1.msra.mxu0 0.0
        %3898 = vmatprep.subr.mxu0 0.0
        %3899 = vmatpush1.msra.mxu0 0.0
        %3900 = vmatprep.subr.mxu0 0.0
        %3901 = vmatpush1.msra.mxu0 0.0
        %3902 = vmatprep.subr.mxu0 0.0
        %3903 = vmatpush1.msra.mxu0 0.0
        %3904 = vmatprep.subr.mxu0 0.0
        %3905 = vmatpush1.msra.mxu0 0.0
        %3906 = vmatprep.subr.mxu0 0.0
        %3907 = vmatpush1.msra.mxu0 0.0
        %3908 = vmatprep.subr.mxu0 0.0
        %3909 = vmatpush1.msra.mxu0 0.0
        %3910 = vmatprep.subr.mxu0 0.0
        %3911 = vmatpush1.msra.mxu0 0.0
        %3912 = vmatprep.subr.mxu0 0.0
        %3913 = vmatpush1.msra.mxu0 0.0
        %3914 = vmatprep.subr.mxu0 0.0
        %3915 = vmatpush1.msra.mxu0 0.0
        %3916 = vmatprep.subr.mxu0 0.0
        %3917 = vmatpush1.msra.mxu0 0.0
        %3918 = vmatprep.subr.mxu0 0.0
        %3919 = vmatpush1.msra.mxu0 0.0
        %3920 = vmatprep.subr.mxu0 0.0
        %3921 = vmatpush1.msra.mxu0 0.0
        %3922 = vmatprep.subr.mxu0 0.0
        %3923 = vmatpush1.msra.mxu0 0.0
        %3924 = vmatprep.subr.mxu0 0.0
        %3925 = vmatpush1.msra.mxu0 0.0
        %3926 = vmatprep.subr.mxu0 0.0
        %3927 = vmatpush1.msra.mxu0 0.0
        %3928 = vmatprep.subr.mxu0 0.0
        %3929 = vmatpush1.msra.mxu0 0.0
        %3930 = vmatprep.subr.mxu0 0.0
        %3931 = vmatpush1.msra.mxu0 0.0
        %3932 = vmatprep.subr.mxu0 0.0
        %3933 = vmatpush1.msra.mxu0 0.0
        %3934 = vmatprep.subr.mxu0 0.0
        %3935 = vmatpush1.msra.mxu0 0.0
        %3936 = vmatprep.subr.mxu0 0.0
        %3937 = vmatpush1.msra.mxu0 0.0
        %3938 = vmatprep.subr.mxu0 0.0
        %3939 = vmatpush1.msra.mxu0 0.0
        %3940 = vmatprep.subr.mxu0 0.0
        %3941 = vmatpush1.msra.mxu0 0.0
        %3942 = vmatprep.subr.mxu0 0.0
        %3943 = vmatpush1.msra.mxu0 0.0
        %3944 = vmatprep.subr.mxu0 0.0
        %3945 = vmatpush1.msra.mxu0 0.0
        %3946 = vmatprep.subr.mxu0 0.0
        %3947 = vmatpush1.msra.mxu0 0.0
        %3948 = vmatprep.mubr.f32.mxu0 0.0
        %3949 = vmatmul.mubr.f32.gmra.mrb[0].mxu0 %v3882
        %v3950 = vpop.f32.mrb[0].mxu0
        %v3951 = vadd.f32 %v3879, %v3950
        %v3952 = vpop.f32.mrb[0].mxu0
        %3953 = vdwg.mxu0
        %v3954 = vadd.f32 %v3107, %v3951
        %s3955 = scalar_lea.vmem [#allocation17], 1
        %v3956 = vld [vmem:[%s3955] sm:$0x1]
        %s3957 = scalar_lea.vmem [#allocation19], 1
        %v3958 = vld [vmem:[%s3957] sm:$0x1]
        %v3959 = vsel %vm1042, %v3954, 0.0
        %3960 = vadd.xlane.f32.xlu0 %v3959
        %v3961 = vpop.xlane.xlu0 %3960
        %v3962 = vmul.f32 %v3961, %v1883
        %v3963 = vsub.f32 %v3954, %v3962
        %v3964 = vmul.f32 %v3963, %v3963
        %v3965 = vsel %vm1042, %v3964, 0.0
        %3966 = vadd.xlane.f32.xlu0 %v3965
        %v3967 = vpop.xlane.xlu0 %3966
        %v3968 = vmul.f32 %v3967, %v1883
        %v3969 = vadd.f32 %v3968, 1e-05
        %v3970 = vrsqrt.pop %v3969
        %v3971 = vmul.f32 %v3963, %v3970
        %v3973 = vlaneseq
        %v3974 = vshrl.u32 %v3973, 7
        %v3975 = vsub.s32 0, %v3974
        %v3976 = vrot.slane %v3956, %v3975
        %v3978 = vmul.f32 %v3971, %v3976
        %v3980 = vlaneseq
        %v3981 = vshrl.u32 %v3980, 7
        %v3982 = vsub.s32 0, %v3981
        %v3983 = vrot.slane %v3958, %v3982
        %v3985 = vadd.f32 %v3978, %v3983
        %s3986 = scalar_lea.vmem %s8, 32
        %v3987 = vld [vmem:[%s3986] sm:$0xff]
        %v3988 = vld [vmem:[%s3986 + $0x8] sm:$0xff]
        %v3989 = vld [vmem:[%s3986 + $0x10] sm:$0xff]
        %v3990 = vld [vmem:[%s3986 + $0x18] sm:$0xff]
        %s3991 = scalar_lea.vmem [#allocation10], 1
        %v3992 = vld [vmem:[%s3991] sm:$0x1]
        %v3994 = vlaneseq
        %v3995 = vshrl.u32 %v3994, 7
        %v3996 = vsub.s32 0, %v3995
        %v3997 = vrot.slane %v3992, %v3996
        %v4000 = vsel %vm1042, %v3985, 0
        %4002 = vmatprep.subr.mxu0 0.0
        %4003 = vmatpush1.msra.mxu0 %v3987
        %4004 = vmatprep.subr.mxu0 0.0
        %4005 = vmatpush1.msra.mxu0 %v3988
        %4006 = vmatprep.subr.mxu0 0.0
        %4007 = vmatpush1.msra.mxu0 %v3989
        %4008 = vmatprep.subr.mxu0 0.0
        %4009 = vmatpush1.msra.mxu0 %v3990
        %4010 = vmatprep.subr.mxu0 0.0
        %4011 = vmatpush1.msra.mxu0 0.0
        %4012 = vmatprep.subr.mxu0 0.0
        %4013 = vmatpush1.msra.mxu0 0.0
        %4014 = vmatprep.subr.mxu0 0.0
        %4015 = vmatpush1.msra.mxu0 0.0
        %4016 = vmatprep.subr.mxu0 0.0
        %4017 = vmatpush1.msra.mxu0 0.0
        %4018 = vmatprep.subr.mxu0 0.0
        %4019 = vmatpush1.msra.mxu0 0.0
        %4020 = vmatprep.subr.mxu0 0.0
        %4021 = vmatpush1.msra.mxu0 0.0
        %4022 = vmatprep.subr.mxu0 0.0
        %4023 = vmatpush1.msra.mxu0 0.0
        %4024 = vmatprep.subr.mxu0 0.0
        %4025 = vmatpush1.msra.mxu0 0.0
        %4026 = vmatprep.subr.mxu0 0.0
        %4027 = vmatpush1.msra.mxu0 0.0
        %4028 = vmatprep.subr.mxu0 0.0
        %4029 = vmatpush1.msra.mxu0 0.0
        %4030 = vmatprep.subr.mxu0 0.0
        %4031 = vmatpush1.msra.mxu0 0.0
        %4032 = vmatprep.subr.mxu0 0.0
        %4033 = vmatpush1.msra.mxu0 0.0
        %4034 = vmatprep.subr.mxu0 0.0
        %4035 = vmatpush1.msra.mxu0 0.0
        %4036 = vmatprep.subr.mxu0 0.0
        %4037 = vmatpush1.msra.mxu0 0.0
        %4038 = vmatprep.subr.mxu0 0.0
        %4039 = vmatpush1.msra.mxu0 0.0
        %4040 = vmatprep.subr.mxu0 0.0
        %4041 = vmatpush1.msra.mxu0 0.0
        %4042 = vmatprep.subr.mxu0 0.0
        %4043 = vmatpush1.msra.mxu0 0.0
        %4044 = vmatprep.subr.mxu0 0.0
        %4045 = vmatpush1.msra.mxu0 0.0
        %4046 = vmatprep.subr.mxu0 0.0
        %4047 = vmatpush1.msra.mxu0 0.0
        %4048 = vmatprep.subr.mxu0 0.0
        %4049 = vmatpush1.msra.mxu0 0.0
        %4050 = vmatprep.subr.mxu0 0.0
        %4051 = vmatpush1.msra.mxu0 0.0
        %4052 = vmatprep.subr.mxu0 0.0
        %4053 = vmatpush1.msra.mxu0 0.0
        %4054 = vmatprep.subr.mxu0 0.0
        %4055 = vmatpush1.msra.mxu0 0.0
        %4056 = vmatprep.subr.mxu0 0.0
        %4057 = vmatpush1.msra.mxu0 0.0
        %4058 = vmatprep.subr.mxu0 0.0
        %4059 = vmatpush1.msra.mxu0 0.0
        %4060 = vmatprep.subr.mxu0 0.0
        %4061 = vmatpush1.msra.mxu0 0.0
        %4062 = vmatprep.subr.mxu0 0.0
        %4063 = vmatpush1.msra.mxu0 0.0
        %4064 = vmatprep.subr.mxu0 0.0
        %4065 = vmatpush1.msra.mxu0 0.0
        %4066 = vmatprep.mubr.f32.mxu0 0.0
        %4067 = vmatmul.mubr.f32.gmra.mrb[0].mxu0 %v4000
        %v4068 = vpop.f32.mrb[0].mxu0
        %v4069 = vadd.f32 %v3997, %v4068
        %v4070 = vpop.f32.mrb[0].mxu0
        %4071 = vdwg.mxu0
        %s4072 = scalar_lea.vmem [#allocation11], 32
        %v4073 = vld [vmem:[%s4072] sm:$0xff]
        %v4074 = vld [vmem:[%s4072 + $0x8] sm:$0xff]
        %v4075 = vld [vmem:[%s4072 + $0x10] sm:$0xff]
        %v4076 = vld [vmem:[%s4072 + $0x18] sm:$0xff]
        %s4077 = scalar_lea.vmem [#allocation13], 1
        %v4078 = vld [vmem:[%s4077] sm:$0x1]
        %v4080 = vlaneseq
        %v4081 = vshrl.u32 %v4080, 7
        %v4082 = vsub.s32 0, %v4081
        %v4083 = vrot.slane %v4078, %v4082
        %4085 = vmatprep.subr.mxu0 0.0
        %4086 = vmatpush1.msra.mxu0 %v4073
        %4087 = vmatprep.subr.mxu0 0.0
        %4088 = vmatpush1.msra.mxu0 %v4074
        %4089 = vmatprep.subr.mxu0 0.0
        %4090 = vmatpush1.msra.mxu0 %v4075
        %4091 = vmatprep.subr.mxu0 0.0
        %4092 = vmatpush1.msra.mxu0 %v4076
        %4093 = vmatprep.subr.mxu0 0.0
        %4094 = vmatpush1.msra.mxu0 0.0
        %4095 = vmatprep.subr.mxu0 0.0
        %4096 = vmatpush1.msra.mxu0 0.0
        %4097 = vmatprep.subr.mxu0 0.0
        %4098 = vmatpush1.msra.mxu0 0.0
        %4099 = vmatprep.subr.mxu0 0.0
        %4100 = vmatpush1.msra.mxu0 0.0
        %4101 = vmatprep.subr.mxu0 0.0
        %4102 = vmatpush1.msra.mxu0 0.0
        %4103 = vmatprep.subr.mxu0 0.0
        %4104 = vmatpush1.msra.mxu0 0.0
        %4105 = vmatprep.subr.mxu0 0.0
        %4106 = vmatpush1.msra.mxu0 0.0
        %4107 = vmatprep.subr.mxu0 0.0
        %4108 = vmatpush1.msra.mxu0 0.0
        %4109 = vmatprep.subr.mxu0 0.0
        %4110 = vmatpush1.msra.mxu0 0.0
        %4111 = vmatprep.subr.mxu0 0.0
        %4112 = vmatpush1.msra.mxu0 0.0
        %4113 = vmatprep.subr.mxu0 0.0
        %4114 = vmatpush1.msra.mxu0 0.0
        %4115 = vmatprep.subr.mxu0 0.0
        %4116 = vmatpush1.msra.mxu0 0.0
        %4117 = vmatprep.subr.mxu0 0.0
        %4118 = vmatpush1.msra.mxu0 0.0
        %4119 = vmatprep.subr.mxu0 0.0
        %4120 = vmatpush1.msra.mxu0 0.0
        %4121 = vmatprep.subr.mxu0 0.0
        %4122 = vmatpush1.msra.mxu0 0.0
        %4123 = vmatprep.subr.mxu0 0.0
        %4124 = vmatpush1.msra.mxu0 0.0
        %4125 = vmatprep.subr.mxu0 0.0
        %4126 = vmatpush1.msra.mxu0 0.0
        %4127 = vmatprep.subr.mxu0 0.0
        %4128 = vmatpush1.msra.mxu0 0.0
        %4129 = vmatprep.subr.mxu0 0.0
        %4130 = vmatpush1.msra.mxu0 0.0
        %4131 = vmatprep.subr.mxu0 0.0
        %4132 = vmatpush1.msra.mxu0 0.0
        %4133 = vmatprep.subr.mxu0 0.0
        %4134 = vmatpush1.msra.mxu0 0.0
        %4135 = vmatprep.subr.mxu0 0.0
        %4136 = vmatpush1.msra.mxu0 0.0
        %4137 = vmatprep.subr.mxu0 0.0
        %4138 = vmatpush1.msra.mxu0 0.0
        %4139 = vmatprep.subr.mxu0 0.0
        %4140 = vmatpush1.msra.mxu0 0.0
        %4141 = vmatprep.subr.mxu0 0.0
        %4142 = vmatpush1.msra.mxu0 0.0
        %4143 = vmatprep.subr.mxu0 0.0
        %4144 = vmatpush1.msra.mxu0 0.0
        %4145 = vmatprep.subr.mxu0 0.0
        %4146 = vmatpush1.msra.mxu0 0.0
        %4147 = vmatprep.subr.mxu0 0.0
        %4148 = vmatpush1.msra.mxu0 0.0
        %4149 = vmatprep.mubr.f32.mxu0 0.0
        %4150 = vmatmul.mubr.f32.gmra.mrb[0].mxu0 %v2004
        %v4151 = vpop.f32.mrb[0].mxu0
        %v4152 = vadd.f32 %v4083, %v4151
        %v4153 = vpop.f32.mrb[0].mxu0
        %4154 = vmatprep.mubr.f32.mxu0 0.0
        %4155 = vmatmul.mubr.f32.gmra.mrb[0].mxu0 %v2007
        %v4156 = vpop.f32.mrb[0].mxu0
        %v4157 = vadd.f32 %v4083, %v4156
        %v4158 = vpop.f32.mrb[0].mxu0
        %4159 = vdwg.mxu0
        %v4161 = vsel %vm1119, %v4069, 0
        %v4164 = vsel %vm1119, %v4152, 0
        %v4167 = vsel %vm1119, %v4157, 0
        %4169 = vmatprep.subr.mxu0 0.0
        %4170 = vmatpush1.xpose.msra.mxu0 %v4164
        %4171 = vmatprep.subr.mxu0 0.0
        %4172 = vmatpush1.xpose.msra.mxu0 %v4167
        %4173 = vmatprep.subr.mxu0 0.0
        %4174 = vmatpush1.xpose.msra.mxu0 0.0
        %4175 = vmatprep.subr.mxu0 0.0
        %4176 = vmatpush1.xpose.msra.mxu0 0.0
        %4177 = vmatprep.subr.mxu0 0.0
        %4178 = vmatpush1.xpose.msra.mxu0 0.0
        %4179 = vmatprep.subr.mxu0 0.0
        %4180 = vmatpush1.xpose.msra.mxu0 0.0
        %4181 = vmatprep.subr.mxu0 0.0
        %4182 = vmatpush1.xpose.msra.mxu0 0.0
        %4183 = vmatprep.subr.mxu0 0.0
        %4184 = vmatpush1.xpose.msra.mxu0 0.0
        %4185 = vmatprep.subr.mxu0 0.0
        %4186 = vmatpush1.xpose.msra.mxu0 0.0
        %4187 = vmatprep.subr.mxu0 0.0
        %4188 = vmatpush1.xpose.msra.mxu0 0.0
        %4189 = vmatprep.subr.mxu0 0.0
        %4190 = vmatpush1.xpose.msra.mxu0 0.0
        %4191 = vmatprep.subr.mxu0 0.0
        %4192 = vmatpush1.xpose.msra.mxu0 0.0
        %4193 = vmatprep.subr.mxu0 0.0
        %4194 = vmatpush1.xpose.msra.mxu0 0.0
        %4195 = vmatprep.subr.mxu0 0.0
        %4196 = vmatpush1.xpose.msra.mxu0 0.0
        %4197 = vmatprep.subr.mxu0 0.0
        %4198 = vmatpush1.xpose.msra.mxu0 0.0
        %4199 = vmatprep.subr.mxu0 0.0
        %4200 = vmatpush1.xpose.msra.mxu0 0.0
        %4201 = vmatprep.subr.mxu0 0.0
        %4202 = vmatpush1.xpose.msra.mxu0 0.0
        %4203 = vmatprep.subr.mxu0 0.0
        %4204 = vmatpush1.xpose.msra.mxu0 0.0
        %4205 = vmatprep.subr.mxu0 0.0
        %4206 = vmatpush1.xpose.msra.mxu0 0.0
        %4207 = vmatprep.subr.mxu0 0.0
        %4208 = vmatpush1.xpose.msra.mxu0 0.0
        %4209 = vmatprep.subr.mxu0 0.0
        %4210 = vmatpush1.xpose.msra.mxu0 0.0
        %4211 = vmatprep.subr.mxu0 0.0
        %4212 = vmatpush1.xpose.msra.mxu0 0.0
        %4213 = vmatprep.subr.mxu0 0.0
        %4214 = vmatpush1.xpose.msra.mxu0 0.0
        %4215 = vmatprep.subr.mxu0 0.0
        %4216 = vmatpush1.xpose.msra.mxu0 0.0
        %4217 = vmatprep.subr.mxu0 0.0
        %4218 = vmatpush1.xpose.msra.mxu0 0.0
        %4219 = vmatprep.subr.mxu0 0.0
        %4220 = vmatpush1.xpose.msra.mxu0 0.0
        %4221 = vmatprep.subr.mxu0 0.0
        %4222 = vmatpush1.xpose.msra.mxu0 0.0
        %4223 = vmatprep.subr.mxu0 0.0
        %4224 = vmatpush1.xpose.msra.mxu0 0.0
        %4225 = vmatprep.subr.mxu0 0.0
        %4226 = vmatpush1.xpose.msra.mxu0 0.0
        %4227 = vmatprep.subr.mxu0 0.0
        %4228 = vmatpush1.xpose.msra.mxu0 0.0
        %4229 = vmatprep.subr.mxu0 0.0
        %4230 = vmatpush1.xpose.msra.mxu0 0.0
        %4231 = vmatprep.subr.mxu0 0.0
        %4232 = vmatpush1.xpose.msra.mxu0 0.0
        %4233 = vmatprep.mubr.f32.mxu0 0.0
        %4234 = vmatmul.mubr.f32.gmra.mrb[0].mxu0 %v4161
        %v4235 = vpop.f32.mrb[0].mxu0
        %v4236 = vadd.f32 %v1030, %v4235
        %v4237 = vpop.f32.mrb[0].mxu0
        %4238 = vdwg.mxu0
        %v4239 = vsel %vm2163, %v4236, -inf
        %4240 = vmax.xlane.f32.xlu0 %v4239
        %v4241 = vpop.xlane.xlu0 %4240
        %v4242 = vsub.f32 %v4236, %v4241
        %v4243 = vmul.f32 %v4242, 1.442695
        %v4244 = vpow.pop %v4243
        %v4245 = vsel %vm2163, %v4244, 0.0
        %4246 = vadd.xlane.f32.xlu0 %v4245
        %v4247 = vpop.xlane.xlu0 %4246
        %v4248 = vrcp.pop %v4247
        %v4249 = vmul.f32 %v4244, %v4248
        %4250 = vrot.lane.b32.xlu0 %v4152, 96
        %v4251 = vpop.permute.xlu0 %4250
        %4252 = vrot.lane.b32.xlu0 %v4157, 96
        %v4253 = vpop.permute.xlu0 %4252
        %v4256 = vsel %vm2163, %v4249, 0
        %v4258 = vsel %vm2183, %v4253, 0
        %4260 = vmatprep.subr.mxu0 0.0
        %4261 = vmatpush1.msra.mxu0 %v4251
        %4262 = vmatprep.subr.mxu0 0.0
        %4263 = vmatpush1.msra.mxu0 %v4258
        %4264 = vmatprep.subr.mxu0 0.0
        %4265 = vmatpush1.msra.mxu0 0.0
        %4266 = vmatprep.subr.mxu0 0.0
        %4267 = vmatpush1.msra.mxu0 0.0
        %4268 = vmatprep.subr.mxu0 0.0
        %4269 = vmatpush1.msra.mxu0 0.0
        %4270 = vmatprep.subr.mxu0 0.0
        %4271 = vmatpush1.msra.mxu0 0.0
        %4272 = vmatprep.subr.mxu0 0.0
        %4273 = vmatpush1.msra.mxu0 0.0
        %4274 = vmatprep.subr.mxu0 0.0
        %4275 = vmatpush1.msra.mxu0 0.0
        %4276 = vmatprep.subr.mxu0 0.0
        %4277 = vmatpush1.msra.mxu0 0.0
        %4278 = vmatprep.subr.mxu0 0.0
        %4279 = vmatpush1.msra.mxu0 0.0
        %4280 = vmatprep.subr.mxu0 0.0
        %4281 = vmatpush1.msra.mxu0 0.0
        %4282 = vmatprep.subr.mxu0 0.0
        %4283 = vmatpush1.msra.mxu0 0.0
        %4284 = vmatprep.subr.mxu0 0.0
        %4285 = vmatpush1.msra.mxu0 0.0
        %4286 = vmatprep.subr.mxu0 0.0
        %4287 = vmatpush1.msra.mxu0 0.0
        %4288 = vmatprep.subr.mxu0 0.0
        %4289 = vmatpush1.msra.mxu0 0.0
        %4290 = vmatprep.subr.mxu0 0.0
        %4291 = vmatpush1.msra.mxu0 0.0
        %4292 = vmatprep.subr.mxu0 0.0
        %4293 = vmatpush1.msra.mxu0 0.0
        %4294 = vmatprep.subr.mxu0 0.0
        %4295 = vmatpush1.msra.mxu0 0.0
        %4296 = vmatprep.subr.mxu0 0.0
        %4297 = vmatpush1.msra.mxu0 0.0
        %4298 = vmatprep.subr.mxu0 0.0
        %4299 = vmatpush1.msra.mxu0 0.0
        %4300 = vmatprep.subr.mxu0 0.0
        %4301 = vmatpush1.msra.mxu0 0.0
        %4302 = vmatprep.subr.mxu0 0.0
        %4303 = vmatpush1.msra.mxu0 0.0
        %4304 = vmatprep.subr.mxu0 0.0
        %4305 = vmatpush1.msra.mxu0 0.0
        %4306 = vmatprep.subr.mxu0 0.0
        %4307 = vmatpush1.msra.mxu0 0.0
        %4308 = vmatprep.subr.mxu0 0.0
        %4309 = vmatpush1.msra.mxu0 0.0
        %4310 = vmatprep.subr.mxu0 0.0
        %4311 = vmatpush1.msra.mxu0 0.0
        %4312 = vmatprep.subr.mxu0 0.0
        %4313 = vmatpush1.msra.mxu0 0.0
        %4314 = vmatprep.subr.mxu0 0.0
        %4315 = vmatpush1.msra.mxu0 0.0
        %4316 = vmatprep.subr.mxu0 0.0
        %4317 = vmatpush1.msra.mxu0 0.0
        %4318 = vmatprep.subr.mxu0 0.0
        %4319 = vmatpush1.msra.mxu0 0.0
        %4320 = vmatprep.subr.mxu0 0.0
        %4321 = vmatpush1.msra.mxu0 0.0
        %4322 = vmatprep.subr.mxu0 0.0
        %4323 = vmatpush1.msra.mxu0 0.0
        %4324 = vmatprep.mubr.f32.mxu0 0.0
        %4325 = vmatmul.mubr.f32.gmra.mrb[0].mxu0 %v4256
        %v4326 = vpop.f32.mrb[0].mxu0
        %v4327 = vadd.f32 0.0, %v4326
        %v4328 = vpop.f32.mrb[0].mxu0
        %4329 = vdwg.mxu0
        %4330 = vrot.lane.b32.xlu0 %v4069, 120
        %v4331 = vpop.permute.xlu0 %4330
        %4332 = vrot.lane.b32.xlu0 %v4152, 120
        %v4333 = vpop.permute.xlu0 %4332
        %4334 = vrot.lane.b32.xlu0 %v4157, 120
        %v4335 = vpop.permute.xlu0 %4334
        %v4336 = vsel %vm1119, %v4331, 0
        %v4338 = vsel %vm1119, %v4333, 0
        %v4340 = vsel %vm1119, %v4335, 0
        %4342 = vmatprep.subr.mxu0 0.0
        %4343 = vmatpush1.xpose.msra.mxu0 %v4338
        %4344 = vmatprep.subr.mxu0 0.0
        %4345 = vmatpush1.xpose.msra.mxu0 %v4340
        %4346 = vmatprep.subr.mxu0 0.0
        %4347 = vmatpush1.xpose.msra.mxu0 0.0
        %4348 = vmatprep.subr.mxu0 0.0
        %4349 = vmatpush1.xpose.msra.mxu0 0.0
        %4350 = vmatprep.subr.mxu0 0.0
        %4351 = vmatpush1.xpose.msra.mxu0 0.0
        %4352 = vmatprep.subr.mxu0 0.0
        %4353 = vmatpush1.xpose.msra.mxu0 0.0
        %4354 = vmatprep.subr.mxu0 0.0
        %4355 = vmatpush1.xpose.msra.mxu0 0.0
        %4356 = vmatprep.subr.mxu0 0.0
        %4357 = vmatpush1.xpose.msra.mxu0 0.0
        %4358 = vmatprep.subr.mxu0 0.0
        %4359 = vmatpush1.xpose.msra.mxu0 0.0
        %4360 = vmatprep.subr.mxu0 0.0
        %4361 = vmatpush1.xpose.msra.mxu0 0.0
        %4362 = vmatprep.subr.mxu0 0.0
        %4363 = vmatpush1.xpose.msra.mxu0 0.0
        %4364 = vmatprep.subr.mxu0 0.0
        %4365 = vmatpush1.xpose.msra.mxu0 0.0
        %4366 = vmatprep.subr.mxu0 0.0
        %4367 = vmatpush1.xpose.msra.mxu0 0.0
        %4368 = vmatprep.subr.mxu0 0.0
        %4369 = vmatpush1.xpose.msra.mxu0 0.0
        %4370 = vmatprep.subr.mxu0 0.0
        %4371 = vmatpush1.xpose.msra.mxu0 0.0
        %4372 = vmatprep.subr.mxu0 0.0
        %4373 = vmatpush1.xpose.msra.mxu0 0.0
        %4374 = vmatprep.subr.mxu0 0.0
        %4375 = vmatpush1.xpose.msra.mxu0 0.0
        %4376 = vmatprep.subr.mxu0 0.0
        %4377 = vmatpush1.xpose.msra.mxu0 0.0
        %4378 = vmatprep.subr.mxu0 0.0
        %4379 = vmatpush1.xpose.msra.mxu0 0.0
        %4380 = vmatprep.subr.mxu0 0.0
        %4381 = vmatpush1.xpose.msra.mxu0 0.0
        %4382 = vmatprep.subr.mxu0 0.0
        %4383 = vmatpush1.xpose.msra.mxu0 0.0
        %4384 = vmatprep.subr.mxu0 0.0
        %4385 = vmatpush1.xpose.msra.mxu0 0.0
        %4386 = vmatprep.subr.mxu0 0.0
        %4387 = vmatpush1.xpose.msra.mxu0 0.0
        %4388 = vmatprep.subr.mxu0 0.0
        %4389 = vmatpush1.xpose.msra.mxu0 0.0
        %4390 = vmatprep.subr.mxu0 0.0
        %4391 = vmatpush1.xpose.msra.mxu0 0.0
        %4392 = vmatprep.subr.mxu0 0.0
        %4393 = vmatpush1.xpose.msra.mxu0 0.0
        %4394 = vmatprep.subr.mxu0 0.0
        %4395 = vmatpush1.xpose.msra.mxu0 0.0
        %4396 = vmatprep.subr.mxu0 0.0
        %4397 = vmatpush1.xpose.msra.mxu0 0.0
        %4398 = vmatprep.subr.mxu0 0.0
        %4399 = vmatpush1.xpose.msra.mxu0 0.0
        %4400 = vmatprep.subr.mxu0 0.0
        %4401 = vmatpush1.xpose.msra.mxu0 0.0
        %4402 = vmatprep.subr.mxu0 0.0
        %4403 = vmatpush1.xpose.msra.mxu0 0.0
        %4404 = vmatprep.subr.mxu0 0.0
        %4405 = vmatpush1.xpose.msra.mxu0 0.0
        %4406 = vmatprep.mubr.f32.mxu0 0.0
        %4407 = vmatmul.mubr.f32.gmra.mrb[0].mxu0 %v4336
        %v4408 = vpop.f32.mrb[0].mxu0
        %v4409 = vadd.f32 %v1030, %v4408
        %v4410 = vpop.f32.mrb[0].mxu0
        %4411 = vdwg.mxu0
        %v4412 = vsel %vm2163, %v4409, -inf
        %4413 = vmax.xlane.f32.xlu0 %v4412
        %v4414 = vpop.xlane.xlu0 %4413
        %v4415 = vsub.f32 %v4409, %v4414
        %v4416 = vmul.f32 %v4415, 1.442695
        %v4417 = vpow.pop %v4416
        %v4418 = vsel %vm2163, %v4417, 0.0
        %4419 = vadd.xlane.f32.xlu0 %v4418
        %v4420 = vpop.xlane.xlu0 %4419
        %v4421 = vrcp.pop %v4420
        %v4422 = vmul.f32 %v4417, %v4421
        %4423 = vrot.lane.b32.xlu0 %v4152, 88
        %v4424 = vpop.permute.xlu0 %4423
        %4425 = vrot.lane.b32.xlu0 %v4157, 88
        %v4426 = vpop.permute.xlu0 %4425
        %v4429 = vsel %vm2163, %v4422, 0
        %v4431 = vsel %vm2183, %v4426, 0
        %4433 = vmatprep.subr.mxu0 0.0
        %4434 = vmatpush1.msra.mxu0 %v4424
        %4435 = vmatprep.subr.mxu0 0.0
        %4436 = vmatpush1.msra.mxu0 %v4431
        %4437 = vmatprep.subr.mxu0 0.0
        %4438 = vmatpush1.msra.mxu0 0.0
        %4439 = vmatprep.subr.mxu0 0.0
        %4440 = vmatpush1.msra.mxu0 0.0
        %4441 = vmatprep.subr.mxu0 0.0
        %4442 = vmatpush1.msra.mxu0 0.0
        %4443 = vmatprep.subr.mxu0 0.0
        %4444 = vmatpush1.msra.mxu0 0.0
        %4445 = vmatprep.subr.mxu0 0.0
        %4446 = vmatpush1.msra.mxu0 0.0
        %4447 = vmatprep.subr.mxu0 0.0
        %4448 = vmatpush1.msra.mxu0 0.0
        %4449 = vmatprep.subr.mxu0 0.0
        %4450 = vmatpush1.msra.mxu0 0.0
        %4451 = vmatprep.subr.mxu0 0.0
        %4452 = vmatpush1.msra.mxu0 0.0
        %4453 = vmatprep.subr.mxu0 0.0
        %4454 = vmatpush1.msra.mxu0 0.0
        %4455 = vmatprep.subr.mxu0 0.0
        %4456 = vmatpush1.msra.mxu0 0.0
        %4457 = vmatprep.subr.mxu0 0.0
        %4458 = vmatpush1.msra.mxu0 0.0
        %4459 = vmatprep.subr.mxu0 0.0
        %4460 = vmatpush1.msra.mxu0 0.0
        %4461 = vmatprep.subr.mxu0 0.0
        %4462 = vmatpush1.msra.mxu0 0.0
        %4463 = vmatprep.subr.mxu0 0.0
        %4464 = vmatpush1.msra.mxu0 0.0
        %4465 = vmatprep.subr.mxu0 0.0
        %4466 = vmatpush1.msra.mxu0 0.0
        %4467 = vmatprep.subr.mxu0 0.0
        %4468 = vmatpush1.msra.mxu0 0.0
        %4469 = vmatprep.subr.mxu0 0.0
        %4470 = vmatpush1.msra.mxu0 0.0
        %4471 = vmatprep.subr.mxu0 0.0
        %4472 = vmatpush1.msra.mxu0 0.0
        %4473 = vmatprep.subr.mxu0 0.0
        %4474 = vmatpush1.msra.mxu0 0.0
        %4475 = vmatprep.subr.mxu0 0.0
        %4476 = vmatpush1.msra.mxu0 0.0
        %4477 = vmatprep.subr.mxu0 0.0
        %4478 = vmatpush1.msra.mxu0 0.0
        %4479 = vmatprep.subr.mxu0 0.0
        %4480 = vmatpush1.msra.mxu0 0.0
        %4481 = vmatprep.subr.mxu0 0.0
        %4482 = vmatpush1.msra.mxu0 0.0
        %4483 = vmatprep.subr.mxu0 0.0
        %4484 = vmatpush1.msra.mxu0 0.0
        %4485 = vmatprep.subr.mxu0 0.0
        %4486 = vmatpush1.msra.mxu0 0.0
        %4487 = vmatprep.subr.mxu0 0.0
        %4488 = vmatpush1.msra.mxu0 0.0
        %4489 = vmatprep.subr.mxu0 0.0
        %4490 = vmatpush1.msra.mxu0 0.0
        %4491 = vmatprep.subr.mxu0 0.0
        %4492 = vmatpush1.msra.mxu0 0.0
        %4493 = vmatprep.subr.mxu0 0.0
        %4494 = vmatpush1.msra.mxu0 0.0
        %4495 = vmatprep.subr.mxu0 0.0
        %4496 = vmatpush1.msra.mxu0 0.0
        %4497 = vmatprep.mubr.f32.mxu0 0.0
        %4498 = vmatmul.mubr.f32.gmra.mrb[0].mxu0 %v4429
        %v4499 = vpop.f32.mrb[0].mxu0
        %v4500 = vadd.f32 0.0, %v4499
        %v4501 = vpop.f32.mrb[0].mxu0
        %4502 = vdwg.mxu0
        %4503 = vrot.lane.b32.xlu0 %v4069, 112
        %v4504 = vpop.permute.xlu0 %4503
        %4505 = vrot.lane.b32.xlu0 %v4152, 112
        %v4506 = vpop.permute.xlu0 %4505
        %4507 = vrot.lane.b32.xlu0 %v4157, 112
        %v4508 = vpop.permute.xlu0 %4507
        %v4509 = vsel %vm1119, %v4504, 0
        %v4511 = vsel %vm1119, %v4506, 0
        %v4513 = vsel %vm1119, %v4508, 0
        %4515 = vmatprep.subr.mxu0 0.0
        %4516 = vmatpush1.xpose.msra.mxu0 %v4511
        %4517 = vmatprep.subr.mxu0 0.0
        %4518 = vmatpush1.xpose.msra.mxu0 %v4513
        %4519 = vmatprep.subr.mxu0 0.0
        %4520 = vmatpush1.xpose.msra.mxu0 0.0
        %4521 = vmatprep.subr.mxu0 0.0
        %4522 = vmatpush1.xpose.msra.mxu0 0.0
        %4523 = vmatprep.subr.mxu0 0.0
        %4524 = vmatpush1.xpose.msra.mxu0 0.0
        %4525 = vmatprep.subr.mxu0 0.0
        %4526 = vmatpush1.xpose.msra.mxu0 0.0
        %4527 = vmatprep.subr.mxu0 0.0
        %4528 = vmatpush1.xpose.msra.mxu0 0.0
        %4529 = vmatprep.subr.mxu0 0.0
        %4530 = vmatpush1.xpose.msra.mxu0 0.0
        %4531 = vmatprep.subr.mxu0 0.0
        %4532 = vmatpush1.xpose.msra.mxu0 0.0
        %4533 = vmatprep.subr.mxu0 0.0
        %4534 = vmatpush1.xpose.msra.mxu0 0.0
        %4535 = vmatprep.subr.mxu0 0.0
        %4536 = vmatpush1.xpose.msra.mxu0 0.0
        %4537 = vmatprep.subr.mxu0 0.0
        %4538 = vmatpush1.xpose.msra.mxu0 0.0
        %4539 = vmatprep.subr.mxu0 0.0
        %4540 = vmatpush1.xpose.msra.mxu0 0.0
        %4541 = vmatprep.subr.mxu0 0.0
        %4542 = vmatpush1.xpose.msra.mxu0 0.0
        %4543 = vmatprep.subr.mxu0 0.0
        %4544 = vmatpush1.xpose.msra.mxu0 0.0
        %4545 = vmatprep.subr.mxu0 0.0
        %4546 = vmatpush1.xpose.msra.mxu0 0.0
        %4547 = vmatprep.subr.mxu0 0.0
        %4548 = vmatpush1.xpose.msra.mxu0 0.0
        %4549 = vmatprep.subr.mxu0 0.0
        %4550 = vmatpush1.xpose.msra.mxu0 0.0
        %4551 = vmatprep.subr.mxu0 0.0
        %4552 = vmatpush1.xpose.msra.mxu0 0.0
        %4553 = vmatprep.subr.mxu0 0.0
        %4554 = vmatpush1.xpose.msra.mxu0 0.0
        %4555 = vmatprep.subr.mxu0 0.0
        %4556 = vmatpush1.xpose.msra.mxu0 0.0
        %4557 = vmatprep.subr.mxu0 0.0
        %4558 = vmatpush1.xpose.msra.mxu0 0.0
        %4559 = vmatprep.subr.mxu0 0.0
        %4560 = vmatpush1.xpose.msra.mxu0 0.0
        %4561 = vmatprep.subr.mxu0 0.0
        %4562 = vmatpush1.xpose.msra.mxu0 0.0
        %4563 = vmatprep.subr.mxu0 0.0
        %4564 = vmatpush1.xpose.msra.mxu0 0.0
        %4565 = vmatprep.subr.mxu0 0.0
        %4566 = vmatpush1.xpose.msra.mxu0 0.0
        %4567 = vmatprep.subr.mxu0 0.0
        %4568 = vmatpush1.xpose.msra.mxu0 0.0
        %4569 = vmatprep.subr.mxu0 0.0
        %4570 = vmatpush1.xpose.msra.mxu0 0.0
        %4571 = vmatprep.subr.mxu0 0.0
        %4572 = vmatpush1.xpose.msra.mxu0 0.0
        %4573 = vmatprep.subr.mxu0 0.0
        %4574 = vmatpush1.xpose.msra.mxu0 0.0
        %4575 = vmatprep.subr.mxu0 0.0
        %4576 = vmatpush1.xpose.msra.mxu0 0.0
        %4577 = vmatprep.subr.mxu0 0.0
        %4578 = vmatpush1.xpose.msra.mxu0 0.0
        %4579 = vmatprep.mubr.f32.mxu0 0.0
        %4580 = vmatmul.mubr.f32.gmra.mrb[0].mxu0 %v4509
        %v4581 = vpop.f32.mrb[0].mxu0
        %v4582 = vadd.f32 %v1030, %v4581
        %v4583 = vpop.f32.mrb[0].mxu0
        %4584 = vdwg.mxu0
        %v4585 = vsel %vm2163, %v4582, -inf
        %4586 = vmax.xlane.f32.xlu0 %v4585
        %v4587 = vpop.xlane.xlu0 %4586
        %v4588 = vsub.f32 %v4582, %v4587
        %v4589 = vmul.f32 %v4588, 1.442695
        %v4590 = vpow.pop %v4589
        %v4591 = vsel %vm2163, %v4590, 0.0
        %4592 = vadd.xlane.f32.xlu0 %v4591
        %v4593 = vpop.xlane.xlu0 %4592
        %v4594 = vrcp.pop %v4593
        %v4595 = vmul.f32 %v4590, %v4594
        %4596 = vrot.lane.b32.xlu0 %v4152, 80
        %v4597 = vpop.permute.xlu0 %4596
        %4598 = vrot.lane.b32.xlu0 %v4157, 80
        %v4599 = vpop.permute.xlu0 %4598
        %v4602 = vsel %vm2163, %v4595, 0
        %v4604 = vsel %vm2183, %v4599, 0
        %4606 = vmatprep.subr.mxu0 0.0
        %4607 = vmatpush1.msra.mxu0 %v4597
        %4608 = vmatprep.subr.mxu0 0.0
        %4609 = vmatpush1.msra.mxu0 %v4604
        %4610 = vmatprep.subr.mxu0 0.0
        %4611 = vmatpush1.msra.mxu0 0.0
        %4612 = vmatprep.subr.mxu0 0.0
        %4613 = vmatpush1.msra.mxu0 0.0
        %4614 = vmatprep.subr.mxu0 0.0
        %4615 = vmatpush1.msra.mxu0 0.0
        %4616 = vmatprep.subr.mxu0 0.0
        %4617 = vmatpush1.msra.mxu0 0.0
        %4618 = vmatprep.subr.mxu0 0.0
        %4619 = vmatpush1.msra.mxu0 0.0
        %4620 = vmatprep.subr.mxu0 0.0
        %4621 = vmatpush1.msra.mxu0 0.0
        %4622 = vmatprep.subr.mxu0 0.0
        %4623 = vmatpush1.msra.mxu0 0.0
        %4624 = vmatprep.subr.mxu0 0.0
        %4625 = vmatpush1.msra.mxu0 0.0
        %4626 = vmatprep.subr.mxu0 0.0
        %4627 = vmatpush1.msra.mxu0 0.0
        %4628 = vmatprep.subr.mxu0 0.0
        %4629 = vmatpush1.msra.mxu0 0.0
        %4630 = vmatprep.subr.mxu0 0.0
        %4631 = vmatpush1.msra.mxu0 0.0
        %4632 = vmatprep.subr.mxu0 0.0
        %4633 = vmatpush1.msra.mxu0 0.0
        %4634 = vmatprep.subr.mxu0 0.0
        %4635 = vmatpush1.msra.mxu0 0.0
        %4636 = vmatprep.subr.mxu0 0.0
        %4637 = vmatpush1.msra.mxu0 0.0
        %4638 = vmatprep.subr.mxu0 0.0
        %4639 = vmatpush1.msra.mxu0 0.0
        %4640 = vmatprep.subr.mxu0 0.0
        %4641 = vmatpush1.msra.mxu0 0.0
        %4642 = vmatprep.subr.mxu0 0.0
        %4643 = vmatpush1.msra.mxu0 0.0
        %4644 = vmatprep.subr.mxu0 0.0
        %4645 = vmatpush1.msra.mxu0 0.0
        %4646 = vmatprep.subr.mxu0 0.0
        %4647 = vmatpush1.msra.mxu0 0.0
        %4648 = vmatprep.subr.mxu0 0.0
        %4649 = vmatpush1.msra.mxu0 0.0
        %4650 = vmatprep.subr.mxu0 0.0
        %4651 = vmatpush1.msra.mxu0 0.0
        %4652 = vmatprep.subr.mxu0 0.0
        %4653 = vmatpush1.msra.mxu0 0.0
        %4654 = vmatprep.subr.mxu0 0.0
        %4655 = vmatpush1.msra.mxu0 0.0
        %4656 = vmatprep.subr.mxu0 0.0
        %4657 = vmatpush1.msra.mxu0 0.0
        %4658 = vmatprep.subr.mxu0 0.0
        %4659 = vmatpush1.msra.mxu0 0.0
        %4660 = vmatprep.subr.mxu0 0.0
        %4661 = vmatpush1.msra.mxu0 0.0
        %4662 = vmatprep.subr.mxu0 0.0
        %4663 = vmatpush1.msra.mxu0 0.0
        %4664 = vmatprep.subr.mxu0 0.0
        %4665 = vmatpush1.msra.mxu0 0.0
        %4666 = vmatprep.subr.mxu0 0.0
        %4667 = vmatpush1.msra.mxu0 0.0
        %4668 = vmatprep.subr.mxu0 0.0
        %4669 = vmatpush1.msra.mxu0 0.0
        %4670 = vmatprep.mubr.f32.mxu0 0.0
        %4671 = vmatmul.mubr.f32.gmra.mrb[0].mxu0 %v4602
        %v4672 = vpop.f32.mrb[0].mxu0
        %v4673 = vadd.f32 0.0, %v4672
        %v4674 = vpop.f32.mrb[0].mxu0
        %4675 = vdwg.mxu0
        %4676 = vrot.lane.b32.xlu0 %v4069, 104
        %v4677 = vpop.permute.xlu0 %4676
        %4678 = vrot.lane.b32.xlu0 %v4152, 104
        %v4679 = vpop.permute.xlu0 %4678
        %4680 = vrot.lane.b32.xlu0 %v4157, 104
        %v4681 = vpop.permute.xlu0 %4680
        %v4682 = vsel %vm1119, %v4677, 0
        %v4684 = vsel %vm1119, %v4679, 0
        %v4686 = vsel %vm1119, %v4681, 0
        %4688 = vmatprep.subr.mxu0 0.0
        %4689 = vmatpush1.xpose.msra.mxu0 %v4684
        %4690 = vmatprep.subr.mxu0 0.0
        %4691 = vmatpush1.xpose.msra.mxu0 %v4686
        %4692 = vmatprep.subr.mxu0 0.0
        %4693 = vmatpush1.xpose.msra.mxu0 0.0
        %4694 = vmatprep.subr.mxu0 0.0
        %4695 = vmatpush1.xpose.msra.mxu0 0.0
        %4696 = vmatprep.subr.mxu0 0.0
        %4697 = vmatpush1.xpose.msra.mxu0 0.0
        %4698 = vmatprep.subr.mxu0 0.0
        %4699 = vmatpush1.xpose.msra.mxu0 0.0
        %4700 = vmatprep.subr.mxu0 0.0
        %4701 = vmatpush1.xpose.msra.mxu0 0.0
        %4702 = vmatprep.subr.mxu0 0.0
        %4703 = vmatpush1.xpose.msra.mxu0 0.0
        %4704 = vmatprep.subr.mxu0 0.0
        %4705 = vmatpush1.xpose.msra.mxu0 0.0
        %4706 = vmatprep.subr.mxu0 0.0
        %4707 = vmatpush1.xpose.msra.mxu0 0.0
        %4708 = vmatprep.subr.mxu0 0.0
        %4709 = vmatpush1.xpose.msra.mxu0 0.0
        %4710 = vmatprep.subr.mxu0 0.0
        %4711 = vmatpush1.xpose.msra.mxu0 0.0
        %4712 = vmatprep.subr.mxu0 0.0
        %4713 = vmatpush1.xpose.msra.mxu0 0.0
        %4714 = vmatprep.subr.mxu0 0.0
        %4715 = vmatpush1.xpose.msra.mxu0 0.0
        %4716 = vmatprep.subr.mxu0 0.0
        %4717 = vmatpush1.xpose.msra.mxu0 0.0
        %4718 = vmatprep.subr.mxu0 0.0
        %4719 = vmatpush1.xpose.msra.mxu0 0.0
        %4720 = vmatprep.subr.mxu0 0.0
        %4721 = vmatpush1.xpose.msra.mxu0 0.0
        %4722 = vmatprep.subr.mxu0 0.0
        %4723 = vmatpush1.xpose.msra.mxu0 0.0
        %4724 = vmatprep.subr.mxu0 0.0
        %4725 = vmatpush1.xpose.msra.mxu0 0.0
        %4726 = vmatprep.subr.mxu0 0.0
        %4727 = vmatpush1.xpose.msra.mxu0 0.0
        %4728 = vmatprep.subr.mxu0 0.0
        %4729 = vmatpush1.xpose.msra.mxu0 0.0
        %4730 = vmatprep.subr.mxu0 0.0
        %4731 = vmatpush1.xpose.msra.mxu0 0.0
        %4732 = vmatprep.subr.mxu0 0.0
        %4733 = vmatpush1.xpose.msra.mxu0 0.0
        %4734 = vmatprep.subr.mxu0 0.0
        %4735 = vmatpush1.xpose.msra.mxu0 0.0
        %4736 = vmatprep.subr.mxu0 0.0
        %4737 = vmatpush1.xpose.msra.mxu0 0.0
        %4738 = vmatprep.subr.mxu0 0.0
        %4739 = vmatpush1.xpose.msra.mxu0 0.0
        %4740 = vmatprep.subr.mxu0 0.0
        %4741 = vmatpush1.xpose.msra.mxu0 0.0
        %4742 = vmatprep.subr.mxu0 0.0
        %4743 = vmatpush1.xpose.msra.mxu0 0.0
        %4744 = vmatprep.subr.mxu0 0.0
        %4745 = vmatpush1.xpose.msra.mxu0 0.0
        %4746 = vmatprep.subr.mxu0 0.0
        %4747 = vmatpush1.xpose.msra.mxu0 0.0
        %4748 = vmatprep.subr.mxu0 0.0
        %4749 = vmatpush1.xpose.msra.mxu0 0.0
        %4750 = vmatprep.subr.mxu0 0.0
        %4751 = vmatpush1.xpose.msra.mxu0 0.0
        %4752 = vmatprep.mubr.f32.mxu0 0.0
        %4753 = vmatmul.mubr.f32.gmra.mrb[0].mxu0 %v4682
        %v4754 = vpop.f32.mrb[0].mxu0
        %v4755 = vadd.f32 %v1030, %v4754
        %v4756 = vpop.f32.mrb[0].mxu0
        %4757 = vdwg.mxu0
        %v4758 = vsel %vm2163, %v4755, -inf
        %4759 = vmax.xlane.f32.xlu0 %v4758
        %v4760 = vpop.xlane.xlu0 %4759
        %v4761 = vsub.f32 %v4755, %v4760
        %v4762 = vmul.f32 %v4761, 1.442695
        %v4763 = vpow.pop %v4762
        %v4764 = vsel %vm2163, %v4763, 0.0
        %4765 = vadd.xlane.f32.xlu0 %v4764
        %v4766 = vpop.xlane.xlu0 %4765
        %v4767 = vrcp.pop %v4766
        %v4768 = vmul.f32 %v4763, %v4767
        %4769 = vrot.lane.b32.xlu0 %v4152, 72
        %v4770 = vpop.permute.xlu0 %4769
        %4771 = vrot.lane.b32.xlu0 %v4157, 72
        %v4772 = vpop.permute.xlu0 %4771
        %v4775 = vsel %vm2163, %v4768, 0
        %v4777 = vsel %vm2183, %v4772, 0
        %4779 = vmatprep.subr.mxu0 0.0
        %4780 = vmatpush1.msra.mxu0 %v4770
        %4781 = vmatprep.subr.mxu0 0.0
        %4782 = vmatpush1.msra.mxu0 %v4777
        %4783 = vmatprep.subr.mxu0 0.0
        %4784 = vmatpush1.msra.mxu0 0.0
        %4785 = vmatprep.subr.mxu0 0.0
        %4786 = vmatpush1.msra.mxu0 0.0
        %4787 = vmatprep.subr.mxu0 0.0
        %4788 = vmatpush1.msra.mxu0 0.0
        %4789 = vmatprep.subr.mxu0 0.0
        %4790 = vmatpush1.msra.mxu0 0.0
        %4791 = vmatprep.subr.mxu0 0.0
        %4792 = vmatpush1.msra.mxu0 0.0
        %4793 = vmatprep.subr.mxu0 0.0
        %4794 = vmatpush1.msra.mxu0 0.0
        %4795 = vmatprep.subr.mxu0 0.0
        %4796 = vmatpush1.msra.mxu0 0.0
        %4797 = vmatprep.subr.mxu0 0.0
        %4798 = vmatpush1.msra.mxu0 0.0
        %4799 = vmatprep.subr.mxu0 0.0
        %4800 = vmatpush1.msra.mxu0 0.0
        %4801 = vmatprep.subr.mxu0 0.0
        %4802 = vmatpush1.msra.mxu0 0.0
        %4803 = vmatprep.subr.mxu0 0.0
        %4804 = vmatpush1.msra.mxu0 0.0
        %4805 = vmatprep.subr.mxu0 0.0
        %4806 = vmatpush1.msra.mxu0 0.0
        %4807 = vmatprep.subr.mxu0 0.0
        %4808 = vmatpush1.msra.mxu0 0.0
        %4809 = vmatprep.subr.mxu0 0.0
        %4810 = vmatpush1.msra.mxu0 0.0
        %4811 = vmatprep.subr.mxu0 0.0
        %4812 = vmatpush1.msra.mxu0 0.0
        %4813 = vmatprep.subr.mxu0 0.0
        %4814 = vmatpush1.msra.mxu0 0.0
        %4815 = vmatprep.subr.mxu0 0.0
        %4816 = vmatpush1.msra.mxu0 0.0
        %4817 = vmatprep.subr.mxu0 0.0
        %4818 = vmatpush1.msra.mxu0 0.0
        %4819 = vmatprep.subr.mxu0 0.0
        %4820 = vmatpush1.msra.mxu0 0.0
        %4821 = vmatprep.subr.mxu0 0.0
        %4822 = vmatpush1.msra.mxu0 0.0
        %4823 = vmatprep.subr.mxu0 0.0
        %4824 = vmatpush1.msra.mxu0 0.0
        %4825 = vmatprep.subr.mxu0 0.0
        %4826 = vmatpush1.msra.mxu0 0.0
        %4827 = vmatprep.subr.mxu0 0.0
        %4828 = vmatpush1.msra.mxu0 0.0
        %4829 = vmatprep.subr.mxu0 0.0
        %4830 = vmatpush1.msra.mxu0 0.0
        %4831 = vmatprep.subr.mxu0 0.0
        %4832 = vmatpush1.msra.mxu0 0.0
        %4833 = vmatprep.subr.mxu0 0.0
        %4834 = vmatpush1.msra.mxu0 0.0
        %4835 = vmatprep.subr.mxu0 0.0
        %4836 = vmatpush1.msra.mxu0 0.0
        %4837 = vmatprep.subr.mxu0 0.0
        %4838 = vmatpush1.msra.mxu0 0.0
        %4839 = vmatprep.subr.mxu0 0.0
        %4840 = vmatpush1.msra.mxu0 0.0
        %4841 = vmatprep.subr.mxu0 0.0
        %4842 = vmatpush1.msra.mxu0 0.0
        %4843 = vmatprep.mubr.f32.mxu0 0.0
        %4844 = vmatmul.mubr.f32.gmra.mrb[0].mxu0 %v4775
        %v4845 = vpop.f32.mrb[0].mxu0
        %v4846 = vadd.f32 0.0, %v4845
        %v4847 = vpop.f32.mrb[0].mxu0
        %4848 = vdwg.mxu0
        %4850 = vrot.lane.b32.xlu0 %v4500, 8
        %v4851 = vpop.permute.xlu0 %4850
        %4854 = vrot.lane.b32.xlu0 %v4673, 16
        %v4855 = vpop.permute.xlu0 %4854
        %4858 = vrot.lane.b32.xlu0 %v4846, 24
        %v4859 = vpop.permute.xlu0 %4858
        %v4861 = vsel %vm1119, %v4327, %v4851
        %v4862 = vsel %vm1789, %v4861, %v4855
        %v4863 = vsel %vm1791, %v4862, %v4859
        %s4864 = scalar_lea.vmem [#allocation14], 32
        %v4865 = vld [vmem:[%s4864] sm:$0xff]
        %v4866 = vld [vmem:[%s4864 + $0x8] sm:$0xff]
        %v4867 = vld [vmem:[%s4864 + $0x10] sm:$0xff]
        %v4868 = vld [vmem:[%s4864 + $0x18] sm:$0xff]
        %s4869 = scalar_lea.vmem [#allocation16], 1
        %v4870 = vld [vmem:[%s4869] sm:$0x1]
        %v4872 = vlaneseq
        %v4873 = vshrl.u32 %v4872, 7
        %v4874 = vsub.s32 0, %v4873
        %v4875 = vrot.slane %v4870, %v4874
        %v4878 = vsel %vm1042, %v4863, 0
        %4880 = vmatprep.subr.mxu0 0.0
        %4881 = vmatpush1.msra.mxu0 %v4865
        %4882 = vmatprep.subr.mxu0 0.0
        %4883 = vmatpush1.msra.mxu0 %v4866
        %4884 = vmatprep.subr.mxu0 0.0
        %4885 = vmatpush1.msra.mxu0 %v4867
        %4886 = vmatprep.subr.mxu0 0.0
        %4887 = vmatpush1.msra.mxu0 %v4868
        %4888 = vmatprep.subr.mxu0 0.0
        %4889 = vmatpush1.msra.mxu0 0.0
        %4890 = vmatprep.subr.mxu0 0.0
        %4891 = vmatpush1.msra.mxu0 0.0
        %4892 = vmatprep.subr.mxu0 0.0
        %4893 = vmatpush1.msra.mxu0 0.0
        %4894 = vmatprep.subr.mxu0 0.0
        %4895 = vmatpush1.msra.mxu0 0.0
        %4896 = vmatprep.subr.mxu0 0.0
        %4897 = vmatpush1.msra.mxu0 0.0
        %4898 = vmatprep.subr.mxu0 0.0
        %4899 = vmatpush1.msra.mxu0 0.0
        %4900 = vmatprep.subr.mxu0 0.0
        %4901 = vmatpush1.msra.mxu0 0.0
        %4902 = vmatprep.subr.mxu0 0.0
        %4903 = vmatpush1.msra.mxu0 0.0
        %4904 = vmatprep.subr.mxu0 0.0
        %4905 = vmatpush1.msra.mxu0 0.0
        %4906 = vmatprep.subr.mxu0 0.0
        %4907 = vmatpush1.msra.mxu0 0.0
        %4908 = vmatprep.subr.mxu0 0.0
        %4909 = vmatpush1.msra.mxu0 0.0
        %4910 = vmatprep.subr.mxu0 0.0
        %4911 = vmatpush1.msra.mxu0 0.0
        %4912 = vmatprep.subr.mxu0 0.0
        %4913 = vmatpush1.msra.mxu0 0.0
        %4914 = vmatprep.subr.mxu0 0.0
        %4915 = vmatpush1.msra.mxu0 0.0
        %4916 = vmatprep.subr.mxu0 0.0
        %4917 = vmatpush1.msra.mxu0 0.0
        %4918 = vmatprep.subr.mxu0 0.0
        %4919 = vmatpush1.msra.mxu0 0.0
        %4920 = vmatprep.subr.mxu0 0.0
        %4921 = vmatpush1.msra.mxu0 0.0
        %4922 = vmatprep.subr.mxu0 0.0
        %4923 = vmatpush1.msra.mxu0 0.0
        %4924 = vmatprep.subr.mxu0 0.0
        %4925 = vmatpush1.msra.mxu0 0.0
        %4926 = vmatprep.subr.mxu0 0.0
        %4927 = vmatpush1.msra.mxu0 0.0
        %4928 = vmatprep.subr.mxu0 0.0
        %4929 = vmatpush1.msra.mxu0 0.0
        %4930 = vmatprep.subr.mxu0 0.0
        %4931 = vmatpush1.msra.mxu0 0.0
        %4932 = vmatprep.subr.mxu0 0.0
        %4933 = vmatpush1.msra.mxu0 0.0
        %4934 = vmatprep.subr.mxu0 0.0
        %4935 = vmatpush1.msra.mxu0 0.0
        %4936 = vmatprep.subr.mxu0 0.0
        %4937 = vmatpush1.msra.mxu0 0.0
        %4938 = vmatprep.subr.mxu0 0.0
        %4939 = vmatpush1.msra.mxu0 0.0
        %4940 = vmatprep.subr.mxu0 0.0
        %4941 = vmatpush1.msra.mxu0 0.0
        %4942 = vmatprep.subr.mxu0 0.0
        %4943 = vmatpush1.msra.mxu0 0.0
        %4944 = vmatprep.mubr.f32.mxu0 0.0
        %4945 = vmatmul.mubr.f32.gmra.mrb[0].mxu0 %v4878
        %v4946 = vpop.f32.mrb[0].mxu0
        %v4947 = vadd.f32 %v4875, %v4946
        %v4948 = vpop.f32.mrb[0].mxu0
        %4949 = vdwg.mxu0
        %v4950 = vadd.f32 %v3985, %v4947
        %s4951 = scalar_lea.vmem [#allocation20], 1
        %v4952 = vld [vmem:[%s4951] sm:$0x1]
        %s4953 = scalar_lea.vmem [#allocation22], 1
        %v4954 = vld [vmem:[%s4953] sm:$0x1]
        %v4955 = vsel %vm1042, %v4950, 0.0
        %4956 = vadd.xlane.f32.xlu0 %v4955
        %v4957 = vpop.xlane.xlu0 %4956
        %v4958 = vmul.f32 %v4957, %v1883
        %v4959 = vsub.f32 %v4950, %v4958
        %v4960 = vmul.f32 %v4959, %v4959
        %v4961 = vsel %vm1042, %v4960, 0.0
        %4962 = vadd.xlane.f32.xlu0 %v4961
        %v4963 = vpop.xlane.xlu0 %4962
        %v4964 = vmul.f32 %v4963, %v1883
        %v4965 = vadd.f32 %v4964, 1e-05
        %v4966 = vrsqrt.pop %v4965
        %v4967 = vmul.f32 %v4959, %v4966
        %v4969 = vlaneseq
        %v4970 = vshrl.u32 %v4969, 7
        %v4971 = vsub.s32 0, %v4970
        %v4972 = vrot.slane %v4952, %v4971
        %v4974 = vmul.f32 %v4967, %v4972
        %v4976 = vlaneseq
        %v4977 = vshrl.u32 %v4976, 7
        %v4978 = vsub.s32 0, %v4977
        %v4979 = vrot.slane %v4954, %v4978
        %v4981 = vadd.f32 %v4974, %v4979
        %s4982 = scalar_lea.vmem %s20, 32
        %v4983 = vld [vmem:[%s4982] sm:$0xff]
        %v4984 = vld [vmem:[%s4982 + $0x8] sm:$0xff]
        %v4985 = vld [vmem:[%s4982 + $0x10] sm:$0xff]
        %v4986 = vld [vmem:[%s4982 + $0x18] sm:$0xff]
        %s4987 = scalar_lea.vmem %s21, 1
        %v4988 = vld [vmem:[%s4987] sm:$0x1]
        %v4990 = vlaneseq
        %v4991 = vshrl.u32 %v4990, 7
        %v4992 = vsub.s32 0, %v4991
        %v4993 = vrot.slane %v4988, %v4992
        %v4996 = vsel %vm1042, %v4981, 0
        %4998 = vmatprep.subr.mxu0 0.0
        %4999 = vmatpush1.msra.mxu0 %v4983
        %5000 = vmatprep.subr.mxu0 0.0
        %5001 = vmatpush1.msra.mxu0 %v4984
        %5002 = vmatprep.subr.mxu0 0.0
        %5003 = vmatpush1.msra.mxu0 %v4985
        %5004 = vmatprep.subr.mxu0 0.0
        %5005 = vmatpush1.msra.mxu0 %v4986
        %5006 = vmatprep.subr.mxu0 0.0
        %5007 = vmatpush1.msra.mxu0 0.0
        %5008 = vmatprep.subr.mxu0 0.0
        %5009 = vmatpush1.msra.mxu0 0.0
        %5010 = vmatprep.subr.mxu0 0.0
        %5011 = vmatpush1.msra.mxu0 0.0
        %5012 = vmatprep.subr.mxu0 0.0
        %5013 = vmatpush1.msra.mxu0 0.0
        %5014 = vmatprep.subr.mxu0 0.0
        %5015 = vmatpush1.msra.mxu0 0.0
        %5016 = vmatprep.subr.mxu0 0.0
        %5017 = vmatpush1.msra.mxu0 0.0
        %5018 = vmatprep.subr.mxu0 0.0
        %5019 = vmatpush1.msra.mxu0 0.0
        %5020 = vmatprep.subr.mxu0 0.0
        %5021 = vmatpush1.msra.mxu0 0.0
        %5022 = vmatprep.subr.mxu0 0.0
        %5023 = vmatpush1.msra.mxu0 0.0
        %5024 = vmatprep.subr.mxu0 0.0
        %5025 = vmatpush1.msra.mxu0 0.0
        %5026 = vmatprep.subr.mxu0 0.0
        %5027 = vmatpush1.msra.mxu0 0.0
        %5028 = vmatprep.subr.mxu0 0.0
        %5029 = vmatpush1.msra.mxu0 0.0
        %5030 = vmatprep.subr.mxu0 0.0
        %5031 = vmatpush1.msra.mxu0 0.0
        %5032 = vmatprep.subr.mxu0 0.0
        %5033 = vmatpush1.msra.mxu0 0.0
        %5034 = vmatprep.subr.mxu0 0.0
        %5035 = vmatpush1.msra.mxu0 0.0
        %5036 = vmatprep.subr.mxu0 0.0
        %5037 = vmatpush1.msra.mxu0 0.0
        %5038 = vmatprep.subr.mxu0 0.0
        %5039 = vmatpush1.msra.mxu0 0.0
        %5040 = vmatprep.subr.mxu0 0.0
        %5041 = vmatpush1.msra.mxu0 0.0
        %5042 = vmatprep.subr.mxu0 0.0
        %5043 = vmatpush1.msra.mxu0 0.0
        %5044 = vmatprep.subr.mxu0 0.0
        %5045 = vmatpush1.msra.mxu0 0.0
        %5046 = vmatprep.subr.mxu0 0.0
        %5047 = vmatpush1.msra.mxu0 0.0
        %5048 = vmatprep.subr.mxu0 0.0
        %5049 = vmatpush1.msra.mxu0 0.0
        %5050 = vmatprep.subr.mxu0 0.0
        %5051 = vmatpush1.msra.mxu0 0.0
        %5052 = vmatprep.subr.mxu0 0.0
        %5053 = vmatpush1.msra.mxu0 0.0
        %5054 = vmatprep.subr.mxu0 0.0
        %5055 = vmatpush1.msra.mxu0 0.0
        %5056 = vmatprep.subr.mxu0 0.0
        %5057 = vmatpush1.msra.mxu0 0.0
        %5058 = vmatprep.subr.mxu0 0.0
        %5059 = vmatpush1.msra.mxu0 0.0
        %5060 = vmatprep.subr.mxu0 0.0
        %5061 = vmatpush1.msra.mxu0 0.0
        %5062 = vmatprep.mubr.f32.mxu0 0.0
        %5063 = vmatmul.mubr.f32.gmra.mrb[0].mxu0 %v4996
        %v5064 = vpop.f32.mrb[0].mxu0
        %v5065 = vadd.f32 %v4993, %v5064
        %v5066 = vpop.f32.mrb[0].mxu0
        %5067 = vdwg.mxu0
        %v5068 = vmax.f32 %v5065, 0.0
        %s5069 = scalar_lea.vmem %s22, 64
        %v5070 = vld [vmem:[%s5069] sm:$0xff]
        %v5071 = vld [vmem:[%s5069 + $0x8] sm:$0xff]
        %v5072 = vld [vmem:[%s5069 + $0x10] sm:$0xff]
        %v5073 = vld [vmem:[%s5069 + $0x18] sm:$0xff]
        %v5074 = vld [vmem:[%s5069 + $0x20] sm:$0xff]
        %v5075 = vld [vmem:[%s5069 + $0x28] sm:$0xff]
        %v5076 = vld [vmem:[%s5069 + $0x30] sm:$0xff]
        %v5077 = vld [vmem:[%s5069 + $0x38] sm:$0xff]
        %s5078 = scalar_lea.vmem %s23, 1
        %v5079 = vld [vmem:[%s5078] sm:$0x1]
        %v5081 = vlaneseq
        %v5082 = vshrl.u32 %v5081, 7
        %v5083 = vsub.s32 0, %v5082
        %v5084 = vrot.slane %v5079, %v5083
        %v5087 = vsel %vm3004, %v5068, 0
        %5089 = vmatprep.subr.mxu0 0.0
        %5090 = vmatpush1.msra.mxu0 %v5070
        %5091 = vmatprep.subr.mxu0 0.0
        %5092 = vmatpush1.msra.mxu0 %v5071
        %5093 = vmatprep.subr.mxu0 0.0
        %5094 = vmatpush1.msra.mxu0 %v5072
        %5095 = vmatprep.subr.mxu0 0.0
        %5096 = vmatpush1.msra.mxu0 %v5073
        %5097 = vmatprep.subr.mxu0 0.0
        %5098 = vmatpush1.msra.mxu0 %v5074
        %5099 = vmatprep.subr.mxu0 0.0
        %5100 = vmatpush1.msra.mxu0 %v5075
        %5101 = vmatprep.subr.mxu0 0.0
        %5102 = vmatpush1.msra.mxu0 %v5076
        %5103 = vmatprep.subr.mxu0 0.0
        %5104 = vmatpush1.msra.mxu0 %v5077
        %5105 = vmatprep.subr.mxu0 0.0
        %5106 = vmatpush1.msra.mxu0 0.0
        %5107 = vmatprep.subr.mxu0 0.0
        %5108 = vmatpush1.msra.mxu0 0.0
        %5109 = vmatprep.subr.mxu0 0.0
        %5110 = vmatpush1.msra.mxu0 0.0
        %5111 = vmatprep.subr.mxu0 0.0
        %5112 = vmatpush1.msra.mxu0 0.0
        %5113 = vmatprep.subr.mxu0 0.0
        %5114 = vmatpush1.msra.mxu0 0.0
        %5115 = vmatprep.subr.mxu0 0.0
        %5116 = vmatpush1.msra.mxu0 0.0
        %5117 = vmatprep.subr.mxu0 0.0
        %5118 = vmatpush1.msra.mxu0 0.0
        %5119 = vmatprep.subr.mxu0 0.0
        %5120 = vmatpush1.msra.mxu0 0.0
        %5121 = vmatprep.subr.mxu0 0.0
        %5122 = vmatpush1.msra.mxu0 0.0
        %5123 = vmatprep.subr.mxu0 0.0
        %5124 = vmatpush1.msra.mxu0 0.0
        %5125 = vmatprep.subr.mxu0 0.0
        %5126 = vmatpush1.msra.mxu0 0.0
        %5127 = vmatprep.subr.mxu0 0.0
        %5128 = vmatpush1.msra.mxu0 0.0
        %5129 = vmatprep.subr.mxu0 0.0
        %5130 = vmatpush1.msra.mxu0 0.0
        %5131 = vmatprep.subr.mxu0 0.0
        %5132 = vmatpush1.msra.mxu0 0.0
        %5133 = vmatprep.subr.mxu0 0.0
        %5134 = vmatpush1.msra.mxu0 0.0
        %5135 = vmatprep.subr.mxu0 0.0
        %5136 = vmatpush1.msra.mxu0 0.0
        %5137 = vmatprep.subr.mxu0 0.0
        %5138 = vmatpush1.msra.mxu0 0.0
        %5139 = vmatprep.subr.mxu0 0.0
        %5140 = vmatpush1.msra.mxu0 0.0
        %5141 = vmatprep.subr.mxu0 0.0
        %5142 = vmatpush1.msra.mxu0 0.0
        %5143 = vmatprep.subr.mxu0 0.0
        %5144 = vmatpush1.msra.mxu0 0.0
        %5145 = vmatprep.subr.mxu0 0.0
        %5146 = vmatpush1.msra.mxu0 0.0
        %5147 = vmatprep.subr.mxu0 0.0
        %5148 = vmatpush1.msra.mxu0 0.0
        %5149 = vmatprep.subr.mxu0 0.0
        %5150 = vmatpush1.msra.mxu0 0.0
        %5151 = vmatprep.subr.mxu0 0.0
        %5152 = vmatpush1.msra.mxu0 0.0
        %5153 = vmatprep.mubr.f32.mxu0 0.0
        %5154 = vmatmul.mubr.f32.gmra.mrb[0].mxu0 %v5087
        %v5155 = vpop.f32.mrb[0].mxu0
        %v5156 = vadd.f32 %v5084, %v5155
        %v5157 = vpop.f32.mrb[0].mxu0
        %5158 = vdwg.mxu0
        %v5159 = vadd.f32 %v4981, %v5156
        %s5160 = scalar_lea.vmem [#allocation23], 1
        %v5161 = vld [vmem:[%s5160] sm:$0x1]
        %s5162 = scalar_lea.vmem [#allocation25], 1
        %v5163 = vld [vmem:[%s5162] sm:$0x1]
        %v5164 = vsel %vm1042, %v5159, 0.0
        %5165 = vadd.xlane.f32.xlu0 %v5164
        %v5166 = vpop.xlane.xlu0 %5165
        %v5167 = vmul.f32 %v5166, %v1883
        %v5168 = vsub.f32 %v5159, %v5167
        %v5169 = vmul.f32 %v5168, %v5168
        %v5170 = vsel %vm1042, %v5169, 0.0
        %5171 = vadd.xlane.f32.xlu0 %v5170
        %v5172 = vpop.xlane.xlu0 %5171
        %v5173 = vmul.f32 %v5172, %v1883
        %v5174 = vadd.f32 %v5173, 1e-05
        %v5175 = vrsqrt.pop %v5174
        %v5176 = vmul.f32 %v5168, %v5175
        %v5178 = vlaneseq
        %v5179 = vshrl.u32 %v5178, 7
        %v5180 = vsub.s32 0, %v5179
        %v5181 = vrot.slane %v5161, %v5180
        %v5183 = vmul.f32 %v5176, %v5181
        %v5185 = vlaneseq
        %v5186 = vshrl.u32 %v5185, 7
        %v5187 = vsub.s32 0, %v5186
        %v5188 = vrot.slane %v5163, %v5187
        %v5190 = vadd.f32 %v5183, %v5188
        %v5191 = vld [vmem:[%s24] sm:$0x1]
        %v5192 = vld [vmem:[%s25] sm:$0x1]
        %v5193 = vsel %vm1042, %v5190, 0.0
        %5194 = vadd.xlane.f32.xlu0 %v5193
        %v5195 = vpop.xlane.xlu0 %5194
        %v5196 = vmul.f32 %v5195, %v1883
        %v5197 = vsub.f32 %v5190, %v5196
        %v5198 = vmul.f32 %v5197, %v5197
        %v5199 = vsel %vm1042, %v5198, 0.0
        %5200 = vadd.xlane.f32.xlu0 %v5199
        %v5201 = vpop.xlane.xlu0 %5200
        %v5202 = vmul.f32 %v5201, %v1883
        %v5203 = vadd.f32 %v5202, 1e-05
        %v5204 = vrsqrt.pop %v5203
        %v5205 = vmul.f32 %v5197, %v5204
        %v5207 = vlaneseq
        %v5208 = vshrl.u32 %v5207, 7
        %v5209 = vsub.s32 0, %v5208
        %v5210 = vrot.slane %v5191, %v5209
        %v5212 = vmul.f32 %v5205, %v5210
        %v5214 = vlaneseq
        %v5215 = vshrl.u32 %v5214, 7
        %v5216 = vsub.s32 0, %v5215
        %v5217 = vrot.slane %v5192, %v5216
        %v5219 = vadd.f32 %v5212, %v5217
        %5220 = vst.msk [vmem:[%s1020] sm:$0xff] %vm1042, %v5219
        %s5221 = sand.u32 %s614, 1
        %s5222 = scalar_lea.sflag [#allocation4], %s5221
        %s5223 = sand.u32 %s614, 1
        %s5224 = smul.addr %s5223, 8
        %s5225 = scalar_lea.vmem [#allocation26], %s5224
        // Predicated region
        $region185: #{tpu_custom_call.1} parent=123 // pred_check
          %p5226 = pneg %p624
        $region186: #{tpu_custom_call.1} parent=123 // pred_check_branch
          %5228 = sbr.rel (%p5226) target = $region188
        $region187: #{tpu_custom_call.1} parent=123 // pred_region
          %s5230 = ssub.s32 128, 128
          %5231 = vsyncadd %s5222, %s5230
          %s5232 = smul.addr %s50, 128
          %s5233 = scalar_lea.hbm %s26, %s5232
          %s5235 = sshll.u32 %s5225, 4
          %s5236 = int_to_ptr.vmem [resolvable:$true] %s5235
          %5238 = dma.vmem_to_hbm [thread:$0]  %s5236, 128, %s5233, %s5222
        $region188: #{tpu_custom_call.1} parent=123 // pred_fallthru
          _
      $region124: #{tpu_custom_call.1} parent=5 // pred_fallthru
        _
      %p5239 = scmp.le.s32.totalorder 2, %s45
      // Predicated region
      $region189: #{tpu_custom_call.1} parent=5 // pred_check
        %p5240 = pneg %p5239
      $region190: #{tpu_custom_call.1} parent=5 // pred_check_branch
        %5242 = sbr.rel (%p5240) target = $region192
      $region191: #{tpu_custom_call.1} parent=5 // pred_region
        %s5243 = ssub.s32 %s45, 2
        // Predicated region
        $region193: #{tpu_custom_call.1} parent=191 // pred_check
          %p5244 = pneg %p630
        $region194: #{tpu_custom_call.1} parent=191 // pred_check_branch
          %5246 = sbr.rel (%p5244) target = $region196
        $region195: #{tpu_custom_call.1} parent=191 // pred_region
          %s5247 = sand.u32 %s615, 1
          %s5248 = scalar_lea.sflag [#allocation4], %s5247
          %s5249 = sand.u32 %s615, 1
          %s5250 = smul.addr %s5249, 8
          %s5251 = scalar_lea.vmem [#allocation26], %s5250
          %5252 = dma.done %s5248, 128
        $region196: #{tpu_custom_call.1} parent=191 // pred_fallthru
          _
      $region192: #{tpu_custom_call.1} parent=5 // pred_fallthru
        _
    $region6: #{tpu_custom_call.1} parent=1 // loop_footer
      %s49 = sadd.s32 1, %s45
    $region7: #{tpu_custom_call.1} parent=1 // loop_footer_branch
      %44 = sbr.rel target = $region3
    $region8: #{tpu_custom_call.1} parent=1 // loop_exit
      _
    %5253 = vsyncpa [#allocation3], 1
    %s5254 = scalar_lea.sflag [#allocation3], 1
    %5255 = vsyncpa %s5254, 1
    %5256 = vsyncpa [#allocation6], 1
    %5257 = vsyncpa [#allocation9], 1
    %5258 = vsyncpa [#allocation12], 1
    %5259 = vsyncpa [#allocation15], 1
    %5260 = vsyncpa [#allocation18], 1
    %5261 = vsyncpa [#allocation21], 1
    %5262 = vsyncpa [#allocation24], 1
    %5263 = vsyncpa [#allocation4], 1
    %s5264 = scalar_lea.sflag [#allocation4], 1
    %5265 = vsyncpa %s5264, 1

</llo_original>
